<compile_context>
chip_gen: v6e
topology: v6e:2x2x1
jax: 0.10.0
libtpu: 0.0.40
codegen_flags: <defaults>
</compile_context>

<pallas_src>
import numpy as np

import jax
import jax.numpy as jnp
from jax import lax
from jax.experimental import pallas as pl
from jax.experimental.pallas import tpu as pltpu


# ----------------------------- fused kernel --------------------------------

def _net_kernel(xpe_ref, xpo_ref, m_ref, b1_ref, q_ref, b2_ref,
                wf1_ref, bf1_ref, wf2_ref, bf2_ref, wf3_ref, bf3_ref,
                wf4_ref, bf4_ref, out_ref, pa_ref, fc1z_ref):
    """Whole Net forward on VMEM-resident data.

    xpe/xpo : (N, 6, 22)  even / odd rows of the zero-padded (12, 22) input.
    m_ref   : (3, 22, 540)  conv1 band matrices (cols = (even W | odd W) x C).
    q_ref   : (3, 270, 270) conv2 block-band matrices (NHWC-flat layout).
    wf*_ref : pre-transposed / pre-permuted fc weights.
    pa_ref  : (7, 270) scratch = H-padded conv2 input for one sample.
    fc1z_ref: (N, 400) scratch = fc1 pre-activations for the whole batch.
    """
    n_batch = xpe_ref.shape[0]
    f32 = jnp.float32

    # Zero once: rows 0 and 6 stay zero for the conv2 H padding.
    pa_ref[...] = jnp.zeros_like(pa_ref)

    m0, m1, m2 = m_ref[0], m_ref[1], m_ref[2]
    q0, q1, q2 = q_ref[0], q_ref[1], q_ref[2]

    for n in range(n_batch):
        # ---------- conv1 (+ fused ReLU + 2x2 max-pool) ---------------------
        e0 = xpe_ref[n, 0:5, :]   # padded rows 0,2,4,6,8
        e1 = xpe_ref[n, 1:6, :]   # padded rows 2,4,6,8,10
        o0 = xpo_ref[n, 0:5, :]   # padded rows 1,3,5,7,9
        o1 = xpo_ref[n, 1:6, :]   # padded rows 3,5,7,9,11
        # even output rows h=2j use padded rows (2j, 2j+1, 2j+2)
        z_even = (jnp.dot(e0, m0, preferred_element_type=f32)
                  + jnp.dot(o0, m1, preferred_element_type=f32)
                  + jnp.dot(e1, m2, preferred_element_type=f32))
        # odd output rows h=2j+1 use padded rows (2j+1, 2j+2, 2j+3)
        z_odd = (jnp.dot(o0, m0, preferred_element_type=f32)
                 + jnp.dot(e1, m1, preferred_element_type=f32)
                 + jnp.dot(o1, m2, preferred_element_type=f32))
        # 2x2 max-pool.  Column order is (even W | odd W) so the W pool is a
        # single max of the two halves.  Per-channel bias commutes with max
        # and ReLU is monotone, so both are applied once, after pooling.
        hp = jnp.maximum(z_even, z_odd)                     # pool over H
        wp = jnp.maximum(hp[:, 0:270], hp[:, 270:540])      # pool over W
        act1 = jnp.maximum(wp + b1_ref[...], 0.0)           # (5, 270)

        # ---------- conv2 (+ ReLU): 3 block-band matmuls, NHWC-flat ---------
        pa_ref[1:6, :] = act1
        z2 = (jnp.dot(pa_ref[0:5, :], q0, preferred_element_type=f32)
              + jnp.dot(pa_ref[1:6, :], q1, preferred_element_type=f32)
              + jnp.dot(pa_ref[2:7, :], q2, preferred_element_type=f32))
        act2 = jnp.maximum(z2 + b2_ref[...], 0.0)            # (5, 270)

        # ---------- fc1: contract the (5, 270) activation -------------------
        # (the NCHW-flatten permutation is folded into wf1's rows)
        f1 = jnp.dot(act2[0:1, :], wf1_ref[0:270, :],
                     preferred_element_type=f32)
        for h in range(1, 5):
            f1 = f1 + jnp.dot(act2[h:h + 1, :],
                              wf1_ref[h * 270:(h + 1) * 270, :],
                              preferred_element_type=f32)
        fc1z_ref[n:n + 1, :] = f1                            # (1, 400)

    # ---------- fc stack on the whole batch ---------------------------------
    h1 = jnp.maximum(fc1z_ref[...] + bf1_ref[...], 0.0)
    h2 = jnp.maximum(jnp.dot(h1, wf2_ref[...], preferred_element_type=f32)
                     + bf2_ref[...], 0.0)
    h3 = jnp.maximum(jnp.dot(h2, wf3_ref[...], preferred_element_type=f32)
                     + bf3_ref[...], 0.0)
    # TODO(synk): nn.Dropout() is stochastic in train mode; identity in eval.
    out_ref[...] = (jnp.dot(h3, wf4_ref[...], preferred_element_type=f32)
                    + bf4_ref[...]).astype(out_ref.dtype)


def _full_block(shape):
    nd = len(shape)
    return pl.BlockSpec(shape, lambda i, nd=nd: (0,) * nd)


def net_forward(x_nchw, packed):
    """Forward pass of Net. x_nchw: (N, 1, 10, 20) float32 -> (N, 2)."""
    n = x_nchw.shape[0]
    # Minimal prep on the raw HBM input (tiny): zero-pad H/W by 1 and split
    # the rows by parity so the kernel never needs strided accesses.
    x2 = x_nchw[:, 0, :, :].astype(jnp.float32)            # (N, 10, 20)
    xp = jnp.pad(x2, ((0, 0), (1, 1), (1, 1)))             # (N, 12, 22)
    xpe = xp[:, 0::2, :]                                   # (N, 6, 22)
    xpo = xp[:, 1::2, :]                                   # (N, 6, 22)

    args = (xpe, xpo, packed["m1"], packed["b1"], packed["q2"], packed["b2"],
            packed["wf1"], packed["bf1"], packed["wf2"], packed["bf2"],
            packed["wf3"], packed["bf3"], packed["wf4"], packed["bf4"])

    return pl.pallas_call(
        _net_kernel,
        out_shape=jax.ShapeDtypeStruct((n, 2), jnp.float32),
        grid=(1,),
        in_specs=[_full_block(a.shape) for a in args],
        out_specs=pl.BlockSpec((n, 2), lambda i: (0, 0)),
        scratch_shapes=[
            pltpu.VMEM((7, 270), jnp.float32),   # H-padded conv2 input
            pltpu.VMEM((n, 400), jnp.float32),   # fc1 pre-activations
        ],
        compiler_params=pltpu.CompilerParams(
            dimension_semantics=("arbitrary",),
            vmem_limit_bytes=32 * 1024 * 1024),
    )(*args)


# -------------------------- one-time weight packing -------------------------

def prepack_params(params):
    """Host-side, one-time repacking of the PyTorch-layout weights.

    Folds every layout transform (conv weight reshapes, fc transposes, the
    NCHW-flatten permutation for fc1, bias tiling, the even/odd W split and
    the conv 'band matrix' construction) into the stored weights so the
    jitted forward contains zero weight-layout ops.
    """
    w1 = np.asarray(params["conv1_w"], np.float32).reshape(27, 3, 3)  # (c,kh,kw)
    b1 = np.asarray(params["conv1_b"], np.float32)
    w2 = np.asarray(params["conv2_w"], np.float32)                    # (co,ci,kh,kw)
    b2 = np.asarray(params["conv2_b"], np.float32)

    # conv1 band matrices: (22 padded W) -> (even W | odd W) x 27 channels.
    col_w_order = list(range(0, 20, 2)) + list(range(1, 20, 2))
    m1 = np.zeros((3, 22, 540), np.float32)
    for kh in range(3):
        for blk, w in enumerate(col_w_order):
            for kw in range(3):
                m1[kh, w + kw, blk * 27:(blk + 1) * 27] = w1[:, kh, kw]

    # conv2 block-band matrices on the NHWC-flat (w*27 + c) layout.
    q2 = np.zeros((3, 270, 270), np.float32)
    for kh in range(3):
        for w in range(10):
            for kw in range(3):
                wp = w + kw - 1
                if 0 <= wp <= 9:
                    q2[kh, wp * 27:(wp + 1) * 27, w * 27:(w + 1) * 27] = \
                        w2[:, :, kh, kw].T
    # fc1: PyTorch flattens NCHW (c*50 + h*10 + w); kernel uses h*270+w*27+c.
    f1 = np.asarray(params["fc1_w"], np.float32)            # (400, 1350)
    wf1 = f1.reshape(400, 27, 5, 10).transpose(2, 3, 1, 0).reshape(1350, 400)

    return {
        "m1": jnp.asarray(m1),
        "b1": jnp.asarray(np.tile(b1, 10)[None, :]),
        "q2": jnp.asarray(q2),
        "b2": jnp.asarray(np.tile(b2, 10)[None, :]),
        "wf1": jnp.asarray(wf1),
        "bf1": jnp.asarray(np.asarray(params["fc1_b"], np.float32)[None, :]),
        "wf2": jnp.asarray(np.asarray(params["fc2_w"], np.float32).T),
        "bf2": jnp.asarray(np.asarray(params["fc2_b"], np.float32)[None, :]),
        "wf3": jnp.asarray(np.asarray(params["fc3_w"], np.float32).T),
        "bf3": jnp.asarray(np.asarray(params["fc3_b"], np.float32)[None, :]),
        "wf4": jnp.asarray(np.asarray(params["fc4_w"], np.float32).T),
        "bf4": jnp.asarray(np.asarray(params["fc4_b"], np.float32)[None, :]),
    }


# ------------------------------ parameters ----------------------------------

def init_params(key):
    """Deterministic synthetic parameters with PyTorch default-init-like scale."""
    def uniform(k, shape, fan_in):
        bound = 1.0 / jnp.sqrt(jnp.float32(fan_in))
        return jax.random.uniform(k, shape, jnp.float32, -bound, bound)

    ks = jax.random.split(key, 12)
    p = {}
    p["conv1_w"] = uniform(ks[0], (27, 1, 3, 3), 1 * 9)
    p["conv1_b"] = uniform(ks[1], (27,), 1 * 9)
    p["conv2_w"] = uniform(ks[2], (27, 27, 3, 3), 27 * 9)
    p["conv2_b"] = uniform(ks[3], (27,), 27 * 9)
    p["fc1_w"] = uniform(ks[4], (400, 27 * 5 * 10), 27 * 5 * 10)  # (out, in)
    p["fc1_b"] = uniform(ks[5], (400,), 27 * 5 * 10)
    p["fc2_w"] = uniform(ks[6], (84, 400), 400)
    p["fc2_b"] = uniform(ks[7], (84,), 400)
    p["fc3_w"] = uniform(ks[8], (10, 84), 84)
    p["fc3_b"] = uniform(ks[9], (10,), 84)
    p["fc4_w"] = uniform(ks[10], (2, 10), 10)
    p["fc4_b"] = uniform(ks[11], (2,), 10)
    return p


# ------------------------- plain-JAX reference (check) ----------------------

def reference_forward(x, params):
    """Plain-JAX/XLA reference of the PyTorch module (eval mode)."""
    dn = ("NCHW", "OIHW", "NCHW")
    y = lax.conv_general_dilated(x, params["conv1_w"], (1, 1),
                                 ((1, 1), (1, 1)), dimension_numbers=dn)
    y = jax.nn.relu(y + params["conv1_b"][None, :, None, None])
    y = lax.reduce_window(y, -jnp.inf, lax.max, (1, 1, 2, 2), (1, 1, 2, 2),
                          "VALID")
    y = lax.conv_general_dilated(y, params["conv2_w"], (1, 1),
                                 ((1, 1), (1, 1)), dimension_numbers=dn)
    y = jax.nn.relu(y + params["conv2_b"][None, :, None, None])
    y = y.reshape(y.shape[0], -1)
    y = jax.nn.relu(y @ params["fc1_w"].T + params["fc1_b"])
    y = jax.nn.relu(y @ params["fc2_w"].T + params["fc2_b"])
    y = jax.nn.relu(y @ params["fc3_w"].T + params["fc3_b"])
    return y @ params["fc4_w"].T + params["fc4_b"]


# ----------------------------------- main ------------------------------------

if __name__ == "__main__":
    key = jax.random.PRNGKey(0)
    k_params, k_x = jax.random.split(key)
    params = init_params(k_params)
    packed = prepack_params(params)      # one-time, host-side weight packing

    # Input implied by fc1 (27*5*10 features after pooling): (N, 1, 10, 20)
    x = jax.random.normal(k_x, (2, 1, 10, 20), jnp.float32)

    out = jax.block_until_ready(jax.jit(net_forward)(x, packed))
    assert out.shape == (2, 2) and out.dtype == jnp.float32

    # Sanity check against the plain-XLA reference (loose tolerance: default
    # TPU matmul precision differs slightly between the two paths).
    ref = jax.block_until_ready(jax.jit(reference_forward)(x, params))
    out_np, ref_np = np.asarray(out), np.asarray(ref)
    err = float(np.max(np.abs(out_np - ref_np)))
    tol = 0.1 * max(float(np.max(np.abs(ref_np))), 1e-3)
    assert err <= tol, f"kernel mismatch: max|err|={err:.3e}, tol={tol:.3e}"

    print("KERNEL_OK")
</pallas_src>

<mosaic_0001>
module attributes {stable_mosaic.version = 11 : i64} {
  func.func @_net_kernel(%arg0: i32, %arg1: memref<2x6x22xf32, #tpu.memory_space<vmem>>, %arg2: memref<2x6x22xf32, #tpu.memory_space<vmem>>, %arg3: memref<3x22x540xf32, #tpu.memory_space<vmem>>, %arg4: memref<1x270xf32, #tpu.memory_space<vmem>>, %arg5: memref<3x270x270xf32, #tpu.memory_space<vmem>>, %arg6: memref<1x270xf32, #tpu.memory_space<vmem>>, %arg7: memref<1350x400xf32, #tpu.memory_space<vmem>>, %arg8: memref<1x400xf32, #tpu.memory_space<vmem>>, %arg9: memref<400x84xf32, #tpu.memory_space<vmem>>, %arg10: memref<1x84xf32, #tpu.memory_space<vmem>>, %arg11: memref<84x10xf32, #tpu.memory_space<vmem>>, %arg12: memref<1x10xf32, #tpu.memory_space<vmem>>, %arg13: memref<10x2xf32, #tpu.memory_space<vmem>>, %arg14: memref<1x2xf32, #tpu.memory_space<vmem>>, %arg15: memref<2x2xf32, #tpu.memory_space<vmem>>, %arg16: memref<7x270xf32, #tpu.memory_space<vmem>>, %arg17: memref<2x400xf32, #tpu.memory_space<vmem>>) attributes {dimension_semantics = [#tpu.dimension_semantics<arbitrary>], iteration_bounds = array<i64: 1>, scalar_prefetch = 0 : i64, scratch_operands = 2 : i64, tpu.core_type = #tpu.core_type<tc>, window_params = [{pipeline_mode = #tpu.pipeline_mode<synchronous>, transform_indices = @transform_0, window_bounds = array<i64: 2, 6, 22>}, {pipeline_mode = #tpu.pipeline_mode<synchronous>, transform_indices = @transform_1, window_bounds = array<i64: 2, 6, 22>}, {pipeline_mode = #tpu.pipeline_mode<synchronous>, transform_indices = @transform_2, window_bounds = array<i64: 3, 22, 540>}, {pipeline_mode = #tpu.pipeline_mode<synchronous>, transform_indices = @transform_3, window_bounds = array<i64: 1, 270>}, {pipeline_mode = #tpu.pipeline_mode<synchronous>, transform_indices = @transform_4, window_bounds = array<i64: 3, 270, 270>}, {pipeline_mode = #tpu.pipeline_mode<synchronous>, transform_indices = @transform_5, window_bounds = array<i64: 1, 270>}, {pipeline_mode = #tpu.pipeline_mode<synchronous>, transform_indices = @transform_6, window_bounds = array<i64: 1350, 400>}, {pipeline_mode = #tpu.pipeline_mode<synchronous>, transform_indices = @transform_7, window_bounds = array<i64: 1, 400>}, {pipeline_mode = #tpu.pipeline_mode<synchronous>, transform_indices = @transform_8, window_bounds = array<i64: 400, 84>}, {pipeline_mode = #tpu.pipeline_mode<synchronous>, transform_indices = @transform_9, window_bounds = array<i64: 1, 84>}, {pipeline_mode = #tpu.pipeline_mode<synchronous>, transform_indices = @transform_10, window_bounds = array<i64: 84, 10>}, {pipeline_mode = #tpu.pipeline_mode<synchronous>, transform_indices = @transform_11, window_bounds = array<i64: 1, 10>}, {pipeline_mode = #tpu.pipeline_mode<synchronous>, transform_indices = @transform_12, window_bounds = array<i64: 10, 2>}, {pipeline_mode = #tpu.pipeline_mode<synchronous>, transform_indices = @transform_13, window_bounds = array<i64: 1, 2>}, {pipeline_mode = #tpu.pipeline_mode<synchronous>, transform_indices = @transform_14, window_bounds = array<i64: 2, 2>}]} {
    %cst = arith.constant 0.000000e+00 : f32
    %0 = vector.broadcast %cst : f32 to vector<7x270xf32>
    %c0 = arith.constant 0 : index
    %c0_0 = arith.constant 0 : index
    %1 = vector.load %arg16[%c0, %c0_0] : memref<7x270xf32, #tpu.memory_space<vmem>>, vector<7x270xf32>
    tpu.vector_store %arg16[%c0, %c0_0], %0 {strides = array<i32>} : memref<7x270xf32, #tpu.memory_space<vmem>>, vector<7x270xf32>,
    %c0_1 = arith.constant 0 : index
    %c0_2 = arith.constant 0 : index
    %c0_3 = arith.constant 0 : index
    %2 = vector.load %arg3[%c0_1, %c0_2, %c0_3] : memref<3x22x540xf32, #tpu.memory_space<vmem>>, vector<1x22x540xf32>
    %3 = vector.shape_cast %2 : vector<1x22x540xf32> to vector<22x540xf32>
    %c1 = arith.constant 1 : index
    %c0_4 = arith.constant 0 : index
    %c0_5 = arith.constant 0 : index
    %4 = vector.load %arg3[%c1, %c0_4, %c0_5] : memref<3x22x540xf32, #tpu.memory_space<vmem>>, vector<1x22x540xf32>
    %5 = vector.shape_cast %4 : vector<1x22x540xf32> to vector<22x540xf32>
    %c2 = arith.constant 2 : index
    %c0_6 = arith.constant 0 : index
    %c0_7 = arith.constant 0 : index
    %6 = vector.load %arg3[%c2, %c0_6, %c0_7] : memref<3x22x540xf32, #tpu.memory_space<vmem>>, vector<1x22x540xf32>
    %7 = vector.shape_cast %6 : vector<1x22x540xf32> to vector<22x540xf32>
    %c0_8 = arith.constant 0 : index
    %c0_9 = arith.constant 0 : index
    %c0_10 = arith.constant 0 : index
    %8 = vector.load %arg5[%c0_8, %c0_9, %c0_10] : memref<3x270x270xf32, #tpu.memory_space<vmem>>, vector<1x270x270xf32>
    %9 = vector.shape_cast %8 : vector<1x270x270xf32> to vector<270x270xf32>
    %c1_11 = arith.constant 1 : index
    %c0_12 = arith.constant 0 : index
    %c0_13 = arith.constant 0 : index
    %10 = vector.load %arg5[%c1_11, %c0_12, %c0_13] : memref<3x270x270xf32, #tpu.memory_space<vmem>>, vector<1x270x270xf32>
    %11 = vector.shape_cast %10 : vector<1x270x270xf32> to vector<270x270xf32>
    %c2_14 = arith.constant 2 : index
    %c0_15 = arith.constant 0 : index
    %c0_16 = arith.constant 0 : index
    %12 = vector.load %arg5[%c2_14, %c0_15, %c0_16] : memref<3x270x270xf32, #tpu.memory_space<vmem>>, vector<1x270x270xf32>
    %13 = vector.shape_cast %12 : vector<1x270x270xf32> to vector<270x270xf32>
    %c0_17 = arith.constant 0 : index
    %c0_18 = arith.constant 0 : index
    %c0_19 = arith.constant 0 : index
    %14 = vector.load %arg1[%c0_17, %c0_18, %c0_19] : memref<2x6x22xf32, #tpu.memory_space<vmem>>, vector<1x5x22xf32>
    %15 = vector.shape_cast %14 : vector<1x5x22xf32> to vector<5x22xf32>
    %c0_20 = arith.constant 0 : index
    %c1_21 = arith.constant 1 : index
    %c0_22 = arith.constant 0 : index
    %16 = vector.load %arg1[%c0_20, %c1_21, %c0_22] : memref<2x6x22xf32, #tpu.memory_space<vmem>>, vector<1x5x22xf32>
    %17 = vector.shape_cast %16 : vector<1x5x22xf32> to vector<5x22xf32>
    %c0_23 = arith.constant 0 : index
    %c0_24 = arith.constant 0 : index
    %c0_25 = arith.constant 0 : index
    %18 = vector.load %arg2[%c0_23, %c0_24, %c0_25] : memref<2x6x22xf32, #tpu.memory_space<vmem>>, vector<1x5x22xf32>
    %19 = vector.shape_cast %18 : vector<1x5x22xf32> to vector<5x22xf32>
    %c0_26 = arith.constant 0 : index
    %c1_27 = arith.constant 1 : index
    %c0_28 = arith.constant 0 : index
    %20 = vector.load %arg2[%c0_26, %c1_27, %c0_28] : memref<2x6x22xf32, #tpu.memory_space<vmem>>, vector<1x5x22xf32>
    %21 = vector.shape_cast %20 : vector<1x5x22xf32> to vector<5x22xf32>
    %cst_29 = arith.constant dense<0.000000e+00> : vector<5x540xf32>
    %22 = tpu.matmul %15, %3, %cst_29 {dimension_numbers = #tpu.dot_dimension_numbers<[1], [0], [0], [1], [0, 0, 1, 1], [], []>} : vector<5x22xf32>, vector<22x540xf32>, vector<5x540xf32> -> vector<5x540xf32>
    %cst_30 = arith.constant dense<0.000000e+00> : vector<5x540xf32>
    %23 = tpu.matmul %19, %5, %cst_30 {dimension_numbers = #tpu.dot_dimension_numbers<[1], [0], [0], [1], [0, 0, 1, 1], [], []>} : vector<5x22xf32>, vector<22x540xf32>, vector<5x540xf32> -> vector<5x540xf32>
    %24 = arith.addf %22, %23 : vector<5x540xf32>
    %cst_31 = arith.constant dense<0.000000e+00> : vector<5x540xf32>
    %25 = tpu.matmul %17, %7, %cst_31 {dimension_numbers = #tpu.dot_dimension_numbers<[1], [0], [0], [1], [0, 0, 1, 1], [], []>} : vector<5x22xf32>, vector<22x540xf32>, vector<5x540xf32> -> vector<5x540xf32>
    %26 = arith.addf %24, %25 : vector<5x540xf32>
    %cst_32 = arith.constant dense<0.000000e+00> : vector<5x540xf32>
    %27 = tpu.matmul %19, %3, %cst_32 {dimension_numbers = #tpu.dot_dimension_numbers<[1], [0], [0], [1], [0, 0, 1, 1], [], []>} : vector<5x22xf32>, vector<22x540xf32>, vector<5x540xf32> -> vector<5x540xf32>
    %cst_33 = arith.constant dense<0.000000e+00> : vector<5x540xf32>
    %28 = tpu.matmul %17, %5, %cst_33 {dimension_numbers = #tpu.dot_dimension_numbers<[1], [0], [0], [1], [0, 0, 1, 1], [], []>} : vector<5x22xf32>, vector<22x540xf32>, vector<5x540xf32> -> vector<5x540xf32>
    %29 = arith.addf %27, %28 : vector<5x540xf32>
    %cst_34 = arith.constant dense<0.000000e+00> : vector<5x540xf32>
    %30 = tpu.matmul %21, %7, %cst_34 {dimension_numbers = #tpu.dot_dimension_numbers<[1], [0], [0], [1], [0, 0, 1, 1], [], []>} : vector<5x22xf32>, vector<22x540xf32>, vector<5x540xf32> -> vector<5x540xf32>
    %31 = arith.addf %29, %30 : vector<5x540xf32>
    %32 = arith.maximumf %26, %31 : vector<5x540xf32>
    %33 = vector.extract_strided_slice %32 {offsets = [0, 0], sizes = [5, 270], strides = [1, 1]} : vector<5x540xf32> to vector<5x270xf32>
    %34 = vector.extract_strided_slice %32 {offsets = [0, 270], sizes = [5, 270], strides = [1, 1]} : vector<5x540xf32> to vector<5x270xf32>
    %35 = arith.maximumf %33, %34 : vector<5x270xf32>
    %c0_35 = arith.constant 0 : index
    %c0_36 = arith.constant 0 : index
    %36 = vector.load %arg4[%c0_35, %c0_36] : memref<1x270xf32, #tpu.memory_space<vmem>>, vector<1x270xf32>
    %37 = vector.broadcast %36 : vector<1x270xf32> to vector<5x270xf32>
    %38 = arith.addf %35, %37 : vector<5x270xf32>
    %cst_37 = arith.constant 0.000000e+00 : f32
    %39 = vector.broadcast %cst_37 : f32 to vector<5x270xf32>
    %40 = arith.maximumf %38, %39 : vector<5x270xf32>
    %c1_38 = arith.constant 1 : index
    %c0_39 = arith.constant 0 : index
    %41 = vector.load %arg16[%c1_38, %c0_39] : memref<7x270xf32, #tpu.memory_space<vmem>>, vector<5x270xf32>
    tpu.vector_store %arg16[%c1_38, %c0_39], %40 {strides = array<i32>} : memref<7x270xf32, #tpu.memory_space<vmem>>, vector<5x270xf32>,
    %c0_40 = arith.constant 0 : index
    %c0_41 = arith.constant 0 : index
    %42 = vector.load %arg16[%c0_40, %c0_41] : memref<7x270xf32, #tpu.memory_space<vmem>>, vector<5x270xf32>
    %cst_42 = arith.constant dense<0.000000e+00> : vector<5x270xf32>
    %43 = tpu.matmul %42, %9, %cst_42 {dimension_numbers = #tpu.dot_dimension_numbers<[1], [0], [0], [1], [0, 0, 1, 1], [], []>} : vector<5x270xf32>, vector<270x270xf32>, vector<5x270xf32> -> vector<5x270xf32>
    %c1_43 = arith.constant 1 : index
    %c0_44 = arith.constant 0 : index
    %44 = vector.load %arg16[%c1_43, %c0_44] : memref<7x270xf32, #tpu.memory_space<vmem>>, vector<5x270xf32>
    %cst_45 = arith.constant dense<0.000000e+00> : vector<5x270xf32>
    %45 = tpu.matmul %44, %11, %cst_45 {dimension_numbers = #tpu.dot_dimension_numbers<[1], [0], [0], [1], [0, 0, 1, 1], [], []>} : vector<5x270xf32>, vector<270x270xf32>, vector<5x270xf32> -> vector<5x270xf32>
    %46 = arith.addf %43, %45 : vector<5x270xf32>
    %c2_46 = arith.constant 2 : index
    %c0_47 = arith.constant 0 : index
    %47 = vector.load %arg16[%c2_46, %c0_47] : memref<7x270xf32, #tpu.memory_space<vmem>>, vector<5x270xf32>
    %cst_48 = arith.constant dense<0.000000e+00> : vector<5x270xf32>
    %48 = tpu.matmul %47, %13, %cst_48 {dimension_numbers = #tpu.dot_dimension_numbers<[1], [0], [0], [1], [0, 0, 1, 1], [], []>} : vector<5x270xf32>, vector<270x270xf32>, vector<5x270xf32> -> vector<5x270xf32>
    %49 = arith.addf %46, %48 : vector<5x270xf32>
    %c0_49 = arith.constant 0 : index
    %c0_50 = arith.constant 0 : index
    %50 = vector.load %arg6[%c0_49, %c0_50] : memref<1x270xf32, #tpu.memory_space<vmem>>, vector<1x270xf32>
    %51 = vector.broadcast %50 : vector<1x270xf32> to vector<5x270xf32>
    %52 = arith.addf %49, %51 : vector<5x270xf32>
    %cst_51 = arith.constant 0.000000e+00 : f32
    %53 = vector.broadcast %cst_51 : f32 to vector<5x270xf32>
    %54 = arith.maximumf %52, %53 : vector<5x270xf32>
    %55 = vector.extract_strided_slice %54 {offsets = [0, 0], sizes = [1, 270], strides = [1, 1]} : vector<5x270xf32> to vector<1x270xf32>
    %c0_52 = arith.constant 0 : index
    %c0_53 = arith.constant 0 : index
    %56 = vector.load %arg7[%c0_52, %c0_53] : memref<1350x400xf32, #tpu.memory_space<vmem>>, vector<270x400xf32>
    %cst_54 = arith.constant dense<0.000000e+00> : vector<1x400xf32>
    %57 = tpu.matmul %55, %56, %cst_54 {dimension_numbers = #tpu.dot_dimension_numbers<[1], [0], [0], [1], [0, 0, 1, 1], [], []>} : vector<1x270xf32>, vector<270x400xf32>, vector<1x400xf32> -> vector<1x400xf32>
    %58 = vector.extract_strided_slice %54 {offsets = [1, 0], sizes = [1, 270], strides = [1, 1]} : vector<5x270xf32> to vector<1x270xf32>
    %c270 = arith.constant 270 : index
    %c0_55 = arith.constant 0 : index
    %59 = vector.load %arg7[%c270, %c0_55] : memref<1350x400xf32, #tpu.memory_space<vmem>>, vector<270x400xf32>
    %cst_56 = arith.constant dense<0.000000e+00> : vector<1x400xf32>
    %60 = tpu.matmul %58, %59, %cst_56 {dimension_numbers = #tpu.dot_dimension_numbers<[1], [0], [0], [1], [0, 0, 1, 1], [], []>} : vector<1x270xf32>, vector<270x400xf32>, vector<1x400xf32> -> vector<1x400xf32>
    %61 = arith.addf %57, %60 : vector<1x400xf32>
    %62 = vector.extract_strided_slice %54 {offsets = [2, 0], sizes = [1, 270], strides = [1, 1]} : vector<5x270xf32> to vector<1x270xf32>
    %c540 = arith.constant 540 : index
    %c0_57 = arith.constant 0 : index
    %63 = vector.load %arg7[%c540, %c0_57] : memref<1350x400xf32, #tpu.memory_space<vmem>>, vector<270x400xf32>
    %cst_58 = arith.constant dense<0.000000e+00> : vector<1x400xf32>
    %64 = tpu.matmul %62, %63, %cst_58 {dimension_numbers = #tpu.dot_dimension_numbers<[1], [0], [0], [1], [0, 0, 1, 1], [], []>} : vector<1x270xf32>, vector<270x400xf32>, vector<1x400xf32> -> vector<1x400xf32>
    %65 = arith.addf %61, %64 : vector<1x400xf32>
    %66 = vector.extract_strided_slice %54 {offsets = [3, 0], sizes = [1, 270], strides = [1, 1]} : vector<5x270xf32> to vector<1x270xf32>
    %c810 = arith.constant 810 : index
    %c0_59 = arith.constant 0 : index
    %67 = vector.load %arg7[%c810, %c0_59] : memref<1350x400xf32, #tpu.memory_space<vmem>>, vector<270x400xf32>
    %cst_60 = arith.constant dense<0.000000e+00> : vector<1x400xf32>
    %68 = tpu.matmul %66, %67, %cst_60 {dimension_numbers = #tpu.dot_dimension_numbers<[1], [0], [0], [1], [0, 0, 1, 1], [], []>} : vector<1x270xf32>, vector<270x400xf32>, vector<1x400xf32> -> vector<1x400xf32>
    %69 = arith.addf %65, %68 : vector<1x400xf32>
    %70 = vector.extract_strided_slice %54 {offsets = [4, 0], sizes = [1, 270], strides = [1, 1]} : vector<5x270xf32> to vector<1x270xf32>
    %c1080 = arith.constant 1080 : index
    %c0_61 = arith.constant 0 : index
    %71 = vector.load %arg7[%c1080, %c0_61] : memref<1350x400xf32, #tpu.memory_space<vmem>>, vector<270x400xf32>
    %cst_62 = arith.constant dense<0.000000e+00> : vector<1x400xf32>
    %72 = tpu.matmul %70, %71, %cst_62 {dimension_numbers = #tpu.dot_dimension_numbers<[1], [0], [0], [1], [0, 0, 1, 1], [], []>} : vector<1x270xf32>, vector<270x400xf32>, vector<1x400xf32> -> vector<1x400xf32>
    %73 = arith.addf %69, %72 : vector<1x400xf32>
    %c0_63 = arith.constant 0 : index
    %c0_64 = arith.constant 0 : index
    %74 = vector.load %arg17[%c0_63, %c0_64] : memref<2x400xf32, #tpu.memory_space<vmem>>, vector<1x400xf32>
    tpu.vector_store %arg17[%c0_63, %c0_64], %73 {strides = array<i32>} : memref<2x400xf32, #tpu.memory_space<vmem>>, vector<1x400xf32>,
    %c1_65 = arith.constant 1 : index
    %c0_66 = arith.constant 0 : index
    %c0_67 = arith.constant 0 : index
    %75 = vector.load %arg1[%c1_65, %c0_66, %c0_67] : memref<2x6x22xf32, #tpu.memory_space<vmem>>, vector<1x5x22xf32>
    %76 = vector.shape_cast %75 : vector<1x5x22xf32> to vector<5x22xf32>
    %c1_68 = arith.constant 1 : index
    %c1_69 = arith.constant 1 : index
    %c0_70 = arith.constant 0 : index
    %77 = vector.load %arg1[%c1_68, %c1_69, %c0_70] : memref<2x6x22xf32, #tpu.memory_space<vmem>>, vector<1x5x22xf32>
    %78 = vector.shape_cast %77 : vector<1x5x22xf32> to vector<5x22xf32>
    %c1_71 = arith.constant 1 : index
    %c0_72 = arith.constant 0 : index
    %c0_73 = arith.constant 0 : index
    %79 = vector.load %arg2[%c1_71, %c0_72, %c0_73] : memref<2x6x22xf32, #tpu.memory_space<vmem>>, vector<1x5x22xf32>
    %80 = vector.shape_cast %79 : vector<1x5x22xf32> to vector<5x22xf32>
    %c1_74 = arith.constant 1 : index
    %c1_75 = arith.constant 1 : index
    %c0_76 = arith.constant 0 : index
    %81 = vector.load %arg2[%c1_74, %c1_75, %c0_76] : memref<2x6x22xf32, #tpu.memory_space<vmem>>, vector<1x5x22xf32>
    %82 = vector.shape_cast %81 : vector<1x5x22xf32> to vector<5x22xf32>
    %cst_77 = arith.constant dense<0.000000e+00> : vector<5x540xf32>
    %83 = tpu.matmul %76, %3, %cst_77 {dimension_numbers = #tpu.dot_dimension_numbers<[1], [0], [0], [1], [0, 0, 1, 1], [], []>} : vector<5x22xf32>, vector<22x540xf32>, vector<5x540xf32> -> vector<5x540xf32>
    %cst_78 = arith.constant dense<0.000000e+00> : vector<5x540xf32>
    %84 = tpu.matmul %80, %5, %cst_78 {dimension_numbers = #tpu.dot_dimension_numbers<[1], [0], [0], [1], [0, 0, 1, 1], [], []>} : vector<5x22xf32>, vector<22x540xf32>, vector<5x540xf32> -> vector<5x540xf32>
    %85 = arith.addf %83, %84 : vector<5x540xf32>
    %cst_79 = arith.constant dense<0.000000e+00> : vector<5x540xf32>
    %86 = tpu.matmul %78, %7, %cst_79 {dimension_numbers = #tpu.dot_dimension_numbers<[1], [0], [0], [1], [0, 0, 1, 1], [], []>} : vector<5x22xf32>, vector<22x540xf32>, vector<5x540xf32> -> vector<5x540xf32>
    %87 = arith.addf %85, %86 : vector<5x540xf32>
    %cst_80 = arith.constant dense<0.000000e+00> : vector<5x540xf32>
    %88 = tpu.matmul %80, %3, %cst_80 {dimension_numbers = #tpu.dot_dimension_numbers<[1], [0], [0], [1], [0, 0, 1, 1], [], []>} : vector<5x22xf32>, vector<22x540xf32>, vector<5x540xf32> -> vector<5x540xf32>
    %cst_81 = arith.constant dense<0.000000e+00> : vector<5x540xf32>
    %89 = tpu.matmul %78, %5, %cst_81 {dimension_numbers = #tpu.dot_dimension_numbers<[1], [0], [0], [1], [0, 0, 1, 1], [], []>} : vector<5x22xf32>, vector<22x540xf32>, vector<5x540xf32> -> vector<5x540xf32>
    %90 = arith.addf %88, %89 : vector<5x540xf32>
    %cst_82 = arith.constant dense<0.000000e+00> : vector<5x540xf32>
    %91 = tpu.matmul %82, %7, %cst_82 {dimension_numbers = #tpu.dot_dimension_numbers<[1], [0], [0], [1], [0, 0, 1, 1], [], []>} : vector<5x22xf32>, vector<22x540xf32>, vector<5x540xf32> -> vector<5x540xf32>
    %92 = arith.addf %90, %91 : vector<5x540xf32>
    %93 = arith.maximumf %87, %92 : vector<5x540xf32>
    %94 = vector.extract_strided_slice %93 {offsets = [0, 0], sizes = [5, 270], strides = [1, 1]} : vector<5x540xf32> to vector<5x270xf32>
    %95 = vector.extract_strided_slice %93 {offsets = [0, 270], sizes = [5, 270], strides = [1, 1]} : vector<5x540xf32> to vector<5x270xf32>
    %96 = arith.maximumf %94, %95 : vector<5x270xf32>
    %c0_83 = arith.constant 0 : index
    %c0_84 = arith.constant 0 : index
    %97 = vector.load %arg4[%c0_83, %c0_84] : memref<1x270xf32, #tpu.memory_space<vmem>>, vector<1x270xf32>
    %98 = vector.broadcast %97 : vector<1x270xf32> to vector<5x270xf32>
    %99 = arith.addf %96, %98 : vector<5x270xf32>
    %cst_85 = arith.constant 0.000000e+00 : f32
    %100 = vector.broadcast %cst_85 : f32 to vector<5x270xf32>
    %101 = arith.maximumf %99, %100 : vector<5x270xf32>
    %c1_86 = arith.constant 1 : index
    %c0_87 = arith.constant 0 : index
    %102 = vector.load %arg16[%c1_86, %c0_87] : memref<7x270xf32, #tpu.memory_space<vmem>>, vector<5x270xf32>
    tpu.vector_store %arg16[%c1_86, %c0_87], %101 {strides = array<i32>} : memref<7x270xf32, #tpu.memory_space<vmem>>, vector<5x270xf32>,
    %c0_88 = arith.constant 0 : index
    %c0_89 = arith.constant 0 : index
    %103 = vector.load %arg16[%c0_88, %c0_89] : memref<7x270xf32, #tpu.memory_space<vmem>>, vector<5x270xf32>
    %cst_90 = arith.constant dense<0.000000e+00> : vector<5x270xf32>
    %104 = tpu.matmul %103, %9, %cst_90 {dimension_numbers = #tpu.dot_dimension_numbers<[1], [0], [0], [1], [0, 0, 1, 1], [], []>} : vector<5x270xf32>, vector<270x270xf32>, vector<5x270xf32> -> vector<5x270xf32>
    %c1_91 = arith.constant 1 : index
    %c0_92 = arith.constant 0 : index
    %105 = vector.load %arg16[%c1_91, %c0_92] : memref<7x270xf32, #tpu.memory_space<vmem>>, vector<5x270xf32>
    %cst_93 = arith.constant dense<0.000000e+00> : vector<5x270xf32>
    %106 = tpu.matmul %105, %11, %cst_93 {dimension_numbers = #tpu.dot_dimension_numbers<[1], [0], [0], [1], [0, 0, 1, 1], [], []>} : vector<5x270xf32>, vector<270x270xf32>, vector<5x270xf32> -> vector<5x270xf32>
    %107 = arith.addf %104, %106 : vector<5x270xf32>
    %c2_94 = arith.constant 2 : index
    %c0_95 = arith.constant 0 : index
    %108 = vector.load %arg16[%c2_94, %c0_95] : memref<7x270xf32, #tpu.memory_space<vmem>>, vector<5x270xf32>
    %cst_96 = arith.constant dense<0.000000e+00> : vector<5x270xf32>
    %109 = tpu.matmul %108, %13, %cst_96 {dimension_numbers = #tpu.dot_dimension_numbers<[1], [0], [0], [1], [0, 0, 1, 1], [], []>} : vector<5x270xf32>, vector<270x270xf32>, vector<5x270xf32> -> vector<5x270xf32>
    %110 = arith.addf %107, %109 : vector<5x270xf32>
    %c0_97 = arith.constant 0 : index
    %c0_98 = arith.constant 0 : index
    %111 = vector.load %arg6[%c0_97, %c0_98] : memref<1x270xf32, #tpu.memory_space<vmem>>, vector<1x270xf32>
    %112 = vector.broadcast %111 : vector<1x270xf32> to vector<5x270xf32>
    %113 = arith.addf %110, %112 : vector<5x270xf32>
    %cst_99 = arith.constant 0.000000e+00 : f32
    %114 = vector.broadcast %cst_99 : f32 to vector<5x270xf32>
    %115 = arith.maximumf %113, %114 : vector<5x270xf32>
    %116 = vector.extract_strided_slice %115 {offsets = [0, 0], sizes = [1, 270], strides = [1, 1]} : vector<5x270xf32> to vector<1x270xf32>
    %c0_100 = arith.constant 0 : index
    %c0_101 = arith.constant 0 : index
    %117 = vector.load %arg7[%c0_100, %c0_101] : memref<1350x400xf32, #tpu.memory_space<vmem>>, vector<270x400xf32>
    %cst_102 = arith.constant dense<0.000000e+00> : vector<1x400xf32>
    %118 = tpu.matmul %116, %117, %cst_102 {dimension_numbers = #tpu.dot_dimension_numbers<[1], [0], [0], [1], [0, 0, 1, 1], [], []>} : vector<1x270xf32>, vector<270x400xf32>, vector<1x400xf32> -> vector<1x400xf32>
    %119 = vector.extract_strided_slice %115 {offsets = [1, 0], sizes = [1, 270], strides = [1, 1]} : vector<5x270xf32> to vector<1x270xf32>
    %c270_103 = arith.constant 270 : index
    %c0_104 = arith.constant 0 : index
    %120 = vector.load %arg7[%c270_103, %c0_104] : memref<1350x400xf32, #tpu.memory_space<vmem>>, vector<270x400xf32>
    %cst_105 = arith.constant dense<0.000000e+00> : vector<1x400xf32>
    %121 = tpu.matmul %119, %120, %cst_105 {dimension_numbers = #tpu.dot_dimension_numbers<[1], [0], [0], [1], [0, 0, 1, 1], [], []>} : vector<1x270xf32>, vector<270x400xf32>, vector<1x400xf32> -> vector<1x400xf32>
    %122 = arith.addf %118, %121 : vector<1x400xf32>
    %123 = vector.extract_strided_slice %115 {offsets = [2, 0], sizes = [1, 270], strides = [1, 1]} : vector<5x270xf32> to vector<1x270xf32>
    %c540_106 = arith.constant 540 : index
    %c0_107 = arith.constant 0 : index
    %124 = vector.load %arg7[%c540_106, %c0_107] : memref<1350x400xf32, #tpu.memory_space<vmem>>, vector<270x400xf32>
    %cst_108 = arith.constant dense<0.000000e+00> : vector<1x400xf32>
    %125 = tpu.matmul %123, %124, %cst_108 {dimension_numbers = #tpu.dot_dimension_numbers<[1], [0], [0], [1], [0, 0, 1, 1], [], []>} : vector<1x270xf32>, vector<270x400xf32>, vector<1x400xf32> -> vector<1x400xf32>
    %126 = arith.addf %122, %125 : vector<1x400xf32>
    %127 = vector.extract_strided_slice %115 {offsets = [3, 0], sizes = [1, 270], strides = [1, 1]} : vector<5x270xf32> to vector<1x270xf32>
    %c810_109 = arith.constant 810 : index
    %c0_110 = arith.constant 0 : index
    %128 = vector.load %arg7[%c810_109, %c0_110] : memref<1350x400xf32, #tpu.memory_space<vmem>>, vector<270x400xf32>
    %cst_111 = arith.constant dense<0.000000e+00> : vector<1x400xf32>
    %129 = tpu.matmul %127, %128, %cst_111 {dimension_numbers = #tpu.dot_dimension_numbers<[1], [0], [0], [1], [0, 0, 1, 1], [], []>} : vector<1x270xf32>, vector<270x400xf32>, vector<1x400xf32> -> vector<1x400xf32>
    %130 = arith.addf %126, %129 : vector<1x400xf32>
    %131 = vector.extract_strided_slice %115 {offsets = [4, 0], sizes = [1, 270], strides = [1, 1]} : vector<5x270xf32> to vector<1x270xf32>
    %c1080_112 = arith.constant 1080 : index
    %c0_113 = arith.constant 0 : index
    %132 = vector.load %arg7[%c1080_112, %c0_113] : memref<1350x400xf32, #tpu.memory_space<vmem>>, vector<270x400xf32>
    %cst_114 = arith.constant dense<0.000000e+00> : vector<1x400xf32>
    %133 = tpu.matmul %131, %132, %cst_114 {dimension_numbers = #tpu.dot_dimension_numbers<[1], [0], [0], [1], [0, 0, 1, 1], [], []>} : vector<1x270xf32>, vector<270x400xf32>, vector<1x400xf32> -> vector<1x400xf32>
    %134 = arith.addf %130, %133 : vector<1x400xf32>
    %c1_115 = arith.constant 1 : index
    %c0_116 = arith.constant 0 : index
    %135 = vector.load %arg17[%c1_115, %c0_116] : memref<2x400xf32, #tpu.memory_space<vmem>>, vector<1x400xf32>
    tpu.vector_store %arg17[%c1_115, %c0_116], %134 {strides = array<i32>} : memref<2x400xf32, #tpu.memory_space<vmem>>, vector<1x400xf32>,
    %c0_117 = arith.constant 0 : index
    %c0_118 = arith.constant 0 : index
    %136 = vector.load %arg17[%c0_117, %c0_118] : memref<2x400xf32, #tpu.memory_space<vmem>>, vector<2x400xf32>
    %c0_119 = arith.constant 0 : index
    %c0_120 = arith.constant 0 : index
    %137 = vector.load %arg8[%c0_119, %c0_120] : memref<1x400xf32, #tpu.memory_space<vmem>>, vector<1x400xf32>
    %138 = vector.broadcast %137 : vector<1x400xf32> to vector<2x400xf32>
    %139 = arith.addf %136, %138 : vector<2x400xf32>
    %cst_121 = arith.constant 0.000000e+00 : f32
    %140 = vector.broadcast %cst_121 : f32 to vector<2x400xf32>
    %141 = arith.maximumf %139, %140 : vector<2x400xf32>
    %c0_122 = arith.constant 0 : index
    %c0_123 = arith.constant 0 : index
    %142 = vector.load %arg9[%c0_122, %c0_123] : memref<400x84xf32, #tpu.memory_space<vmem>>, vector<400x84xf32>
    %cst_124 = arith.constant dense<0.000000e+00> : vector<2x84xf32>
    %143 = tpu.matmul %141, %142, %cst_124 {dimension_numbers = #tpu.dot_dimension_numbers<[1], [0], [0], [1], [0, 0, 1, 1], [], []>} : vector<2x400xf32>, vector<400x84xf32>, vector<2x84xf32> -> vector<2x84xf32>
    %c0_125 = arith.constant 0 : index
    %c0_126 = arith.constant 0 : index
    %144 = vector.load %arg10[%c0_125, %c0_126] : memref<1x84xf32, #tpu.memory_space<vmem>>, vector<1x84xf32>
    %145 = vector.broadcast %144 : vector<1x84xf32> to vector<2x84xf32>
    %146 = arith.addf %143, %145 : vector<2x84xf32>
    %cst_127 = arith.constant 0.000000e+00 : f32
    %147 = vector.broadcast %cst_127 : f32 to vector<2x84xf32>
    %148 = arith.maximumf %146, %147 : vector<2x84xf32>
    %c0_128 = arith.constant 0 : index
    %c0_129 = arith.constant 0 : index
    %149 = vector.load %arg11[%c0_128, %c0_129] : memref<84x10xf32, #tpu.memory_space<vmem>>, vector<84x10xf32>
    %cst_130 = arith.constant dense<0.000000e+00> : vector<2x10xf32>
    %150 = tpu.matmul %148, %149, %cst_130 {dimension_numbers = #tpu.dot_dimension_numbers<[1], [0], [0], [1], [0, 0, 1, 1], [], []>} : vector<2x84xf32>, vector<84x10xf32>, vector<2x10xf32> -> vector<2x10xf32>
    %c0_131 = arith.constant 0 : index
    %c0_132 = arith.constant 0 : index
    %151 = vector.load %arg12[%c0_131, %c0_132] : memref<1x10xf32, #tpu.memory_space<vmem>>, vector<1x10xf32>
    %152 = vector.broadcast %151 : vector<1x10xf32> to vector<2x10xf32>
    %153 = arith.addf %150, %152 : vector<2x10xf32>
    %cst_133 = arith.constant 0.000000e+00 : f32
    %154 = vector.broadcast %cst_133 : f32 to vector<2x10xf32>
    %155 = arith.maximumf %153, %154 : vector<2x10xf32>
    %c0_134 = arith.constant 0 : index
    %c0_135 = arith.constant 0 : index
    %156 = vector.load %arg13[%c0_134, %c0_135] : memref<10x2xf32, #tpu.memory_space<vmem>>, vector<10x2xf32>
    %cst_136 = arith.constant dense<0.000000e+00> : vector<2x2xf32>
    %157 = tpu.matmul %155, %156, %cst_136 {dimension_numbers = #tpu.dot_dimension_numbers<[1], [0], [0], [1], [0, 0, 1, 1], [], []>} : vector<2x10xf32>, vector<10x2xf32>, vector<2x2xf32> -> vector<2x2xf32>
    %c0_137 = arith.constant 0 : index
    %c0_138 = arith.constant 0 : index
    %158 = vector.load %arg14[%c0_137, %c0_138] : memref<1x2xf32, #tpu.memory_space<vmem>>, vector<1x2xf32>
    %159 = vector.broadcast %158 : vector<1x2xf32> to vector<2x2xf32>
    %160 = arith.addf %157, %159 : vector<2x2xf32>
    %c0_139 = arith.constant 0 : index
    %c0_140 = arith.constant 0 : index
    %161 = vector.load %arg15[%c0_139, %c0_140] : memref<2x2xf32, #tpu.memory_space<vmem>>, vector<2x2xf32>
    tpu.vector_store %arg15[%c0_139, %c0_140], %160 {strides = array<i32>} : memref<2x2xf32, #tpu.memory_space<vmem>>, vector<2x2xf32>,
    return
  }
  func.func @transform_0(%arg0: i32) -> (i32, i32, i32) {
    %c0_i32 = arith.constant 0 : i32
    %c0_i32_0 = arith.constant 0 : i32
    %c0_i32_1 = arith.constant 0 : i32
    %c0_i32_2 = arith.constant 0 : i32
    return %c0_i32, %c0_i32_0, %c0_i32_1 : i32, i32, i32
  }
  func.func @transform_1(%arg0: i32) -> (i32, i32, i32) {
    %c0_i32 = arith.constant 0 : i32
    %c0_i32_0 = arith.constant 0 : i32
    %c0_i32_1 = arith.constant 0 : i32
    %c0_i32_2 = arith.constant 0 : i32
    return %c0_i32, %c0_i32_0, %c0_i32_1 : i32, i32, i32
  }
  func.func @transform_2(%arg0: i32) -> (i32, i32, i32) {
    %c0_i32 = arith.constant 0 : i32
    %c0_i32_0 = arith.constant 0 : i32
    %c0_i32_1 = arith.constant 0 : i32
    %c0_i32_2 = arith.constant 0 : i32
    return %c0_i32, %c0_i32_0, %c0_i32_1 : i32, i32, i32
  }
  func.func @transform_3(%arg0: i32) -> (i32, i32) {
    %c0_i32 = arith.constant 0 : i32
    %c0_i32_0 = arith.constant 0 : i32
    %c0_i32_1 = arith.constant 0 : i32
    return %c0_i32, %c0_i32_0 : i32, i32
  }
  func.func @transform_4(%arg0: i32) -> (i32, i32, i32) {
    %c0_i32 = arith.constant 0 : i32
    %c0_i32_0 = arith.constant 0 : i32
    %c0_i32_1 = arith.constant 0 : i32
    %c0_i32_2 = arith.constant 0 : i32
    return %c0_i32, %c0_i32_0, %c0_i32_1 : i32, i32, i32
  }
  func.func @transform_5(%arg0: i32) -> (i32, i32) {
    %c0_i32 = arith.constant 0 : i32
    %c0_i32_0 = arith.constant 0 : i32
    %c0_i32_1 = arith.constant 0 : i32
    return %c0_i32, %c0_i32_0 : i32, i32
  }
  func.func @transform_6(%arg0: i32) -> (i32, i32) {
    %c0_i32 = arith.constant 0 : i32
    %c0_i32_0 = arith.constant 0 : i32
    %c0_i32_1 = arith.constant 0 : i32
    return %c0_i32, %c0_i32_0 : i32, i32
  }
  func.func @transform_7(%arg0: i32) -> (i32, i32) {
    %c0_i32 = arith.constant 0 : i32
    %c0_i32_0 = arith.constant 0 : i32
    %c0_i32_1 = arith.constant 0 : i32
    return %c0_i32, %c0_i32_0 : i32, i32
  }
  func.func @transform_8(%arg0: i32) -> (i32, i32) {
    %c0_i32 = arith.constant 0 : i32
    %c0_i32_0 = arith.constant 0 : i32
    %c0_i32_1 = arith.constant 0 : i32
    return %c0_i32, %c0_i32_0 : i32, i32
  }
  func.func @transform_9(%arg0: i32) -> (i32, i32) {
    %c0_i32 = arith.constant 0 : i32
    %c0_i32_0 = arith.constant 0 : i32
    %c0_i32_1 = arith.constant 0 : i32
    return %c0_i32, %c0_i32_0 : i32, i32
  }
  func.func @transform_10(%arg0: i32) -> (i32, i32) {
    %c0_i32 = arith.constant 0 : i32
    %c0_i32_0 = arith.constant 0 : i32
    %c0_i32_1 = arith.constant 0 : i32
    return %c0_i32, %c0_i32_0 : i32, i32
  }
  func.func @transform_11(%arg0: i32) -> (i32, i32) {
    %c0_i32 = arith.constant 0 : i32
    %c0_i32_0 = arith.constant 0 : i32
    %c0_i32_1 = arith.constant 0 : i32
    return %c0_i32, %c0_i32_0 : i32, i32
  }
  func.func @transform_12(%arg0: i32) -> (i32, i32) {
    %c0_i32 = arith.constant 0 : i32
    %c0_i32_0 = arith.constant 0 : i32
    %c0_i32_1 = arith.constant 0 : i32
    return %c0_i32, %c0_i32_0 : i32, i32
  }
  func.func @transform_13(%arg0: i32) -> (i32, i32) {
    %c0_i32 = arith.constant 0 : i32
    %c0_i32_0 = arith.constant 0 : i32
    %c0_i32_1 = arith.constant 0 : i32
    return %c0_i32, %c0_i32_0 : i32, i32
  }
  func.func @transform_14(%arg0: i32) -> (i32, i32) {
    %c0_i32 = arith.constant 0 : i32
    %c0_i32_0 = arith.constant 0 : i32
    %c0_i32_1 = arith.constant 0 : i32
    return %c0_i32, %c0_i32_0 : i32, i32
  }
}

</mosaic_0001>

<llo_original>
// kernel: net_forward.1
$region0: #{net_forward.1}
  #allocation0 [shape = 'u32[]', space=smem, size = 0x4, offset = 0x4, fixed_abs, tag = 'smem constant byte address 0x4 - core index']
  #allocation1 [shape = 'u32[144,128]{1,0:T(1,128)}', space=vmem, size = 0x12000, scoped, tag = 'internal scratch']
  #allocation2 [shape = 'f32[7,270]{1,0:T(8,128)}', space=vmem, size = 0x3000, scoped, tag = 'scratch operand']
  #allocation3 [shape = 'f32[2,400]{1,0:T(2,128)}', space=vmem, size = 0x1000, scoped, tag = 'scratch operand']
  %s0 = inlined_call_operand.vmem [shape: f32[2,6,22], index: 0, kind: input, shape index: {}]
  %s1 = inlined_call_operand.vmem [shape: f32[2,6,22], index: 1, kind: input, shape index: {}]
  %s2 = inlined_call_operand.vmem [shape: f32[3,22,540], index: 2, kind: input, shape index: {}]
  %s3 = inlined_call_operand.vmem [shape: f32[1,270], index: 3, kind: input, shape index: {}]
  %s4 = inlined_call_operand.vmem [shape: f32[3,270,270], index: 4, kind: input, shape index: {}]
  %s5 = inlined_call_operand.vmem [shape: f32[1,270], index: 5, kind: input, shape index: {}]
  %s6 = inlined_call_operand.vmem [shape: f32[1350,400], index: 6, kind: input, shape index: {}]
  %s7 = inlined_call_operand.vmem [shape: f32[1,400], index: 7, kind: input, shape index: {}]
  %s8 = inlined_call_operand.vmem [shape: f32[400,84], index: 8, kind: input, shape index: {}]
  %s9 = inlined_call_operand.vmem [shape: f32[1,84], index: 9, kind: input, shape index: {}]
  %s10 = inlined_call_operand.vmem [shape: f32[84,10], index: 10, kind: input, shape index: {}]
  %s11 = inlined_call_operand.vmem [shape: f32[1,10], index: 11, kind: input, shape index: {}]
  %s12 = inlined_call_operand.vmem [shape: f32[10,2], index: 12, kind: input, shape index: {}]
  %s13 = inlined_call_operand.vmem [shape: f32[1,2], index: 13, kind: input, shape index: {}]
  %s14 = inlined_call_operand.hbm [shape: f32[2,2], index: 14, kind: output, shape index: {}]
  %s15 = sld [smem:[#allocation0]]
  $region66: #{net_forward.1} parent=0
    _
  %s17 = ssub.s32 1, %s15
  %s18 = scalar_select 0, %s17, %s15
  $region1: #{net_forward.1} parent=0
    #allocation4 [shape = 'u8[1024]{0}', space=vmem, size = 0x400, scoped, tag = 'output window, operand 0, single buffered']
    #allocation5 [shape = 's32[1]{0}', space=sflag, size = 0x4, scoped, tag = 'scoped memory for net_forward.1']
    %19 = vsyncpa [#allocation5], 0
    // Predicated region
    $region2: #{net_forward.1} parent=1 // pred_check
      _
    $region3: #{net_forward.1} parent=1 // pred_check_branch
      %21 = sbr.rel (0) target = $region5
    $region4: #{net_forward.1} parent=1 // pred_region
      _
    $region5: #{net_forward.1} parent=1 // pred_fallthru
      _
    // Predicated region
    $region6: #{net_forward.1} parent=1 // pred_check
      _
    $region7: #{net_forward.1} parent=1 // pred_check_branch
      %23 = sbr.rel (0) target = $region9
    $region8: #{net_forward.1} parent=1 // pred_region
      _
    $region9: #{net_forward.1} parent=1 // pred_fallthru
      _
    // Predicated region
    $region10: #{net_forward.1} parent=1 // pred_check
      _
    $region11: #{net_forward.1} parent=1 // pred_check_branch
      %25 = sbr.rel (0) target = $region13
    $region12: #{net_forward.1} parent=1 // pred_region
      _
    $region13: #{net_forward.1} parent=1 // pred_fallthru
      _
    // Predicated region
    $region14: #{net_forward.1} parent=1 // pred_check
      _
    $region15: #{net_forward.1} parent=1 // pred_check_branch
      %27 = sbr.rel (0) target = $region17
    $region16: #{net_forward.1} parent=1 // pred_region
      _
    $region17: #{net_forward.1} parent=1 // pred_fallthru
      _
    // Predicated region
    $region18: #{net_forward.1} parent=1 // pred_check
      _
    $region19: #{net_forward.1} parent=1 // pred_check_branch
      %29 = sbr.rel (0) target = $region21
    $region20: #{net_forward.1} parent=1 // pred_region
      _
    $region21: #{net_forward.1} parent=1 // pred_fallthru
      _
    // Predicated region
    $region22: #{net_forward.1} parent=1 // pred_check
      _
    $region23: #{net_forward.1} parent=1 // pred_check_branch
      %31 = sbr.rel (0) target = $region25
    $region24: #{net_forward.1} parent=1 // pred_region
      _
    $region25: #{net_forward.1} parent=1 // pred_fallthru
      _
    // Predicated region
    $region26: #{net_forward.1} parent=1 // pred_check
      _
    $region27: #{net_forward.1} parent=1 // pred_check_branch
      %33 = sbr.rel (0) target = $region29
    $region28: #{net_forward.1} parent=1 // pred_region
      _
    $region29: #{net_forward.1} parent=1 // pred_fallthru
      _
    // Predicated region
    $region30: #{net_forward.1} parent=1 // pred_check
      _
    $region31: #{net_forward.1} parent=1 // pred_check_branch
      %35 = sbr.rel (0) target = $region33
    $region32: #{net_forward.1} parent=1 // pred_region
      _
    $region33: #{net_forward.1} parent=1 // pred_fallthru
      _
    // Predicated region
    $region34: #{net_forward.1} parent=1 // pred_check
      _
    $region35: #{net_forward.1} parent=1 // pred_check_branch
      %37 = sbr.rel (0) target = $region37
    $region36: #{net_forward.1} parent=1 // pred_region
      _
    $region37: #{net_forward.1} parent=1 // pred_fallthru
      _
    // Predicated region
    $region38: #{net_forward.1} parent=1 // pred_check
      _
    $region39: #{net_forward.1} parent=1 // pred_check_branch
      %39 = sbr.rel (0) target = $region41
    $region40: #{net_forward.1} parent=1 // pred_region
      _
    $region41: #{net_forward.1} parent=1 // pred_fallthru
      _
    // Predicated region
    $region42: #{net_forward.1} parent=1 // pred_check
      _
    $region43: #{net_forward.1} parent=1 // pred_check_branch
      %41 = sbr.rel (0) target = $region45
    $region44: #{net_forward.1} parent=1 // pred_region
      _
    $region45: #{net_forward.1} parent=1 // pred_fallthru
      _
    // Predicated region
    $region46: #{net_forward.1} parent=1 // pred_check
      _
    $region47: #{net_forward.1} parent=1 // pred_check_branch
      %43 = sbr.rel (0) target = $region49
    $region48: #{net_forward.1} parent=1 // pred_region
      _
    $region49: #{net_forward.1} parent=1 // pred_fallthru
      _
    // Predicated region
    $region50: #{net_forward.1} parent=1 // pred_check
      _
    $region51: #{net_forward.1} parent=1 // pred_check_branch
      %45 = sbr.rel (0) target = $region53
    $region52: #{net_forward.1} parent=1 // pred_region
      _
    $region53: #{net_forward.1} parent=1 // pred_fallthru
      _
    // Predicated region
    $region54: #{net_forward.1} parent=1 // pred_check
      _
    $region55: #{net_forward.1} parent=1 // pred_check_branch
      %47 = sbr.rel (0) target = $region57
    $region56: #{net_forward.1} parent=1 // pred_region
      _
    $region57: #{net_forward.1} parent=1 // pred_fallthru
      _
    %48 = vst [vmem:[#allocation2] sm:$0x7f] 0.0
    %49 = vst [vmem:[#allocation2 + $0x8] sm:$0x7f] 0.0
    %vm50 = vcmask 112640
    %51 = vst.msk [vmem:[#allocation2 + $0x10] sm:$0x7f] %vm50, 0.0
    %v52 = vld [vmem:[%s2] sm:$0xff]
    %v53 = vld [vmem:[%s2 + $0x8] sm:$0xff]
    %v54 = vld [vmem:[%s2 + $0x10] sm:$0xff]
    %v55 = vld [vmem:[%s2 + $0x18] sm:$0xff]
    %v56 = vld [vmem:[%s2 + $0x20] sm:$0xff]
    %v57 = vld [vmem:[%s2 + $0x28] sm:$0xff]
    %v58 = vld [vmem:[%s2 + $0x30] sm:$0xff]
    %v59 = vld [vmem:[%s2 + $0x38] sm:$0xff]
    %v60 = vld [vmem:[%s2 + $0x40] sm:$0xff]
    %v61 = vld [vmem:[%s2 + $0x48] sm:$0xff]
    %v62 = vld [vmem:[%s2 + $0x50] sm:$0x3f]
    %v63 = vld [vmem:[%s2 + $0x58] sm:$0x3f]
    %v64 = vld [vmem:[%s2 + $0x60] sm:$0x3f]
    %v65 = vld [vmem:[%s2 + $0x68] sm:$0x3f]
    %v66 = vld [vmem:[%s2 + $0x70] sm:$0x3f]
    %s67 = scalar_lea.vmem %s2, 120
    %v68 = vld [vmem:[%s67] sm:$0xff]
    %v69 = vld [vmem:[%s67 + $0x8] sm:$0xff]
    %v70 = vld [vmem:[%s67 + $0x10] sm:$0xff]
    %v71 = vld [vmem:[%s67 + $0x18] sm:$0xff]
    %v72 = vld [vmem:[%s67 + $0x20] sm:$0xff]
    %v73 = vld [vmem:[%s67 + $0x28] sm:$0xff]
    %v74 = vld [vmem:[%s67 + $0x30] sm:$0xff]
    %v75 = vld [vmem:[%s67 + $0x38] sm:$0xff]
    %v76 = vld [vmem:[%s67 + $0x40] sm:$0xff]
    %v77 = vld [vmem:[%s67 + $0x48] sm:$0xff]
    %v78 = vld [vmem:[%s67 + $0x50] sm:$0x3f]
    %v79 = vld [vmem:[%s67 + $0x58] sm:$0x3f]
    %v80 = vld [vmem:[%s67 + $0x60] sm:$0x3f]
    %v81 = vld [vmem:[%s67 + $0x68] sm:$0x3f]
    %v82 = vld [vmem:[%s67 + $0x70] sm:$0x3f]
    %s83 = scalar_lea.vmem %s2, 240
    %v84 = vld [vmem:[%s83] sm:$0xff]
    %v85 = vld [vmem:[%s83 + $0x8] sm:$0xff]
    %v86 = vld [vmem:[%s83 + $0x10] sm:$0xff]
    %v87 = vld [vmem:[%s83 + $0x18] sm:$0xff]
    %v88 = vld [vmem:[%s83 + $0x20] sm:$0xff]
    %v89 = vld [vmem:[%s83 + $0x28] sm:$0xff]
    %v90 = vld [vmem:[%s83 + $0x30] sm:$0xff]
    %v91 = vld [vmem:[%s83 + $0x38] sm:$0xff]
    %v92 = vld [vmem:[%s83 + $0x40] sm:$0xff]
    %v93 = vld [vmem:[%s83 + $0x48] sm:$0xff]
    %v94 = vld [vmem:[%s83 + $0x50] sm:$0x3f]
    %v95 = vld [vmem:[%s83 + $0x58] sm:$0x3f]
    %v96 = vld [vmem:[%s83 + $0x60] sm:$0x3f]
    %v97 = vld [vmem:[%s83 + $0x68] sm:$0x3f]
    %v98 = vld [vmem:[%s83 + $0x70] sm:$0x3f]
    %v99 = vld [vmem:[%s4] sm:$0xff]
    %v100 = vld [vmem:[%s4 + $0x8] sm:$0xff]
    %v101 = vld [vmem:[%s4 + $0x10] sm:$0xff]
    %v102 = vld [vmem:[%s4 + $0x18] sm:$0xff]
    %v103 = vld [vmem:[%s4 + $0x20] sm:$0xff]
    %v104 = vld [vmem:[%s4 + $0x28] sm:$0xff]
    %v105 = vld [vmem:[%s4 + $0x30] sm:$0xff]
    %v106 = vld [vmem:[%s4 + $0x38] sm:$0xff]
    %v107 = vld [vmem:[%s4 + $0x40] sm:$0xff]
    %v108 = vld [vmem:[%s4 + $0x48] sm:$0xff]
    %v109 = vld [vmem:[%s4 + $0x50] sm:$0xff]
    %v110 = vld [vmem:[%s4 + $0x58] sm:$0xff]
    %v111 = vld [vmem:[%s4 + $0x60] sm:$0xff]
    %v112 = vld [vmem:[%s4 + $0x68] sm:$0xff]
    %v113 = vld [vmem:[%s4 + $0x70] sm:$0xff]
    %v114 = vld [vmem:[%s4 + $0x78] sm:$0xff]
    %v115 = vld [vmem:[%s4 + $0x80] sm:$0xff]
    %v116 = vld [vmem:[%s4 + $0x88] sm:$0xff]
    %v117 = vld [vmem:[%s4 + $0x90] sm:$0xff]
    %v118 = vld [vmem:[%s4 + $0x98] sm:$0xff]
    %v119 = vld [vmem:[%s4 + $0xa0] sm:$0xff]
    %v120 = vld [vmem:[%s4 + $0xa8] sm:$0xff]
    %v121 = vld [vmem:[%s4 + $0xb0] sm:$0xff]
    %v122 = vld [vmem:[%s4 + $0xb8] sm:$0xff]
    %v123 = vld [vmem:[%s4 + $0xc0] sm:$0xff]
    %v124 = vld [vmem:[%s4 + $0xc8] sm:$0xff]
    %v125 = vld [vmem:[%s4 + $0xd0] sm:$0xff]
    %v126 = vld [vmem:[%s4 + $0xd8] sm:$0xff]
    %v127 = vld [vmem:[%s4 + $0xe0] sm:$0xff]
    %v128 = vld [vmem:[%s4 + $0xe8] sm:$0xff]
    %v129 = vld [vmem:[%s4 + $0xf0] sm:$0xff]
    %v130 = vld [vmem:[%s4 + $0xf8] sm:$0xff]
    %v131 = vld [vmem:[%s4 + $0x100] sm:$0xff]
    %v132 = vld [vmem:[%s4 + $0x108] sm:$0xff]
    %v133 = vld [vmem:[%s4 + $0x110] sm:$0xff]
    %v134 = vld [vmem:[%s4 + $0x118] sm:$0xff]
    %v135 = vld [vmem:[%s4 + $0x120] sm:$0xff]
    %v136 = vld [vmem:[%s4 + $0x128] sm:$0xff]
    %v137 = vld [vmem:[%s4 + $0x130] sm:$0xff]
    %v138 = vld [vmem:[%s4 + $0x138] sm:$0xff]
    %v139 = vld [vmem:[%s4 + $0x140] sm:$0xff]
    %v140 = vld [vmem:[%s4 + $0x148] sm:$0xff]
    %v141 = vld [vmem:[%s4 + $0x150] sm:$0xff]
    %v142 = vld [vmem:[%s4 + $0x158] sm:$0xff]
    %v143 = vld [vmem:[%s4 + $0x160] sm:$0xff]
    %v144 = vld [vmem:[%s4 + $0x168] sm:$0xff]
    %v145 = vld [vmem:[%s4 + $0x170] sm:$0xff]
    %v146 = vld [vmem:[%s4 + $0x178] sm:$0xff]
    %v147 = vld [vmem:[%s4 + $0x180] sm:$0xff]
    %v148 = vld [vmem:[%s4 + $0x188] sm:$0xff]
    %v149 = vld [vmem:[%s4 + $0x190] sm:$0xff]
    %v150 = vld [vmem:[%s4 + $0x198] sm:$0xff]
    %v151 = vld [vmem:[%s4 + $0x1a0] sm:$0xff]
    %v152 = vld [vmem:[%s4 + $0x1a8] sm:$0xff]
    %v153 = vld [vmem:[%s4 + $0x1b0] sm:$0xff]
    %v154 = vld [vmem:[%s4 + $0x1b8] sm:$0xff]
    %v155 = vld [vmem:[%s4 + $0x1c0] sm:$0xff]
    %v156 = vld [vmem:[%s4 + $0x1c8] sm:$0xff]
    %v157 = vld [vmem:[%s4 + $0x1d0] sm:$0xff]
    %v158 = vld [vmem:[%s4 + $0x1d8] sm:$0xff]
    %v159 = vld [vmem:[%s4 + $0x1e0] sm:$0xff]
    %v160 = vld [vmem:[%s4 + $0x1e8] sm:$0xff]
    %v161 = vld [vmem:[%s4 + $0x1f0] sm:$0xff]
    %v162 = vld [vmem:[%s4 + $0x1f8] sm:$0xff]
    %v163 = vld [vmem:[%s4 + $0x200] sm:$0xff]
    %v164 = vld [vmem:[%s4 + $0x208] sm:$0xff]
    %v165 = vld [vmem:[%s4 + $0x210] sm:$0xff]
    %v166 = vld [vmem:[%s4 + $0x218] sm:$0xff]
    %v167 = vld [vmem:[%s4 + $0x220] sm:$0xff]
    %v168 = vld [vmem:[%s4 + $0x228] sm:$0xff]
    %v169 = vld [vmem:[%s4 + $0x230] sm:$0xff]
    %v170 = vld [vmem:[%s4 + $0x238] sm:$0xff]
    %v171 = vld [vmem:[%s4 + $0x240] sm:$0xff]
    %v172 = vld [vmem:[%s4 + $0x248] sm:$0xff]
    %v173 = vld [vmem:[%s4 + $0x250] sm:$0xff]
    %v174 = vld [vmem:[%s4 + $0x258] sm:$0xff]
    %v175 = vld [vmem:[%s4 + $0x260] sm:$0xff]
    %v176 = vld [vmem:[%s4 + $0x268] sm:$0xff]
    %v177 = vld [vmem:[%s4 + $0x270] sm:$0xff]
    %v178 = vld [vmem:[%s4 + $0x278] sm:$0xff]
    %v179 = vld [vmem:[%s4 + $0x280] sm:$0xff]
    %v180 = vld [vmem:[%s4 + $0x288] sm:$0xff]
    %v181 = vld [vmem:[%s4 + $0x290] sm:$0xff]
    %v182 = vld [vmem:[%s4 + $0x298] sm:$0xff]
    %v183 = vld [vmem:[%s4 + $0x2a0] sm:$0xff]
    %v184 = vld [vmem:[%s4 + $0x2a8] sm:$0xff]
    %v185 = vld [vmem:[%s4 + $0x2b0] sm:$0xff]
    %v186 = vld [vmem:[%s4 + $0x2b8] sm:$0xff]
    %v187 = vld [vmem:[%s4 + $0x2c0] sm:$0xff]
    %v188 = vld [vmem:[%s4 + $0x2c8] sm:$0xff]
    %v189 = vld [vmem:[%s4 + $0x2d0] sm:$0xff]
    %v190 = vld [vmem:[%s4 + $0x2d8] sm:$0xff]
    %v191 = vld [vmem:[%s4 + $0x2e0] sm:$0xff]
    %v192 = vld [vmem:[%s4 + $0x2e8] sm:$0xff]
    %v193 = vld [vmem:[%s4 + $0x2f0] sm:$0xff]
    %v194 = vld [vmem:[%s4 + $0x2f8] sm:$0xff]
    %v195 = vld [vmem:[%s4 + $0x300] sm:$0xff]
    %v196 = vld [vmem:[%s4 + $0x308] sm:$0xff]
    %v197 = vld [vmem:[%s4 + $0x310] sm:$0xff]
    %v198 = vld [vmem:[%s4 + $0x318] sm:$0x3f]
    %v199 = vld [vmem:[%s4 + $0x320] sm:$0x3f]
    %v200 = vld [vmem:[%s4 + $0x328] sm:$0x3f]
    %s201 = scalar_lea.vmem %s4, 816
    %v202 = vld [vmem:[%s201] sm:$0xff]
    %v203 = vld [vmem:[%s201 + $0x8] sm:$0xff]
    %v204 = vld [vmem:[%s201 + $0x10] sm:$0xff]
    %v205 = vld [vmem:[%s201 + $0x18] sm:$0xff]
    %v206 = vld [vmem:[%s201 + $0x20] sm:$0xff]
    %v207 = vld [vmem:[%s201 + $0x28] sm:$0xff]
    %v208 = vld [vmem:[%s201 + $0x30] sm:$0xff]
    %v209 = vld [vmem:[%s201 + $0x38] sm:$0xff]
    %v210 = vld [vmem:[%s201 + $0x40] sm:$0xff]
    %v211 = vld [vmem:[%s201 + $0x48] sm:$0xff]
    %v212 = vld [vmem:[%s201 + $0x50] sm:$0xff]
    %v213 = vld [vmem:[%s201 + $0x58] sm:$0xff]
    %v214 = vld [vmem:[%s201 + $0x60] sm:$0xff]
    %v215 = vld [vmem:[%s201 + $0x68] sm:$0xff]
    %v216 = vld [vmem:[%s201 + $0x70] sm:$0xff]
    %v217 = vld [vmem:[%s201 + $0x78] sm:$0xff]
    %v218 = vld [vmem:[%s201 + $0x80] sm:$0xff]
    %v219 = vld [vmem:[%s201 + $0x88] sm:$0xff]
    %v220 = vld [vmem:[%s201 + $0x90] sm:$0xff]
    %v221 = vld [vmem:[%s201 + $0x98] sm:$0xff]
    %v222 = vld [vmem:[%s201 + $0xa0] sm:$0xff]
    %v223 = vld [vmem:[%s201 + $0xa8] sm:$0xff]
    %v224 = vld [vmem:[%s201 + $0xb0] sm:$0xff]
    %v225 = vld [vmem:[%s201 + $0xb8] sm:$0xff]
    %v226 = vld [vmem:[%s201 + $0xc0] sm:$0xff]
    %v227 = vld [vmem:[%s201 + $0xc8] sm:$0xff]
    %v228 = vld [vmem:[%s201 + $0xd0] sm:$0xff]
    %v229 = vld [vmem:[%s201 + $0xd8] sm:$0xff]
    %v230 = vld [vmem:[%s201 + $0xe0] sm:$0xff]
    %v231 = vld [vmem:[%s201 + $0xe8] sm:$0xff]
    %v232 = vld [vmem:[%s201 + $0xf0] sm:$0xff]
    %v233 = vld [vmem:[%s201 + $0xf8] sm:$0xff]
    %v234 = vld [vmem:[%s201 + $0x100] sm:$0xff]
    %v235 = vld [vmem:[%s201 + $0x108] sm:$0xff]
    %v236 = vld [vmem:[%s201 + $0x110] sm:$0xff]
    %v237 = vld [vmem:[%s201 + $0x118] sm:$0xff]
    %v238 = vld [vmem:[%s201 + $0x120] sm:$0xff]
    %v239 = vld [vmem:[%s201 + $0x128] sm:$0xff]
    %v240 = vld [vmem:[%s201 + $0x130] sm:$0xff]
    %v241 = vld [vmem:[%s201 + $0x138] sm:$0xff]
    %v242 = vld [vmem:[%s201 + $0x140] sm:$0xff]
    %v243 = vld [vmem:[%s201 + $0x148] sm:$0xff]
    %v244 = vld [vmem:[%s201 + $0x150] sm:$0xff]
    %v245 = vld [vmem:[%s201 + $0x158] sm:$0xff]
    %v246 = vld [vmem:[%s201 + $0x160] sm:$0xff]
    %v247 = vld [vmem:[%s201 + $0x168] sm:$0xff]
    %v248 = vld [vmem:[%s201 + $0x170] sm:$0xff]
    %v249 = vld [vmem:[%s201 + $0x178] sm:$0xff]
    %v250 = vld [vmem:[%s201 + $0x180] sm:$0xff]
    %v251 = vld [vmem:[%s201 + $0x188] sm:$0xff]
    %v252 = vld [vmem:[%s201 + $0x190] sm:$0xff]
    %v253 = vld [vmem:[%s201 + $0x198] sm:$0xff]
    %v254 = vld [vmem:[%s201 + $0x1a0] sm:$0xff]
    %v255 = vld [vmem:[%s201 + $0x1a8] sm:$0xff]
    %v256 = vld [vmem:[%s201 + $0x1b0] sm:$0xff]
    %v257 = vld [vmem:[%s201 + $0x1b8] sm:$0xff]
    %v258 = vld [vmem:[%s201 + $0x1c0] sm:$0xff]
    %v259 = vld [vmem:[%s201 + $0x1c8] sm:$0xff]
    %v260 = vld [vmem:[%s201 + $0x1d0] sm:$0xff]
    %v261 = vld [vmem:[%s201 + $0x1d8] sm:$0xff]
    %v262 = vld [vmem:[%s201 + $0x1e0] sm:$0xff]
    %v263 = vld [vmem:[%s201 + $0x1e8] sm:$0xff]
    %v264 = vld [vmem:[%s201 + $0x1f0] sm:$0xff]
    %v265 = vld [vmem:[%s201 + $0x1f8] sm:$0xff]
    %v266 = vld [vmem:[%s201 + $0x200] sm:$0xff]
    %v267 = vld [vmem:[%s201 + $0x208] sm:$0xff]
    %v268 = vld [vmem:[%s201 + $0x210] sm:$0xff]
    %v269 = vld [vmem:[%s201 + $0x218] sm:$0xff]
    %v270 = vld [vmem:[%s201 + $0x220] sm:$0xff]
    %v271 = vld [vmem:[%s201 + $0x228] sm:$0xff]
    %v272 = vld [vmem:[%s201 + $0x230] sm:$0xff]
    %v273 = vld [vmem:[%s201 + $0x238] sm:$0xff]
    %v274 = vld [vmem:[%s201 + $0x240] sm:$0xff]
    %v275 = vld [vmem:[%s201 + $0x248] sm:$0xff]
    %v276 = vld [vmem:[%s201 + $0x250] sm:$0xff]
    %v277 = vld [vmem:[%s201 + $0x258] sm:$0xff]
    %v278 = vld [vmem:[%s201 + $0x260] sm:$0xff]
    %v279 = vld [vmem:[%s201 + $0x268] sm:$0xff]
    %v280 = vld [vmem:[%s201 + $0x270] sm:$0xff]
    %v281 = vld [vmem:[%s201 + $0x278] sm:$0xff]
    %v282 = vld [vmem:[%s201 + $0x280] sm:$0xff]
    %v283 = vld [vmem:[%s201 + $0x288] sm:$0xff]
    %v284 = vld [vmem:[%s201 + $0x290] sm:$0xff]
    %v285 = vld [vmem:[%s201 + $0x298] sm:$0xff]
    %v286 = vld [vmem:[%s201 + $0x2a0] sm:$0xff]
    %v287 = vld [vmem:[%s201 + $0x2a8] sm:$0xff]
    %v288 = vld [vmem:[%s201 + $0x2b0] sm:$0xff]
    %v289 = vld [vmem:[%s201 + $0x2b8] sm:$0xff]
    %v290 = vld [vmem:[%s201 + $0x2c0] sm:$0xff]
    %v291 = vld [vmem:[%s201 + $0x2c8] sm:$0xff]
    %v292 = vld [vmem:[%s201 + $0x2d0] sm:$0xff]
    %v293 = vld [vmem:[%s201 + $0x2d8] sm:$0xff]
    %v294 = vld [vmem:[%s201 + $0x2e0] sm:$0xff]
    %v295 = vld [vmem:[%s201 + $0x2e8] sm:$0xff]
    %v296 = vld [vmem:[%s201 + $0x2f0] sm:$0xff]
    %v297 = vld [vmem:[%s201 + $0x2f8] sm:$0xff]
    %v298 = vld [vmem:[%s201 + $0x300] sm:$0xff]
    %v299 = vld [vmem:[%s201 + $0x308] sm:$0xff]
    %v300 = vld [vmem:[%s201 + $0x310] sm:$0xff]
    %v301 = vld [vmem:[%s201 + $0x318] sm:$0x3f]
    %v302 = vld [vmem:[%s201 + $0x320] sm:$0x3f]
    %v303 = vld [vmem:[%s201 + $0x328] sm:$0x3f]
    %s304 = scalar_lea.vmem %s4, 1632
    %v305 = vld [vmem:[%s304] sm:$0xff]
    %v306 = vld [vmem:[%s304 + $0x8] sm:$0xff]
    %v307 = vld [vmem:[%s304 + $0x10] sm:$0xff]
    %v308 = vld [vmem:[%s304 + $0x18] sm:$0xff]
    %v309 = vld [vmem:[%s304 + $0x20] sm:$0xff]
    %v310 = vld [vmem:[%s304 + $0x28] sm:$0xff]
    %v311 = vld [vmem:[%s304 + $0x30] sm:$0xff]
    %v312 = vld [vmem:[%s304 + $0x38] sm:$0xff]
    %v313 = vld [vmem:[%s304 + $0x40] sm:$0xff]
    %v314 = vld [vmem:[%s304 + $0x48] sm:$0xff]
    %v315 = vld [vmem:[%s304 + $0x50] sm:$0xff]
    %v316 = vld [vmem:[%s304 + $0x58] sm:$0xff]
    %v317 = vld [vmem:[%s304 + $0x60] sm:$0xff]
    %v318 = vld [vmem:[%s304 + $0x68] sm:$0xff]
    %v319 = vld [vmem:[%s304 + $0x70] sm:$0xff]
    %v320 = vld [vmem:[%s304 + $0x78] sm:$0xff]
    %v321 = vld [vmem:[%s304 + $0x80] sm:$0xff]
    %v322 = vld [vmem:[%s304 + $0x88] sm:$0xff]
    %v323 = vld [vmem:[%s304 + $0x90] sm:$0xff]
    %v324 = vld [vmem:[%s304 + $0x98] sm:$0xff]
    %v325 = vld [vmem:[%s304 + $0xa0] sm:$0xff]
    %v326 = vld [vmem:[%s304 + $0xa8] sm:$0xff]
    %v327 = vld [vmem:[%s304 + $0xb0] sm:$0xff]
    %v328 = vld [vmem:[%s304 + $0xb8] sm:$0xff]
    %v329 = vld [vmem:[%s304 + $0xc0] sm:$0xff]
    %v330 = vld [vmem:[%s304 + $0xc8] sm:$0xff]
    %v331 = vld [vmem:[%s304 + $0xd0] sm:$0xff]
    %v332 = vld [vmem:[%s304 + $0xd8] sm:$0xff]
    %v333 = vld [vmem:[%s304 + $0xe0] sm:$0xff]
    %v334 = vld [vmem:[%s304 + $0xe8] sm:$0xff]
    %v335 = vld [vmem:[%s304 + $0xf0] sm:$0xff]
    %v336 = vld [vmem:[%s304 + $0xf8] sm:$0xff]
    %v337 = vld [vmem:[%s304 + $0x100] sm:$0xff]
    %v338 = vld [vmem:[%s304 + $0x108] sm:$0xff]
    %v339 = vld [vmem:[%s304 + $0x110] sm:$0xff]
    %v340 = vld [vmem:[%s304 + $0x118] sm:$0xff]
    %v341 = vld [vmem:[%s304 + $0x120] sm:$0xff]
    %v342 = vld [vmem:[%s304 + $0x128] sm:$0xff]
    %v343 = vld [vmem:[%s304 + $0x130] sm:$0xff]
    %v344 = vld [vmem:[%s304 + $0x138] sm:$0xff]
    %v345 = vld [vmem:[%s304 + $0x140] sm:$0xff]
    %v346 = vld [vmem:[%s304 + $0x148] sm:$0xff]
    %v347 = vld [vmem:[%s304 + $0x150] sm:$0xff]
    %v348 = vld [vmem:[%s304 + $0x158] sm:$0xff]
    %v349 = vld [vmem:[%s304 + $0x160] sm:$0xff]
    %v350 = vld [vmem:[%s304 + $0x168] sm:$0xff]
    %v351 = vld [vmem:[%s304 + $0x170] sm:$0xff]
    %v352 = vld [vmem:[%s304 + $0x178] sm:$0xff]
    %v353 = vld [vmem:[%s304 + $0x180] sm:$0xff]
    %v354 = vld [vmem:[%s304 + $0x188] sm:$0xff]
    %v355 = vld [vmem:[%s304 + $0x190] sm:$0xff]
    %v356 = vld [vmem:[%s304 + $0x198] sm:$0xff]
    %v357 = vld [vmem:[%s304 + $0x1a0] sm:$0xff]
    %v358 = vld [vmem:[%s304 + $0x1a8] sm:$0xff]
    %v359 = vld [vmem:[%s304 + $0x1b0] sm:$0xff]
    %v360 = vld [vmem:[%s304 + $0x1b8] sm:$0xff]
    %v361 = vld [vmem:[%s304 + $0x1c0] sm:$0xff]
    %v362 = vld [vmem:[%s304 + $0x1c8] sm:$0xff]
    %v363 = vld [vmem:[%s304 + $0x1d0] sm:$0xff]
    %v364 = vld [vmem:[%s304 + $0x1d8] sm:$0xff]
    %v365 = vld [vmem:[%s304 + $0x1e0] sm:$0xff]
    %v366 = vld [vmem:[%s304 + $0x1e8] sm:$0xff]
    %v367 = vld [vmem:[%s304 + $0x1f0] sm:$0xff]
    %v368 = vld [vmem:[%s304 + $0x1f8] sm:$0xff]
    %v369 = vld [vmem:[%s304 + $0x200] sm:$0xff]
    %v370 = vld [vmem:[%s304 + $0x208] sm:$0xff]
    %v371 = vld [vmem:[%s304 + $0x210] sm:$0xff]
    %v372 = vld [vmem:[%s304 + $0x218] sm:$0xff]
    %v373 = vld [vmem:[%s304 + $0x220] sm:$0xff]
    %v374 = vld [vmem:[%s304 + $0x228] sm:$0xff]
    %v375 = vld [vmem:[%s304 + $0x230] sm:$0xff]
    %v376 = vld [vmem:[%s304 + $0x238] sm:$0xff]
    %v377 = vld [vmem:[%s304 + $0x240] sm:$0xff]
    %v378 = vld [vmem:[%s304 + $0x248] sm:$0xff]
    %v379 = vld [vmem:[%s304 + $0x250] sm:$0xff]
    %v380 = vld [vmem:[%s304 + $0x258] sm:$0xff]
    %v381 = vld [vmem:[%s304 + $0x260] sm:$0xff]
    %v382 = vld [vmem:[%s304 + $0x268] sm:$0xff]
    %v383 = vld [vmem:[%s304 + $0x270] sm:$0xff]
    %v384 = vld [vmem:[%s304 + $0x278] sm:$0xff]
    %v385 = vld [vmem:[%s304 + $0x280] sm:$0xff]
    %v386 = vld [vmem:[%s304 + $0x288] sm:$0xff]
    %v387 = vld [vmem:[%s304 + $0x290] sm:$0xff]
    %v388 = vld [vmem:[%s304 + $0x298] sm:$0xff]
    %v389 = vld [vmem:[%s304 + $0x2a0] sm:$0xff]
    %v390 = vld [vmem:[%s304 + $0x2a8] sm:$0xff]
    %v391 = vld [vmem:[%s304 + $0x2b0] sm:$0xff]
    %v392 = vld [vmem:[%s304 + $0x2b8] sm:$0xff]
    %v393 = vld [vmem:[%s304 + $0x2c0] sm:$0xff]
    %v394 = vld [vmem:[%s304 + $0x2c8] sm:$0xff]
    %v395 = vld [vmem:[%s304 + $0x2d0] sm:$0xff]
    %v396 = vld [vmem:[%s304 + $0x2d8] sm:$0xff]
    %v397 = vld [vmem:[%s304 + $0x2e0] sm:$0xff]
    %v398 = vld [vmem:[%s304 + $0x2e8] sm:$0xff]
    %v399 = vld [vmem:[%s304 + $0x2f0] sm:$0xff]
    %v400 = vld [vmem:[%s304 + $0x2f8] sm:$0xff]
    %v401 = vld [vmem:[%s304 + $0x300] sm:$0xff]
    %v402 = vld [vmem:[%s304 + $0x308] sm:$0xff]
    %v403 = vld [vmem:[%s304 + $0x310] sm:$0xff]
    %v404 = vld [vmem:[%s304 + $0x318] sm:$0x3f]
    %v405 = vld [vmem:[%s304 + $0x320] sm:$0x3f]
    %v406 = vld [vmem:[%s304 + $0x328] sm:$0x3f]
    %v407 = vld [vmem:[%s0] sm:$0x1f]
    %v408 = vld [vmem:[%s0 + $0x1] sm:$0x1f]
    %v409 = vld [vmem:[%s1] sm:$0x1f]
    %v410 = vld [vmem:[%s1 + $0x1] sm:$0x1f]
    %vm411 = vcmask 179200
    %v413 = vsel %vm411, %v409, 0
    %vm415 = vcmask 1045504
    %v417 = vsel %vm415, %v78, 0
    %v420 = vsel %vm415, %v79, 0
    %v423 = vsel %vm415, %v80, 0
    %v426 = vsel %vm415, %v81, 0
    %v429 = vsel %vm415, %v82, 0
    %431 = vmatprep.subr.mxu0 0.0
    %432 = vmatpush1.msra.mxu0 0.0
    %433 = vmatprep.subr.mxu0 0.0
    %434 = vmatpush1.msra.mxu0 0.0
    %435 = vmatprep.subr.mxu0 0.0
    %436 = vmatpush1.msra.mxu0 0.0
    %437 = vmatprep.subr.mxu0 0.0
    %438 = vmatpush1.msra.mxu0 0.0
    %439 = vmatprep.subr.mxu0 0.0
    %440 = vmatpush1.msra.mxu0 0.0
    %441 = vmatprep.subr.mxu0 0.0
    %442 = vmatpush1.msra.mxu0 0.0
    %443 = vmatprep.subr.mxu0 0.0
    %444 = vmatpush1.msra.mxu0 0.0
    %445 = vmatprep.subr.mxu0 0.0
    %446 = vmatpush1.msra.mxu0 0.0
    %447 = vmatprep.subr.mxu0 0.0
    %448 = vmatpush1.msra.mxu0 0.0
    %449 = vmatprep.subr.mxu0 0.0
    %450 = vmatpush1.msra.mxu0 0.0
    %451 = vmatprep.subr.mxu0 0.0
    %452 = vmatpush1.msra.mxu0 0.0
    %453 = vmatprep.subr.mxu0 0.0
    %454 = vmatpush1.msra.mxu0 0.0
    %455 = vmatprep.subr.mxu0 0.0
    %456 = vmatpush1.msra.mxu0 0.0
    %457 = vmatprep.subr.mxu0 %v420
    %458 = vmatpush1.msra.mxu0 %v417
    %459 = vmatprep.subr.mxu0 %v74
    %460 = vmatpush1.msra.mxu0 %v73
    %461 = vmatprep.subr.mxu0 %v69
    %462 = vmatpush1.msra.mxu0 %v68
    %463 = vmatprep.subr.mxu0 0.0
    %464 = vmatpush2.msra.mxu0 0.0
    %465 = vmatprep.subr.mxu0 0.0
    %466 = vmatpush2.msra.mxu0 0.0
    %467 = vmatprep.subr.mxu0 0.0
    %468 = vmatpush2.msra.mxu0 0.0
    %469 = vmatprep.subr.mxu0 0.0
    %470 = vmatpush2.msra.mxu0 0.0
    %471 = vmatprep.subr.mxu0 0.0
    %472 = vmatpush2.msra.mxu0 0.0
    %473 = vmatprep.subr.mxu0 0.0
    %474 = vmatpush2.msra.mxu0 0.0
    %475 = vmatprep.subr.mxu0 0.0
    %476 = vmatpush2.msra.mxu0 0.0
    %477 = vmatprep.subr.mxu0 0.0
    %478 = vmatpush2.msra.mxu0 0.0
    %479 = vmatprep.subr.mxu0 0.0
    %480 = vmatpush2.msra.mxu0 0.0
    %481 = vmatprep.subr.mxu0 0.0
    %482 = vmatpush2.msra.mxu0 0.0
    %483 = vmatprep.subr.mxu0 0.0
    %484 = vmatpush2.msra.mxu0 0.0
    %485 = vmatprep.subr.mxu0 0.0
    %486 = vmatpush2.msra.mxu0 0.0
    %487 = vmatprep.subr.mxu0 0.0
    %488 = vmatpush2.msra.mxu0 0.0
    %489 = vmatprep.subr.mxu0 0.0
    %490 = vmatpush2.msra.mxu0 0.0
    %491 = vmatprep.subr.mxu0 0.0
    %492 = vmatpush2.msra.mxu0 0.0
    %493 = vmatprep.subr.mxu0 0.0
    %494 = vmatpush2.msra.mxu0 0.0
    %495 = vmatprep.mubr.f32.mxu0 0.0
    %496 = vmatmul.mubr.f32.gmra.mxu0 %v413
    %v497 = vpop.f32.mrf.mxu0
    %v498 = vadd.f32 0.0, %v497
    %v499 = vpop.f32.mrf.mxu0
    %v500 = vadd.f32 0.0, %v499
    %501 = vdwg.mxu0
    %502 = vmatprep.subr.mxu0 0.0
    %503 = vmatpush1.msra.mxu0 0.0
    %504 = vmatprep.subr.mxu0 0.0
    %505 = vmatpush1.msra.mxu0 0.0
    %506 = vmatprep.subr.mxu0 0.0
    %507 = vmatpush1.msra.mxu0 0.0
    %508 = vmatprep.subr.mxu0 0.0
    %509 = vmatpush1.msra.mxu0 0.0
    %510 = vmatprep.subr.mxu0 0.0
    %511 = vmatpush1.msra.mxu0 0.0
    %512 = vmatprep.subr.mxu0 0.0
    %513 = vmatpush1.msra.mxu0 0.0
    %514 = vmatprep.subr.mxu0 0.0
    %515 = vmatpush1.msra.mxu0 0.0
    %516 = vmatprep.subr.mxu0 0.0
    %517 = vmatpush1.msra.mxu0 0.0
    %518 = vmatprep.subr.mxu0 0.0
    %519 = vmatpush1.msra.mxu0 0.0
    %520 = vmatprep.subr.mxu0 0.0
    %521 = vmatpush1.msra.mxu0 0.0
    %522 = vmatprep.subr.mxu0 0.0
    %523 = vmatpush1.msra.mxu0 0.0
    %524 = vmatprep.subr.mxu0 0.0
    %525 = vmatpush1.msra.mxu0 0.0
    %526 = vmatprep.subr.mxu0 0.0
    %527 = vmatpush1.msra.mxu0 0.0
    %528 = vmatprep.subr.mxu0 %v426
    %529 = vmatpush1.msra.mxu0 %v423
    %530 = vmatprep.subr.mxu0 %v76
    %531 = vmatpush1.msra.mxu0 %v75
    %532 = vmatprep.subr.mxu0 %v71
    %533 = vmatpush1.msra.mxu0 %v70
    %534 = vmatprep.subr.mxu0 0.0
    %535 = vmatpush2.msra.mxu0 0.0
    %536 = vmatprep.subr.mxu0 0.0
    %537 = vmatpush2.msra.mxu0 0.0
    %538 = vmatprep.subr.mxu0 0.0
    %539 = vmatpush2.msra.mxu0 0.0
    %540 = vmatprep.subr.mxu0 0.0
    %541 = vmatpush2.msra.mxu0 0.0
    %542 = vmatprep.subr.mxu0 0.0
    %543 = vmatpush2.msra.mxu0 0.0
    %544 = vmatprep.subr.mxu0 0.0
    %545 = vmatpush2.msra.mxu0 0.0
    %546 = vmatprep.subr.mxu0 0.0
    %547 = vmatpush2.msra.mxu0 0.0
    %548 = vmatprep.subr.mxu0 0.0
    %549 = vmatpush2.msra.mxu0 0.0
    %550 = vmatprep.subr.mxu0 0.0
    %551 = vmatpush2.msra.mxu0 0.0
    %552 = vmatprep.subr.mxu0 0.0
    %553 = vmatpush2.msra.mxu0 0.0
    %554 = vmatprep.subr.mxu0 0.0
    %555 = vmatpush2.msra.mxu0 0.0
    %556 = vmatprep.subr.mxu0 0.0
    %557 = vmatpush2.msra.mxu0 0.0
    %558 = vmatprep.subr.mxu0 0.0
    %559 = vmatpush2.msra.mxu0 0.0
    %560 = vmatprep.subr.mxu0 0.0
    %561 = vmatpush2.msra.mxu0 0.0
    %562 = vmatprep.subr.mxu0 0.0
    %563 = vmatpush2.msra.mxu0 0.0
    %564 = vmatprep.subr.mxu0 0.0
    %565 = vmatpush2.msra.mxu0 0.0
    %566 = vmatprep.mubr.f32.mxu0 0.0
    %567 = vmatmul.mubr.f32.gmra.mxu0 %v413
    %v568 = vpop.f32.mrf.mxu0
    %v569 = vadd.f32 0.0, %v568
    %v570 = vpop.f32.mrf.mxu0
    %v571 = vadd.f32 0.0, %v570
    %572 = vdwg.mxu0
    %573 = vmatprep.subr.mxu0 0.0
    %574 = vmatpush1.msra.mxu0 0.0
    %575 = vmatprep.subr.mxu0 0.0
    %576 = vmatpush1.msra.mxu0 0.0
    %577 = vmatprep.subr.mxu0 0.0
    %578 = vmatpush1.msra.mxu0 0.0
    %579 = vmatprep.subr.mxu0 0.0
    %580 = vmatpush1.msra.mxu0 0.0
    %581 = vmatprep.subr.mxu0 0.0
    %582 = vmatpush1.msra.mxu0 0.0
    %583 = vmatprep.subr.mxu0 0.0
    %584 = vmatpush1.msra.mxu0 0.0
    %585 = vmatprep.subr.mxu0 0.0
    %586 = vmatpush1.msra.mxu0 0.0
    %587 = vmatprep.subr.mxu0 0.0
    %588 = vmatpush1.msra.mxu0 0.0
    %589 = vmatprep.subr.mxu0 0.0
    %590 = vmatpush1.msra.mxu0 0.0
    %591 = vmatprep.subr.mxu0 0.0
    %592 = vmatpush1.msra.mxu0 0.0
    %593 = vmatprep.subr.mxu0 0.0
    %594 = vmatpush1.msra.mxu0 0.0
    %595 = vmatprep.subr.mxu0 0.0
    %596 = vmatpush1.msra.mxu0 0.0
    %597 = vmatprep.subr.mxu0 0.0
    %598 = vmatpush1.msra.mxu0 0.0
    %599 = vmatprep.subr.mxu0 0.0
    %600 = vmatpush1.msra.mxu0 %v429
    %601 = vmatprep.subr.mxu0 0.0
    %602 = vmatpush1.msra.mxu0 %v77
    %603 = vmatprep.subr.mxu0 0.0
    %604 = vmatpush1.msra.mxu0 %v72
    %605 = vmatprep.subr.mxu0 0.0
    %606 = vmatpush2.msra.mxu0 0.0
    %607 = vmatprep.subr.mxu0 0.0
    %608 = vmatpush2.msra.mxu0 0.0
    %609 = vmatprep.subr.mxu0 0.0
    %610 = vmatpush2.msra.mxu0 0.0
    %611 = vmatprep.subr.mxu0 0.0
    %612 = vmatpush2.msra.mxu0 0.0
    %613 = vmatprep.subr.mxu0 0.0
    %614 = vmatpush2.msra.mxu0 0.0
    %615 = vmatprep.subr.mxu0 0.0
    %616 = vmatpush2.msra.mxu0 0.0
    %617 = vmatprep.subr.mxu0 0.0
    %618 = vmatpush2.msra.mxu0 0.0
    %619 = vmatprep.subr.mxu0 0.0
    %620 = vmatpush2.msra.mxu0 0.0
    %621 = vmatprep.subr.mxu0 0.0
    %622 = vmatpush2.msra.mxu0 0.0
    %623 = vmatprep.subr.mxu0 0.0
    %624 = vmatpush2.msra.mxu0 0.0
    %625 = vmatprep.subr.mxu0 0.0
    %626 = vmatpush2.msra.mxu0 0.0
    %627 = vmatprep.subr.mxu0 0.0
    %628 = vmatpush2.msra.mxu0 0.0
    %629 = vmatprep.subr.mxu0 0.0
    %630 = vmatpush2.msra.mxu0 0.0
    %631 = vmatprep.subr.mxu0 0.0
    %632 = vmatpush2.msra.mxu0 0.0
    %633 = vmatprep.subr.mxu0 0.0
    %634 = vmatpush2.msra.mxu0 0.0
    %635 = vmatprep.subr.mxu0 0.0
    %636 = vmatpush2.msra.mxu0 0.0
    %637 = vmatprep.mubr.f32.mxu0 0.0
    %638 = vmatmul.mubr.f32.gmra.mxu0 %v413
    %v639 = vpop.f32.mrf.mxu0
    %v640 = vadd.f32 0.0, %v639
    %v641 = vpop.f32.mrf.mxu0
    %642 = vdwg.mxu0
    %v644 = vsel %vm411, %v407, 0
    %v647 = vsel %vm415, %v62, 0
    %v650 = vsel %vm415, %v63, 0
    %v653 = vsel %vm415, %v64, 0
    %v656 = vsel %vm415, %v65, 0
    %v659 = vsel %vm415, %v66, 0
    %661 = vmatprep.subr.mxu0 0.0
    %662 = vmatpush1.msra.mxu0 0.0
    %663 = vmatprep.subr.mxu0 0.0
    %664 = vmatpush1.msra.mxu0 0.0
    %665 = vmatprep.subr.mxu0 0.0
    %666 = vmatpush1.msra.mxu0 0.0
    %667 = vmatprep.subr.mxu0 0.0
    %668 = vmatpush1.msra.mxu0 0.0
    %669 = vmatprep.subr.mxu0 0.0
    %670 = vmatpush1.msra.mxu0 0.0
    %671 = vmatprep.subr.mxu0 0.0
    %672 = vmatpush1.msra.mxu0 0.0
    %673 = vmatprep.subr.mxu0 0.0
    %674 = vmatpush1.msra.mxu0 0.0
    %675 = vmatprep.subr.mxu0 0.0
    %676 = vmatpush1.msra.mxu0 0.0
    %677 = vmatprep.subr.mxu0 0.0
    %678 = vmatpush1.msra.mxu0 0.0
    %679 = vmatprep.subr.mxu0 0.0
    %680 = vmatpush1.msra.mxu0 0.0
    %681 = vmatprep.subr.mxu0 0.0
    %682 = vmatpush1.msra.mxu0 0.0
    %683 = vmatprep.subr.mxu0 0.0
    %684 = vmatpush1.msra.mxu0 0.0
    %685 = vmatprep.subr.mxu0 0.0
    %686 = vmatpush1.msra.mxu0 0.0
    %687 = vmatprep.subr.mxu0 %v650
    %688 = vmatpush1.msra.mxu0 %v647
    %689 = vmatprep.subr.mxu0 %v58
    %690 = vmatpush1.msra.mxu0 %v57
    %691 = vmatprep.subr.mxu0 %v53
    %692 = vmatpush1.msra.mxu0 %v52
    %693 = vmatprep.subr.mxu0 0.0
    %694 = vmatpush2.msra.mxu0 0.0
    %695 = vmatprep.subr.mxu0 0.0
    %696 = vmatpush2.msra.mxu0 0.0
    %697 = vmatprep.subr.mxu0 0.0
    %698 = vmatpush2.msra.mxu0 0.0
    %699 = vmatprep.subr.mxu0 0.0
    %700 = vmatpush2.msra.mxu0 0.0
    %701 = vmatprep.subr.mxu0 0.0
    %702 = vmatpush2.msra.mxu0 0.0
    %703 = vmatprep.subr.mxu0 0.0
    %704 = vmatpush2.msra.mxu0 0.0
    %705 = vmatprep.subr.mxu0 0.0
    %706 = vmatpush2.msra.mxu0 0.0
    %707 = vmatprep.subr.mxu0 0.0
    %708 = vmatpush2.msra.mxu0 0.0
    %709 = vmatprep.subr.mxu0 0.0
    %710 = vmatpush2.msra.mxu0 0.0
    %711 = vmatprep.subr.mxu0 0.0
    %712 = vmatpush2.msra.mxu0 0.0
    %713 = vmatprep.subr.mxu0 0.0
    %714 = vmatpush2.msra.mxu0 0.0
    %715 = vmatprep.subr.mxu0 0.0
    %716 = vmatpush2.msra.mxu0 0.0
    %717 = vmatprep.subr.mxu0 0.0
    %718 = vmatpush2.msra.mxu0 0.0
    %719 = vmatprep.subr.mxu0 0.0
    %720 = vmatpush2.msra.mxu0 0.0
    %721 = vmatprep.subr.mxu0 0.0
    %722 = vmatpush2.msra.mxu0 0.0
    %723 = vmatprep.subr.mxu0 0.0
    %724 = vmatpush2.msra.mxu0 0.0
    %725 = vmatprep.mubr.f32.mxu0 0.0
    %726 = vmatmul.mubr.f32.gmra.mxu0 %v644
    %v727 = vpop.f32.mrf.mxu0
    %v728 = vadd.f32 %v498, %v727
    %v729 = vpop.f32.mrf.mxu0
    %v730 = vadd.f32 %v500, %v729
    %731 = vdwg.mxu0
    %732 = vmatprep.subr.mxu0 0.0
    %733 = vmatpush1.msra.mxu0 0.0
    %734 = vmatprep.subr.mxu0 0.0
    %735 = vmatpush1.msra.mxu0 0.0
    %736 = vmatprep.subr.mxu0 0.0
    %737 = vmatpush1.msra.mxu0 0.0
    %738 = vmatprep.subr.mxu0 0.0
    %739 = vmatpush1.msra.mxu0 0.0
    %740 = vmatprep.subr.mxu0 0.0
    %741 = vmatpush1.msra.mxu0 0.0
    %742 = vmatprep.subr.mxu0 0.0
    %743 = vmatpush1.msra.mxu0 0.0
    %744 = vmatprep.subr.mxu0 0.0
    %745 = vmatpush1.msra.mxu0 0.0
    %746 = vmatprep.subr.mxu0 0.0
    %747 = vmatpush1.msra.mxu0 0.0
    %748 = vmatprep.subr.mxu0 0.0
    %749 = vmatpush1.msra.mxu0 0.0
    %750 = vmatprep.subr.mxu0 0.0
    %751 = vmatpush1.msra.mxu0 0.0
    %752 = vmatprep.subr.mxu0 0.0
    %753 = vmatpush1.msra.mxu0 0.0
    %754 = vmatprep.subr.mxu0 0.0
    %755 = vmatpush1.msra.mxu0 0.0
    %756 = vmatprep.subr.mxu0 0.0
    %757 = vmatpush1.msra.mxu0 0.0
    %758 = vmatprep.subr.mxu0 %v656
    %759 = vmatpush1.msra.mxu0 %v653
    %760 = vmatprep.subr.mxu0 %v60
    %761 = vmatpush1.msra.mxu0 %v59
    %762 = vmatprep.subr.mxu0 %v55
    %763 = vmatpush1.msra.mxu0 %v54
    %764 = vmatprep.subr.mxu0 0.0
    %765 = vmatpush2.msra.mxu0 0.0
    %766 = vmatprep.subr.mxu0 0.0
    %767 = vmatpush2.msra.mxu0 0.0
    %768 = vmatprep.subr.mxu0 0.0
    %769 = vmatpush2.msra.mxu0 0.0
    %770 = vmatprep.subr.mxu0 0.0
    %771 = vmatpush2.msra.mxu0 0.0
    %772 = vmatprep.subr.mxu0 0.0
    %773 = vmatpush2.msra.mxu0 0.0
    %774 = vmatprep.subr.mxu0 0.0
    %775 = vmatpush2.msra.mxu0 0.0
    %776 = vmatprep.subr.mxu0 0.0
    %777 = vmatpush2.msra.mxu0 0.0
    %778 = vmatprep.subr.mxu0 0.0
    %779 = vmatpush2.msra.mxu0 0.0
    %780 = vmatprep.subr.mxu0 0.0
    %781 = vmatpush2.msra.mxu0 0.0
    %782 = vmatprep.subr.mxu0 0.0
    %783 = vmatpush2.msra.mxu0 0.0
    %784 = vmatprep.subr.mxu0 0.0
    %785 = vmatpush2.msra.mxu0 0.0
    %786 = vmatprep.subr.mxu0 0.0
    %787 = vmatpush2.msra.mxu0 0.0
    %788 = vmatprep.subr.mxu0 0.0
    %789 = vmatpush2.msra.mxu0 0.0
    %790 = vmatprep.subr.mxu0 0.0
    %791 = vmatpush2.msra.mxu0 0.0
    %792 = vmatprep.subr.mxu0 0.0
    %793 = vmatpush2.msra.mxu0 0.0
    %794 = vmatprep.subr.mxu0 0.0
    %795 = vmatpush2.msra.mxu0 0.0
    %796 = vmatprep.mubr.f32.mxu0 0.0
    %797 = vmatmul.mubr.f32.gmra.mxu0 %v644
    %v798 = vpop.f32.mrf.mxu0
    %v799 = vadd.f32 %v569, %v798
    %v800 = vpop.f32.mrf.mxu0
    %v801 = vadd.f32 %v571, %v800
    %802 = vdwg.mxu0
    %803 = vmatprep.subr.mxu0 0.0
    %804 = vmatpush1.msra.mxu0 0.0
    %805 = vmatprep.subr.mxu0 0.0
    %806 = vmatpush1.msra.mxu0 0.0
    %807 = vmatprep.subr.mxu0 0.0
    %808 = vmatpush1.msra.mxu0 0.0
    %809 = vmatprep.subr.mxu0 0.0
    %810 = vmatpush1.msra.mxu0 0.0
    %811 = vmatprep.subr.mxu0 0.0
    %812 = vmatpush1.msra.mxu0 0.0
    %813 = vmatprep.subr.mxu0 0.0
    %814 = vmatpush1.msra.mxu0 0.0
    %815 = vmatprep.subr.mxu0 0.0
    %816 = vmatpush1.msra.mxu0 0.0
    %817 = vmatprep.subr.mxu0 0.0
    %818 = vmatpush1.msra.mxu0 0.0
    %819 = vmatprep.subr.mxu0 0.0
    %820 = vmatpush1.msra.mxu0 0.0
    %821 = vmatprep.subr.mxu0 0.0
    %822 = vmatpush1.msra.mxu0 0.0
    %823 = vmatprep.subr.mxu0 0.0
    %824 = vmatpush1.msra.mxu0 0.0
    %825 = vmatprep.subr.mxu0 0.0
    %826 = vmatpush1.msra.mxu0 0.0
    %827 = vmatprep.subr.mxu0 0.0
    %828 = vmatpush1.msra.mxu0 0.0
    %829 = vmatprep.subr.mxu0 0.0
    %830 = vmatpush1.msra.mxu0 %v659
    %831 = vmatprep.subr.mxu0 0.0
    %832 = vmatpush1.msra.mxu0 %v61
    %833 = vmatprep.subr.mxu0 0.0
    %834 = vmatpush1.msra.mxu0 %v56
    %835 = vmatprep.subr.mxu0 0.0
    %836 = vmatpush2.msra.mxu0 0.0
    %837 = vmatprep.subr.mxu0 0.0
    %838 = vmatpush2.msra.mxu0 0.0
    %839 = vmatprep.subr.mxu0 0.0
    %840 = vmatpush2.msra.mxu0 0.0
    %841 = vmatprep.subr.mxu0 0.0
    %842 = vmatpush2.msra.mxu0 0.0
    %843 = vmatprep.subr.mxu0 0.0
    %844 = vmatpush2.msra.mxu0 0.0
    %845 = vmatprep.subr.mxu0 0.0
    %846 = vmatpush2.msra.mxu0 0.0
    %847 = vmatprep.subr.mxu0 0.0
    %848 = vmatpush2.msra.mxu0 0.0
    %849 = vmatprep.subr.mxu0 0.0
    %850 = vmatpush2.msra.mxu0 0.0
    %851 = vmatprep.subr.mxu0 0.0
    %852 = vmatpush2.msra.mxu0 0.0
    %853 = vmatprep.subr.mxu0 0.0
    %854 = vmatpush2.msra.mxu0 0.0
    %855 = vmatprep.subr.mxu0 0.0
    %856 = vmatpush2.msra.mxu0 0.0
    %857 = vmatprep.subr.mxu0 0.0
    %858 = vmatpush2.msra.mxu0 0.0
    %859 = vmatprep.subr.mxu0 0.0
    %860 = vmatpush2.msra.mxu0 0.0
    %861 = vmatprep.subr.mxu0 0.0
    %862 = vmatpush2.msra.mxu0 0.0
    %863 = vmatprep.subr.mxu0 0.0
    %864 = vmatpush2.msra.mxu0 0.0
    %865 = vmatprep.subr.mxu0 0.0
    %866 = vmatpush2.msra.mxu0 0.0
    %867 = vmatprep.mubr.f32.mxu0 0.0
    %868 = vmatmul.mubr.f32.gmra.mxu0 %v644
    %v869 = vpop.f32.mrf.mxu0
    %v870 = vadd.f32 %v640, %v869
    %v871 = vpop.f32.mrf.mxu0
    %872 = vdwg.mxu0
    %v874 = vsel %vm411, %v408, 0
    %v877 = vsel %vm415, %v94, 0
    %v880 = vsel %vm415, %v95, 0
    %v883 = vsel %vm415, %v96, 0
    %v886 = vsel %vm415, %v97, 0
    %v889 = vsel %vm415, %v98, 0
    %891 = vmatprep.subr.mxu0 0.0
    %892 = vmatpush1.msra.mxu0 0.0
    %893 = vmatprep.subr.mxu0 0.0
    %894 = vmatpush1.msra.mxu0 0.0
    %895 = vmatprep.subr.mxu0 0.0
    %896 = vmatpush1.msra.mxu0 0.0
    %897 = vmatprep.subr.mxu0 0.0
    %898 = vmatpush1.msra.mxu0 0.0
    %899 = vmatprep.subr.mxu0 0.0
    %900 = vmatpush1.msra.mxu0 0.0
    %901 = vmatprep.subr.mxu0 0.0
    %902 = vmatpush1.msra.mxu0 0.0
    %903 = vmatprep.subr.mxu0 0.0
    %904 = vmatpush1.msra.mxu0 0.0
    %905 = vmatprep.subr.mxu0 0.0
    %906 = vmatpush1.msra.mxu0 0.0
    %907 = vmatprep.subr.mxu0 0.0
    %908 = vmatpush1.msra.mxu0 0.0
    %909 = vmatprep.subr.mxu0 0.0
    %910 = vmatpush1.msra.mxu0 0.0
    %911 = vmatprep.subr.mxu0 0.0
    %912 = vmatpush1.msra.mxu0 0.0
    %913 = vmatprep.subr.mxu0 0.0
    %914 = vmatpush1.msra.mxu0 0.0
    %915 = vmatprep.subr.mxu0 0.0
    %916 = vmatpush1.msra.mxu0 0.0
    %917 = vmatprep.subr.mxu0 %v880
    %918 = vmatpush1.msra.mxu0 %v877
    %919 = vmatprep.subr.mxu0 %v90
    %920 = vmatpush1.msra.mxu0 %v89
    %921 = vmatprep.subr.mxu0 %v85
    %922 = vmatpush1.msra.mxu0 %v84
    %923 = vmatprep.subr.mxu0 0.0
    %924 = vmatpush2.msra.mxu0 0.0
    %925 = vmatprep.subr.mxu0 0.0
    %926 = vmatpush2.msra.mxu0 0.0
    %927 = vmatprep.subr.mxu0 0.0
    %928 = vmatpush2.msra.mxu0 0.0
    %929 = vmatprep.subr.mxu0 0.0
    %930 = vmatpush2.msra.mxu0 0.0
    %931 = vmatprep.subr.mxu0 0.0
    %932 = vmatpush2.msra.mxu0 0.0
    %933 = vmatprep.subr.mxu0 0.0
    %934 = vmatpush2.msra.mxu0 0.0
    %935 = vmatprep.subr.mxu0 0.0
    %936 = vmatpush2.msra.mxu0 0.0
    %937 = vmatprep.subr.mxu0 0.0
    %938 = vmatpush2.msra.mxu0 0.0
    %939 = vmatprep.subr.mxu0 0.0
    %940 = vmatpush2.msra.mxu0 0.0
    %941 = vmatprep.subr.mxu0 0.0
    %942 = vmatpush2.msra.mxu0 0.0
    %943 = vmatprep.subr.mxu0 0.0
    %944 = vmatpush2.msra.mxu0 0.0
    %945 = vmatprep.subr.mxu0 0.0
    %946 = vmatpush2.msra.mxu0 0.0
    %947 = vmatprep.subr.mxu0 0.0
    %948 = vmatpush2.msra.mxu0 0.0
    %949 = vmatprep.subr.mxu0 0.0
    %950 = vmatpush2.msra.mxu0 0.0
    %951 = vmatprep.subr.mxu0 0.0
    %952 = vmatpush2.msra.mxu0 0.0
    %953 = vmatprep.subr.mxu0 0.0
    %954 = vmatpush2.msra.mxu0 0.0
    %955 = vmatprep.mubr.f32.mxu0 0.0
    %956 = vmatmul.mubr.f32.gmra.mxu0 %v874
    %v957 = vpop.f32.mrf.mxu0
    %v958 = vadd.f32 0.0, %v957
    %v959 = vpop.f32.mrf.mxu0
    %v960 = vadd.f32 0.0, %v959
    %961 = vdwg.mxu0
    %962 = vmatprep.subr.mxu0 0.0
    %963 = vmatpush1.msra.mxu0 0.0
    %964 = vmatprep.subr.mxu0 0.0
    %965 = vmatpush1.msra.mxu0 0.0
    %966 = vmatprep.subr.mxu0 0.0
    %967 = vmatpush1.msra.mxu0 0.0
    %968 = vmatprep.subr.mxu0 0.0
    %969 = vmatpush1.msra.mxu0 0.0
    %970 = vmatprep.subr.mxu0 0.0
    %971 = vmatpush1.msra.mxu0 0.0
    %972 = vmatprep.subr.mxu0 0.0
    %973 = vmatpush1.msra.mxu0 0.0
    %974 = vmatprep.subr.mxu0 0.0
    %975 = vmatpush1.msra.mxu0 0.0
    %976 = vmatprep.subr.mxu0 0.0
    %977 = vmatpush1.msra.mxu0 0.0
    %978 = vmatprep.subr.mxu0 0.0
    %979 = vmatpush1.msra.mxu0 0.0
    %980 = vmatprep.subr.mxu0 0.0
    %981 = vmatpush1.msra.mxu0 0.0
    %982 = vmatprep.subr.mxu0 0.0
    %983 = vmatpush1.msra.mxu0 0.0
    %984 = vmatprep.subr.mxu0 0.0
    %985 = vmatpush1.msra.mxu0 0.0
    %986 = vmatprep.subr.mxu0 0.0
    %987 = vmatpush1.msra.mxu0 0.0
    %988 = vmatprep.subr.mxu0 %v886
    %989 = vmatpush1.msra.mxu0 %v883
    %990 = vmatprep.subr.mxu0 %v92
    %991 = vmatpush1.msra.mxu0 %v91
    %992 = vmatprep.subr.mxu0 %v87
    %993 = vmatpush1.msra.mxu0 %v86
    %994 = vmatprep.subr.mxu0 0.0
    %995 = vmatpush2.msra.mxu0 0.0
    %996 = vmatprep.subr.mxu0 0.0
    %997 = vmatpush2.msra.mxu0 0.0
    %998 = vmatprep.subr.mxu0 0.0
    %999 = vmatpush2.msra.mxu0 0.0
    %1000 = vmatprep.subr.mxu0 0.0
    %1001 = vmatpush2.msra.mxu0 0.0
    %1002 = vmatprep.subr.mxu0 0.0
    %1003 = vmatpush2.msra.mxu0 0.0
    %1004 = vmatprep.subr.mxu0 0.0
    %1005 = vmatpush2.msra.mxu0 0.0
    %1006 = vmatprep.subr.mxu0 0.0
    %1007 = vmatpush2.msra.mxu0 0.0
    %1008 = vmatprep.subr.mxu0 0.0
    %1009 = vmatpush2.msra.mxu0 0.0
    %1010 = vmatprep.subr.mxu0 0.0
    %1011 = vmatpush2.msra.mxu0 0.0
    %1012 = vmatprep.subr.mxu0 0.0
    %1013 = vmatpush2.msra.mxu0 0.0
    %1014 = vmatprep.subr.mxu0 0.0
    %1015 = vmatpush2.msra.mxu0 0.0
    %1016 = vmatprep.subr.mxu0 0.0
    %1017 = vmatpush2.msra.mxu0 0.0
    %1018 = vmatprep.subr.mxu0 0.0
    %1019 = vmatpush2.msra.mxu0 0.0
    %1020 = vmatprep.subr.mxu0 0.0
    %1021 = vmatpush2.msra.mxu0 0.0
    %1022 = vmatprep.subr.mxu0 0.0
    %1023 = vmatpush2.msra.mxu0 0.0
    %1024 = vmatprep.subr.mxu0 0.0
    %1025 = vmatpush2.msra.mxu0 0.0
    %1026 = vmatprep.mubr.f32.mxu0 0.0
    %1027 = vmatmul.mubr.f32.gmra.mxu0 %v874
    %v1028 = vpop.f32.mrf.mxu0
    %v1029 = vadd.f32 0.0, %v1028
    %v1030 = vpop.f32.mrf.mxu0
    %v1031 = vadd.f32 0.0, %v1030
    %1032 = vdwg.mxu0
    %1033 = vmatprep.subr.mxu0 0.0
    %1034 = vmatpush1.msra.mxu0 0.0
    %1035 = vmatprep.subr.mxu0 0.0
    %1036 = vmatpush1.msra.mxu0 0.0
    %1037 = vmatprep.subr.mxu0 0.0
    %1038 = vmatpush1.msra.mxu0 0.0
    %1039 = vmatprep.subr.mxu0 0.0
    %1040 = vmatpush1.msra.mxu0 0.0
    %1041 = vmatprep.subr.mxu0 0.0
    %1042 = vmatpush1.msra.mxu0 0.0
    %1043 = vmatprep.subr.mxu0 0.0
    %1044 = vmatpush1.msra.mxu0 0.0
    %1045 = vmatprep.subr.mxu0 0.0
    %1046 = vmatpush1.msra.mxu0 0.0
    %1047 = vmatprep.subr.mxu0 0.0
    %1048 = vmatpush1.msra.mxu0 0.0
    %1049 = vmatprep.subr.mxu0 0.0
    %1050 = vmatpush1.msra.mxu0 0.0
    %1051 = vmatprep.subr.mxu0 0.0
    %1052 = vmatpush1.msra.mxu0 0.0
    %1053 = vmatprep.subr.mxu0 0.0
    %1054 = vmatpush1.msra.mxu0 0.0
    %1055 = vmatprep.subr.mxu0 0.0
    %1056 = vmatpush1.msra.mxu0 0.0
    %1057 = vmatprep.subr.mxu0 0.0
    %1058 = vmatpush1.msra.mxu0 0.0
    %1059 = vmatprep.subr.mxu0 0.0
    %1060 = vmatpush1.msra.mxu0 %v889
    %1061 = vmatprep.subr.mxu0 0.0
    %1062 = vmatpush1.msra.mxu0 %v93
    %1063 = vmatprep.subr.mxu0 0.0
    %1064 = vmatpush1.msra.mxu0 %v88
    %1065 = vmatprep.subr.mxu0 0.0
    %1066 = vmatpush2.msra.mxu0 0.0
    %1067 = vmatprep.subr.mxu0 0.0
    %1068 = vmatpush2.msra.mxu0 0.0
    %1069 = vmatprep.subr.mxu0 0.0
    %1070 = vmatpush2.msra.mxu0 0.0
    %1071 = vmatprep.subr.mxu0 0.0
    %1072 = vmatpush2.msra.mxu0 0.0
    %1073 = vmatprep.subr.mxu0 0.0
    %1074 = vmatpush2.msra.mxu0 0.0
    %1075 = vmatprep.subr.mxu0 0.0
    %1076 = vmatpush2.msra.mxu0 0.0
    %1077 = vmatprep.subr.mxu0 0.0
    %1078 = vmatpush2.msra.mxu0 0.0
    %1079 = vmatprep.subr.mxu0 0.0
    %1080 = vmatpush2.msra.mxu0 0.0
    %1081 = vmatprep.subr.mxu0 0.0
    %1082 = vmatpush2.msra.mxu0 0.0
    %1083 = vmatprep.subr.mxu0 0.0
    %1084 = vmatpush2.msra.mxu0 0.0
    %1085 = vmatprep.subr.mxu0 0.0
    %1086 = vmatpush2.msra.mxu0 0.0
    %1087 = vmatprep.subr.mxu0 0.0
    %1088 = vmatpush2.msra.mxu0 0.0
    %1089 = vmatprep.subr.mxu0 0.0
    %1090 = vmatpush2.msra.mxu0 0.0
    %1091 = vmatprep.subr.mxu0 0.0
    %1092 = vmatpush2.msra.mxu0 0.0
    %1093 = vmatprep.subr.mxu0 0.0
    %1094 = vmatpush2.msra.mxu0 0.0
    %1095 = vmatprep.subr.mxu0 0.0
    %1096 = vmatpush2.msra.mxu0 0.0
    %1097 = vmatprep.mubr.f32.mxu0 0.0
    %1098 = vmatmul.mubr.f32.gmra.mxu0 %v874
    %v1099 = vpop.f32.mrf.mxu0
    %v1100 = vadd.f32 0.0, %v1099
    %v1101 = vpop.f32.mrf.mxu0
    %1102 = vdwg.mxu0
    %v1103 = vadd.f32 %v728, %v958
    %v1104 = vadd.f32 %v730, %v960
    %v1105 = vadd.f32 %v799, %v1029
    %v1106 = vadd.f32 %v801, %v1031
    %v1107 = vadd.f32 %v870, %v1100
    %1108 = vmatprep.subr.mxu0 0.0
    %1109 = vmatpush1.msra.mxu0 0.0
    %1110 = vmatprep.subr.mxu0 0.0
    %1111 = vmatpush1.msra.mxu0 0.0
    %1112 = vmatprep.subr.mxu0 0.0
    %1113 = vmatpush1.msra.mxu0 0.0
    %1114 = vmatprep.subr.mxu0 0.0
    %1115 = vmatpush1.msra.mxu0 0.0
    %1116 = vmatprep.subr.mxu0 0.0
    %1117 = vmatpush1.msra.mxu0 0.0
    %1118 = vmatprep.subr.mxu0 0.0
    %1119 = vmatpush1.msra.mxu0 0.0
    %1120 = vmatprep.subr.mxu0 0.0
    %1121 = vmatpush1.msra.mxu0 0.0
    %1122 = vmatprep.subr.mxu0 0.0
    %1123 = vmatpush1.msra.mxu0 0.0
    %1124 = vmatprep.subr.mxu0 0.0
    %1125 = vmatpush1.msra.mxu0 0.0
    %1126 = vmatprep.subr.mxu0 0.0
    %1127 = vmatpush1.msra.mxu0 0.0
    %1128 = vmatprep.subr.mxu0 0.0
    %1129 = vmatpush1.msra.mxu0 0.0
    %1130 = vmatprep.subr.mxu0 0.0
    %1131 = vmatpush1.msra.mxu0 0.0
    %1132 = vmatprep.subr.mxu0 0.0
    %1133 = vmatpush1.msra.mxu0 0.0
    %1134 = vmatprep.subr.mxu0 %v420
    %1135 = vmatpush1.msra.mxu0 %v417
    %1136 = vmatprep.subr.mxu0 %v74
    %1137 = vmatpush1.msra.mxu0 %v73
    %1138 = vmatprep.subr.mxu0 %v69
    %1139 = vmatpush1.msra.mxu0 %v68
    %1140 = vmatprep.subr.mxu0 0.0
    %1141 = vmatpush2.msra.mxu0 0.0
    %1142 = vmatprep.subr.mxu0 0.0
    %1143 = vmatpush2.msra.mxu0 0.0
    %1144 = vmatprep.subr.mxu0 0.0
    %1145 = vmatpush2.msra.mxu0 0.0
    %1146 = vmatprep.subr.mxu0 0.0
    %1147 = vmatpush2.msra.mxu0 0.0
    %1148 = vmatprep.subr.mxu0 0.0
    %1149 = vmatpush2.msra.mxu0 0.0
    %1150 = vmatprep.subr.mxu0 0.0
    %1151 = vmatpush2.msra.mxu0 0.0
    %1152 = vmatprep.subr.mxu0 0.0
    %1153 = vmatpush2.msra.mxu0 0.0
    %1154 = vmatprep.subr.mxu0 0.0
    %1155 = vmatpush2.msra.mxu0 0.0
    %1156 = vmatprep.subr.mxu0 0.0
    %1157 = vmatpush2.msra.mxu0 0.0
    %1158 = vmatprep.subr.mxu0 0.0
    %1159 = vmatpush2.msra.mxu0 0.0
    %1160 = vmatprep.subr.mxu0 0.0
    %1161 = vmatpush2.msra.mxu0 0.0
    %1162 = vmatprep.subr.mxu0 0.0
    %1163 = vmatpush2.msra.mxu0 0.0
    %1164 = vmatprep.subr.mxu0 0.0
    %1165 = vmatpush2.msra.mxu0 0.0
    %1166 = vmatprep.subr.mxu0 0.0
    %1167 = vmatpush2.msra.mxu0 0.0
    %1168 = vmatprep.subr.mxu0 0.0
    %1169 = vmatpush2.msra.mxu0 0.0
    %1170 = vmatprep.subr.mxu0 0.0
    %1171 = vmatpush2.msra.mxu0 0.0
    %1172 = vmatprep.mubr.f32.mxu0 0.0
    %1173 = vmatmul.mubr.f32.gmra.mxu0 %v874
    %v1174 = vpop.f32.mrf.mxu0
    %v1175 = vadd.f32 0.0, %v1174
    %v1176 = vpop.f32.mrf.mxu0
    %v1177 = vadd.f32 0.0, %v1176
    %1178 = vdwg.mxu0
    %1179 = vmatprep.subr.mxu0 0.0
    %1180 = vmatpush1.msra.mxu0 0.0
    %1181 = vmatprep.subr.mxu0 0.0
    %1182 = vmatpush1.msra.mxu0 0.0
    %1183 = vmatprep.subr.mxu0 0.0
    %1184 = vmatpush1.msra.mxu0 0.0
    %1185 = vmatprep.subr.mxu0 0.0
    %1186 = vmatpush1.msra.mxu0 0.0
    %1187 = vmatprep.subr.mxu0 0.0
    %1188 = vmatpush1.msra.mxu0 0.0
    %1189 = vmatprep.subr.mxu0 0.0
    %1190 = vmatpush1.msra.mxu0 0.0
    %1191 = vmatprep.subr.mxu0 0.0
    %1192 = vmatpush1.msra.mxu0 0.0
    %1193 = vmatprep.subr.mxu0 0.0
    %1194 = vmatpush1.msra.mxu0 0.0
    %1195 = vmatprep.subr.mxu0 0.0
    %1196 = vmatpush1.msra.mxu0 0.0
    %1197 = vmatprep.subr.mxu0 0.0
    %1198 = vmatpush1.msra.mxu0 0.0
    %1199 = vmatprep.subr.mxu0 0.0
    %1200 = vmatpush1.msra.mxu0 0.0
    %1201 = vmatprep.subr.mxu0 0.0
    %1202 = vmatpush1.msra.mxu0 0.0
    %1203 = vmatprep.subr.mxu0 0.0
    %1204 = vmatpush1.msra.mxu0 0.0
    %1205 = vmatprep.subr.mxu0 %v426
    %1206 = vmatpush1.msra.mxu0 %v423
    %1207 = vmatprep.subr.mxu0 %v76
    %1208 = vmatpush1.msra.mxu0 %v75
    %1209 = vmatprep.subr.mxu0 %v71
    %1210 = vmatpush1.msra.mxu0 %v70
    %1211 = vmatprep.subr.mxu0 0.0
    %1212 = vmatpush2.msra.mxu0 0.0
    %1213 = vmatprep.subr.mxu0 0.0
    %1214 = vmatpush2.msra.mxu0 0.0
    %1215 = vmatprep.subr.mxu0 0.0
    %1216 = vmatpush2.msra.mxu0 0.0
    %1217 = vmatprep.subr.mxu0 0.0
    %1218 = vmatpush2.msra.mxu0 0.0
    %1219 = vmatprep.subr.mxu0 0.0
    %1220 = vmatpush2.msra.mxu0 0.0
    %1221 = vmatprep.subr.mxu0 0.0
    %1222 = vmatpush2.msra.mxu0 0.0
    %1223 = vmatprep.subr.mxu0 0.0
    %1224 = vmatpush2.msra.mxu0 0.0
    %1225 = vmatprep.subr.mxu0 0.0
    %1226 = vmatpush2.msra.mxu0 0.0
    %1227 = vmatprep.subr.mxu0 0.0
    %1228 = vmatpush2.msra.mxu0 0.0
    %1229 = vmatprep.subr.mxu0 0.0
    %1230 = vmatpush2.msra.mxu0 0.0
    %1231 = vmatprep.subr.mxu0 0.0
    %1232 = vmatpush2.msra.mxu0 0.0
    %1233 = vmatprep.subr.mxu0 0.0
    %1234 = vmatpush2.msra.mxu0 0.0
    %1235 = vmatprep.subr.mxu0 0.0
    %1236 = vmatpush2.msra.mxu0 0.0
    %1237 = vmatprep.subr.mxu0 0.0
    %1238 = vmatpush2.msra.mxu0 0.0
    %1239 = vmatprep.subr.mxu0 0.0
    %1240 = vmatpush2.msra.mxu0 0.0
    %1241 = vmatprep.subr.mxu0 0.0
    %1242 = vmatpush2.msra.mxu0 0.0
    %1243 = vmatprep.mubr.f32.mxu0 0.0
    %1244 = vmatmul.mubr.f32.gmra.mxu0 %v874
    %v1245 = vpop.f32.mrf.mxu0
    %v1246 = vadd.f32 0.0, %v1245
    %v1247 = vpop.f32.mrf.mxu0
    %v1248 = vadd.f32 0.0, %v1247
    %1249 = vdwg.mxu0
    %1250 = vmatprep.subr.mxu0 0.0
    %1251 = vmatpush1.msra.mxu0 0.0
    %1252 = vmatprep.subr.mxu0 0.0
    %1253 = vmatpush1.msra.mxu0 0.0
    %1254 = vmatprep.subr.mxu0 0.0
    %1255 = vmatpush1.msra.mxu0 0.0
    %1256 = vmatprep.subr.mxu0 0.0
    %1257 = vmatpush1.msra.mxu0 0.0
    %1258 = vmatprep.subr.mxu0 0.0
    %1259 = vmatpush1.msra.mxu0 0.0
    %1260 = vmatprep.subr.mxu0 0.0
    %1261 = vmatpush1.msra.mxu0 0.0
    %1262 = vmatprep.subr.mxu0 0.0
    %1263 = vmatpush1.msra.mxu0 0.0
    %1264 = vmatprep.subr.mxu0 0.0
    %1265 = vmatpush1.msra.mxu0 0.0
    %1266 = vmatprep.subr.mxu0 0.0
    %1267 = vmatpush1.msra.mxu0 0.0
    %1268 = vmatprep.subr.mxu0 0.0
    %1269 = vmatpush1.msra.mxu0 0.0
    %1270 = vmatprep.subr.mxu0 0.0
    %1271 = vmatpush1.msra.mxu0 0.0
    %1272 = vmatprep.subr.mxu0 0.0
    %1273 = vmatpush1.msra.mxu0 0.0
    %1274 = vmatprep.subr.mxu0 0.0
    %1275 = vmatpush1.msra.mxu0 0.0
    %1276 = vmatprep.subr.mxu0 0.0
    %1277 = vmatpush1.msra.mxu0 %v429
    %1278 = vmatprep.subr.mxu0 0.0
    %1279 = vmatpush1.msra.mxu0 %v77
    %1280 = vmatprep.subr.mxu0 0.0
    %1281 = vmatpush1.msra.mxu0 %v72
    %1282 = vmatprep.subr.mxu0 0.0
    %1283 = vmatpush2.msra.mxu0 0.0
    %1284 = vmatprep.subr.mxu0 0.0
    %1285 = vmatpush2.msra.mxu0 0.0
    %1286 = vmatprep.subr.mxu0 0.0
    %1287 = vmatpush2.msra.mxu0 0.0
    %1288 = vmatprep.subr.mxu0 0.0
    %1289 = vmatpush2.msra.mxu0 0.0
    %1290 = vmatprep.subr.mxu0 0.0
    %1291 = vmatpush2.msra.mxu0 0.0
    %1292 = vmatprep.subr.mxu0 0.0
    %1293 = vmatpush2.msra.mxu0 0.0
    %1294 = vmatprep.subr.mxu0 0.0
    %1295 = vmatpush2.msra.mxu0 0.0
    %1296 = vmatprep.subr.mxu0 0.0
    %1297 = vmatpush2.msra.mxu0 0.0
    %1298 = vmatprep.subr.mxu0 0.0
    %1299 = vmatpush2.msra.mxu0 0.0
    %1300 = vmatprep.subr.mxu0 0.0
    %1301 = vmatpush2.msra.mxu0 0.0
    %1302 = vmatprep.subr.mxu0 0.0
    %1303 = vmatpush2.msra.mxu0 0.0
    %1304 = vmatprep.subr.mxu0 0.0
    %1305 = vmatpush2.msra.mxu0 0.0
    %1306 = vmatprep.subr.mxu0 0.0
    %1307 = vmatpush2.msra.mxu0 0.0
    %1308 = vmatprep.subr.mxu0 0.0
    %1309 = vmatpush2.msra.mxu0 0.0
    %1310 = vmatprep.subr.mxu0 0.0
    %1311 = vmatpush2.msra.mxu0 0.0
    %1312 = vmatprep.subr.mxu0 0.0
    %1313 = vmatpush2.msra.mxu0 0.0
    %1314 = vmatprep.mubr.f32.mxu0 0.0
    %1315 = vmatmul.mubr.f32.gmra.mxu0 %v874
    %v1316 = vpop.f32.mrf.mxu0
    %v1317 = vadd.f32 0.0, %v1316
    %v1318 = vpop.f32.mrf.mxu0
    %1319 = vdwg.mxu0
    %1320 = vmatprep.subr.mxu0 0.0
    %1321 = vmatpush1.msra.mxu0 0.0
    %1322 = vmatprep.subr.mxu0 0.0
    %1323 = vmatpush1.msra.mxu0 0.0
    %1324 = vmatprep.subr.mxu0 0.0
    %1325 = vmatpush1.msra.mxu0 0.0
    %1326 = vmatprep.subr.mxu0 0.0
    %1327 = vmatpush1.msra.mxu0 0.0
    %1328 = vmatprep.subr.mxu0 0.0
    %1329 = vmatpush1.msra.mxu0 0.0
    %1330 = vmatprep.subr.mxu0 0.0
    %1331 = vmatpush1.msra.mxu0 0.0
    %1332 = vmatprep.subr.mxu0 0.0
    %1333 = vmatpush1.msra.mxu0 0.0
    %1334 = vmatprep.subr.mxu0 0.0
    %1335 = vmatpush1.msra.mxu0 0.0
    %1336 = vmatprep.subr.mxu0 0.0
    %1337 = vmatpush1.msra.mxu0 0.0
    %1338 = vmatprep.subr.mxu0 0.0
    %1339 = vmatpush1.msra.mxu0 0.0
    %1340 = vmatprep.subr.mxu0 0.0
    %1341 = vmatpush1.msra.mxu0 0.0
    %1342 = vmatprep.subr.mxu0 0.0
    %1343 = vmatpush1.msra.mxu0 0.0
    %1344 = vmatprep.subr.mxu0 0.0
    %1345 = vmatpush1.msra.mxu0 0.0
    %1346 = vmatprep.subr.mxu0 %v650
    %1347 = vmatpush1.msra.mxu0 %v647
    %1348 = vmatprep.subr.mxu0 %v58
    %1349 = vmatpush1.msra.mxu0 %v57
    %1350 = vmatprep.subr.mxu0 %v53
    %1351 = vmatpush1.msra.mxu0 %v52
    %1352 = vmatprep.subr.mxu0 0.0
    %1353 = vmatpush2.msra.mxu0 0.0
    %1354 = vmatprep.subr.mxu0 0.0
    %1355 = vmatpush2.msra.mxu0 0.0
    %1356 = vmatprep.subr.mxu0 0.0
    %1357 = vmatpush2.msra.mxu0 0.0
    %1358 = vmatprep.subr.mxu0 0.0
    %1359 = vmatpush2.msra.mxu0 0.0
    %1360 = vmatprep.subr.mxu0 0.0
    %1361 = vmatpush2.msra.mxu0 0.0
    %1362 = vmatprep.subr.mxu0 0.0
    %1363 = vmatpush2.msra.mxu0 0.0
    %1364 = vmatprep.subr.mxu0 0.0
    %1365 = vmatpush2.msra.mxu0 0.0
    %1366 = vmatprep.subr.mxu0 0.0
    %1367 = vmatpush2.msra.mxu0 0.0
    %1368 = vmatprep.subr.mxu0 0.0
    %1369 = vmatpush2.msra.mxu0 0.0
    %1370 = vmatprep.subr.mxu0 0.0
    %1371 = vmatpush2.msra.mxu0 0.0
    %1372 = vmatprep.subr.mxu0 0.0
    %1373 = vmatpush2.msra.mxu0 0.0
    %1374 = vmatprep.subr.mxu0 0.0
    %1375 = vmatpush2.msra.mxu0 0.0
    %1376 = vmatprep.subr.mxu0 0.0
    %1377 = vmatpush2.msra.mxu0 0.0
    %1378 = vmatprep.subr.mxu0 0.0
    %1379 = vmatpush2.msra.mxu0 0.0
    %1380 = vmatprep.subr.mxu0 0.0
    %1381 = vmatpush2.msra.mxu0 0.0
    %1382 = vmatprep.subr.mxu0 0.0
    %1383 = vmatpush2.msra.mxu0 0.0
    %1384 = vmatprep.mubr.f32.mxu0 0.0
    %1385 = vmatmul.mubr.f32.gmra.mxu0 %v413
    %v1386 = vpop.f32.mrf.mxu0
    %v1387 = vadd.f32 %v1175, %v1386
    %v1388 = vpop.f32.mrf.mxu0
    %v1389 = vadd.f32 %v1177, %v1388
    %1390 = vdwg.mxu0
    %1391 = vmatprep.subr.mxu0 0.0
    %1392 = vmatpush1.msra.mxu0 0.0
    %1393 = vmatprep.subr.mxu0 0.0
    %1394 = vmatpush1.msra.mxu0 0.0
    %1395 = vmatprep.subr.mxu0 0.0
    %1396 = vmatpush1.msra.mxu0 0.0
    %1397 = vmatprep.subr.mxu0 0.0
    %1398 = vmatpush1.msra.mxu0 0.0
    %1399 = vmatprep.subr.mxu0 0.0
    %1400 = vmatpush1.msra.mxu0 0.0
    %1401 = vmatprep.subr.mxu0 0.0
    %1402 = vmatpush1.msra.mxu0 0.0
    %1403 = vmatprep.subr.mxu0 0.0
    %1404 = vmatpush1.msra.mxu0 0.0
    %1405 = vmatprep.subr.mxu0 0.0
    %1406 = vmatpush1.msra.mxu0 0.0
    %1407 = vmatprep.subr.mxu0 0.0
    %1408 = vmatpush1.msra.mxu0 0.0
    %1409 = vmatprep.subr.mxu0 0.0
    %1410 = vmatpush1.msra.mxu0 0.0
    %1411 = vmatprep.subr.mxu0 0.0
    %1412 = vmatpush1.msra.mxu0 0.0
    %1413 = vmatprep.subr.mxu0 0.0
    %1414 = vmatpush1.msra.mxu0 0.0
    %1415 = vmatprep.subr.mxu0 0.0
    %1416 = vmatpush1.msra.mxu0 0.0
    %1417 = vmatprep.subr.mxu0 %v656
    %1418 = vmatpush1.msra.mxu0 %v653
    %1419 = vmatprep.subr.mxu0 %v60
    %1420 = vmatpush1.msra.mxu0 %v59
    %1421 = vmatprep.subr.mxu0 %v55
    %1422 = vmatpush1.msra.mxu0 %v54
    %1423 = vmatprep.subr.mxu0 0.0
    %1424 = vmatpush2.msra.mxu0 0.0
    %1425 = vmatprep.subr.mxu0 0.0
    %1426 = vmatpush2.msra.mxu0 0.0
    %1427 = vmatprep.subr.mxu0 0.0
    %1428 = vmatpush2.msra.mxu0 0.0
    %1429 = vmatprep.subr.mxu0 0.0
    %1430 = vmatpush2.msra.mxu0 0.0
    %1431 = vmatprep.subr.mxu0 0.0
    %1432 = vmatpush2.msra.mxu0 0.0
    %1433 = vmatprep.subr.mxu0 0.0
    %1434 = vmatpush2.msra.mxu0 0.0
    %1435 = vmatprep.subr.mxu0 0.0
    %1436 = vmatpush2.msra.mxu0 0.0
    %1437 = vmatprep.subr.mxu0 0.0
    %1438 = vmatpush2.msra.mxu0 0.0
    %1439 = vmatprep.subr.mxu0 0.0
    %1440 = vmatpush2.msra.mxu0 0.0
    %1441 = vmatprep.subr.mxu0 0.0
    %1442 = vmatpush2.msra.mxu0 0.0
    %1443 = vmatprep.subr.mxu0 0.0
    %1444 = vmatpush2.msra.mxu0 0.0
    %1445 = vmatprep.subr.mxu0 0.0
    %1446 = vmatpush2.msra.mxu0 0.0
    %1447 = vmatprep.subr.mxu0 0.0
    %1448 = vmatpush2.msra.mxu0 0.0
    %1449 = vmatprep.subr.mxu0 0.0
    %1450 = vmatpush2.msra.mxu0 0.0
    %1451 = vmatprep.subr.mxu0 0.0
    %1452 = vmatpush2.msra.mxu0 0.0
    %1453 = vmatprep.subr.mxu0 0.0
    %1454 = vmatpush2.msra.mxu0 0.0
    %1455 = vmatprep.mubr.f32.mxu0 0.0
    %1456 = vmatmul.mubr.f32.gmra.mxu0 %v413
    %v1457 = vpop.f32.mrf.mxu0
    %v1458 = vadd.f32 %v1246, %v1457
    %v1459 = vpop.f32.mrf.mxu0
    %v1460 = vadd.f32 %v1248, %v1459
    %1461 = vdwg.mxu0
    %1462 = vmatprep.subr.mxu0 0.0
    %1463 = vmatpush1.msra.mxu0 0.0
    %1464 = vmatprep.subr.mxu0 0.0
    %1465 = vmatpush1.msra.mxu0 0.0
    %1466 = vmatprep.subr.mxu0 0.0
    %1467 = vmatpush1.msra.mxu0 0.0
    %1468 = vmatprep.subr.mxu0 0.0
    %1469 = vmatpush1.msra.mxu0 0.0
    %1470 = vmatprep.subr.mxu0 0.0
    %1471 = vmatpush1.msra.mxu0 0.0
    %1472 = vmatprep.subr.mxu0 0.0
    %1473 = vmatpush1.msra.mxu0 0.0
    %1474 = vmatprep.subr.mxu0 0.0
    %1475 = vmatpush1.msra.mxu0 0.0
    %1476 = vmatprep.subr.mxu0 0.0
    %1477 = vmatpush1.msra.mxu0 0.0
    %1478 = vmatprep.subr.mxu0 0.0
    %1479 = vmatpush1.msra.mxu0 0.0
    %1480 = vmatprep.subr.mxu0 0.0
    %1481 = vmatpush1.msra.mxu0 0.0
    %1482 = vmatprep.subr.mxu0 0.0
    %1483 = vmatpush1.msra.mxu0 0.0
    %1484 = vmatprep.subr.mxu0 0.0
    %1485 = vmatpush1.msra.mxu0 0.0
    %1486 = vmatprep.subr.mxu0 0.0
    %1487 = vmatpush1.msra.mxu0 0.0
    %1488 = vmatprep.subr.mxu0 0.0
    %1489 = vmatpush1.msra.mxu0 %v659
    %1490 = vmatprep.subr.mxu0 0.0
    %1491 = vmatpush1.msra.mxu0 %v61
    %1492 = vmatprep.subr.mxu0 0.0
    %1493 = vmatpush1.msra.mxu0 %v56
    %1494 = vmatprep.subr.mxu0 0.0
    %1495 = vmatpush2.msra.mxu0 0.0
    %1496 = vmatprep.subr.mxu0 0.0
    %1497 = vmatpush2.msra.mxu0 0.0
    %1498 = vmatprep.subr.mxu0 0.0
    %1499 = vmatpush2.msra.mxu0 0.0
    %1500 = vmatprep.subr.mxu0 0.0
    %1501 = vmatpush2.msra.mxu0 0.0
    %1502 = vmatprep.subr.mxu0 0.0
    %1503 = vmatpush2.msra.mxu0 0.0
    %1504 = vmatprep.subr.mxu0 0.0
    %1505 = vmatpush2.msra.mxu0 0.0
    %1506 = vmatprep.subr.mxu0 0.0
    %1507 = vmatpush2.msra.mxu0 0.0
    %1508 = vmatprep.subr.mxu0 0.0
    %1509 = vmatpush2.msra.mxu0 0.0
    %1510 = vmatprep.subr.mxu0 0.0
    %1511 = vmatpush2.msra.mxu0 0.0
    %1512 = vmatprep.subr.mxu0 0.0
    %1513 = vmatpush2.msra.mxu0 0.0
    %1514 = vmatprep.subr.mxu0 0.0
    %1515 = vmatpush2.msra.mxu0 0.0
    %1516 = vmatprep.subr.mxu0 0.0
    %1517 = vmatpush2.msra.mxu0 0.0
    %1518 = vmatprep.subr.mxu0 0.0
    %1519 = vmatpush2.msra.mxu0 0.0
    %1520 = vmatprep.subr.mxu0 0.0
    %1521 = vmatpush2.msra.mxu0 0.0
    %1522 = vmatprep.subr.mxu0 0.0
    %1523 = vmatpush2.msra.mxu0 0.0
    %1524 = vmatprep.subr.mxu0 0.0
    %1525 = vmatpush2.msra.mxu0 0.0
    %1526 = vmatprep.mubr.f32.mxu0 0.0
    %1527 = vmatmul.mubr.f32.gmra.mxu0 %v413
    %v1528 = vpop.f32.mrf.mxu0
    %v1529 = vadd.f32 %v1317, %v1528
    %v1530 = vpop.f32.mrf.mxu0
    %1531 = vdwg.mxu0
    %v1533 = vsel %vm411, %v410, 0
    %1535 = vmatprep.subr.mxu0 0.0
    %1536 = vmatpush1.msra.mxu0 0.0
    %1537 = vmatprep.subr.mxu0 0.0
    %1538 = vmatpush1.msra.mxu0 0.0
    %1539 = vmatprep.subr.mxu0 0.0
    %1540 = vmatpush1.msra.mxu0 0.0
    %1541 = vmatprep.subr.mxu0 0.0
    %1542 = vmatpush1.msra.mxu0 0.0
    %1543 = vmatprep.subr.mxu0 0.0
    %1544 = vmatpush1.msra.mxu0 0.0
    %1545 = vmatprep.subr.mxu0 0.0
    %1546 = vmatpush1.msra.mxu0 0.0
    %1547 = vmatprep.subr.mxu0 0.0
    %1548 = vmatpush1.msra.mxu0 0.0
    %1549 = vmatprep.subr.mxu0 0.0
    %1550 = vmatpush1.msra.mxu0 0.0
    %1551 = vmatprep.subr.mxu0 0.0
    %1552 = vmatpush1.msra.mxu0 0.0
    %1553 = vmatprep.subr.mxu0 0.0
    %1554 = vmatpush1.msra.mxu0 0.0
    %1555 = vmatprep.subr.mxu0 0.0
    %1556 = vmatpush1.msra.mxu0 0.0
    %1557 = vmatprep.subr.mxu0 0.0
    %1558 = vmatpush1.msra.mxu0 0.0
    %1559 = vmatprep.subr.mxu0 0.0
    %1560 = vmatpush1.msra.mxu0 0.0
    %1561 = vmatprep.subr.mxu0 %v880
    %1562 = vmatpush1.msra.mxu0 %v877
    %1563 = vmatprep.subr.mxu0 %v90
    %1564 = vmatpush1.msra.mxu0 %v89
    %1565 = vmatprep.subr.mxu0 %v85
    %1566 = vmatpush1.msra.mxu0 %v84
    %1567 = vmatprep.subr.mxu0 0.0
    %1568 = vmatpush2.msra.mxu0 0.0
    %1569 = vmatprep.subr.mxu0 0.0
    %1570 = vmatpush2.msra.mxu0 0.0
    %1571 = vmatprep.subr.mxu0 0.0
    %1572 = vmatpush2.msra.mxu0 0.0
    %1573 = vmatprep.subr.mxu0 0.0
    %1574 = vmatpush2.msra.mxu0 0.0
    %1575 = vmatprep.subr.mxu0 0.0
    %1576 = vmatpush2.msra.mxu0 0.0
    %1577 = vmatprep.subr.mxu0 0.0
    %1578 = vmatpush2.msra.mxu0 0.0
    %1579 = vmatprep.subr.mxu0 0.0
    %1580 = vmatpush2.msra.mxu0 0.0
    %1581 = vmatprep.subr.mxu0 0.0
    %1582 = vmatpush2.msra.mxu0 0.0
    %1583 = vmatprep.subr.mxu0 0.0
    %1584 = vmatpush2.msra.mxu0 0.0
    %1585 = vmatprep.subr.mxu0 0.0
    %1586 = vmatpush2.msra.mxu0 0.0
    %1587 = vmatprep.subr.mxu0 0.0
    %1588 = vmatpush2.msra.mxu0 0.0
    %1589 = vmatprep.subr.mxu0 0.0
    %1590 = vmatpush2.msra.mxu0 0.0
    %1591 = vmatprep.subr.mxu0 0.0
    %1592 = vmatpush2.msra.mxu0 0.0
    %1593 = vmatprep.subr.mxu0 0.0
    %1594 = vmatpush2.msra.mxu0 0.0
    %1595 = vmatprep.subr.mxu0 0.0
    %1596 = vmatpush2.msra.mxu0 0.0
    %1597 = vmatprep.subr.mxu0 0.0
    %1598 = vmatpush2.msra.mxu0 0.0
    %1599 = vmatprep.mubr.f32.mxu0 0.0
    %1600 = vmatmul.mubr.f32.gmra.mxu0 %v1533
    %v1601 = vpop.f32.mrf.mxu0
    %v1602 = vadd.f32 0.0, %v1601
    %v1603 = vpop.f32.mrf.mxu0
    %v1604 = vadd.f32 0.0, %v1603
    %1605 = vdwg.mxu0
    %1606 = vmatprep.subr.mxu0 0.0
    %1607 = vmatpush1.msra.mxu0 0.0
    %1608 = vmatprep.subr.mxu0 0.0
    %1609 = vmatpush1.msra.mxu0 0.0
    %1610 = vmatprep.subr.mxu0 0.0
    %1611 = vmatpush1.msra.mxu0 0.0
    %1612 = vmatprep.subr.mxu0 0.0
    %1613 = vmatpush1.msra.mxu0 0.0
    %1614 = vmatprep.subr.mxu0 0.0
    %1615 = vmatpush1.msra.mxu0 0.0
    %1616 = vmatprep.subr.mxu0 0.0
    %1617 = vmatpush1.msra.mxu0 0.0
    %1618 = vmatprep.subr.mxu0 0.0
    %1619 = vmatpush1.msra.mxu0 0.0
    %1620 = vmatprep.subr.mxu0 0.0
    %1621 = vmatpush1.msra.mxu0 0.0
    %1622 = vmatprep.subr.mxu0 0.0
    %1623 = vmatpush1.msra.mxu0 0.0
    %1624 = vmatprep.subr.mxu0 0.0
    %1625 = vmatpush1.msra.mxu0 0.0
    %1626 = vmatprep.subr.mxu0 0.0
    %1627 = vmatpush1.msra.mxu0 0.0
    %1628 = vmatprep.subr.mxu0 0.0
    %1629 = vmatpush1.msra.mxu0 0.0
    %1630 = vmatprep.subr.mxu0 0.0
    %1631 = vmatpush1.msra.mxu0 0.0
    %1632 = vmatprep.subr.mxu0 %v886
    %1633 = vmatpush1.msra.mxu0 %v883
    %1634 = vmatprep.subr.mxu0 %v92
    %1635 = vmatpush1.msra.mxu0 %v91
    %1636 = vmatprep.subr.mxu0 %v87
    %1637 = vmatpush1.msra.mxu0 %v86
    %1638 = vmatprep.subr.mxu0 0.0
    %1639 = vmatpush2.msra.mxu0 0.0
    %1640 = vmatprep.subr.mxu0 0.0
    %1641 = vmatpush2.msra.mxu0 0.0
    %1642 = vmatprep.subr.mxu0 0.0
    %1643 = vmatpush2.msra.mxu0 0.0
    %1644 = vmatprep.subr.mxu0 0.0
    %1645 = vmatpush2.msra.mxu0 0.0
    %1646 = vmatprep.subr.mxu0 0.0
    %1647 = vmatpush2.msra.mxu0 0.0
    %1648 = vmatprep.subr.mxu0 0.0
    %1649 = vmatpush2.msra.mxu0 0.0
    %1650 = vmatprep.subr.mxu0 0.0
    %1651 = vmatpush2.msra.mxu0 0.0
    %1652 = vmatprep.subr.mxu0 0.0
    %1653 = vmatpush2.msra.mxu0 0.0
    %1654 = vmatprep.subr.mxu0 0.0
    %1655 = vmatpush2.msra.mxu0 0.0
    %1656 = vmatprep.subr.mxu0 0.0
    %1657 = vmatpush2.msra.mxu0 0.0
    %1658 = vmatprep.subr.mxu0 0.0
    %1659 = vmatpush2.msra.mxu0 0.0
    %1660 = vmatprep.subr.mxu0 0.0
    %1661 = vmatpush2.msra.mxu0 0.0
    %1662 = vmatprep.subr.mxu0 0.0
    %1663 = vmatpush2.msra.mxu0 0.0
    %1664 = vmatprep.subr.mxu0 0.0
    %1665 = vmatpush2.msra.mxu0 0.0
    %1666 = vmatprep.subr.mxu0 0.0
    %1667 = vmatpush2.msra.mxu0 0.0
    %1668 = vmatprep.subr.mxu0 0.0
    %1669 = vmatpush2.msra.mxu0 0.0
    %1670 = vmatprep.mubr.f32.mxu0 0.0
    %1671 = vmatmul.mubr.f32.gmra.mxu0 %v1533
    %v1672 = vpop.f32.mrf.mxu0
    %v1673 = vadd.f32 0.0, %v1672
    %v1674 = vpop.f32.mrf.mxu0
    %v1675 = vadd.f32 0.0, %v1674
    %1676 = vdwg.mxu0
    %1677 = vmatprep.subr.mxu0 0.0
    %1678 = vmatpush1.msra.mxu0 0.0
    %1679 = vmatprep.subr.mxu0 0.0
    %1680 = vmatpush1.msra.mxu0 0.0
    %1681 = vmatprep.subr.mxu0 0.0
    %1682 = vmatpush1.msra.mxu0 0.0
    %1683 = vmatprep.subr.mxu0 0.0
    %1684 = vmatpush1.msra.mxu0 0.0
    %1685 = vmatprep.subr.mxu0 0.0
    %1686 = vmatpush1.msra.mxu0 0.0
    %1687 = vmatprep.subr.mxu0 0.0
    %1688 = vmatpush1.msra.mxu0 0.0
    %1689 = vmatprep.subr.mxu0 0.0
    %1690 = vmatpush1.msra.mxu0 0.0
    %1691 = vmatprep.subr.mxu0 0.0
    %1692 = vmatpush1.msra.mxu0 0.0
    %1693 = vmatprep.subr.mxu0 0.0
    %1694 = vmatpush1.msra.mxu0 0.0
    %1695 = vmatprep.subr.mxu0 0.0
    %1696 = vmatpush1.msra.mxu0 0.0
    %1697 = vmatprep.subr.mxu0 0.0
    %1698 = vmatpush1.msra.mxu0 0.0
    %1699 = vmatprep.subr.mxu0 0.0
    %1700 = vmatpush1.msra.mxu0 0.0
    %1701 = vmatprep.subr.mxu0 0.0
    %1702 = vmatpush1.msra.mxu0 0.0
    %1703 = vmatprep.subr.mxu0 0.0
    %1704 = vmatpush1.msra.mxu0 %v889
    %1705 = vmatprep.subr.mxu0 0.0
    %1706 = vmatpush1.msra.mxu0 %v93
    %1707 = vmatprep.subr.mxu0 0.0
    %1708 = vmatpush1.msra.mxu0 %v88
    %1709 = vmatprep.subr.mxu0 0.0
    %1710 = vmatpush2.msra.mxu0 0.0
    %1711 = vmatprep.subr.mxu0 0.0
    %1712 = vmatpush2.msra.mxu0 0.0
    %1713 = vmatprep.subr.mxu0 0.0
    %1714 = vmatpush2.msra.mxu0 0.0
    %1715 = vmatprep.subr.mxu0 0.0
    %1716 = vmatpush2.msra.mxu0 0.0
    %1717 = vmatprep.subr.mxu0 0.0
    %1718 = vmatpush2.msra.mxu0 0.0
    %1719 = vmatprep.subr.mxu0 0.0
    %1720 = vmatpush2.msra.mxu0 0.0
    %1721 = vmatprep.subr.mxu0 0.0
    %1722 = vmatpush2.msra.mxu0 0.0
    %1723 = vmatprep.subr.mxu0 0.0
    %1724 = vmatpush2.msra.mxu0 0.0
    %1725 = vmatprep.subr.mxu0 0.0
    %1726 = vmatpush2.msra.mxu0 0.0
    %1727 = vmatprep.subr.mxu0 0.0
    %1728 = vmatpush2.msra.mxu0 0.0
    %1729 = vmatprep.subr.mxu0 0.0
    %1730 = vmatpush2.msra.mxu0 0.0
    %1731 = vmatprep.subr.mxu0 0.0
    %1732 = vmatpush2.msra.mxu0 0.0
    %1733 = vmatprep.subr.mxu0 0.0
    %1734 = vmatpush2.msra.mxu0 0.0
    %1735 = vmatprep.subr.mxu0 0.0
    %1736 = vmatpush2.msra.mxu0 0.0
    %1737 = vmatprep.subr.mxu0 0.0
    %1738 = vmatpush2.msra.mxu0 0.0
    %1739 = vmatprep.subr.mxu0 0.0
    %1740 = vmatpush2.msra.mxu0 0.0
    %1741 = vmatprep.mubr.f32.mxu0 0.0
    %1742 = vmatmul.mubr.f32.gmra.mxu0 %v1533
    %v1743 = vpop.f32.mrf.mxu0
    %v1744 = vadd.f32 0.0, %v1743
    %v1745 = vpop.f32.mrf.mxu0
    %1746 = vdwg.mxu0
    %v1747 = vadd.f32 %v1387, %v1602
    %v1748 = vadd.f32 %v1389, %v1604
    %v1749 = vadd.f32 %v1458, %v1673
    %v1750 = vadd.f32 %v1460, %v1675
    %v1751 = vadd.f32 %v1529, %v1744
    %v1752 = vmax.f32 %v1103, %v1747
    %v1753 = vmax.f32 %v1104, %v1748
    %v1754 = vmax.f32 %v1105, %v1749
    %v1755 = vmax.f32 %v1106, %v1750
    %v1756 = vmax.f32 %v1107, %v1751
    %1760 = vrot.lane.b32.xlu0 %v1754, 114
    %v1761 = vpop.permute.xlu0 %1760
    %1762 = vrot.lane.b32.xlu0 %v1755, 114
    %v1763 = vpop.permute.xlu0 %1762
    %1764 = vrot.lane.b32.xlu0 %v1756, 114
    %v1765 = vpop.permute.xlu0 %1764
    %vm1766 = vcmask 932864
    %v1767 = vsel %vm1766, %v1761, %v1763
    %v1768 = vsel %vm1766, %v1763, %v1765
    %v1772 = vmax.f32 %v1752, %v1767
    %v1773 = vmax.f32 %v1753, %v1768
    %v1774 = vmax.f32 %v1754, %v1765
    %v1775 = vld [vmem:[%s3] sm:$0x7]
    %v1777 = vlaneseq
    %v1778 = vshrl.u32 %v1777, 7
    %v1779 = vsub.s32 0, %v1778
    %v1780 = vrot.slane %v1775, %v1779
    %v1781 = vlaneseq
    %v1782 = vshrl.u32 %v1781, 7
    %v1783 = vsub.s32 1, %v1782
    %v1784 = vrot.slane %v1775, %v1783
    %v1785 = vlaneseq
    %v1786 = vshrl.u32 %v1785, 7
    %v1787 = vsub.s32 2, %v1786
    %v1788 = vrot.slane %v1775, %v1787
    %v1792 = vadd.f32 %v1772, %v1780
    %v1793 = vadd.f32 %v1773, %v1784
    %v1794 = vadd.f32 %v1774, %v1788
    %v1795 = vmax.f32 %v1792, 0.0
    %v1796 = vmax.f32 %v1793, 0.0
    %v1797 = vmax.f32 %v1794, 0.0
    %v1801 = vrot.slane %v1795, 7
    %v1802 = vrot.slane %v1796, 7
    %v1803 = vrot.slane %v1797, 7
    %1807 = vst [vmem:[#allocation2] sm:$0x3e] %v1801
    %1808 = vst [vmem:[#allocation2 + $0x8] sm:$0x3e] %v1802
    %vm1809 = vcmask 111617
    %1810 = vst.msk [vmem:[#allocation2 + $0x10] sm:$0x3e] %vm1809, %v1803
    %v1811 = vld [vmem:[#allocation2] sm:$0x1f]
    %v1812 = vld [vmem:[#allocation2 + $0x8] sm:$0x1f]
    %v1813 = vld [vmem:[#allocation2 + $0x10] sm:$0x1f]
    %v1814 = vld [vmem:[#allocation2] sm:$0x3e]
    %v1815 = vld [vmem:[#allocation2 + $0x8] sm:$0x3e]
    %v1816 = vld [vmem:[#allocation2 + $0x10] sm:$0x3e]
    %v1820 = vrot.slane %v1814, 1
    %v1821 = vrot.slane %v1815, 1
    %v1822 = vrot.slane %v1816, 1
    %vm1825 = vcmask 113664
    %v1826 = vsel %vm1825, %v1822, 0
    %v1829 = vsel %vm415, %v301, 0
    %v1832 = vsel %vm415, %v302, 0
    %v1835 = vsel %vm415, %v303, 0
    %1837 = vmatprep.subr.mxu0 %v248
    %1838 = vmatpush1.msra.mxu0 %v247
    %1839 = vmatprep.subr.mxu0 %v245
    %1840 = vmatpush1.msra.mxu0 %v244
    %1841 = vmatprep.subr.mxu0 %v242
    %1842 = vmatpush1.msra.mxu0 %v241
    %1843 = vmatprep.subr.mxu0 %v239
    %1844 = vmatpush1.msra.mxu0 %v238
    %1845 = vmatprep.subr.mxu0 %v236
    %1846 = vmatpush1.msra.mxu0 %v235
    %1847 = vmatprep.subr.mxu0 %v233
    %1848 = vmatpush1.msra.mxu0 %v232
    %1849 = vmatprep.subr.mxu0 %v230
    %1850 = vmatpush1.msra.mxu0 %v229
    %1851 = vmatprep.subr.mxu0 %v227
    %1852 = vmatpush1.msra.mxu0 %v226
    %1853 = vmatprep.subr.mxu0 %v224
    %1854 = vmatpush1.msra.mxu0 %v223
    %1855 = vmatprep.subr.mxu0 %v221
    %1856 = vmatpush1.msra.mxu0 %v220
    %1857 = vmatprep.subr.mxu0 %v218
    %1858 = vmatpush1.msra.mxu0 %v217
    %1859 = vmatprep.subr.mxu0 %v215
    %1860 = vmatpush1.msra.mxu0 %v214
    %1861 = vmatprep.subr.mxu0 %v212
    %1862 = vmatpush1.msra.mxu0 %v211
    %1863 = vmatprep.subr.mxu0 %v209
    %1864 = vmatpush1.msra.mxu0 %v208
    %1865 = vmatprep.subr.mxu0 %v206
    %1866 = vmatpush1.msra.mxu0 %v205
    %1867 = vmatprep.subr.mxu0 %v203
    %1868 = vmatpush1.msra.mxu0 %v202
    %1869 = vmatprep.subr.mxu0 %v296
    %1870 = vmatpush2.msra.mxu0 %v295
    %1871 = vmatprep.subr.mxu0 %v293
    %1872 = vmatpush2.msra.mxu0 %v292
    %1873 = vmatprep.subr.mxu0 %v290
    %1874 = vmatpush2.msra.mxu0 %v289
    %1875 = vmatprep.subr.mxu0 %v287
    %1876 = vmatpush2.msra.mxu0 %v286
    %1877 = vmatprep.subr.mxu0 %v284
    %1878 = vmatpush2.msra.mxu0 %v283
    %1879 = vmatprep.subr.mxu0 %v281
    %1880 = vmatpush2.msra.mxu0 %v280
    %1881 = vmatprep.subr.mxu0 %v278
    %1882 = vmatpush2.msra.mxu0 %v277
    %1883 = vmatprep.subr.mxu0 %v275
    %1884 = vmatpush2.msra.mxu0 %v274
    %1885 = vmatprep.subr.mxu0 %v272
    %1886 = vmatpush2.msra.mxu0 %v271
    %1887 = vmatprep.subr.mxu0 %v269
    %1888 = vmatpush2.msra.mxu0 %v268
    %1889 = vmatprep.subr.mxu0 %v266
    %1890 = vmatpush2.msra.mxu0 %v265
    %1891 = vmatprep.subr.mxu0 %v263
    %1892 = vmatpush2.msra.mxu0 %v262
    %1893 = vmatprep.subr.mxu0 %v260
    %1894 = vmatpush2.msra.mxu0 %v259
    %1895 = vmatprep.subr.mxu0 %v257
    %1896 = vmatpush2.msra.mxu0 %v256
    %1897 = vmatprep.subr.mxu0 %v254
    %1898 = vmatpush2.msra.mxu0 %v253
    %1899 = vmatprep.subr.mxu0 %v251
    %1900 = vmatpush2.msra.mxu0 %v250
    %1901 = vmatprep.mubr.f32.mxu0 %v1821
    %1902 = vmatmul.mubr.f32.gmra.mxu0 %v1820
    %v1903 = vpop.f32.mrf.mxu0
    %v1904 = vadd.f32 0.0, %v1903
    %v1905 = vpop.f32.mrf.mxu0
    %v1906 = vadd.f32 0.0, %v1905
    %1907 = vdwg.mxu0
    %1908 = vmatprep.subr.mxu0 0.0
    %1909 = vmatpush1.msra.mxu0 0.0
    %1910 = vmatprep.subr.mxu0 0.0
    %1911 = vmatpush1.msra.mxu0 0.0
    %1912 = vmatprep.subr.mxu0 0.0
    %1913 = vmatpush1.msra.mxu0 0.0
    %1914 = vmatprep.subr.mxu0 0.0
    %1915 = vmatpush1.msra.mxu0 0.0
    %1916 = vmatprep.subr.mxu0 0.0
    %1917 = vmatpush1.msra.mxu0 0.0
    %1918 = vmatprep.subr.mxu0 0.0
    %1919 = vmatpush1.msra.mxu0 0.0
    %1920 = vmatprep.subr.mxu0 0.0
    %1921 = vmatpush1.msra.mxu0 0.0
    %1922 = vmatprep.subr.mxu0 0.0
    %1923 = vmatpush1.msra.mxu0 0.0
    %1924 = vmatprep.subr.mxu0 0.0
    %1925 = vmatpush1.msra.mxu0 0.0
    %1926 = vmatprep.subr.mxu0 0.0
    %1927 = vmatpush1.msra.mxu0 0.0
    %1928 = vmatprep.subr.mxu0 0.0
    %1929 = vmatpush1.msra.mxu0 0.0
    %1930 = vmatprep.subr.mxu0 0.0
    %1931 = vmatpush1.msra.mxu0 0.0
    %1932 = vmatprep.subr.mxu0 0.0
    %1933 = vmatpush1.msra.mxu0 0.0
    %1934 = vmatprep.subr.mxu0 0.0
    %1935 = vmatpush1.msra.mxu0 0.0
    %1936 = vmatprep.subr.mxu0 %v1832
    %1937 = vmatpush1.msra.mxu0 %v1829
    %1938 = vmatprep.subr.mxu0 %v299
    %1939 = vmatpush1.msra.mxu0 %v298
    %1940 = vmatprep.subr.mxu0 0.0
    %1941 = vmatpush2.msra.mxu0 0.0
    %1942 = vmatprep.subr.mxu0 0.0
    %1943 = vmatpush2.msra.mxu0 0.0
    %1944 = vmatprep.subr.mxu0 0.0
    %1945 = vmatpush2.msra.mxu0 0.0
    %1946 = vmatprep.subr.mxu0 0.0
    %1947 = vmatpush2.msra.mxu0 0.0
    %1948 = vmatprep.subr.mxu0 0.0
    %1949 = vmatpush2.msra.mxu0 0.0
    %1950 = vmatprep.subr.mxu0 0.0
    %1951 = vmatpush2.msra.mxu0 0.0
    %1952 = vmatprep.subr.mxu0 0.0
    %1953 = vmatpush2.msra.mxu0 0.0
    %1954 = vmatprep.subr.mxu0 0.0
    %1955 = vmatpush2.msra.mxu0 0.0
    %1956 = vmatprep.subr.mxu0 0.0
    %1957 = vmatpush2.msra.mxu0 0.0
    %1958 = vmatprep.subr.mxu0 0.0
    %1959 = vmatpush2.msra.mxu0 0.0
    %1960 = vmatprep.subr.mxu0 0.0
    %1961 = vmatpush2.msra.mxu0 0.0
    %1962 = vmatprep.subr.mxu0 0.0
    %1963 = vmatpush2.msra.mxu0 0.0
    %1964 = vmatprep.subr.mxu0 0.0
    %1965 = vmatpush2.msra.mxu0 0.0
    %1966 = vmatprep.subr.mxu0 0.0
    %1967 = vmatpush2.msra.mxu0 0.0
    %1968 = vmatprep.subr.mxu0 0.0
    %1969 = vmatpush2.msra.mxu0 0.0
    %1970 = vmatprep.subr.mxu0 0.0
    %1971 = vmatpush2.msra.mxu0 0.0
    %1972 = vmatprep.mubr.f32.mxu0 0.0
    %1973 = vmatmul.mubr.f32.gmra.mxu0 %v1826
    %v1974 = vpop.f32.mrf.mxu0
    %v1975 = vadd.f32 %v1904, %v1974
    %v1976 = vpop.f32.mrf.mxu0
    %v1977 = vadd.f32 %v1906, %v1976
    %1978 = vdwg.mxu0
    %1979 = vmatprep.subr.mxu0 0.0
    %1980 = vmatpush1.msra.mxu0 %v249
    %1981 = vmatprep.subr.mxu0 0.0
    %1982 = vmatpush1.msra.mxu0 %v246
    %1983 = vmatprep.subr.mxu0 0.0
    %1984 = vmatpush1.msra.mxu0 %v243
    %1985 = vmatprep.subr.mxu0 0.0
    %1986 = vmatpush1.msra.mxu0 %v240
    %1987 = vmatprep.subr.mxu0 0.0
    %1988 = vmatpush1.msra.mxu0 %v237
    %1989 = vmatprep.subr.mxu0 0.0
    %1990 = vmatpush1.msra.mxu0 %v234
    %1991 = vmatprep.subr.mxu0 0.0
    %1992 = vmatpush1.msra.mxu0 %v231
    %1993 = vmatprep.subr.mxu0 0.0
    %1994 = vmatpush1.msra.mxu0 %v228
    %1995 = vmatprep.subr.mxu0 0.0
    %1996 = vmatpush1.msra.mxu0 %v225
    %1997 = vmatprep.subr.mxu0 0.0
    %1998 = vmatpush1.msra.mxu0 %v222
    %1999 = vmatprep.subr.mxu0 0.0
    %2000 = vmatpush1.msra.mxu0 %v219
    %2001 = vmatprep.subr.mxu0 0.0
    %2002 = vmatpush1.msra.mxu0 %v216
    %2003 = vmatprep.subr.mxu0 0.0
    %2004 = vmatpush1.msra.mxu0 %v213
    %2005 = vmatprep.subr.mxu0 0.0
    %2006 = vmatpush1.msra.mxu0 %v210
    %2007 = vmatprep.subr.mxu0 0.0
    %2008 = vmatpush1.msra.mxu0 %v207
    %2009 = vmatprep.subr.mxu0 0.0
    %2010 = vmatpush1.msra.mxu0 %v204
    %2011 = vmatprep.subr.mxu0 0.0
    %2012 = vmatpush2.msra.mxu0 %v297
    %2013 = vmatprep.subr.mxu0 0.0
    %2014 = vmatpush2.msra.mxu0 %v294
    %2015 = vmatprep.subr.mxu0 0.0
    %2016 = vmatpush2.msra.mxu0 %v291
    %2017 = vmatprep.subr.mxu0 0.0
    %2018 = vmatpush2.msra.mxu0 %v288
    %2019 = vmatprep.subr.mxu0 0.0
    %2020 = vmatpush2.msra.mxu0 %v285
    %2021 = vmatprep.subr.mxu0 0.0
    %2022 = vmatpush2.msra.mxu0 %v282
    %2023 = vmatprep.subr.mxu0 0.0
    %2024 = vmatpush2.msra.mxu0 %v279
    %2025 = vmatprep.subr.mxu0 0.0
    %2026 = vmatpush2.msra.mxu0 %v276
    %2027 = vmatprep.subr.mxu0 0.0
    %2028 = vmatpush2.msra.mxu0 %v273
    %2029 = vmatprep.subr.mxu0 0.0
    %2030 = vmatpush2.msra.mxu0 %v270
    %2031 = vmatprep.subr.mxu0 0.0
    %2032 = vmatpush2.msra.mxu0 %v267
    %2033 = vmatprep.subr.mxu0 0.0
    %2034 = vmatpush2.msra.mxu0 %v264
    %2035 = vmatprep.subr.mxu0 0.0
    %2036 = vmatpush2.msra.mxu0 %v261
    %2037 = vmatprep.subr.mxu0 0.0
    %2038 = vmatpush2.msra.mxu0 %v258
    %2039 = vmatprep.subr.mxu0 0.0
    %2040 = vmatpush2.msra.mxu0 %v255
    %2041 = vmatprep.subr.mxu0 0.0
    %2042 = vmatpush2.msra.mxu0 %v252
    %2043 = vmatprep.mubr.f32.mxu0 %v1821
    %2044 = vmatmul.mubr.f32.gmra.mxu0 %v1820
    %v2045 = vpop.f32.mrf.mxu0
    %v2046 = vadd.f32 0.0, %v2045
    %v2047 = vpop.f32.mrf.mxu0
    %2048 = vdwg.mxu0
    %2049 = vmatprep.subr.mxu0 0.0
    %2050 = vmatpush1.msra.mxu0 0.0
    %2051 = vmatprep.subr.mxu0 0.0
    %2052 = vmatpush1.msra.mxu0 0.0
    %2053 = vmatprep.subr.mxu0 0.0
    %2054 = vmatpush1.msra.mxu0 0.0
    %2055 = vmatprep.subr.mxu0 0.0
    %2056 = vmatpush1.msra.mxu0 0.0
    %2057 = vmatprep.subr.mxu0 0.0
    %2058 = vmatpush1.msra.mxu0 0.0
    %2059 = vmatprep.subr.mxu0 0.0
    %2060 = vmatpush1.msra.mxu0 0.0
    %2061 = vmatprep.subr.mxu0 0.0
    %2062 = vmatpush1.msra.mxu0 0.0
    %2063 = vmatprep.subr.mxu0 0.0
    %2064 = vmatpush1.msra.mxu0 0.0
    %2065 = vmatprep.subr.mxu0 0.0
    %2066 = vmatpush1.msra.mxu0 0.0
    %2067 = vmatprep.subr.mxu0 0.0
    %2068 = vmatpush1.msra.mxu0 0.0
    %2069 = vmatprep.subr.mxu0 0.0
    %2070 = vmatpush1.msra.mxu0 0.0
    %2071 = vmatprep.subr.mxu0 0.0
    %2072 = vmatpush1.msra.mxu0 0.0
    %2073 = vmatprep.subr.mxu0 0.0
    %2074 = vmatpush1.msra.mxu0 0.0
    %2075 = vmatprep.subr.mxu0 0.0
    %2076 = vmatpush1.msra.mxu0 0.0
    %2077 = vmatprep.subr.mxu0 0.0
    %2078 = vmatpush1.msra.mxu0 %v1835
    %2079 = vmatprep.subr.mxu0 0.0
    %2080 = vmatpush1.msra.mxu0 %v300
    %2081 = vmatprep.subr.mxu0 0.0
    %2082 = vmatpush2.msra.mxu0 0.0
    %2083 = vmatprep.subr.mxu0 0.0
    %2084 = vmatpush2.msra.mxu0 0.0
    %2085 = vmatprep.subr.mxu0 0.0
    %2086 = vmatpush2.msra.mxu0 0.0
    %2087 = vmatprep.subr.mxu0 0.0
    %2088 = vmatpush2.msra.mxu0 0.0
    %2089 = vmatprep.subr.mxu0 0.0
    %2090 = vmatpush2.msra.mxu0 0.0
    %2091 = vmatprep.subr.mxu0 0.0
    %2092 = vmatpush2.msra.mxu0 0.0
    %2093 = vmatprep.subr.mxu0 0.0
    %2094 = vmatpush2.msra.mxu0 0.0
    %2095 = vmatprep.subr.mxu0 0.0
    %2096 = vmatpush2.msra.mxu0 0.0
    %2097 = vmatprep.subr.mxu0 0.0
    %2098 = vmatpush2.msra.mxu0 0.0
    %2099 = vmatprep.subr.mxu0 0.0
    %2100 = vmatpush2.msra.mxu0 0.0
    %2101 = vmatprep.subr.mxu0 0.0
    %2102 = vmatpush2.msra.mxu0 0.0
    %2103 = vmatprep.subr.mxu0 0.0
    %2104 = vmatpush2.msra.mxu0 0.0
    %2105 = vmatprep.subr.mxu0 0.0
    %2106 = vmatpush2.msra.mxu0 0.0
    %2107 = vmatprep.subr.mxu0 0.0
    %2108 = vmatpush2.msra.mxu0 0.0
    %2109 = vmatprep.subr.mxu0 0.0
    %2110 = vmatpush2.msra.mxu0 0.0
    %2111 = vmatprep.subr.mxu0 0.0
    %2112 = vmatpush2.msra.mxu0 0.0
    %2113 = vmatprep.mubr.f32.mxu0 0.0
    %2114 = vmatmul.mubr.f32.gmra.mxu0 %v1826
    %v2115 = vpop.f32.mrf.mxu0
    %v2116 = vadd.f32 %v2046, %v2115
    %v2117 = vpop.f32.mrf.mxu0
    %2118 = vdwg.mxu0
    %v2120 = vsel %vm1825, %v1813, 0
    %v2123 = vsel %vm415, %v198, 0
    %v2126 = vsel %vm415, %v199, 0
    %v2129 = vsel %vm415, %v200, 0
    %2131 = vmatprep.subr.mxu0 %v145
    %2132 = vmatpush1.msra.mxu0 %v144
    %2133 = vmatprep.subr.mxu0 %v142
    %2134 = vmatpush1.msra.mxu0 %v141
    %2135 = vmatprep.subr.mxu0 %v139
    %2136 = vmatpush1.msra.mxu0 %v138
    %2137 = vmatprep.subr.mxu0 %v136
    %2138 = vmatpush1.msra.mxu0 %v135
    %2139 = vmatprep.subr.mxu0 %v133
    %2140 = vmatpush1.msra.mxu0 %v132
    %2141 = vmatprep.subr.mxu0 %v130
    %2142 = vmatpush1.msra.mxu0 %v129
    %2143 = vmatprep.subr.mxu0 %v127
    %2144 = vmatpush1.msra.mxu0 %v126
    %2145 = vmatprep.subr.mxu0 %v124
    %2146 = vmatpush1.msra.mxu0 %v123
    %2147 = vmatprep.subr.mxu0 %v121
    %2148 = vmatpush1.msra.mxu0 %v120
    %2149 = vmatprep.subr.mxu0 %v118
    %2150 = vmatpush1.msra.mxu0 %v117
    %2151 = vmatprep.subr.mxu0 %v115
    %2152 = vmatpush1.msra.mxu0 %v114
    %2153 = vmatprep.subr.mxu0 %v112
    %2154 = vmatpush1.msra.mxu0 %v111
    %2155 = vmatprep.subr.mxu0 %v109
    %2156 = vmatpush1.msra.mxu0 %v108
    %2157 = vmatprep.subr.mxu0 %v106
    %2158 = vmatpush1.msra.mxu0 %v105
    %2159 = vmatprep.subr.mxu0 %v103
    %2160 = vmatpush1.msra.mxu0 %v102
    %2161 = vmatprep.subr.mxu0 %v100
    %2162 = vmatpush1.msra.mxu0 %v99
    %2163 = vmatprep.subr.mxu0 %v193
    %2164 = vmatpush2.msra.mxu0 %v192
    %2165 = vmatprep.subr.mxu0 %v190
    %2166 = vmatpush2.msra.mxu0 %v189
    %2167 = vmatprep.subr.mxu0 %v187
    %2168 = vmatpush2.msra.mxu0 %v186
    %2169 = vmatprep.subr.mxu0 %v184
    %2170 = vmatpush2.msra.mxu0 %v183
    %2171 = vmatprep.subr.mxu0 %v181
    %2172 = vmatpush2.msra.mxu0 %v180
    %2173 = vmatprep.subr.mxu0 %v178
    %2174 = vmatpush2.msra.mxu0 %v177
    %2175 = vmatprep.subr.mxu0 %v175
    %2176 = vmatpush2.msra.mxu0 %v174
    %2177 = vmatprep.subr.mxu0 %v172
    %2178 = vmatpush2.msra.mxu0 %v171
    %2179 = vmatprep.subr.mxu0 %v169
    %2180 = vmatpush2.msra.mxu0 %v168
    %2181 = vmatprep.subr.mxu0 %v166
    %2182 = vmatpush2.msra.mxu0 %v165
    %2183 = vmatprep.subr.mxu0 %v163
    %2184 = vmatpush2.msra.mxu0 %v162
    %2185 = vmatprep.subr.mxu0 %v160
    %2186 = vmatpush2.msra.mxu0 %v159
    %2187 = vmatprep.subr.mxu0 %v157
    %2188 = vmatpush2.msra.mxu0 %v156
    %2189 = vmatprep.subr.mxu0 %v154
    %2190 = vmatpush2.msra.mxu0 %v153
    %2191 = vmatprep.subr.mxu0 %v151
    %2192 = vmatpush2.msra.mxu0 %v150
    %2193 = vmatprep.subr.mxu0 %v148
    %2194 = vmatpush2.msra.mxu0 %v147
    %2195 = vmatprep.mubr.f32.mxu0 %v1812
    %2196 = vmatmul.mubr.f32.gmra.mxu0 %v1811
    %v2197 = vpop.f32.mrf.mxu0
    %v2198 = vadd.f32 %v1975, %v2197
    %v2199 = vpop.f32.mrf.mxu0
    %v2200 = vadd.f32 %v1977, %v2199
    %2201 = vdwg.mxu0
    %2202 = vmatprep.subr.mxu0 0.0
    %2203 = vmatpush1.msra.mxu0 0.0
    %2204 = vmatprep.subr.mxu0 0.0
    %2205 = vmatpush1.msra.mxu0 0.0
    %2206 = vmatprep.subr.mxu0 0.0
    %2207 = vmatpush1.msra.mxu0 0.0
    %2208 = vmatprep.subr.mxu0 0.0
    %2209 = vmatpush1.msra.mxu0 0.0
    %2210 = vmatprep.subr.mxu0 0.0
    %2211 = vmatpush1.msra.mxu0 0.0
    %2212 = vmatprep.subr.mxu0 0.0
    %2213 = vmatpush1.msra.mxu0 0.0
    %2214 = vmatprep.subr.mxu0 0.0
    %2215 = vmatpush1.msra.mxu0 0.0
    %2216 = vmatprep.subr.mxu0 0.0
    %2217 = vmatpush1.msra.mxu0 0.0
    %2218 = vmatprep.subr.mxu0 0.0
    %2219 = vmatpush1.msra.mxu0 0.0
    %2220 = vmatprep.subr.mxu0 0.0
    %2221 = vmatpush1.msra.mxu0 0.0
    %2222 = vmatprep.subr.mxu0 0.0
    %2223 = vmatpush1.msra.mxu0 0.0
    %2224 = vmatprep.subr.mxu0 0.0
    %2225 = vmatpush1.msra.mxu0 0.0
    %2226 = vmatprep.subr.mxu0 0.0
    %2227 = vmatpush1.msra.mxu0 0.0
    %2228 = vmatprep.subr.mxu0 0.0
    %2229 = vmatpush1.msra.mxu0 0.0
    %2230 = vmatprep.subr.mxu0 %v2126
    %2231 = vmatpush1.msra.mxu0 %v2123
    %2232 = vmatprep.subr.mxu0 %v196
    %2233 = vmatpush1.msra.mxu0 %v195
    %2234 = vmatprep.subr.mxu0 0.0
    %2235 = vmatpush2.msra.mxu0 0.0
    %2236 = vmatprep.subr.mxu0 0.0
    %2237 = vmatpush2.msra.mxu0 0.0
    %2238 = vmatprep.subr.mxu0 0.0
    %2239 = vmatpush2.msra.mxu0 0.0
    %2240 = vmatprep.subr.mxu0 0.0
    %2241 = vmatpush2.msra.mxu0 0.0
    %2242 = vmatprep.subr.mxu0 0.0
    %2243 = vmatpush2.msra.mxu0 0.0
    %2244 = vmatprep.subr.mxu0 0.0
    %2245 = vmatpush2.msra.mxu0 0.0
    %2246 = vmatprep.subr.mxu0 0.0
    %2247 = vmatpush2.msra.mxu0 0.0
    %2248 = vmatprep.subr.mxu0 0.0
    %2249 = vmatpush2.msra.mxu0 0.0
    %2250 = vmatprep.subr.mxu0 0.0
    %2251 = vmatpush2.msra.mxu0 0.0
    %2252 = vmatprep.subr.mxu0 0.0
    %2253 = vmatpush2.msra.mxu0 0.0
    %2254 = vmatprep.subr.mxu0 0.0
    %2255 = vmatpush2.msra.mxu0 0.0
    %2256 = vmatprep.subr.mxu0 0.0
    %2257 = vmatpush2.msra.mxu0 0.0
    %2258 = vmatprep.subr.mxu0 0.0
    %2259 = vmatpush2.msra.mxu0 0.0
    %2260 = vmatprep.subr.mxu0 0.0
    %2261 = vmatpush2.msra.mxu0 0.0
    %2262 = vmatprep.subr.mxu0 0.0
    %2263 = vmatpush2.msra.mxu0 0.0
    %2264 = vmatprep.subr.mxu0 0.0
    %2265 = vmatpush2.msra.mxu0 0.0
    %2266 = vmatprep.mubr.f32.mxu0 0.0
    %2267 = vmatmul.mubr.f32.gmra.mxu0 %v2120
    %v2268 = vpop.f32.mrf.mxu0
    %v2269 = vadd.f32 %v2198, %v2268
    %v2270 = vpop.f32.mrf.mxu0
    %v2271 = vadd.f32 %v2200, %v2270
    %2272 = vdwg.mxu0
    %2273 = vmatprep.subr.mxu0 0.0
    %2274 = vmatpush1.msra.mxu0 %v146
    %2275 = vmatprep.subr.mxu0 0.0
    %2276 = vmatpush1.msra.mxu0 %v143
    %2277 = vmatprep.subr.mxu0 0.0
    %2278 = vmatpush1.msra.mxu0 %v140
    %2279 = vmatprep.subr.mxu0 0.0
    %2280 = vmatpush1.msra.mxu0 %v137
    %2281 = vmatprep.subr.mxu0 0.0
    %2282 = vmatpush1.msra.mxu0 %v134
    %2283 = vmatprep.subr.mxu0 0.0
    %2284 = vmatpush1.msra.mxu0 %v131
    %2285 = vmatprep.subr.mxu0 0.0
    %2286 = vmatpush1.msra.mxu0 %v128
    %2287 = vmatprep.subr.mxu0 0.0
    %2288 = vmatpush1.msra.mxu0 %v125
    %2289 = vmatprep.subr.mxu0 0.0
    %2290 = vmatpush1.msra.mxu0 %v122
    %2291 = vmatprep.subr.mxu0 0.0
    %2292 = vmatpush1.msra.mxu0 %v119
    %2293 = vmatprep.subr.mxu0 0.0
    %2294 = vmatpush1.msra.mxu0 %v116
    %2295 = vmatprep.subr.mxu0 0.0
    %2296 = vmatpush1.msra.mxu0 %v113
    %2297 = vmatprep.subr.mxu0 0.0
    %2298 = vmatpush1.msra.mxu0 %v110
    %2299 = vmatprep.subr.mxu0 0.0
    %2300 = vmatpush1.msra.mxu0 %v107
    %2301 = vmatprep.subr.mxu0 0.0
    %2302 = vmatpush1.msra.mxu0 %v104
    %2303 = vmatprep.subr.mxu0 0.0
    %2304 = vmatpush1.msra.mxu0 %v101
    %2305 = vmatprep.subr.mxu0 0.0
    %2306 = vmatpush2.msra.mxu0 %v194
    %2307 = vmatprep.subr.mxu0 0.0
    %2308 = vmatpush2.msra.mxu0 %v191
    %2309 = vmatprep.subr.mxu0 0.0
    %2310 = vmatpush2.msra.mxu0 %v188
    %2311 = vmatprep.subr.mxu0 0.0
    %2312 = vmatpush2.msra.mxu0 %v185
    %2313 = vmatprep.subr.mxu0 0.0
    %2314 = vmatpush2.msra.mxu0 %v182
    %2315 = vmatprep.subr.mxu0 0.0
    %2316 = vmatpush2.msra.mxu0 %v179
    %2317 = vmatprep.subr.mxu0 0.0
    %2318 = vmatpush2.msra.mxu0 %v176
    %2319 = vmatprep.subr.mxu0 0.0
    %2320 = vmatpush2.msra.mxu0 %v173
    %2321 = vmatprep.subr.mxu0 0.0
    %2322 = vmatpush2.msra.mxu0 %v170
    %2323 = vmatprep.subr.mxu0 0.0
    %2324 = vmatpush2.msra.mxu0 %v167
    %2325 = vmatprep.subr.mxu0 0.0
    %2326 = vmatpush2.msra.mxu0 %v164
    %2327 = vmatprep.subr.mxu0 0.0
    %2328 = vmatpush2.msra.mxu0 %v161
    %2329 = vmatprep.subr.mxu0 0.0
    %2330 = vmatpush2.msra.mxu0 %v158
    %2331 = vmatprep.subr.mxu0 0.0
    %2332 = vmatpush2.msra.mxu0 %v155
    %2333 = vmatprep.subr.mxu0 0.0
    %2334 = vmatpush2.msra.mxu0 %v152
    %2335 = vmatprep.subr.mxu0 0.0
    %2336 = vmatpush2.msra.mxu0 %v149
    %2337 = vmatprep.mubr.f32.mxu0 %v1812
    %2338 = vmatmul.mubr.f32.gmra.mxu0 %v1811
    %v2339 = vpop.f32.mrf.mxu0
    %v2340 = vadd.f32 %v2116, %v2339
    %v2341 = vpop.f32.mrf.mxu0
    %2342 = vdwg.mxu0
    %2343 = vmatprep.subr.mxu0 0.0
    %2344 = vmatpush1.msra.mxu0 0.0
    %2345 = vmatprep.subr.mxu0 0.0
    %2346 = vmatpush1.msra.mxu0 0.0
    %2347 = vmatprep.subr.mxu0 0.0
    %2348 = vmatpush1.msra.mxu0 0.0
    %2349 = vmatprep.subr.mxu0 0.0
    %2350 = vmatpush1.msra.mxu0 0.0
    %2351 = vmatprep.subr.mxu0 0.0
    %2352 = vmatpush1.msra.mxu0 0.0
    %2353 = vmatprep.subr.mxu0 0.0
    %2354 = vmatpush1.msra.mxu0 0.0
    %2355 = vmatprep.subr.mxu0 0.0
    %2356 = vmatpush1.msra.mxu0 0.0
    %2357 = vmatprep.subr.mxu0 0.0
    %2358 = vmatpush1.msra.mxu0 0.0
    %2359 = vmatprep.subr.mxu0 0.0
    %2360 = vmatpush1.msra.mxu0 0.0
    %2361 = vmatprep.subr.mxu0 0.0
    %2362 = vmatpush1.msra.mxu0 0.0
    %2363 = vmatprep.subr.mxu0 0.0
    %2364 = vmatpush1.msra.mxu0 0.0
    %2365 = vmatprep.subr.mxu0 0.0
    %2366 = vmatpush1.msra.mxu0 0.0
    %2367 = vmatprep.subr.mxu0 0.0
    %2368 = vmatpush1.msra.mxu0 0.0
    %2369 = vmatprep.subr.mxu0 0.0
    %2370 = vmatpush1.msra.mxu0 0.0
    %2371 = vmatprep.subr.mxu0 0.0
    %2372 = vmatpush1.msra.mxu0 %v2129
    %2373 = vmatprep.subr.mxu0 0.0
    %2374 = vmatpush1.msra.mxu0 %v197
    %2375 = vmatprep.subr.mxu0 0.0
    %2376 = vmatpush2.msra.mxu0 0.0
    %2377 = vmatprep.subr.mxu0 0.0
    %2378 = vmatpush2.msra.mxu0 0.0
    %2379 = vmatprep.subr.mxu0 0.0
    %2380 = vmatpush2.msra.mxu0 0.0
    %2381 = vmatprep.subr.mxu0 0.0
    %2382 = vmatpush2.msra.mxu0 0.0
    %2383 = vmatprep.subr.mxu0 0.0
    %2384 = vmatpush2.msra.mxu0 0.0
    %2385 = vmatprep.subr.mxu0 0.0
    %2386 = vmatpush2.msra.mxu0 0.0
    %2387 = vmatprep.subr.mxu0 0.0
    %2388 = vmatpush2.msra.mxu0 0.0
    %2389 = vmatprep.subr.mxu0 0.0
    %2390 = vmatpush2.msra.mxu0 0.0
    %2391 = vmatprep.subr.mxu0 0.0
    %2392 = vmatpush2.msra.mxu0 0.0
    %2393 = vmatprep.subr.mxu0 0.0
    %2394 = vmatpush2.msra.mxu0 0.0
    %2395 = vmatprep.subr.mxu0 0.0
    %2396 = vmatpush2.msra.mxu0 0.0
    %2397 = vmatprep.subr.mxu0 0.0
    %2398 = vmatpush2.msra.mxu0 0.0
    %2399 = vmatprep.subr.mxu0 0.0
    %2400 = vmatpush2.msra.mxu0 0.0
    %2401 = vmatprep.subr.mxu0 0.0
    %2402 = vmatpush2.msra.mxu0 0.0
    %2403 = vmatprep.subr.mxu0 0.0
    %2404 = vmatpush2.msra.mxu0 0.0
    %2405 = vmatprep.subr.mxu0 0.0
    %2406 = vmatpush2.msra.mxu0 0.0
    %2407 = vmatprep.mubr.f32.mxu0 0.0
    %2408 = vmatmul.mubr.f32.gmra.mxu0 %v2120
    %v2409 = vpop.f32.mrf.mxu0
    %v2410 = vadd.f32 %v2340, %v2409
    %v2411 = vpop.f32.mrf.mxu0
    %2412 = vdwg.mxu0
    %v2413 = vld [vmem:[#allocation2] sm:$0x7c]
    %v2414 = vld [vmem:[#allocation2 + $0x8] sm:$0x7c]
    %v2415 = vld [vmem:[#allocation2 + $0x10] sm:$0x7c]
    %v2419 = vrot.slane %v2413, 2
    %v2420 = vrot.slane %v2414, 2
    %v2421 = vrot.slane %v2415, 2
    %v2424 = vsel %vm1825, %v2421, 0
    %v2427 = vsel %vm415, %v404, 0
    %v2430 = vsel %vm415, %v405, 0
    %v2433 = vsel %vm415, %v406, 0
    %2435 = vmatprep.subr.mxu0 %v351
    %2436 = vmatpush1.msra.mxu0 %v350
    %2437 = vmatprep.subr.mxu0 %v348
    %2438 = vmatpush1.msra.mxu0 %v347
    %2439 = vmatprep.subr.mxu0 %v345
    %2440 = vmatpush1.msra.mxu0 %v344
    %2441 = vmatprep.subr.mxu0 %v342
    %2442 = vmatpush1.msra.mxu0 %v341
    %2443 = vmatprep.subr.mxu0 %v339
    %2444 = vmatpush1.msra.mxu0 %v338
    %2445 = vmatprep.subr.mxu0 %v336
    %2446 = vmatpush1.msra.mxu0 %v335
    %2447 = vmatprep.subr.mxu0 %v333
    %2448 = vmatpush1.msra.mxu0 %v332
    %2449 = vmatprep.subr.mxu0 %v330
    %2450 = vmatpush1.msra.mxu0 %v329
    %2451 = vmatprep.subr.mxu0 %v327
    %2452 = vmatpush1.msra.mxu0 %v326
    %2453 = vmatprep.subr.mxu0 %v324
    %2454 = vmatpush1.msra.mxu0 %v323
    %2455 = vmatprep.subr.mxu0 %v321
    %2456 = vmatpush1.msra.mxu0 %v320
    %2457 = vmatprep.subr.mxu0 %v318
    %2458 = vmatpush1.msra.mxu0 %v317
    %2459 = vmatprep.subr.mxu0 %v315
    %2460 = vmatpush1.msra.mxu0 %v314
    %2461 = vmatprep.subr.mxu0 %v312
    %2462 = vmatpush1.msra.mxu0 %v311
    %2463 = vmatprep.subr.mxu0 %v309
    %2464 = vmatpush1.msra.mxu0 %v308
    %2465 = vmatprep.subr.mxu0 %v306
    %2466 = vmatpush1.msra.mxu0 %v305
    %2467 = vmatprep.subr.mxu0 %v399
    %2468 = vmatpush2.msra.mxu0 %v398
    %2469 = vmatprep.subr.mxu0 %v396
    %2470 = vmatpush2.msra.mxu0 %v395
    %2471 = vmatprep.subr.mxu0 %v393
    %2472 = vmatpush2.msra.mxu0 %v392
    %2473 = vmatprep.subr.mxu0 %v390
    %2474 = vmatpush2.msra.mxu0 %v389
    %2475 = vmatprep.subr.mxu0 %v387
    %2476 = vmatpush2.msra.mxu0 %v386
    %2477 = vmatprep.subr.mxu0 %v384
    %2478 = vmatpush2.msra.mxu0 %v383
    %2479 = vmatprep.subr.mxu0 %v381
    %2480 = vmatpush2.msra.mxu0 %v380
    %2481 = vmatprep.subr.mxu0 %v378
    %2482 = vmatpush2.msra.mxu0 %v377
    %2483 = vmatprep.subr.mxu0 %v375
    %2484 = vmatpush2.msra.mxu0 %v374
    %2485 = vmatprep.subr.mxu0 %v372
    %2486 = vmatpush2.msra.mxu0 %v371
    %2487 = vmatprep.subr.mxu0 %v369
    %2488 = vmatpush2.msra.mxu0 %v368
    %2489 = vmatprep.subr.mxu0 %v366
    %2490 = vmatpush2.msra.mxu0 %v365
    %2491 = vmatprep.subr.mxu0 %v363
    %2492 = vmatpush2.msra.mxu0 %v362
    %2493 = vmatprep.subr.mxu0 %v360
    %2494 = vmatpush2.msra.mxu0 %v359
    %2495 = vmatprep.subr.mxu0 %v357
    %2496 = vmatpush2.msra.mxu0 %v356
    %2497 = vmatprep.subr.mxu0 %v354
    %2498 = vmatpush2.msra.mxu0 %v353
    %2499 = vmatprep.mubr.f32.mxu0 %v2420
    %2500 = vmatmul.mubr.f32.gmra.mxu0 %v2419
    %v2501 = vpop.f32.mrf.mxu0
    %v2502 = vadd.f32 0.0, %v2501
    %v2503 = vpop.f32.mrf.mxu0
    %v2504 = vadd.f32 0.0, %v2503
    %2505 = vdwg.mxu0
    %2506 = vmatprep.subr.mxu0 0.0
    %2507 = vmatpush1.msra.mxu0 0.0
    %2508 = vmatprep.subr.mxu0 0.0
    %2509 = vmatpush1.msra.mxu0 0.0
    %2510 = vmatprep.subr.mxu0 0.0
    %2511 = vmatpush1.msra.mxu0 0.0
    %2512 = vmatprep.subr.mxu0 0.0
    %2513 = vmatpush1.msra.mxu0 0.0
    %2514 = vmatprep.subr.mxu0 0.0
    %2515 = vmatpush1.msra.mxu0 0.0
    %2516 = vmatprep.subr.mxu0 0.0
    %2517 = vmatpush1.msra.mxu0 0.0
    %2518 = vmatprep.subr.mxu0 0.0
    %2519 = vmatpush1.msra.mxu0 0.0
    %2520 = vmatprep.subr.mxu0 0.0
    %2521 = vmatpush1.msra.mxu0 0.0
    %2522 = vmatprep.subr.mxu0 0.0
    %2523 = vmatpush1.msra.mxu0 0.0
    %2524 = vmatprep.subr.mxu0 0.0
    %2525 = vmatpush1.msra.mxu0 0.0
    %2526 = vmatprep.subr.mxu0 0.0
    %2527 = vmatpush1.msra.mxu0 0.0
    %2528 = vmatprep.subr.mxu0 0.0
    %2529 = vmatpush1.msra.mxu0 0.0
    %2530 = vmatprep.subr.mxu0 0.0
    %2531 = vmatpush1.msra.mxu0 0.0
    %2532 = vmatprep.subr.mxu0 0.0
    %2533 = vmatpush1.msra.mxu0 0.0
    %2534 = vmatprep.subr.mxu0 %v2430
    %2535 = vmatpush1.msra.mxu0 %v2427
    %2536 = vmatprep.subr.mxu0 %v402
    %2537 = vmatpush1.msra.mxu0 %v401
    %2538 = vmatprep.subr.mxu0 0.0
    %2539 = vmatpush2.msra.mxu0 0.0
    %2540 = vmatprep.subr.mxu0 0.0
    %2541 = vmatpush2.msra.mxu0 0.0
    %2542 = vmatprep.subr.mxu0 0.0
    %2543 = vmatpush2.msra.mxu0 0.0
    %2544 = vmatprep.subr.mxu0 0.0
    %2545 = vmatpush2.msra.mxu0 0.0
    %2546 = vmatprep.subr.mxu0 0.0
    %2547 = vmatpush2.msra.mxu0 0.0
    %2548 = vmatprep.subr.mxu0 0.0
    %2549 = vmatpush2.msra.mxu0 0.0
    %2550 = vmatprep.subr.mxu0 0.0
    %2551 = vmatpush2.msra.mxu0 0.0
    %2552 = vmatprep.subr.mxu0 0.0
    %2553 = vmatpush2.msra.mxu0 0.0
    %2554 = vmatprep.subr.mxu0 0.0
    %2555 = vmatpush2.msra.mxu0 0.0
    %2556 = vmatprep.subr.mxu0 0.0
    %2557 = vmatpush2.msra.mxu0 0.0
    %2558 = vmatprep.subr.mxu0 0.0
    %2559 = vmatpush2.msra.mxu0 0.0
    %2560 = vmatprep.subr.mxu0 0.0
    %2561 = vmatpush2.msra.mxu0 0.0
    %2562 = vmatprep.subr.mxu0 0.0
    %2563 = vmatpush2.msra.mxu0 0.0
    %2564 = vmatprep.subr.mxu0 0.0
    %2565 = vmatpush2.msra.mxu0 0.0
    %2566 = vmatprep.subr.mxu0 0.0
    %2567 = vmatpush2.msra.mxu0 0.0
    %2568 = vmatprep.subr.mxu0 0.0
    %2569 = vmatpush2.msra.mxu0 0.0
    %2570 = vmatprep.mubr.f32.mxu0 0.0
    %2571 = vmatmul.mubr.f32.gmra.mxu0 %v2424
    %v2572 = vpop.f32.mrf.mxu0
    %v2573 = vadd.f32 %v2502, %v2572
    %v2574 = vpop.f32.mrf.mxu0
    %v2575 = vadd.f32 %v2504, %v2574
    %2576 = vdwg.mxu0
    %2577 = vmatprep.subr.mxu0 0.0
    %2578 = vmatpush1.msra.mxu0 %v352
    %2579 = vmatprep.subr.mxu0 0.0
    %2580 = vmatpush1.msra.mxu0 %v349
    %2581 = vmatprep.subr.mxu0 0.0
    %2582 = vmatpush1.msra.mxu0 %v346
    %2583 = vmatprep.subr.mxu0 0.0
    %2584 = vmatpush1.msra.mxu0 %v343
    %2585 = vmatprep.subr.mxu0 0.0
    %2586 = vmatpush1.msra.mxu0 %v340
    %2587 = vmatprep.subr.mxu0 0.0
    %2588 = vmatpush1.msra.mxu0 %v337
    %2589 = vmatprep.subr.mxu0 0.0
    %2590 = vmatpush1.msra.mxu0 %v334
    %2591 = vmatprep.subr.mxu0 0.0
    %2592 = vmatpush1.msra.mxu0 %v331
    %2593 = vmatprep.subr.mxu0 0.0
    %2594 = vmatpush1.msra.mxu0 %v328
    %2595 = vmatprep.subr.mxu0 0.0
    %2596 = vmatpush1.msra.mxu0 %v325
    %2597 = vmatprep.subr.mxu0 0.0
    %2598 = vmatpush1.msra.mxu0 %v322
    %2599 = vmatprep.subr.mxu0 0.0
    %2600 = vmatpush1.msra.mxu0 %v319
    %2601 = vmatprep.subr.mxu0 0.0
    %2602 = vmatpush1.msra.mxu0 %v316
    %2603 = vmatprep.subr.mxu0 0.0
    %2604 = vmatpush1.msra.mxu0 %v313
    %2605 = vmatprep.subr.mxu0 0.0
    %2606 = vmatpush1.msra.mxu0 %v310
    %2607 = vmatprep.subr.mxu0 0.0
    %2608 = vmatpush1.msra.mxu0 %v307
    %2609 = vmatprep.subr.mxu0 0.0
    %2610 = vmatpush2.msra.mxu0 %v400
    %2611 = vmatprep.subr.mxu0 0.0
    %2612 = vmatpush2.msra.mxu0 %v397
    %2613 = vmatprep.subr.mxu0 0.0
    %2614 = vmatpush2.msra.mxu0 %v394
    %2615 = vmatprep.subr.mxu0 0.0
    %2616 = vmatpush2.msra.mxu0 %v391
    %2617 = vmatprep.subr.mxu0 0.0
    %2618 = vmatpush2.msra.mxu0 %v388
    %2619 = vmatprep.subr.mxu0 0.0
    %2620 = vmatpush2.msra.mxu0 %v385
    %2621 = vmatprep.subr.mxu0 0.0
    %2622 = vmatpush2.msra.mxu0 %v382
    %2623 = vmatprep.subr.mxu0 0.0
    %2624 = vmatpush2.msra.mxu0 %v379
    %2625 = vmatprep.subr.mxu0 0.0
    %2626 = vmatpush2.msra.mxu0 %v376
    %2627 = vmatprep.subr.mxu0 0.0
    %2628 = vmatpush2.msra.mxu0 %v373
    %2629 = vmatprep.subr.mxu0 0.0
    %2630 = vmatpush2.msra.mxu0 %v370
    %2631 = vmatprep.subr.mxu0 0.0
    %2632 = vmatpush2.msra.mxu0 %v367
    %2633 = vmatprep.subr.mxu0 0.0
    %2634 = vmatpush2.msra.mxu0 %v364
    %2635 = vmatprep.subr.mxu0 0.0
    %2636 = vmatpush2.msra.mxu0 %v361
    %2637 = vmatprep.subr.mxu0 0.0
    %2638 = vmatpush2.msra.mxu0 %v358
    %2639 = vmatprep.subr.mxu0 0.0
    %2640 = vmatpush2.msra.mxu0 %v355
    %2641 = vmatprep.mubr.f32.mxu0 %v2420
    %2642 = vmatmul.mubr.f32.gmra.mxu0 %v2419
    %v2643 = vpop.f32.mrf.mxu0
    %v2644 = vadd.f32 0.0, %v2643
    %v2645 = vpop.f32.mrf.mxu0
    %2646 = vdwg.mxu0
    %2647 = vmatprep.subr.mxu0 0.0
    %2648 = vmatpush1.msra.mxu0 0.0
    %2649 = vmatprep.subr.mxu0 0.0
    %2650 = vmatpush1.msra.mxu0 0.0
    %2651 = vmatprep.subr.mxu0 0.0
    %2652 = vmatpush1.msra.mxu0 0.0
    %2653 = vmatprep.subr.mxu0 0.0
    %2654 = vmatpush1.msra.mxu0 0.0
    %2655 = vmatprep.subr.mxu0 0.0
    %2656 = vmatpush1.msra.mxu0 0.0
    %2657 = vmatprep.subr.mxu0 0.0
    %2658 = vmatpush1.msra.mxu0 0.0
    %2659 = vmatprep.subr.mxu0 0.0
    %2660 = vmatpush1.msra.mxu0 0.0
    %2661 = vmatprep.subr.mxu0 0.0
    %2662 = vmatpush1.msra.mxu0 0.0
    %2663 = vmatprep.subr.mxu0 0.0
    %2664 = vmatpush1.msra.mxu0 0.0
    %2665 = vmatprep.subr.mxu0 0.0
    %2666 = vmatpush1.msra.mxu0 0.0
    %2667 = vmatprep.subr.mxu0 0.0
    %2668 = vmatpush1.msra.mxu0 0.0
    %2669 = vmatprep.subr.mxu0 0.0
    %2670 = vmatpush1.msra.mxu0 0.0
    %2671 = vmatprep.subr.mxu0 0.0
    %2672 = vmatpush1.msra.mxu0 0.0
    %2673 = vmatprep.subr.mxu0 0.0
    %2674 = vmatpush1.msra.mxu0 0.0
    %2675 = vmatprep.subr.mxu0 0.0
    %2676 = vmatpush1.msra.mxu0 %v2433
    %2677 = vmatprep.subr.mxu0 0.0
    %2678 = vmatpush1.msra.mxu0 %v403
    %2679 = vmatprep.subr.mxu0 0.0
    %2680 = vmatpush2.msra.mxu0 0.0
    %2681 = vmatprep.subr.mxu0 0.0
    %2682 = vmatpush2.msra.mxu0 0.0
    %2683 = vmatprep.subr.mxu0 0.0
    %2684 = vmatpush2.msra.mxu0 0.0
    %2685 = vmatprep.subr.mxu0 0.0
    %2686 = vmatpush2.msra.mxu0 0.0
    %2687 = vmatprep.subr.mxu0 0.0
    %2688 = vmatpush2.msra.mxu0 0.0
    %2689 = vmatprep.subr.mxu0 0.0
    %2690 = vmatpush2.msra.mxu0 0.0
    %2691 = vmatprep.subr.mxu0 0.0
    %2692 = vmatpush2.msra.mxu0 0.0
    %2693 = vmatprep.subr.mxu0 0.0
    %2694 = vmatpush2.msra.mxu0 0.0
    %2695 = vmatprep.subr.mxu0 0.0
    %2696 = vmatpush2.msra.mxu0 0.0
    %2697 = vmatprep.subr.mxu0 0.0
    %2698 = vmatpush2.msra.mxu0 0.0
    %2699 = vmatprep.subr.mxu0 0.0
    %2700 = vmatpush2.msra.mxu0 0.0
    %2701 = vmatprep.subr.mxu0 0.0
    %2702 = vmatpush2.msra.mxu0 0.0
    %2703 = vmatprep.subr.mxu0 0.0
    %2704 = vmatpush2.msra.mxu0 0.0
    %2705 = vmatprep.subr.mxu0 0.0
    %2706 = vmatpush2.msra.mxu0 0.0
    %2707 = vmatprep.subr.mxu0 0.0
    %2708 = vmatpush2.msra.mxu0 0.0
    %2709 = vmatprep.subr.mxu0 0.0
    %2710 = vmatpush2.msra.mxu0 0.0
    %2711 = vmatprep.mubr.f32.mxu0 0.0
    %2712 = vmatmul.mubr.f32.gmra.mxu0 %v2424
    %v2713 = vpop.f32.mrf.mxu0
    %v2714 = vadd.f32 %v2644, %v2713
    %v2715 = vpop.f32.mrf.mxu0
    %2716 = vdwg.mxu0
    %v2717 = vadd.f32 %v2269, %v2573
    %v2718 = vadd.f32 %v2271, %v2575
    %v2719 = vadd.f32 %v2410, %v2714
    %v2720 = vld [vmem:[%s5] sm:$0x7]
    %v2722 = vlaneseq
    %v2723 = vshrl.u32 %v2722, 7
    %v2724 = vsub.s32 0, %v2723
    %v2725 = vrot.slane %v2720, %v2724
    %v2726 = vlaneseq
    %v2727 = vshrl.u32 %v2726, 7
    %v2728 = vsub.s32 1, %v2727
    %v2729 = vrot.slane %v2720, %v2728
    %v2730 = vlaneseq
    %v2731 = vshrl.u32 %v2730, 7
    %v2732 = vsub.s32 2, %v2731
    %v2733 = vrot.slane %v2720, %v2732
    %v2737 = vadd.f32 %v2717, %v2725
    %v2738 = vadd.f32 %v2718, %v2729
    %v2739 = vadd.f32 %v2719, %v2733
    %v2740 = vmax.f32 %v2737, 0.0
    %v2741 = vmax.f32 %v2738, 0.0
    %v2742 = vmax.f32 %v2739, 0.0
    %v2743 = vld [vmem:[%s6] sm:$0xff]
    %v2744 = vld [vmem:[%s6 + $0x8] sm:$0xff]
    %v2745 = vld [vmem:[%s6 + $0x10] sm:$0xff]
    %v2746 = vld [vmem:[%s6 + $0x18] sm:$0xff]
    %v2747 = vld [vmem:[%s6 + $0x20] sm:$0xff]
    %v2748 = vld [vmem:[%s6 + $0x28] sm:$0xff]
    %v2749 = vld [vmem:[%s6 + $0x30] sm:$0xff]
    %v2750 = vld [vmem:[%s6 + $0x38] sm:$0xff]
    %v2751 = vld [vmem:[%s6 + $0x40] sm:$0xff]
    %v2752 = vld [vmem:[%s6 + $0x48] sm:$0xff]
    %v2753 = vld [vmem:[%s6 + $0x50] sm:$0xff]
    %v2754 = vld [vmem:[%s6 + $0x58] sm:$0xff]
    %v2755 = vld [vmem:[%s6 + $0x60] sm:$0xff]
    %v2756 = vld [vmem:[%s6 + $0x68] sm:$0xff]
    %v2757 = vld [vmem:[%s6 + $0x70] sm:$0xff]
    %v2758 = vld [vmem:[%s6 + $0x78] sm:$0xff]
    %v2759 = vld [vmem:[%s6 + $0x80] sm:$0xff]
    %v2760 = vld [vmem:[%s6 + $0x88] sm:$0xff]
    %v2761 = vld [vmem:[%s6 + $0x90] sm:$0xff]
    %v2762 = vld [vmem:[%s6 + $0x98] sm:$0xff]
    %v2763 = vld [vmem:[%s6 + $0xa0] sm:$0xff]
    %v2764 = vld [vmem:[%s6 + $0xa8] sm:$0xff]
    %v2765 = vld [vmem:[%s6 + $0xb0] sm:$0xff]
    %v2766 = vld [vmem:[%s6 + $0xb8] sm:$0xff]
    %v2767 = vld [vmem:[%s6 + $0xc0] sm:$0xff]
    %v2768 = vld [vmem:[%s6 + $0xc8] sm:$0xff]
    %v2769 = vld [vmem:[%s6 + $0xd0] sm:$0xff]
    %v2770 = vld [vmem:[%s6 + $0xd8] sm:$0xff]
    %v2771 = vld [vmem:[%s6 + $0xe0] sm:$0xff]
    %v2772 = vld [vmem:[%s6 + $0xe8] sm:$0xff]
    %v2773 = vld [vmem:[%s6 + $0xf0] sm:$0xff]
    %v2774 = vld [vmem:[%s6 + $0xf8] sm:$0xff]
    %v2775 = vld [vmem:[%s6 + $0x100] sm:$0xff]
    %v2776 = vld [vmem:[%s6 + $0x108] sm:$0xff]
    %v2777 = vld [vmem:[%s6 + $0x110] sm:$0xff]
    %v2778 = vld [vmem:[%s6 + $0x118] sm:$0xff]
    %v2779 = vld [vmem:[%s6 + $0x120] sm:$0xff]
    %v2780 = vld [vmem:[%s6 + $0x128] sm:$0xff]
    %v2781 = vld [vmem:[%s6 + $0x130] sm:$0xff]
    %v2782 = vld [vmem:[%s6 + $0x138] sm:$0xff]
    %v2783 = vld [vmem:[%s6 + $0x140] sm:$0xff]
    %v2784 = vld [vmem:[%s6 + $0x148] sm:$0xff]
    %v2785 = vld [vmem:[%s6 + $0x150] sm:$0xff]
    %v2786 = vld [vmem:[%s6 + $0x158] sm:$0xff]
    %v2787 = vld [vmem:[%s6 + $0x160] sm:$0xff]
    %v2788 = vld [vmem:[%s6 + $0x168] sm:$0xff]
    %v2789 = vld [vmem:[%s6 + $0x170] sm:$0xff]
    %v2790 = vld [vmem:[%s6 + $0x178] sm:$0xff]
    %v2791 = vld [vmem:[%s6 + $0x180] sm:$0xff]
    %v2792 = vld [vmem:[%s6 + $0x188] sm:$0xff]
    %v2793 = vld [vmem:[%s6 + $0x190] sm:$0xff]
    %v2794 = vld [vmem:[%s6 + $0x198] sm:$0xff]
    %v2795 = vld [vmem:[%s6 + $0x1a0] sm:$0xff]
    %v2796 = vld [vmem:[%s6 + $0x1a8] sm:$0xff]
    %v2797 = vld [vmem:[%s6 + $0x1b0] sm:$0xff]
    %v2798 = vld [vmem:[%s6 + $0x1b8] sm:$0xff]
    %v2799 = vld [vmem:[%s6 + $0x1c0] sm:$0xff]
    %v2800 = vld [vmem:[%s6 + $0x1c8] sm:$0xff]
    %v2801 = vld [vmem:[%s6 + $0x1d0] sm:$0xff]
    %v2802 = vld [vmem:[%s6 + $0x1d8] sm:$0xff]
    %v2803 = vld [vmem:[%s6 + $0x1e0] sm:$0xff]
    %v2804 = vld [vmem:[%s6 + $0x1e8] sm:$0xff]
    %v2805 = vld [vmem:[%s6 + $0x1f0] sm:$0xff]
    %v2806 = vld [vmem:[%s6 + $0x1f8] sm:$0xff]
    %v2807 = vld [vmem:[%s6 + $0x200] sm:$0xff]
    %v2808 = vld [vmem:[%s6 + $0x208] sm:$0xff]
    %v2809 = vld [vmem:[%s6 + $0x210] sm:$0xff]
    %v2810 = vld [vmem:[%s6 + $0x218] sm:$0xff]
    %v2811 = vld [vmem:[%s6 + $0x220] sm:$0xff]
    %v2812 = vld [vmem:[%s6 + $0x228] sm:$0xff]
    %v2813 = vld [vmem:[%s6 + $0x230] sm:$0xff]
    %v2814 = vld [vmem:[%s6 + $0x238] sm:$0xff]
    %v2815 = vld [vmem:[%s6 + $0x240] sm:$0xff]
    %v2816 = vld [vmem:[%s6 + $0x248] sm:$0xff]
    %v2817 = vld [vmem:[%s6 + $0x250] sm:$0xff]
    %v2818 = vld [vmem:[%s6 + $0x258] sm:$0xff]
    %v2819 = vld [vmem:[%s6 + $0x260] sm:$0xff]
    %v2820 = vld [vmem:[%s6 + $0x268] sm:$0xff]
    %v2821 = vld [vmem:[%s6 + $0x270] sm:$0xff]
    %v2822 = vld [vmem:[%s6 + $0x278] sm:$0xff]
    %v2823 = vld [vmem:[%s6 + $0x280] sm:$0xff]
    %v2824 = vld [vmem:[%s6 + $0x288] sm:$0xff]
    %v2825 = vld [vmem:[%s6 + $0x290] sm:$0xff]
    %v2826 = vld [vmem:[%s6 + $0x298] sm:$0xff]
    %v2827 = vld [vmem:[%s6 + $0x2a0] sm:$0xff]
    %v2828 = vld [vmem:[%s6 + $0x2a8] sm:$0xff]
    %v2829 = vld [vmem:[%s6 + $0x2b0] sm:$0xff]
    %v2830 = vld [vmem:[%s6 + $0x2b8] sm:$0xff]
    %v2831 = vld [vmem:[%s6 + $0x2c0] sm:$0xff]
    %v2832 = vld [vmem:[%s6 + $0x2c8] sm:$0xff]
    %v2833 = vld [vmem:[%s6 + $0x2d0] sm:$0xff]
    %v2834 = vld [vmem:[%s6 + $0x2d8] sm:$0xff]
    %v2835 = vld [vmem:[%s6 + $0x2e0] sm:$0xff]
    %v2836 = vld [vmem:[%s6 + $0x2e8] sm:$0xff]
    %v2837 = vld [vmem:[%s6 + $0x2f0] sm:$0xff]
    %v2838 = vld [vmem:[%s6 + $0x2f8] sm:$0xff]
    %v2839 = vld [vmem:[%s6 + $0x300] sm:$0xff]
    %v2840 = vld [vmem:[%s6 + $0x308] sm:$0xff]
    %v2841 = vld [vmem:[%s6 + $0x310] sm:$0xff]
    %v2842 = vld [vmem:[%s6 + $0x318] sm:$0xff]
    %v2843 = vld [vmem:[%s6 + $0x320] sm:$0xff]
    %v2844 = vld [vmem:[%s6 + $0x328] sm:$0xff]
    %v2845 = vld [vmem:[%s6 + $0x330] sm:$0xff]
    %v2846 = vld [vmem:[%s6 + $0x338] sm:$0xff]
    %v2847 = vld [vmem:[%s6 + $0x340] sm:$0xff]
    %v2848 = vld [vmem:[%s6 + $0x348] sm:$0xff]
    %v2849 = vld [vmem:[%s6 + $0x350] sm:$0xff]
    %v2850 = vld [vmem:[%s6 + $0x358] sm:$0xff]
    %v2851 = vld [vmem:[%s6 + $0x360] sm:$0xff]
    %v2852 = vld [vmem:[%s6 + $0x368] sm:$0xff]
    %v2853 = vld [vmem:[%s6 + $0x370] sm:$0xff]
    %v2854 = vld [vmem:[%s6 + $0x378] sm:$0xff]
    %v2855 = vld [vmem:[%s6 + $0x380] sm:$0xff]
    %v2856 = vld [vmem:[%s6 + $0x388] sm:$0xff]
    %v2857 = vld [vmem:[%s6 + $0x390] sm:$0xff]
    %v2858 = vld [vmem:[%s6 + $0x398] sm:$0xff]
    %v2859 = vld [vmem:[%s6 + $0x3a0] sm:$0xff]
    %v2860 = vld [vmem:[%s6 + $0x3a8] sm:$0xff]
    %v2861 = vld [vmem:[%s6 + $0x3b0] sm:$0xff]
    %v2862 = vld [vmem:[%s6 + $0x3b8] sm:$0xff]
    %v2863 = vld [vmem:[%s6 + $0x3c0] sm:$0xff]
    %v2864 = vld [vmem:[%s6 + $0x3c8] sm:$0xff]
    %v2865 = vld [vmem:[%s6 + $0x3d0] sm:$0xff]
    %v2866 = vld [vmem:[%s6 + $0x3d8] sm:$0xff]
    %v2867 = vld [vmem:[%s6 + $0x3e0] sm:$0xff]
    %v2868 = vld [vmem:[%s6 + $0x3e8] sm:$0xff]
    %v2869 = vld [vmem:[%s6 + $0x3f0] sm:$0xff]
    %v2870 = vld [vmem:[%s6 + $0x3f8] sm:$0xff]
    %v2871 = vld [vmem:[%s6 + $0x400] sm:$0xff]
    %v2872 = vld [vmem:[%s6 + $0x408] sm:$0xff]
    %v2873 = vld [vmem:[%s6 + $0x410] sm:$0xff]
    %v2874 = vld [vmem:[%s6 + $0x418] sm:$0xff]
    %v2875 = vld [vmem:[%s6 + $0x420] sm:$0x3f]
    %v2876 = vld [vmem:[%s6 + $0x428] sm:$0x3f]
    %v2877 = vld [vmem:[%s6 + $0x430] sm:$0x3f]
    %v2878 = vld [vmem:[%s6 + $0x438] sm:$0x3f]
    %v2879 = vld [vmem:[%s6 + $0x420] sm:$0xc0]
    %v2880 = vld [vmem:[%s6 + $0x428] sm:$0xc0]
    %v2881 = vld [vmem:[%s6 + $0x430] sm:$0xc0]
    %v2882 = vld [vmem:[%s6 + $0x438] sm:$0xc0]
    %v2883 = vld [vmem:[%s6 + $0x440] sm:$0xff]
    %v2884 = vld [vmem:[%s6 + $0x448] sm:$0xff]
    %v2885 = vld [vmem:[%s6 + $0x450] sm:$0xff]
    %v2886 = vld [vmem:[%s6 + $0x458] sm:$0xff]
    %v2887 = vld [vmem:[%s6 + $0x460] sm:$0xff]
    %v2888 = vld [vmem:[%s6 + $0x468] sm:$0xff]
    %v2889 = vld [vmem:[%s6 + $0x470] sm:$0xff]
    %v2890 = vld [vmem:[%s6 + $0x478] sm:$0xff]
    %v2891 = vld [vmem:[%s6 + $0x480] sm:$0xff]
    %v2892 = vld [vmem:[%s6 + $0x488] sm:$0xff]
    %v2893 = vld [vmem:[%s6 + $0x490] sm:$0xff]
    %v2894 = vld [vmem:[%s6 + $0x498] sm:$0xff]
    %v2895 = vld [vmem:[%s6 + $0x4a0] sm:$0xff]
    %v2896 = vld [vmem:[%s6 + $0x4a8] sm:$0xff]
    %v2897 = vld [vmem:[%s6 + $0x4b0] sm:$0xff]
    %v2898 = vld [vmem:[%s6 + $0x4b8] sm:$0xff]
    %v2899 = vld [vmem:[%s6 + $0x4c0] sm:$0xff]
    %v2900 = vld [vmem:[%s6 + $0x4c8] sm:$0xff]
    %v2901 = vld [vmem:[%s6 + $0x4d0] sm:$0xff]
    %v2902 = vld [vmem:[%s6 + $0x4d8] sm:$0xff]
    %v2903 = vld [vmem:[%s6 + $0x4e0] sm:$0xff]
    %v2904 = vld [vmem:[%s6 + $0x4e8] sm:$0xff]
    %v2905 = vld [vmem:[%s6 + $0x4f0] sm:$0xff]
    %v2906 = vld [vmem:[%s6 + $0x4f8] sm:$0xff]
    %v2907 = vld [vmem:[%s6 + $0x500] sm:$0xff]
    %v2908 = vld [vmem:[%s6 + $0x508] sm:$0xff]
    %v2909 = vld [vmem:[%s6 + $0x510] sm:$0xff]
    %v2910 = vld [vmem:[%s6 + $0x518] sm:$0xff]
    %v2911 = vld [vmem:[%s6 + $0x520] sm:$0xff]
    %v2912 = vld [vmem:[%s6 + $0x528] sm:$0xff]
    %v2913 = vld [vmem:[%s6 + $0x530] sm:$0xff]
    %v2914 = vld [vmem:[%s6 + $0x538] sm:$0xff]
    %v2915 = vld [vmem:[%s6 + $0x540] sm:$0xff]
    %v2916 = vld [vmem:[%s6 + $0x548] sm:$0xff]
    %v2917 = vld [vmem:[%s6 + $0x550] sm:$0xff]
    %v2918 = vld [vmem:[%s6 + $0x558] sm:$0xff]
    %v2919 = vld [vmem:[%s6 + $0x560] sm:$0xff]
    %v2920 = vld [vmem:[%s6 + $0x568] sm:$0xff]
    %v2921 = vld [vmem:[%s6 + $0x570] sm:$0xff]
    %v2922 = vld [vmem:[%s6 + $0x578] sm:$0xff]
    %v2923 = vld [vmem:[%s6 + $0x580] sm:$0xff]
    %v2924 = vld [vmem:[%s6 + $0x588] sm:$0xff]
    %v2925 = vld [vmem:[%s6 + $0x590] sm:$0xff]
    %v2926 = vld [vmem:[%s6 + $0x598] sm:$0xff]
    %v2927 = vld [vmem:[%s6 + $0x5a0] sm:$0xff]
    %v2928 = vld [vmem:[%s6 + $0x5a8] sm:$0xff]
    %v2929 = vld [vmem:[%s6 + $0x5b0] sm:$0xff]
    %v2930 = vld [vmem:[%s6 + $0x5b8] sm:$0xff]
    %v2931 = vld [vmem:[%s6 + $0x5c0] sm:$0xff]
    %v2932 = vld [vmem:[%s6 + $0x5c8] sm:$0xff]
    %v2933 = vld [vmem:[%s6 + $0x5d0] sm:$0xff]
    %v2934 = vld [vmem:[%s6 + $0x5d8] sm:$0xff]
    %v2935 = vld [vmem:[%s6 + $0x5e0] sm:$0xff]
    %v2936 = vld [vmem:[%s6 + $0x5e8] sm:$0xff]
    %v2937 = vld [vmem:[%s6 + $0x5f0] sm:$0xff]
    %v2938 = vld [vmem:[%s6 + $0x5f8] sm:$0xff]
    %v2939 = vld [vmem:[%s6 + $0x600] sm:$0xff]
    %v2940 = vld [vmem:[%s6 + $0x608] sm:$0xff]
    %v2941 = vld [vmem:[%s6 + $0x610] sm:$0xff]
    %v2942 = vld [vmem:[%s6 + $0x618] sm:$0xff]
    %v2943 = vld [vmem:[%s6 + $0x620] sm:$0xff]
    %v2944 = vld [vmem:[%s6 + $0x628] sm:$0xff]
    %v2945 = vld [vmem:[%s6 + $0x630] sm:$0xff]
    %v2946 = vld [vmem:[%s6 + $0x638] sm:$0xff]
    %v2947 = vld [vmem:[%s6 + $0x640] sm:$0xff]
    %v2948 = vld [vmem:[%s6 + $0x648] sm:$0xff]
    %v2949 = vld [vmem:[%s6 + $0x650] sm:$0xff]
    %v2950 = vld [vmem:[%s6 + $0x658] sm:$0xff]
    %v2951 = vld [vmem:[%s6 + $0x660] sm:$0xff]
    %v2952 = vld [vmem:[%s6 + $0x668] sm:$0xff]
    %v2953 = vld [vmem:[%s6 + $0x670] sm:$0xff]
    %v2954 = vld [vmem:[%s6 + $0x678] sm:$0xff]
    %v2955 = vld [vmem:[%s6 + $0x680] sm:$0xff]
    %v2956 = vld [vmem:[%s6 + $0x688] sm:$0xff]
    %v2957 = vld [vmem:[%s6 + $0x690] sm:$0xff]
    %v2958 = vld [vmem:[%s6 + $0x698] sm:$0xff]
    %v2959 = vld [vmem:[%s6 + $0x6a0] sm:$0xff]
    %v2960 = vld [vmem:[%s6 + $0x6a8] sm:$0xff]
    %v2961 = vld [vmem:[%s6 + $0x6b0] sm:$0xff]
    %v2962 = vld [vmem:[%s6 + $0x6b8] sm:$0xff]
    %v2963 = vld [vmem:[%s6 + $0x6c0] sm:$0xff]
    %v2964 = vld [vmem:[%s6 + $0x6c8] sm:$0xff]
    %v2965 = vld [vmem:[%s6 + $0x6d0] sm:$0xff]
    %v2966 = vld [vmem:[%s6 + $0x6d8] sm:$0xff]
    %v2967 = vld [vmem:[%s6 + $0x6e0] sm:$0xff]
    %v2968 = vld [vmem:[%s6 + $0x6e8] sm:$0xff]
    %v2969 = vld [vmem:[%s6 + $0x6f0] sm:$0xff]
    %v2970 = vld [vmem:[%s6 + $0x6f8] sm:$0xff]
    %v2971 = vld [vmem:[%s6 + $0x700] sm:$0xff]
    %v2972 = vld [vmem:[%s6 + $0x708] sm:$0xff]
    %v2973 = vld [vmem:[%s6 + $0x710] sm:$0xff]
    %v2974 = vld [vmem:[%s6 + $0x718] sm:$0xff]
    %v2975 = vld [vmem:[%s6 + $0x720] sm:$0xff]
    %v2976 = vld [vmem:[%s6 + $0x728] sm:$0xff]
    %v2977 = vld [vmem:[%s6 + $0x730] sm:$0xff]
    %v2978 = vld [vmem:[%s6 + $0x738] sm:$0xff]
    %v2979 = vld [vmem:[%s6 + $0x740] sm:$0xff]
    %v2980 = vld [vmem:[%s6 + $0x748] sm:$0xff]
    %v2981 = vld [vmem:[%s6 + $0x750] sm:$0xff]
    %v2982 = vld [vmem:[%s6 + $0x758] sm:$0xff]
    %v2983 = vld [vmem:[%s6 + $0x760] sm:$0xff]
    %v2984 = vld [vmem:[%s6 + $0x768] sm:$0xff]
    %v2985 = vld [vmem:[%s6 + $0x770] sm:$0xff]
    %v2986 = vld [vmem:[%s6 + $0x778] sm:$0xff]
    %v2987 = vld [vmem:[%s6 + $0x780] sm:$0xff]
    %v2988 = vld [vmem:[%s6 + $0x788] sm:$0xff]
    %v2989 = vld [vmem:[%s6 + $0x790] sm:$0xff]
    %v2990 = vld [vmem:[%s6 + $0x798] sm:$0xff]
    %v2991 = vld [vmem:[%s6 + $0x7a0] sm:$0xff]
    %v2992 = vld [vmem:[%s6 + $0x7a8] sm:$0xff]
    %v2993 = vld [vmem:[%s6 + $0x7b0] sm:$0xff]
    %v2994 = vld [vmem:[%s6 + $0x7b8] sm:$0xff]
    %v2995 = vld [vmem:[%s6 + $0x7c0] sm:$0xff]
    %v2996 = vld [vmem:[%s6 + $0x7c8] sm:$0xff]
    %v2997 = vld [vmem:[%s6 + $0x7d0] sm:$0xff]
    %v2998 = vld [vmem:[%s6 + $0x7d8] sm:$0xff]
    %v2999 = vld [vmem:[%s6 + $0x7e0] sm:$0xff]
    %v3000 = vld [vmem:[%s6 + $0x7e8] sm:$0xff]
    %v3001 = vld [vmem:[%s6 + $0x7f0] sm:$0xff]
    %v3002 = vld [vmem:[%s6 + $0x7f8] sm:$0xff]
    %v3003 = vld [vmem:[%s6 + $0x800] sm:$0xff]
    %v3004 = vld [vmem:[%s6 + $0x808] sm:$0xff]
    %v3005 = vld [vmem:[%s6 + $0x810] sm:$0xff]
    %v3006 = vld [vmem:[%s6 + $0x818] sm:$0xff]
    %v3007 = vld [vmem:[%s6 + $0x820] sm:$0xff]
    %v3008 = vld [vmem:[%s6 + $0x828] sm:$0xff]
    %v3009 = vld [vmem:[%s6 + $0x830] sm:$0xff]
    %v3010 = vld [vmem:[%s6 + $0x838] sm:$0xff]
    %v3011 = vld [vmem:[%s6 + $0x840] sm:$0xff]
    %v3012 = vld [vmem:[%s6 + $0x848] sm:$0xff]
    %v3013 = vld [vmem:[%s6 + $0x850] sm:$0xff]
    %v3014 = vld [vmem:[%s6 + $0x858] sm:$0xff]
    %v3015 = vld [vmem:[%s6 + $0x860] sm:$0xf]
    %v3016 = vld [vmem:[%s6 + $0x868] sm:$0xf]
    %v3017 = vld [vmem:[%s6 + $0x870] sm:$0xf]
    %v3018 = vld [vmem:[%s6 + $0x878] sm:$0xf]
    %v3022 = vrot.slane %v2740, 1
    %v3023 = vrot.slane %v2741, 1
    %v3024 = vrot.slane %v2742, 1
    %vm3167 = vcmask 1041408
    %v3168 = vrot.slane %v2879, 6
    %v3169 = vrot.slane %v2883, 6
    %v3170 = vsel %vm3167, %v3168, %v3169
    %v3171 = vrot.slane %v2880, 6
    %v3172 = vrot.slane %v2884, 6
    %v3173 = vsel %vm3167, %v3171, %v3172
    %v3174 = vrot.slane %v2881, 6
    %v3175 = vrot.slane %v2885, 6
    %v3176 = vsel %vm3167, %v3174, %v3175
    %v3177 = vrot.slane %v2882, 6
    %v3178 = vrot.slane %v2886, 6
    %v3179 = vsel %vm3167, %v3177, %v3178
    %v3180 = vrot.slane %v2887, 6
    %v3181 = vsel %vm3167, %v3169, %v3180
    %v3182 = vrot.slane %v2888, 6
    %v3183 = vsel %vm3167, %v3172, %v3182
    %v3184 = vrot.slane %v2889, 6
    %v3185 = vsel %vm3167, %v3175, %v3184
    %v3186 = vrot.slane %v2890, 6
    %v3187 = vsel %vm3167, %v3178, %v3186
    %v3188 = vrot.slane %v2891, 6
    %v3189 = vsel %vm3167, %v3180, %v3188
    %v3190 = vrot.slane %v2892, 6
    %v3191 = vsel %vm3167, %v3182, %v3190
    %v3192 = vrot.slane %v2893, 6
    %v3193 = vsel %vm3167, %v3184, %v3192
    %v3194 = vrot.slane %v2894, 6
    %v3195 = vsel %vm3167, %v3186, %v3194
    %v3196 = vrot.slane %v2895, 6
    %v3197 = vsel %vm3167, %v3188, %v3196
    %v3198 = vrot.slane %v2896, 6
    %v3199 = vsel %vm3167, %v3190, %v3198
    %v3200 = vrot.slane %v2897, 6
    %v3201 = vsel %vm3167, %v3192, %v3200
    %v3202 = vrot.slane %v2898, 6
    %v3203 = vsel %vm3167, %v3194, %v3202
    %v3204 = vrot.slane %v2899, 6
    %v3205 = vsel %vm3167, %v3196, %v3204
    %v3206 = vrot.slane %v2900, 6
    %v3207 = vsel %vm3167, %v3198, %v3206
    %v3208 = vrot.slane %v2901, 6
    %v3209 = vsel %vm3167, %v3200, %v3208
    %v3210 = vrot.slane %v2902, 6
    %v3211 = vsel %vm3167, %v3202, %v3210
    %v3212 = vrot.slane %v2903, 6
    %v3213 = vsel %vm3167, %v3204, %v3212
    %v3214 = vrot.slane %v2904, 6
    %v3215 = vsel %vm3167, %v3206, %v3214
    %v3216 = vrot.slane %v2905, 6
    %v3217 = vsel %vm3167, %v3208, %v3216
    %v3218 = vrot.slane %v2906, 6
    %v3219 = vsel %vm3167, %v3210, %v3218
    %v3220 = vrot.slane %v2907, 6
    %v3221 = vsel %vm3167, %v3212, %v3220
    %v3222 = vrot.slane %v2908, 6
    %v3223 = vsel %vm3167, %v3214, %v3222
    %v3224 = vrot.slane %v2909, 6
    %v3225 = vsel %vm3167, %v3216, %v3224
    %v3226 = vrot.slane %v2910, 6
    %v3227 = vsel %vm3167, %v3218, %v3226
    %v3228 = vrot.slane %v2911, 6
    %v3229 = vsel %vm3167, %v3220, %v3228
    %v3230 = vrot.slane %v2912, 6
    %v3231 = vsel %vm3167, %v3222, %v3230
    %v3232 = vrot.slane %v2913, 6
    %v3233 = vsel %vm3167, %v3224, %v3232
    %v3234 = vrot.slane %v2914, 6
    %v3235 = vsel %vm3167, %v3226, %v3234
    %v3236 = vrot.slane %v2915, 6
    %v3237 = vsel %vm3167, %v3228, %v3236
    %v3238 = vrot.slane %v2916, 6
    %v3239 = vsel %vm3167, %v3230, %v3238
    %v3240 = vrot.slane %v2917, 6
    %v3241 = vsel %vm3167, %v3232, %v3240
    %v3242 = vrot.slane %v2918, 6
    %v3243 = vsel %vm3167, %v3234, %v3242
    %v3244 = vrot.slane %v2919, 6
    %v3245 = vsel %vm3167, %v3236, %v3244
    %v3246 = vrot.slane %v2920, 6
    %v3247 = vsel %vm3167, %v3238, %v3246
    %v3248 = vrot.slane %v2921, 6
    %v3249 = vsel %vm3167, %v3240, %v3248
    %v3250 = vrot.slane %v2922, 6
    %v3251 = vsel %vm3167, %v3242, %v3250
    %v3252 = vrot.slane %v2923, 6
    %v3253 = vsel %vm3167, %v3244, %v3252
    %v3254 = vrot.slane %v2924, 6
    %v3255 = vsel %vm3167, %v3246, %v3254
    %v3256 = vrot.slane %v2925, 6
    %v3257 = vsel %vm3167, %v3248, %v3256
    %v3258 = vrot.slane %v2926, 6
    %v3259 = vsel %vm3167, %v3250, %v3258
    %v3260 = vrot.slane %v2927, 6
    %v3261 = vsel %vm3167, %v3252, %v3260
    %v3262 = vrot.slane %v2928, 6
    %v3263 = vsel %vm3167, %v3254, %v3262
    %v3264 = vrot.slane %v2929, 6
    %v3265 = vsel %vm3167, %v3256, %v3264
    %v3266 = vrot.slane %v2930, 6
    %v3267 = vsel %vm3167, %v3258, %v3266
    %v3268 = vrot.slane %v2931, 6
    %v3269 = vsel %vm3167, %v3260, %v3268
    %v3270 = vrot.slane %v2932, 6
    %v3271 = vsel %vm3167, %v3262, %v3270
    %v3272 = vrot.slane %v2933, 6
    %v3273 = vsel %vm3167, %v3264, %v3272
    %v3274 = vrot.slane %v2934, 6
    %v3275 = vsel %vm3167, %v3266, %v3274
    %v3276 = vrot.slane %v2935, 6
    %v3277 = vsel %vm3167, %v3268, %v3276
    %v3278 = vrot.slane %v2936, 6
    %v3279 = vsel %vm3167, %v3270, %v3278
    %v3280 = vrot.slane %v2937, 6
    %v3281 = vsel %vm3167, %v3272, %v3280
    %v3282 = vrot.slane %v2938, 6
    %v3283 = vsel %vm3167, %v3274, %v3282
    %v3284 = vrot.slane %v2939, 6
    %v3285 = vsel %vm3167, %v3276, %v3284
    %v3286 = vrot.slane %v2940, 6
    %v3287 = vsel %vm3167, %v3278, %v3286
    %v3288 = vrot.slane %v2941, 6
    %v3289 = vsel %vm3167, %v3280, %v3288
    %v3290 = vrot.slane %v2942, 6
    %v3291 = vsel %vm3167, %v3282, %v3290
    %v3292 = vrot.slane %v2943, 6
    %v3293 = vsel %vm3167, %v3284, %v3292
    %v3294 = vrot.slane %v2944, 6
    %v3295 = vsel %vm3167, %v3286, %v3294
    %v3296 = vrot.slane %v2945, 6
    %v3297 = vsel %vm3167, %v3288, %v3296
    %v3298 = vrot.slane %v2946, 6
    %v3299 = vsel %vm3167, %v3290, %v3298
    %v3300 = vrot.slane %v2947, 6
    %v3301 = vsel %vm3167, %v3292, %v3300
    %v3302 = vrot.slane %v2948, 6
    %v3303 = vsel %vm3167, %v3294, %v3302
    %v3304 = vrot.slane %v2949, 6
    %v3305 = vsel %vm3167, %v3296, %v3304
    %v3306 = vrot.slane %v2950, 6
    %v3307 = vsel %vm3167, %v3298, %v3306
    %v3308 = vrot.slane %v2951, 6
    %v3309 = vsel %vm3167, %v3300, %v3308
    %v3310 = vrot.slane %v2952, 6
    %v3311 = vsel %vm3167, %v3302, %v3310
    %v3312 = vrot.slane %v2953, 6
    %v3313 = vsel %vm3167, %v3304, %v3312
    %v3314 = vrot.slane %v2954, 6
    %v3315 = vsel %vm3167, %v3306, %v3314
    %v3316 = vrot.slane %v2955, 6
    %v3317 = vsel %vm3167, %v3308, %v3316
    %v3318 = vrot.slane %v2956, 6
    %v3319 = vsel %vm3167, %v3310, %v3318
    %v3320 = vrot.slane %v2957, 6
    %v3321 = vsel %vm3167, %v3312, %v3320
    %v3322 = vrot.slane %v2958, 6
    %v3323 = vsel %vm3167, %v3314, %v3322
    %v3324 = vrot.slane %v2959, 6
    %v3325 = vsel %vm3167, %v3316, %v3324
    %v3326 = vrot.slane %v2960, 6
    %v3327 = vsel %vm3167, %v3318, %v3326
    %v3328 = vrot.slane %v2961, 6
    %v3329 = vsel %vm3167, %v3320, %v3328
    %v3330 = vrot.slane %v2962, 6
    %v3331 = vsel %vm3167, %v3322, %v3330
    %v3332 = vrot.slane %v2963, 6
    %v3333 = vsel %vm3167, %v3324, %v3332
    %v3334 = vrot.slane %v2964, 6
    %v3335 = vsel %vm3167, %v3326, %v3334
    %v3336 = vrot.slane %v2965, 6
    %v3337 = vsel %vm3167, %v3328, %v3336
    %v3338 = vrot.slane %v2966, 6
    %v3339 = vsel %vm3167, %v3330, %v3338
    %v3340 = vrot.slane %v2967, 6
    %v3341 = vsel %vm3167, %v3332, %v3340
    %v3342 = vrot.slane %v2968, 6
    %v3343 = vsel %vm3167, %v3334, %v3342
    %v3344 = vrot.slane %v2969, 6
    %v3345 = vsel %vm3167, %v3336, %v3344
    %v3346 = vrot.slane %v2970, 6
    %v3347 = vsel %vm3167, %v3338, %v3346
    %v3348 = vrot.slane %v2971, 6
    %v3349 = vsel %vm3167, %v3340, %v3348
    %v3350 = vrot.slane %v2972, 6
    %v3351 = vsel %vm3167, %v3342, %v3350
    %v3352 = vrot.slane %v2973, 6
    %v3353 = vsel %vm3167, %v3344, %v3352
    %v3354 = vrot.slane %v2974, 6
    %v3355 = vsel %vm3167, %v3346, %v3354
    %v3356 = vrot.slane %v2975, 6
    %v3357 = vsel %vm3167, %v3348, %v3356
    %v3358 = vrot.slane %v2976, 6
    %v3359 = vsel %vm3167, %v3350, %v3358
    %v3360 = vrot.slane %v2977, 6
    %v3361 = vsel %vm3167, %v3352, %v3360
    %v3362 = vrot.slane %v2978, 6
    %v3363 = vsel %vm3167, %v3354, %v3362
    %v3364 = vrot.slane %v2979, 6
    %v3365 = vsel %vm3167, %v3356, %v3364
    %v3366 = vrot.slane %v2980, 6
    %v3367 = vsel %vm3167, %v3358, %v3366
    %v3368 = vrot.slane %v2981, 6
    %v3369 = vsel %vm3167, %v3360, %v3368
    %v3370 = vrot.slane %v2982, 6
    %v3371 = vsel %vm3167, %v3362, %v3370
    %v3372 = vrot.slane %v2983, 6
    %v3373 = vsel %vm3167, %v3364, %v3372
    %v3374 = vrot.slane %v2984, 6
    %v3375 = vsel %vm3167, %v3366, %v3374
    %v3376 = vrot.slane %v2985, 6
    %v3377 = vsel %vm3167, %v3368, %v3376
    %v3378 = vrot.slane %v2986, 6
    %v3379 = vsel %vm3167, %v3370, %v3378
    %v3380 = vrot.slane %v2987, 6
    %v3381 = vsel %vm3167, %v3372, %v3380
    %v3382 = vrot.slane %v2988, 6
    %v3383 = vsel %vm3167, %v3374, %v3382
    %v3384 = vrot.slane %v2989, 6
    %v3385 = vsel %vm3167, %v3376, %v3384
    %v3386 = vrot.slane %v2990, 6
    %v3387 = vsel %vm3167, %v3378, %v3386
    %v3388 = vrot.slane %v2991, 6
    %v3389 = vsel %vm3167, %v3380, %v3388
    %v3390 = vrot.slane %v2992, 6
    %v3391 = vsel %vm3167, %v3382, %v3390
    %v3392 = vrot.slane %v2993, 6
    %v3393 = vsel %vm3167, %v3384, %v3392
    %v3394 = vrot.slane %v2994, 6
    %v3395 = vsel %vm3167, %v3386, %v3394
    %v3396 = vrot.slane %v2995, 6
    %v3397 = vsel %vm3167, %v3388, %v3396
    %v3398 = vrot.slane %v2996, 6
    %v3399 = vsel %vm3167, %v3390, %v3398
    %v3400 = vrot.slane %v2997, 6
    %v3401 = vsel %vm3167, %v3392, %v3400
    %v3402 = vrot.slane %v2998, 6
    %v3403 = vsel %vm3167, %v3394, %v3402
    %v3404 = vrot.slane %v2999, 6
    %v3405 = vsel %vm3167, %v3396, %v3404
    %v3406 = vrot.slane %v3000, 6
    %v3407 = vsel %vm3167, %v3398, %v3406
    %v3408 = vrot.slane %v3001, 6
    %v3409 = vsel %vm3167, %v3400, %v3408
    %v3410 = vrot.slane %v3002, 6
    %v3411 = vsel %vm3167, %v3402, %v3410
    %v3412 = vrot.slane %v3003, 6
    %v3413 = vsel %vm3167, %v3404, %v3412
    %v3414 = vrot.slane %v3004, 6
    %v3415 = vsel %vm3167, %v3406, %v3414
    %v3416 = vrot.slane %v3005, 6
    %v3417 = vsel %vm3167, %v3408, %v3416
    %v3418 = vrot.slane %v3006, 6
    %v3419 = vsel %vm3167, %v3410, %v3418
    %v3420 = vrot.slane %v3007, 6
    %v3421 = vsel %vm3167, %v3412, %v3420
    %v3422 = vrot.slane %v3008, 6
    %v3423 = vsel %vm3167, %v3414, %v3422
    %v3424 = vrot.slane %v3009, 6
    %v3425 = vsel %vm3167, %v3416, %v3424
    %v3426 = vrot.slane %v3010, 6
    %v3427 = vsel %vm3167, %v3418, %v3426
    %v3428 = vrot.slane %v3011, 6
    %v3429 = vsel %vm3167, %v3420, %v3428
    %v3430 = vrot.slane %v3012, 6
    %v3431 = vsel %vm3167, %v3422, %v3430
    %v3432 = vrot.slane %v3013, 6
    %v3433 = vsel %vm3167, %v3424, %v3432
    %v3434 = vrot.slane %v3014, 6
    %v3435 = vsel %vm3167, %v3426, %v3434
    %v3436 = vrot.slane %v3015, 6
    %v3437 = vsel %vm3167, %v3428, %v3436
    %v3438 = vrot.slane %v3016, 6
    %v3439 = vsel %vm3167, %v3430, %v3438
    %v3440 = vrot.slane %v3017, 6
    %v3441 = vsel %vm3167, %v3432, %v3440
    %v3442 = vrot.slane %v3018, 6
    %v3443 = vsel %vm3167, %v3434, %v3442
    %v3576 = vsel %vm1825, %v3024, 0
    %v3578 = vsel %vm415, %v3437, 0
    %v3580 = vsel %vm415, %v3439, 0
    %v3582 = vsel %vm415, %v3441, 0
    %v3584 = vsel %vm415, %v3443, 0
    %3586 = vmatprep.subr.mxu0 %v3295
    %3587 = vmatpush1.msra.mxu0 %v3293
    %3588 = vmatprep.subr.mxu0 %v3287
    %3589 = vmatpush1.msra.mxu0 %v3285
    %3590 = vmatprep.subr.mxu0 %v3279
    %3591 = vmatpush1.msra.mxu0 %v3277
    %3592 = vmatprep.subr.mxu0 %v3271
    %3593 = vmatpush1.msra.mxu0 %v3269
    %3594 = vmatprep.subr.mxu0 %v3263
    %3595 = vmatpush1.msra.mxu0 %v3261
    %3596 = vmatprep.subr.mxu0 %v3255
    %3597 = vmatpush1.msra.mxu0 %v3253
    %3598 = vmatprep.subr.mxu0 %v3247
    %3599 = vmatpush1.msra.mxu0 %v3245
    %3600 = vmatprep.subr.mxu0 %v3239
    %3601 = vmatpush1.msra.mxu0 %v3237
    %3602 = vmatprep.subr.mxu0 %v3231
    %3603 = vmatpush1.msra.mxu0 %v3229
    %3604 = vmatprep.subr.mxu0 %v3223
    %3605 = vmatpush1.msra.mxu0 %v3221
    %3606 = vmatprep.subr.mxu0 %v3215
    %3607 = vmatpush1.msra.mxu0 %v3213
    %3608 = vmatprep.subr.mxu0 %v3207
    %3609 = vmatpush1.msra.mxu0 %v3205
    %3610 = vmatprep.subr.mxu0 %v3199
    %3611 = vmatpush1.msra.mxu0 %v3197
    %3612 = vmatprep.subr.mxu0 %v3191
    %3613 = vmatpush1.msra.mxu0 %v3189
    %3614 = vmatprep.subr.mxu0 %v3183
    %3615 = vmatpush1.msra.mxu0 %v3181
    %3616 = vmatprep.subr.mxu0 %v3173
    %3617 = vmatpush1.msra.mxu0 %v3170
    %3618 = vmatprep.subr.mxu0 %v3423
    %3619 = vmatpush2.msra.mxu0 %v3421
    %3620 = vmatprep.subr.mxu0 %v3415
    %3621 = vmatpush2.msra.mxu0 %v3413
    %3622 = vmatprep.subr.mxu0 %v3407
    %3623 = vmatpush2.msra.mxu0 %v3405
    %3624 = vmatprep.subr.mxu0 %v3399
    %3625 = vmatpush2.msra.mxu0 %v3397
    %3626 = vmatprep.subr.mxu0 %v3391
    %3627 = vmatpush2.msra.mxu0 %v3389
    %3628 = vmatprep.subr.mxu0 %v3383
    %3629 = vmatpush2.msra.mxu0 %v3381
    %3630 = vmatprep.subr.mxu0 %v3375
    %3631 = vmatpush2.msra.mxu0 %v3373
    %3632 = vmatprep.subr.mxu0 %v3367
    %3633 = vmatpush2.msra.mxu0 %v3365
    %3634 = vmatprep.subr.mxu0 %v3359
    %3635 = vmatpush2.msra.mxu0 %v3357
    %3636 = vmatprep.subr.mxu0 %v3351
    %3637 = vmatpush2.msra.mxu0 %v3349
    %3638 = vmatprep.subr.mxu0 %v3343
    %3639 = vmatpush2.msra.mxu0 %v3341
    %3640 = vmatprep.subr.mxu0 %v3335
    %3641 = vmatpush2.msra.mxu0 %v3333
    %3642 = vmatprep.subr.mxu0 %v3327
    %3643 = vmatpush2.msra.mxu0 %v3325
    %3644 = vmatprep.subr.mxu0 %v3319
    %3645 = vmatpush2.msra.mxu0 %v3317
    %3646 = vmatprep.subr.mxu0 %v3311
    %3647 = vmatpush2.msra.mxu0 %v3309
    %3648 = vmatprep.subr.mxu0 %v3303
    %3649 = vmatpush2.msra.mxu0 %v3301
    %3650 = vmatprep.mubr.f32.mxu0 %v3023
    %3651 = vmatmul.mubr.f32.gmra.mxu0 %v3022
    %v3652 = vpop.f32.mrf.mxu0
    %v3653 = vadd.f32 0.0, %v3652
    %v3654 = vpop.f32.mrf.mxu0
    %v3655 = vadd.f32 0.0, %v3654
    %3656 = vdwg.mxu0
    %3657 = vmatprep.subr.mxu0 0.0
    %3658 = vmatpush1.msra.mxu0 0.0
    %3659 = vmatprep.subr.mxu0 0.0
    %3660 = vmatpush1.msra.mxu0 0.0
    %3661 = vmatprep.subr.mxu0 0.0
    %3662 = vmatpush1.msra.mxu0 0.0
    %3663 = vmatprep.subr.mxu0 0.0
    %3664 = vmatpush1.msra.mxu0 0.0
    %3665 = vmatprep.subr.mxu0 0.0
    %3666 = vmatpush1.msra.mxu0 0.0
    %3667 = vmatprep.subr.mxu0 0.0
    %3668 = vmatpush1.msra.mxu0 0.0
    %3669 = vmatprep.subr.mxu0 0.0
    %3670 = vmatpush1.msra.mxu0 0.0
    %3671 = vmatprep.subr.mxu0 0.0
    %3672 = vmatpush1.msra.mxu0 0.0
    %3673 = vmatprep.subr.mxu0 0.0
    %3674 = vmatpush1.msra.mxu0 0.0
    %3675 = vmatprep.subr.mxu0 0.0
    %3676 = vmatpush1.msra.mxu0 0.0
    %3677 = vmatprep.subr.mxu0 0.0
    %3678 = vmatpush1.msra.mxu0 0.0
    %3679 = vmatprep.subr.mxu0 0.0
    %3680 = vmatpush1.msra.mxu0 0.0
    %3681 = vmatprep.subr.mxu0 0.0
    %3682 = vmatpush1.msra.mxu0 0.0
    %3683 = vmatprep.subr.mxu0 0.0
    %3684 = vmatpush1.msra.mxu0 0.0
    %3685 = vmatprep.subr.mxu0 %v3580
    %3686 = vmatpush1.msra.mxu0 %v3578
    %3687 = vmatprep.subr.mxu0 %v3431
    %3688 = vmatpush1.msra.mxu0 %v3429
    %3689 = vmatprep.subr.mxu0 0.0
    %3690 = vmatpush2.msra.mxu0 0.0
    %3691 = vmatprep.subr.mxu0 0.0
    %3692 = vmatpush2.msra.mxu0 0.0
    %3693 = vmatprep.subr.mxu0 0.0
    %3694 = vmatpush2.msra.mxu0 0.0
    %3695 = vmatprep.subr.mxu0 0.0
    %3696 = vmatpush2.msra.mxu0 0.0
    %3697 = vmatprep.subr.mxu0 0.0
    %3698 = vmatpush2.msra.mxu0 0.0
    %3699 = vmatprep.subr.mxu0 0.0
    %3700 = vmatpush2.msra.mxu0 0.0
    %3701 = vmatprep.subr.mxu0 0.0
    %3702 = vmatpush2.msra.mxu0 0.0
    %3703 = vmatprep.subr.mxu0 0.0
    %3704 = vmatpush2.msra.mxu0 0.0
    %3705 = vmatprep.subr.mxu0 0.0
    %3706 = vmatpush2.msra.mxu0 0.0
    %3707 = vmatprep.subr.mxu0 0.0
    %3708 = vmatpush2.msra.mxu0 0.0
    %3709 = vmatprep.subr.mxu0 0.0
    %3710 = vmatpush2.msra.mxu0 0.0
    %3711 = vmatprep.subr.mxu0 0.0
    %3712 = vmatpush2.msra.mxu0 0.0
    %3713 = vmatprep.subr.mxu0 0.0
    %3714 = vmatpush2.msra.mxu0 0.0
    %3715 = vmatprep.subr.mxu0 0.0
    %3716 = vmatpush2.msra.mxu0 0.0
    %3717 = vmatprep.subr.mxu0 0.0
    %3718 = vmatpush2.msra.mxu0 0.0
    %3719 = vmatprep.subr.mxu0 0.0
    %3720 = vmatpush2.msra.mxu0 0.0
    %3721 = vmatprep.mubr.f32.mxu0 0.0
    %3722 = vmatmul.mubr.f32.gmra.mxu0 %v3576
    %v3723 = vpop.f32.mrf.mxu0
    %v3724 = vadd.f32 %v3653, %v3723
    %v3725 = vpop.f32.mrf.mxu0
    %v3726 = vadd.f32 %v3655, %v3725
    %3727 = vdwg.mxu0
    %3728 = vmatprep.subr.mxu0 %v3299
    %3729 = vmatpush1.msra.mxu0 %v3297
    %3730 = vmatprep.subr.mxu0 %v3291
    %3731 = vmatpush1.msra.mxu0 %v3289
    %3732 = vmatprep.subr.mxu0 %v3283
    %3733 = vmatpush1.msra.mxu0 %v3281
    %3734 = vmatprep.subr.mxu0 %v3275
    %3735 = vmatpush1.msra.mxu0 %v3273
    %3736 = vmatprep.subr.mxu0 %v3267
    %3737 = vmatpush1.msra.mxu0 %v3265
    %3738 = vmatprep.subr.mxu0 %v3259
    %3739 = vmatpush1.msra.mxu0 %v3257
    %3740 = vmatprep.subr.mxu0 %v3251
    %3741 = vmatpush1.msra.mxu0 %v3249
    %3742 = vmatprep.subr.mxu0 %v3243
    %3743 = vmatpush1.msra.mxu0 %v3241
    %3744 = vmatprep.subr.mxu0 %v3235
    %3745 = vmatpush1.msra.mxu0 %v3233
    %3746 = vmatprep.subr.mxu0 %v3227
    %3747 = vmatpush1.msra.mxu0 %v3225
    %3748 = vmatprep.subr.mxu0 %v3219
    %3749 = vmatpush1.msra.mxu0 %v3217
    %3750 = vmatprep.subr.mxu0 %v3211
    %3751 = vmatpush1.msra.mxu0 %v3209
    %3752 = vmatprep.subr.mxu0 %v3203
    %3753 = vmatpush1.msra.mxu0 %v3201
    %3754 = vmatprep.subr.mxu0 %v3195
    %3755 = vmatpush1.msra.mxu0 %v3193
    %3756 = vmatprep.subr.mxu0 %v3187
    %3757 = vmatpush1.msra.mxu0 %v3185
    %3758 = vmatprep.subr.mxu0 %v3179
    %3759 = vmatpush1.msra.mxu0 %v3176
    %3760 = vmatprep.subr.mxu0 %v3427
    %3761 = vmatpush2.msra.mxu0 %v3425
    %3762 = vmatprep.subr.mxu0 %v3419
    %3763 = vmatpush2.msra.mxu0 %v3417
    %3764 = vmatprep.subr.mxu0 %v3411
    %3765 = vmatpush2.msra.mxu0 %v3409
    %3766 = vmatprep.subr.mxu0 %v3403
    %3767 = vmatpush2.msra.mxu0 %v3401
    %3768 = vmatprep.subr.mxu0 %v3395
    %3769 = vmatpush2.msra.mxu0 %v3393
    %3770 = vmatprep.subr.mxu0 %v3387
    %3771 = vmatpush2.msra.mxu0 %v3385
    %3772 = vmatprep.subr.mxu0 %v3379
    %3773 = vmatpush2.msra.mxu0 %v3377
    %3774 = vmatprep.subr.mxu0 %v3371
    %3775 = vmatpush2.msra.mxu0 %v3369
    %3776 = vmatprep.subr.mxu0 %v3363
    %3777 = vmatpush2.msra.mxu0 %v3361
    %3778 = vmatprep.subr.mxu0 %v3355
    %3779 = vmatpush2.msra.mxu0 %v3353
    %3780 = vmatprep.subr.mxu0 %v3347
    %3781 = vmatpush2.msra.mxu0 %v3345
    %3782 = vmatprep.subr.mxu0 %v3339
    %3783 = vmatpush2.msra.mxu0 %v3337
    %3784 = vmatprep.subr.mxu0 %v3331
    %3785 = vmatpush2.msra.mxu0 %v3329
    %3786 = vmatprep.subr.mxu0 %v3323
    %3787 = vmatpush2.msra.mxu0 %v3321
    %3788 = vmatprep.subr.mxu0 %v3315
    %3789 = vmatpush2.msra.mxu0 %v3313
    %3790 = vmatprep.subr.mxu0 %v3307
    %3791 = vmatpush2.msra.mxu0 %v3305
    %3792 = vmatprep.mubr.f32.mxu0 %v3023
    %3793 = vmatmul.mubr.f32.gmra.mxu0 %v3022
    %v3794 = vpop.f32.mrf.mxu0
    %v3795 = vadd.f32 0.0, %v3794
    %v3796 = vpop.f32.mrf.mxu0
    %v3797 = vadd.f32 0.0, %v3796
    %3798 = vdwg.mxu0
    %3799 = vmatprep.subr.mxu0 0.0
    %3800 = vmatpush1.msra.mxu0 0.0
    %3801 = vmatprep.subr.mxu0 0.0
    %3802 = vmatpush1.msra.mxu0 0.0
    %3803 = vmatprep.subr.mxu0 0.0
    %3804 = vmatpush1.msra.mxu0 0.0
    %3805 = vmatprep.subr.mxu0 0.0
    %3806 = vmatpush1.msra.mxu0 0.0
    %3807 = vmatprep.subr.mxu0 0.0
    %3808 = vmatpush1.msra.mxu0 0.0
    %3809 = vmatprep.subr.mxu0 0.0
    %3810 = vmatpush1.msra.mxu0 0.0
    %3811 = vmatprep.subr.mxu0 0.0
    %3812 = vmatpush1.msra.mxu0 0.0
    %3813 = vmatprep.subr.mxu0 0.0
    %3814 = vmatpush1.msra.mxu0 0.0
    %3815 = vmatprep.subr.mxu0 0.0
    %3816 = vmatpush1.msra.mxu0 0.0
    %3817 = vmatprep.subr.mxu0 0.0
    %3818 = vmatpush1.msra.mxu0 0.0
    %3819 = vmatprep.subr.mxu0 0.0
    %3820 = vmatpush1.msra.mxu0 0.0
    %3821 = vmatprep.subr.mxu0 0.0
    %3822 = vmatpush1.msra.mxu0 0.0
    %3823 = vmatprep.subr.mxu0 0.0
    %3824 = vmatpush1.msra.mxu0 0.0
    %3825 = vmatprep.subr.mxu0 0.0
    %3826 = vmatpush1.msra.mxu0 0.0
    %3827 = vmatprep.subr.mxu0 %v3584
    %3828 = vmatpush1.msra.mxu0 %v3582
    %3829 = vmatprep.subr.mxu0 %v3435
    %3830 = vmatpush1.msra.mxu0 %v3433
    %3831 = vmatprep.subr.mxu0 0.0
    %3832 = vmatpush2.msra.mxu0 0.0
    %3833 = vmatprep.subr.mxu0 0.0
    %3834 = vmatpush2.msra.mxu0 0.0
    %3835 = vmatprep.subr.mxu0 0.0
    %3836 = vmatpush2.msra.mxu0 0.0
    %3837 = vmatprep.subr.mxu0 0.0
    %3838 = vmatpush2.msra.mxu0 0.0
    %3839 = vmatprep.subr.mxu0 0.0
    %3840 = vmatpush2.msra.mxu0 0.0
    %3841 = vmatprep.subr.mxu0 0.0
    %3842 = vmatpush2.msra.mxu0 0.0
    %3843 = vmatprep.subr.mxu0 0.0
    %3844 = vmatpush2.msra.mxu0 0.0
    %3845 = vmatprep.subr.mxu0 0.0
    %3846 = vmatpush2.msra.mxu0 0.0
    %3847 = vmatprep.subr.mxu0 0.0
    %3848 = vmatpush2.msra.mxu0 0.0
    %3849 = vmatprep.subr.mxu0 0.0
    %3850 = vmatpush2.msra.mxu0 0.0
    %3851 = vmatprep.subr.mxu0 0.0
    %3852 = vmatpush2.msra.mxu0 0.0
    %3853 = vmatprep.subr.mxu0 0.0
    %3854 = vmatpush2.msra.mxu0 0.0
    %3855 = vmatprep.subr.mxu0 0.0
    %3856 = vmatpush2.msra.mxu0 0.0
    %3857 = vmatprep.subr.mxu0 0.0
    %3858 = vmatpush2.msra.mxu0 0.0
    %3859 = vmatprep.subr.mxu0 0.0
    %3860 = vmatpush2.msra.mxu0 0.0
    %3861 = vmatprep.subr.mxu0 0.0
    %3862 = vmatpush2.msra.mxu0 0.0
    %3863 = vmatprep.mubr.f32.mxu0 0.0
    %3864 = vmatmul.mubr.f32.gmra.mxu0 %v3576
    %v3865 = vpop.f32.mrf.mxu0
    %v3866 = vadd.f32 %v3795, %v3865
    %v3867 = vpop.f32.mrf.mxu0
    %v3868 = vadd.f32 %v3797, %v3867
    %3869 = vdwg.mxu0
    %v3870 = vsel %vm1825, %v2742, 0
    %v3873 = vsel %vm415, %v2875, 0
    %v3876 = vsel %vm415, %v2876, 0
    %v3879 = vsel %vm415, %v2877, 0
    %v3882 = vsel %vm415, %v2878, 0
    %3884 = vmatprep.subr.mxu0 %v2804
    %3885 = vmatpush1.msra.mxu0 %v2803
    %3886 = vmatprep.subr.mxu0 %v2800
    %3887 = vmatpush1.msra.mxu0 %v2799
    %3888 = vmatprep.subr.mxu0 %v2796
    %3889 = vmatpush1.msra.mxu0 %v2795
    %3890 = vmatprep.subr.mxu0 %v2792
    %3891 = vmatpush1.msra.mxu0 %v2791
    %3892 = vmatprep.subr.mxu0 %v2788
    %3893 = vmatpush1.msra.mxu0 %v2787
    %3894 = vmatprep.subr.mxu0 %v2784
    %3895 = vmatpush1.msra.mxu0 %v2783
    %3896 = vmatprep.subr.mxu0 %v2780
    %3897 = vmatpush1.msra.mxu0 %v2779
    %3898 = vmatprep.subr.mxu0 %v2776
    %3899 = vmatpush1.msra.mxu0 %v2775
    %3900 = vmatprep.subr.mxu0 %v2772
    %3901 = vmatpush1.msra.mxu0 %v2771
    %3902 = vmatprep.subr.mxu0 %v2768
    %3903 = vmatpush1.msra.mxu0 %v2767
    %3904 = vmatprep.subr.mxu0 %v2764
    %3905 = vmatpush1.msra.mxu0 %v2763
    %3906 = vmatprep.subr.mxu0 %v2760
    %3907 = vmatpush1.msra.mxu0 %v2759
    %3908 = vmatprep.subr.mxu0 %v2756
    %3909 = vmatpush1.msra.mxu0 %v2755
    %3910 = vmatprep.subr.mxu0 %v2752
    %3911 = vmatpush1.msra.mxu0 %v2751
    %3912 = vmatprep.subr.mxu0 %v2748
    %3913 = vmatpush1.msra.mxu0 %v2747
    %3914 = vmatprep.subr.mxu0 %v2744
    %3915 = vmatpush1.msra.mxu0 %v2743
    %3916 = vmatprep.subr.mxu0 %v2868
    %3917 = vmatpush2.msra.mxu0 %v2867
    %3918 = vmatprep.subr.mxu0 %v2864
    %3919 = vmatpush2.msra.mxu0 %v2863
    %3920 = vmatprep.subr.mxu0 %v2860
    %3921 = vmatpush2.msra.mxu0 %v2859
    %3922 = vmatprep.subr.mxu0 %v2856
    %3923 = vmatpush2.msra.mxu0 %v2855
    %3924 = vmatprep.subr.mxu0 %v2852
    %3925 = vmatpush2.msra.mxu0 %v2851
    %3926 = vmatprep.subr.mxu0 %v2848
    %3927 = vmatpush2.msra.mxu0 %v2847
    %3928 = vmatprep.subr.mxu0 %v2844
    %3929 = vmatpush2.msra.mxu0 %v2843
    %3930 = vmatprep.subr.mxu0 %v2840
    %3931 = vmatpush2.msra.mxu0 %v2839
    %3932 = vmatprep.subr.mxu0 %v2836
    %3933 = vmatpush2.msra.mxu0 %v2835
    %3934 = vmatprep.subr.mxu0 %v2832
    %3935 = vmatpush2.msra.mxu0 %v2831
    %3936 = vmatprep.subr.mxu0 %v2828
    %3937 = vmatpush2.msra.mxu0 %v2827
    %3938 = vmatprep.subr.mxu0 %v2824
    %3939 = vmatpush2.msra.mxu0 %v2823
    %3940 = vmatprep.subr.mxu0 %v2820
    %3941 = vmatpush2.msra.mxu0 %v2819
    %3942 = vmatprep.subr.mxu0 %v2816
    %3943 = vmatpush2.msra.mxu0 %v2815
    %3944 = vmatprep.subr.mxu0 %v2812
    %3945 = vmatpush2.msra.mxu0 %v2811
    %3946 = vmatprep.subr.mxu0 %v2808
    %3947 = vmatpush2.msra.mxu0 %v2807
    %3948 = vmatprep.mubr.f32.mxu0 %v2741
    %3949 = vmatmul.mubr.f32.gmra.mxu0 %v2740
    %v3950 = vpop.f32.mrf.mxu0
    %v3951 = vadd.f32 %v3724, %v3950
    %v3952 = vpop.f32.mrf.mxu0
    %v3953 = vadd.f32 %v3726, %v3952
    %3954 = vdwg.mxu0
    %3955 = vmatprep.subr.mxu0 0.0
    %3956 = vmatpush1.msra.mxu0 0.0
    %3957 = vmatprep.subr.mxu0 0.0
    %3958 = vmatpush1.msra.mxu0 0.0
    %3959 = vmatprep.subr.mxu0 0.0
    %3960 = vmatpush1.msra.mxu0 0.0
    %3961 = vmatprep.subr.mxu0 0.0
    %3962 = vmatpush1.msra.mxu0 0.0
    %3963 = vmatprep.subr.mxu0 0.0
    %3964 = vmatpush1.msra.mxu0 0.0
    %3965 = vmatprep.subr.mxu0 0.0
    %3966 = vmatpush1.msra.mxu0 0.0
    %3967 = vmatprep.subr.mxu0 0.0
    %3968 = vmatpush1.msra.mxu0 0.0
    %3969 = vmatprep.subr.mxu0 0.0
    %3970 = vmatpush1.msra.mxu0 0.0
    %3971 = vmatprep.subr.mxu0 0.0
    %3972 = vmatpush1.msra.mxu0 0.0
    %3973 = vmatprep.subr.mxu0 0.0
    %3974 = vmatpush1.msra.mxu0 0.0
    %3975 = vmatprep.subr.mxu0 0.0
    %3976 = vmatpush1.msra.mxu0 0.0
    %3977 = vmatprep.subr.mxu0 0.0
    %3978 = vmatpush1.msra.mxu0 0.0
    %3979 = vmatprep.subr.mxu0 0.0
    %3980 = vmatpush1.msra.mxu0 0.0
    %3981 = vmatprep.subr.mxu0 0.0
    %3982 = vmatpush1.msra.mxu0 0.0
    %3983 = vmatprep.subr.mxu0 %v3876
    %3984 = vmatpush1.msra.mxu0 %v3873
    %3985 = vmatprep.subr.mxu0 %v2872
    %3986 = vmatpush1.msra.mxu0 %v2871
    %3987 = vmatprep.subr.mxu0 0.0
    %3988 = vmatpush2.msra.mxu0 0.0
    %3989 = vmatprep.subr.mxu0 0.0
    %3990 = vmatpush2.msra.mxu0 0.0
    %3991 = vmatprep.subr.mxu0 0.0
    %3992 = vmatpush2.msra.mxu0 0.0
    %3993 = vmatprep.subr.mxu0 0.0
    %3994 = vmatpush2.msra.mxu0 0.0
    %3995 = vmatprep.subr.mxu0 0.0
    %3996 = vmatpush2.msra.mxu0 0.0
    %3997 = vmatprep.subr.mxu0 0.0
    %3998 = vmatpush2.msra.mxu0 0.0
    %3999 = vmatprep.subr.mxu0 0.0
    %4000 = vmatpush2.msra.mxu0 0.0
    %4001 = vmatprep.subr.mxu0 0.0
    %4002 = vmatpush2.msra.mxu0 0.0
    %4003 = vmatprep.subr.mxu0 0.0
    %4004 = vmatpush2.msra.mxu0 0.0
    %4005 = vmatprep.subr.mxu0 0.0
    %4006 = vmatpush2.msra.mxu0 0.0
    %4007 = vmatprep.subr.mxu0 0.0
    %4008 = vmatpush2.msra.mxu0 0.0
    %4009 = vmatprep.subr.mxu0 0.0
    %4010 = vmatpush2.msra.mxu0 0.0
    %4011 = vmatprep.subr.mxu0 0.0
    %4012 = vmatpush2.msra.mxu0 0.0
    %4013 = vmatprep.subr.mxu0 0.0
    %4014 = vmatpush2.msra.mxu0 0.0
    %4015 = vmatprep.subr.mxu0 0.0
    %4016 = vmatpush2.msra.mxu0 0.0
    %4017 = vmatprep.subr.mxu0 0.0
    %4018 = vmatpush2.msra.mxu0 0.0
    %4019 = vmatprep.mubr.f32.mxu0 0.0
    %4020 = vmatmul.mubr.f32.gmra.mxu0 %v3870
    %v4021 = vpop.f32.mrf.mxu0
    %v4022 = vadd.f32 %v3951, %v4021
    %v4023 = vpop.f32.mrf.mxu0
    %v4024 = vadd.f32 %v3953, %v4023
    %4025 = vdwg.mxu0
    %4026 = vmatprep.subr.mxu0 %v2806
    %4027 = vmatpush1.msra.mxu0 %v2805
    %4028 = vmatprep.subr.mxu0 %v2802
    %4029 = vmatpush1.msra.mxu0 %v2801
    %4030 = vmatprep.subr.mxu0 %v2798
    %4031 = vmatpush1.msra.mxu0 %v2797
    %4032 = vmatprep.subr.mxu0 %v2794
    %4033 = vmatpush1.msra.mxu0 %v2793
    %4034 = vmatprep.subr.mxu0 %v2790
    %4035 = vmatpush1.msra.mxu0 %v2789
    %4036 = vmatprep.subr.mxu0 %v2786
    %4037 = vmatpush1.msra.mxu0 %v2785
    %4038 = vmatprep.subr.mxu0 %v2782
    %4039 = vmatpush1.msra.mxu0 %v2781
    %4040 = vmatprep.subr.mxu0 %v2778
    %4041 = vmatpush1.msra.mxu0 %v2777
    %4042 = vmatprep.subr.mxu0 %v2774
    %4043 = vmatpush1.msra.mxu0 %v2773
    %4044 = vmatprep.subr.mxu0 %v2770
    %4045 = vmatpush1.msra.mxu0 %v2769
    %4046 = vmatprep.subr.mxu0 %v2766
    %4047 = vmatpush1.msra.mxu0 %v2765
    %4048 = vmatprep.subr.mxu0 %v2762
    %4049 = vmatpush1.msra.mxu0 %v2761
    %4050 = vmatprep.subr.mxu0 %v2758
    %4051 = vmatpush1.msra.mxu0 %v2757
    %4052 = vmatprep.subr.mxu0 %v2754
    %4053 = vmatpush1.msra.mxu0 %v2753
    %4054 = vmatprep.subr.mxu0 %v2750
    %4055 = vmatpush1.msra.mxu0 %v2749
    %4056 = vmatprep.subr.mxu0 %v2746
    %4057 = vmatpush1.msra.mxu0 %v2745
    %4058 = vmatprep.subr.mxu0 %v2870
    %4059 = vmatpush2.msra.mxu0 %v2869
    %4060 = vmatprep.subr.mxu0 %v2866
    %4061 = vmatpush2.msra.mxu0 %v2865
    %4062 = vmatprep.subr.mxu0 %v2862
    %4063 = vmatpush2.msra.mxu0 %v2861
    %4064 = vmatprep.subr.mxu0 %v2858
    %4065 = vmatpush2.msra.mxu0 %v2857
    %4066 = vmatprep.subr.mxu0 %v2854
    %4067 = vmatpush2.msra.mxu0 %v2853
    %4068 = vmatprep.subr.mxu0 %v2850
    %4069 = vmatpush2.msra.mxu0 %v2849
    %4070 = vmatprep.subr.mxu0 %v2846
    %4071 = vmatpush2.msra.mxu0 %v2845
    %4072 = vmatprep.subr.mxu0 %v2842
    %4073 = vmatpush2.msra.mxu0 %v2841
    %4074 = vmatprep.subr.mxu0 %v2838
    %4075 = vmatpush2.msra.mxu0 %v2837
    %4076 = vmatprep.subr.mxu0 %v2834
    %4077 = vmatpush2.msra.mxu0 %v2833
    %4078 = vmatprep.subr.mxu0 %v2830
    %4079 = vmatpush2.msra.mxu0 %v2829
    %4080 = vmatprep.subr.mxu0 %v2826
    %4081 = vmatpush2.msra.mxu0 %v2825
    %4082 = vmatprep.subr.mxu0 %v2822
    %4083 = vmatpush2.msra.mxu0 %v2821
    %4084 = vmatprep.subr.mxu0 %v2818
    %4085 = vmatpush2.msra.mxu0 %v2817
    %4086 = vmatprep.subr.mxu0 %v2814
    %4087 = vmatpush2.msra.mxu0 %v2813
    %4088 = vmatprep.subr.mxu0 %v2810
    %4089 = vmatpush2.msra.mxu0 %v2809
    %4090 = vmatprep.mubr.f32.mxu0 %v2741
    %4091 = vmatmul.mubr.f32.gmra.mxu0 %v2740
    %v4092 = vpop.f32.mrf.mxu0
    %v4093 = vadd.f32 %v3866, %v4092
    %v4094 = vpop.f32.mrf.mxu0
    %v4095 = vadd.f32 %v3868, %v4094
    %4096 = vdwg.mxu0
    %4097 = vmatprep.subr.mxu0 0.0
    %4098 = vmatpush1.msra.mxu0 0.0
    %4099 = vmatprep.subr.mxu0 0.0
    %4100 = vmatpush1.msra.mxu0 0.0
    %4101 = vmatprep.subr.mxu0 0.0
    %4102 = vmatpush1.msra.mxu0 0.0
    %4103 = vmatprep.subr.mxu0 0.0
    %4104 = vmatpush1.msra.mxu0 0.0
    %4105 = vmatprep.subr.mxu0 0.0
    %4106 = vmatpush1.msra.mxu0 0.0
    %4107 = vmatprep.subr.mxu0 0.0
    %4108 = vmatpush1.msra.mxu0 0.0
    %4109 = vmatprep.subr.mxu0 0.0
    %4110 = vmatpush1.msra.mxu0 0.0
    %4111 = vmatprep.subr.mxu0 0.0
    %4112 = vmatpush1.msra.mxu0 0.0
    %4113 = vmatprep.subr.mxu0 0.0
    %4114 = vmatpush1.msra.mxu0 0.0
    %4115 = vmatprep.subr.mxu0 0.0
    %4116 = vmatpush1.msra.mxu0 0.0
    %4117 = vmatprep.subr.mxu0 0.0
    %4118 = vmatpush1.msra.mxu0 0.0
    %4119 = vmatprep.subr.mxu0 0.0
    %4120 = vmatpush1.msra.mxu0 0.0
    %4121 = vmatprep.subr.mxu0 0.0
    %4122 = vmatpush1.msra.mxu0 0.0
    %4123 = vmatprep.subr.mxu0 0.0
    %4124 = vmatpush1.msra.mxu0 0.0
    %4125 = vmatprep.subr.mxu0 %v3882
    %4126 = vmatpush1.msra.mxu0 %v3879
    %4127 = vmatprep.subr.mxu0 %v2874
    %4128 = vmatpush1.msra.mxu0 %v2873
    %4129 = vmatprep.subr.mxu0 0.0
    %4130 = vmatpush2.msra.mxu0 0.0
    %4131 = vmatprep.subr.mxu0 0.0
    %4132 = vmatpush2.msra.mxu0 0.0
    %4133 = vmatprep.subr.mxu0 0.0
    %4134 = vmatpush2.msra.mxu0 0.0
    %4135 = vmatprep.subr.mxu0 0.0
    %4136 = vmatpush2.msra.mxu0 0.0
    %4137 = vmatprep.subr.mxu0 0.0
    %4138 = vmatpush2.msra.mxu0 0.0
    %4139 = vmatprep.subr.mxu0 0.0
    %4140 = vmatpush2.msra.mxu0 0.0
    %4141 = vmatprep.subr.mxu0 0.0
    %4142 = vmatpush2.msra.mxu0 0.0
    %4143 = vmatprep.subr.mxu0 0.0
    %4144 = vmatpush2.msra.mxu0 0.0
    %4145 = vmatprep.subr.mxu0 0.0
    %4146 = vmatpush2.msra.mxu0 0.0
    %4147 = vmatprep.subr.mxu0 0.0
    %4148 = vmatpush2.msra.mxu0 0.0
    %4149 = vmatprep.subr.mxu0 0.0
    %4150 = vmatpush2.msra.mxu0 0.0
    %4151 = vmatprep.subr.mxu0 0.0
    %4152 = vmatpush2.msra.mxu0 0.0
    %4153 = vmatprep.subr.mxu0 0.0
    %4154 = vmatpush2.msra.mxu0 0.0
    %4155 = vmatprep.subr.mxu0 0.0
    %4156 = vmatpush2.msra.mxu0 0.0
    %4157 = vmatprep.subr.mxu0 0.0
    %4158 = vmatpush2.msra.mxu0 0.0
    %4159 = vmatprep.subr.mxu0 0.0
    %4160 = vmatpush2.msra.mxu0 0.0
    %4161 = vmatprep.mubr.f32.mxu0 0.0
    %4162 = vmatmul.mubr.f32.gmra.mxu0 %v3870
    %v4163 = vpop.f32.mrf.mxu0
    %v4164 = vadd.f32 %v4093, %v4163
    %v4165 = vpop.f32.mrf.mxu0
    %v4166 = vadd.f32 %v4095, %v4165
    %4167 = vdwg.mxu0
    %v4168 = vld [vmem:[%s6 + $0x860] sm:$0xf0]
    %v4169 = vld [vmem:[%s6 + $0x868] sm:$0xf0]
    %v4170 = vld [vmem:[%s6 + $0x870] sm:$0xf0]
    %v4171 = vld [vmem:[%s6 + $0x878] sm:$0xf0]
    %v4172 = vld [vmem:[%s6 + $0x880] sm:$0xff]
    %v4173 = vld [vmem:[%s6 + $0x888] sm:$0xff]
    %v4174 = vld [vmem:[%s6 + $0x890] sm:$0xff]
    %v4175 = vld [vmem:[%s6 + $0x898] sm:$0xff]
    %v4176 = vld [vmem:[%s6 + $0x8a0] sm:$0xff]
    %v4177 = vld [vmem:[%s6 + $0x8a8] sm:$0xff]
    %v4178 = vld [vmem:[%s6 + $0x8b0] sm:$0xff]
    %v4179 = vld [vmem:[%s6 + $0x8b8] sm:$0xff]
    %v4180 = vld [vmem:[%s6 + $0x8c0] sm:$0xff]
    %v4181 = vld [vmem:[%s6 + $0x8c8] sm:$0xff]
    %v4182 = vld [vmem:[%s6 + $0x8d0] sm:$0xff]
    %v4183 = vld [vmem:[%s6 + $0x8d8] sm:$0xff]
    %v4184 = vld [vmem:[%s6 + $0x8e0] sm:$0xff]
    %v4185 = vld [vmem:[%s6 + $0x8e8] sm:$0xff]
    %v4186 = vld [vmem:[%s6 + $0x8f0] sm:$0xff]
    %v4187 = vld [vmem:[%s6 + $0x8f8] sm:$0xff]
    %v4188 = vld [vmem:[%s6 + $0x900] sm:$0xff]
    %v4189 = vld [vmem:[%s6 + $0x908] sm:$0xff]
    %v4190 = vld [vmem:[%s6 + $0x910] sm:$0xff]
    %v4191 = vld [vmem:[%s6 + $0x918] sm:$0xff]
    %v4192 = vld [vmem:[%s6 + $0x920] sm:$0xff]
    %v4193 = vld [vmem:[%s6 + $0x928] sm:$0xff]
    %v4194 = vld [vmem:[%s6 + $0x930] sm:$0xff]
    %v4195 = vld [vmem:[%s6 + $0x938] sm:$0xff]
    %v4196 = vld [vmem:[%s6 + $0x940] sm:$0xff]
    %v4197 = vld [vmem:[%s6 + $0x948] sm:$0xff]
    %v4198 = vld [vmem:[%s6 + $0x950] sm:$0xff]
    %v4199 = vld [vmem:[%s6 + $0x958] sm:$0xff]
    %v4200 = vld [vmem:[%s6 + $0x960] sm:$0xff]
    %v4201 = vld [vmem:[%s6 + $0x968] sm:$0xff]
    %v4202 = vld [vmem:[%s6 + $0x970] sm:$0xff]
    %v4203 = vld [vmem:[%s6 + $0x978] sm:$0xff]
    %v4204 = vld [vmem:[%s6 + $0x980] sm:$0xff]
    %v4205 = vld [vmem:[%s6 + $0x988] sm:$0xff]
    %v4206 = vld [vmem:[%s6 + $0x990] sm:$0xff]
    %v4207 = vld [vmem:[%s6 + $0x998] sm:$0xff]
    %v4208 = vld [vmem:[%s6 + $0x9a0] sm:$0xff]
    %v4209 = vld [vmem:[%s6 + $0x9a8] sm:$0xff]
    %v4210 = vld [vmem:[%s6 + $0x9b0] sm:$0xff]
    %v4211 = vld [vmem:[%s6 + $0x9b8] sm:$0xff]
    %v4212 = vld [vmem:[%s6 + $0x9c0] sm:$0xff]
    %v4213 = vld [vmem:[%s6 + $0x9c8] sm:$0xff]
    %v4214 = vld [vmem:[%s6 + $0x9d0] sm:$0xff]
    %v4215 = vld [vmem:[%s6 + $0x9d8] sm:$0xff]
    %v4216 = vld [vmem:[%s6 + $0x9e0] sm:$0xff]
    %v4217 = vld [vmem:[%s6 + $0x9e8] sm:$0xff]
    %v4218 = vld [vmem:[%s6 + $0x9f0] sm:$0xff]
    %v4219 = vld [vmem:[%s6 + $0x9f8] sm:$0xff]
    %v4220 = vld [vmem:[%s6 + $0xa00] sm:$0xff]
    %v4221 = vld [vmem:[%s6 + $0xa08] sm:$0xff]
    %v4222 = vld [vmem:[%s6 + $0xa10] sm:$0xff]
    %v4223 = vld [vmem:[%s6 + $0xa18] sm:$0xff]
    %v4224 = vld [vmem:[%s6 + $0xa20] sm:$0xff]
    %v4225 = vld [vmem:[%s6 + $0xa28] sm:$0xff]
    %v4226 = vld [vmem:[%s6 + $0xa30] sm:$0xff]
    %v4227 = vld [vmem:[%s6 + $0xa38] sm:$0xff]
    %v4228 = vld [vmem:[%s6 + $0xa40] sm:$0xff]
    %v4229 = vld [vmem:[%s6 + $0xa48] sm:$0xff]
    %v4230 = vld [vmem:[%s6 + $0xa50] sm:$0xff]
    %v4231 = vld [vmem:[%s6 + $0xa58] sm:$0xff]
    %v4232 = vld [vmem:[%s6 + $0xa60] sm:$0xff]
    %v4233 = vld [vmem:[%s6 + $0xa68] sm:$0xff]
    %v4234 = vld [vmem:[%s6 + $0xa70] sm:$0xff]
    %v4235 = vld [vmem:[%s6 + $0xa78] sm:$0xff]
    %v4236 = vld [vmem:[%s6 + $0xa80] sm:$0xff]
    %v4237 = vld [vmem:[%s6 + $0xa88] sm:$0xff]
    %v4238 = vld [vmem:[%s6 + $0xa90] sm:$0xff]
    %v4239 = vld [vmem:[%s6 + $0xa98] sm:$0xff]
    %v4240 = vld [vmem:[%s6 + $0xaa0] sm:$0xff]
    %v4241 = vld [vmem:[%s6 + $0xaa8] sm:$0xff]
    %v4242 = vld [vmem:[%s6 + $0xab0] sm:$0xff]
    %v4243 = vld [vmem:[%s6 + $0xab8] sm:$0xff]
    %v4244 = vld [vmem:[%s6 + $0xac0] sm:$0xff]
    %v4245 = vld [vmem:[%s6 + $0xac8] sm:$0xff]
    %v4246 = vld [vmem:[%s6 + $0xad0] sm:$0xff]
    %v4247 = vld [vmem:[%s6 + $0xad8] sm:$0xff]
    %v4248 = vld [vmem:[%s6 + $0xae0] sm:$0xff]
    %v4249 = vld [vmem:[%s6 + $0xae8] sm:$0xff]
    %v4250 = vld [vmem:[%s6 + $0xaf0] sm:$0xff]
    %v4251 = vld [vmem:[%s6 + $0xaf8] sm:$0xff]
    %v4252 = vld [vmem:[%s6 + $0xb00] sm:$0xff]
    %v4253 = vld [vmem:[%s6 + $0xb08] sm:$0xff]
    %v4254 = vld [vmem:[%s6 + $0xb10] sm:$0xff]
    %v4255 = vld [vmem:[%s6 + $0xb18] sm:$0xff]
    %v4256 = vld [vmem:[%s6 + $0xb20] sm:$0xff]
    %v4257 = vld [vmem:[%s6 + $0xb28] sm:$0xff]
    %v4258 = vld [vmem:[%s6 + $0xb30] sm:$0xff]
    %v4259 = vld [vmem:[%s6 + $0xb38] sm:$0xff]
    %v4260 = vld [vmem:[%s6 + $0xb40] sm:$0xff]
    %v4261 = vld [vmem:[%s6 + $0xb48] sm:$0xff]
    %v4262 = vld [vmem:[%s6 + $0xb50] sm:$0xff]
    %v4263 = vld [vmem:[%s6 + $0xb58] sm:$0xff]
    %v4264 = vld [vmem:[%s6 + $0xb60] sm:$0xff]
    %v4265 = vld [vmem:[%s6 + $0xb68] sm:$0xff]
    %v4266 = vld [vmem:[%s6 + $0xb70] sm:$0xff]
    %v4267 = vld [vmem:[%s6 + $0xb78] sm:$0xff]
    %v4268 = vld [vmem:[%s6 + $0xb80] sm:$0xff]
    %v4269 = vld [vmem:[%s6 + $0xb88] sm:$0xff]
    %v4270 = vld [vmem:[%s6 + $0xb90] sm:$0xff]
    %v4271 = vld [vmem:[%s6 + $0xb98] sm:$0xff]
    %v4272 = vld [vmem:[%s6 + $0xba0] sm:$0xff]
    %v4273 = vld [vmem:[%s6 + $0xba8] sm:$0xff]
    %v4274 = vld [vmem:[%s6 + $0xbb0] sm:$0xff]
    %v4275 = vld [vmem:[%s6 + $0xbb8] sm:$0xff]
    %v4276 = vld [vmem:[%s6 + $0xbc0] sm:$0xff]
    %v4277 = vld [vmem:[%s6 + $0xbc8] sm:$0xff]
    %v4278 = vld [vmem:[%s6 + $0xbd0] sm:$0xff]
    %v4279 = vld [vmem:[%s6 + $0xbd8] sm:$0xff]
    %v4280 = vld [vmem:[%s6 + $0xbe0] sm:$0xff]
    %v4281 = vld [vmem:[%s6 + $0xbe8] sm:$0xff]
    %v4282 = vld [vmem:[%s6 + $0xbf0] sm:$0xff]
    %v4283 = vld [vmem:[%s6 + $0xbf8] sm:$0xff]
    %v4284 = vld [vmem:[%s6 + $0xc00] sm:$0xff]
    %v4285 = vld [vmem:[%s6 + $0xc08] sm:$0xff]
    %v4286 = vld [vmem:[%s6 + $0xc10] sm:$0xff]
    %v4287 = vld [vmem:[%s6 + $0xc18] sm:$0xff]
    %v4288 = vld [vmem:[%s6 + $0xc20] sm:$0xff]
    %v4289 = vld [vmem:[%s6 + $0xc28] sm:$0xff]
    %v4290 = vld [vmem:[%s6 + $0xc30] sm:$0xff]
    %v4291 = vld [vmem:[%s6 + $0xc38] sm:$0xff]
    %v4292 = vld [vmem:[%s6 + $0xc40] sm:$0xff]
    %v4293 = vld [vmem:[%s6 + $0xc48] sm:$0xff]
    %v4294 = vld [vmem:[%s6 + $0xc50] sm:$0xff]
    %v4295 = vld [vmem:[%s6 + $0xc58] sm:$0xff]
    %v4296 = vld [vmem:[%s6 + $0xc60] sm:$0xff]
    %v4297 = vld [vmem:[%s6 + $0xc68] sm:$0xff]
    %v4298 = vld [vmem:[%s6 + $0xc70] sm:$0xff]
    %v4299 = vld [vmem:[%s6 + $0xc78] sm:$0xff]
    %v4300 = vld [vmem:[%s6 + $0xc80] sm:$0xff]
    %v4301 = vld [vmem:[%s6 + $0xc88] sm:$0xff]
    %v4302 = vld [vmem:[%s6 + $0xc90] sm:$0xff]
    %v4303 = vld [vmem:[%s6 + $0xc98] sm:$0xff]
    %v4304 = vld [vmem:[%s6 + $0xca0] sm:$0x3]
    %v4305 = vld [vmem:[%s6 + $0xca8] sm:$0x3]
    %v4306 = vld [vmem:[%s6 + $0xcb0] sm:$0x3]
    %v4307 = vld [vmem:[%s6 + $0xcb8] sm:$0x3]
    %v4308 = vrot.slane %v2740, 2
    %v4309 = vrot.slane %v2741, 2
    %v4310 = vrot.slane %v2742, 2
    %vm4453 = vcmask 1043456
    %v4454 = vrot.slane %v4168, 4
    %v4455 = vrot.slane %v4172, 4
    %v4456 = vsel %vm4453, %v4454, %v4455
    %v4457 = vrot.slane %v4169, 4
    %v4458 = vrot.slane %v4173, 4
    %v4459 = vsel %vm4453, %v4457, %v4458
    %v4460 = vrot.slane %v4170, 4
    %v4461 = vrot.slane %v4174, 4
    %v4462 = vsel %vm4453, %v4460, %v4461
    %v4463 = vrot.slane %v4171, 4
    %v4464 = vrot.slane %v4175, 4
    %v4465 = vsel %vm4453, %v4463, %v4464
    %v4466 = vrot.slane %v4176, 4
    %v4467 = vsel %vm4453, %v4455, %v4466
    %v4468 = vrot.slane %v4177, 4
    %v4469 = vsel %vm4453, %v4458, %v4468
    %v4470 = vrot.slane %v4178, 4
    %v4471 = vsel %vm4453, %v4461, %v4470
    %v4472 = vrot.slane %v4179, 4
    %v4473 = vsel %vm4453, %v4464, %v4472
    %v4474 = vrot.slane %v4180, 4
    %v4475 = vsel %vm4453, %v4466, %v4474
    %v4476 = vrot.slane %v4181, 4
    %v4477 = vsel %vm4453, %v4468, %v4476
    %v4478 = vrot.slane %v4182, 4
    %v4479 = vsel %vm4453, %v4470, %v4478
    %v4480 = vrot.slane %v4183, 4
    %v4481 = vsel %vm4453, %v4472, %v4480
    %v4482 = vrot.slane %v4184, 4
    %v4483 = vsel %vm4453, %v4474, %v4482
    %v4484 = vrot.slane %v4185, 4
    %v4485 = vsel %vm4453, %v4476, %v4484
    %v4486 = vrot.slane %v4186, 4
    %v4487 = vsel %vm4453, %v4478, %v4486
    %v4488 = vrot.slane %v4187, 4
    %v4489 = vsel %vm4453, %v4480, %v4488
    %v4490 = vrot.slane %v4188, 4
    %v4491 = vsel %vm4453, %v4482, %v4490
    %v4492 = vrot.slane %v4189, 4
    %v4493 = vsel %vm4453, %v4484, %v4492
    %v4494 = vrot.slane %v4190, 4
    %v4495 = vsel %vm4453, %v4486, %v4494
    %v4496 = vrot.slane %v4191, 4
    %v4497 = vsel %vm4453, %v4488, %v4496
    %v4498 = vrot.slane %v4192, 4
    %v4499 = vsel %vm4453, %v4490, %v4498
    %v4500 = vrot.slane %v4193, 4
    %v4501 = vsel %vm4453, %v4492, %v4500
    %v4502 = vrot.slane %v4194, 4
    %v4503 = vsel %vm4453, %v4494, %v4502
    %v4504 = vrot.slane %v4195, 4
    %v4505 = vsel %vm4453, %v4496, %v4504
    %v4506 = vrot.slane %v4196, 4
    %v4507 = vsel %vm4453, %v4498, %v4506
    %v4508 = vrot.slane %v4197, 4
    %v4509 = vsel %vm4453, %v4500, %v4508
    %v4510 = vrot.slane %v4198, 4
    %v4511 = vsel %vm4453, %v4502, %v4510
    %v4512 = vrot.slane %v4199, 4
    %v4513 = vsel %vm4453, %v4504, %v4512
    %v4514 = vrot.slane %v4200, 4
    %v4515 = vsel %vm4453, %v4506, %v4514
    %v4516 = vrot.slane %v4201, 4
    %v4517 = vsel %vm4453, %v4508, %v4516
    %v4518 = vrot.slane %v4202, 4
    %v4519 = vsel %vm4453, %v4510, %v4518
    %v4520 = vrot.slane %v4203, 4
    %v4521 = vsel %vm4453, %v4512, %v4520
    %v4522 = vrot.slane %v4204, 4
    %v4523 = vsel %vm4453, %v4514, %v4522
    %v4524 = vrot.slane %v4205, 4
    %v4525 = vsel %vm4453, %v4516, %v4524
    %v4526 = vrot.slane %v4206, 4
    %v4527 = vsel %vm4453, %v4518, %v4526
    %v4528 = vrot.slane %v4207, 4
    %v4529 = vsel %vm4453, %v4520, %v4528
    %v4530 = vrot.slane %v4208, 4
    %v4531 = vsel %vm4453, %v4522, %v4530
    %v4532 = vrot.slane %v4209, 4
    %v4533 = vsel %vm4453, %v4524, %v4532
    %v4534 = vrot.slane %v4210, 4
    %v4535 = vsel %vm4453, %v4526, %v4534
    %v4536 = vrot.slane %v4211, 4
    %v4537 = vsel %vm4453, %v4528, %v4536
    %v4538 = vrot.slane %v4212, 4
    %v4539 = vsel %vm4453, %v4530, %v4538
    %v4540 = vrot.slane %v4213, 4
    %v4541 = vsel %vm4453, %v4532, %v4540
    %v4542 = vrot.slane %v4214, 4
    %v4543 = vsel %vm4453, %v4534, %v4542
    %v4544 = vrot.slane %v4215, 4
    %v4545 = vsel %vm4453, %v4536, %v4544
    %v4546 = vrot.slane %v4216, 4
    %v4547 = vsel %vm4453, %v4538, %v4546
    %v4548 = vrot.slane %v4217, 4
    %v4549 = vsel %vm4453, %v4540, %v4548
    %v4550 = vrot.slane %v4218, 4
    %v4551 = vsel %vm4453, %v4542, %v4550
    %v4552 = vrot.slane %v4219, 4
    %v4553 = vsel %vm4453, %v4544, %v4552
    %v4554 = vrot.slane %v4220, 4
    %v4555 = vsel %vm4453, %v4546, %v4554
    %v4556 = vrot.slane %v4221, 4
    %v4557 = vsel %vm4453, %v4548, %v4556
    %v4558 = vrot.slane %v4222, 4
    %v4559 = vsel %vm4453, %v4550, %v4558
    %v4560 = vrot.slane %v4223, 4
    %v4561 = vsel %vm4453, %v4552, %v4560
    %v4562 = vrot.slane %v4224, 4
    %v4563 = vsel %vm4453, %v4554, %v4562
    %v4564 = vrot.slane %v4225, 4
    %v4565 = vsel %vm4453, %v4556, %v4564
    %v4566 = vrot.slane %v4226, 4
    %v4567 = vsel %vm4453, %v4558, %v4566
    %v4568 = vrot.slane %v4227, 4
    %v4569 = vsel %vm4453, %v4560, %v4568
    %v4570 = vrot.slane %v4228, 4
    %v4571 = vsel %vm4453, %v4562, %v4570
    %v4572 = vrot.slane %v4229, 4
    %v4573 = vsel %vm4453, %v4564, %v4572
    %v4574 = vrot.slane %v4230, 4
    %v4575 = vsel %vm4453, %v4566, %v4574
    %v4576 = vrot.slane %v4231, 4
    %v4577 = vsel %vm4453, %v4568, %v4576
    %v4578 = vrot.slane %v4232, 4
    %v4579 = vsel %vm4453, %v4570, %v4578
    %v4580 = vrot.slane %v4233, 4
    %v4581 = vsel %vm4453, %v4572, %v4580
    %v4582 = vrot.slane %v4234, 4
    %v4583 = vsel %vm4453, %v4574, %v4582
    %v4584 = vrot.slane %v4235, 4
    %v4585 = vsel %vm4453, %v4576, %v4584
    %v4586 = vrot.slane %v4236, 4
    %v4587 = vsel %vm4453, %v4578, %v4586
    %v4588 = vrot.slane %v4237, 4
    %v4589 = vsel %vm4453, %v4580, %v4588
    %v4590 = vrot.slane %v4238, 4
    %v4591 = vsel %vm4453, %v4582, %v4590
    %v4592 = vrot.slane %v4239, 4
    %v4593 = vsel %vm4453, %v4584, %v4592
    %v4594 = vrot.slane %v4240, 4
    %v4595 = vsel %vm4453, %v4586, %v4594
    %v4596 = vrot.slane %v4241, 4
    %v4597 = vsel %vm4453, %v4588, %v4596
    %v4598 = vrot.slane %v4242, 4
    %v4599 = vsel %vm4453, %v4590, %v4598
    %v4600 = vrot.slane %v4243, 4
    %v4601 = vsel %vm4453, %v4592, %v4600
    %v4602 = vrot.slane %v4244, 4
    %v4603 = vsel %vm4453, %v4594, %v4602
    %v4604 = vrot.slane %v4245, 4
    %v4605 = vsel %vm4453, %v4596, %v4604
    %v4606 = vrot.slane %v4246, 4
    %v4607 = vsel %vm4453, %v4598, %v4606
    %v4608 = vrot.slane %v4247, 4
    %v4609 = vsel %vm4453, %v4600, %v4608
    %v4610 = vrot.slane %v4248, 4
    %v4611 = vsel %vm4453, %v4602, %v4610
    %v4612 = vrot.slane %v4249, 4
    %v4613 = vsel %vm4453, %v4604, %v4612
    %v4614 = vrot.slane %v4250, 4
    %v4615 = vsel %vm4453, %v4606, %v4614
    %v4616 = vrot.slane %v4251, 4
    %v4617 = vsel %vm4453, %v4608, %v4616
    %v4618 = vrot.slane %v4252, 4
    %v4619 = vsel %vm4453, %v4610, %v4618
    %v4620 = vrot.slane %v4253, 4
    %v4621 = vsel %vm4453, %v4612, %v4620
    %v4622 = vrot.slane %v4254, 4
    %v4623 = vsel %vm4453, %v4614, %v4622
    %v4624 = vrot.slane %v4255, 4
    %v4625 = vsel %vm4453, %v4616, %v4624
    %v4626 = vrot.slane %v4256, 4
    %v4627 = vsel %vm4453, %v4618, %v4626
    %v4628 = vrot.slane %v4257, 4
    %v4629 = vsel %vm4453, %v4620, %v4628
    %v4630 = vrot.slane %v4258, 4
    %v4631 = vsel %vm4453, %v4622, %v4630
    %v4632 = vrot.slane %v4259, 4
    %v4633 = vsel %vm4453, %v4624, %v4632
    %v4634 = vrot.slane %v4260, 4
    %v4635 = vsel %vm4453, %v4626, %v4634
    %v4636 = vrot.slane %v4261, 4
    %v4637 = vsel %vm4453, %v4628, %v4636
    %v4638 = vrot.slane %v4262, 4
    %v4639 = vsel %vm4453, %v4630, %v4638
    %v4640 = vrot.slane %v4263, 4
    %v4641 = vsel %vm4453, %v4632, %v4640
    %v4642 = vrot.slane %v4264, 4
    %v4643 = vsel %vm4453, %v4634, %v4642
    %v4644 = vrot.slane %v4265, 4
    %v4645 = vsel %vm4453, %v4636, %v4644
    %v4646 = vrot.slane %v4266, 4
    %v4647 = vsel %vm4453, %v4638, %v4646
    %v4648 = vrot.slane %v4267, 4
    %v4649 = vsel %vm4453, %v4640, %v4648
    %v4650 = vrot.slane %v4268, 4
    %v4651 = vsel %vm4453, %v4642, %v4650
    %v4652 = vrot.slane %v4269, 4
    %v4653 = vsel %vm4453, %v4644, %v4652
    %v4654 = vrot.slane %v4270, 4
    %v4655 = vsel %vm4453, %v4646, %v4654
    %v4656 = vrot.slane %v4271, 4
    %v4657 = vsel %vm4453, %v4648, %v4656
    %v4658 = vrot.slane %v4272, 4
    %v4659 = vsel %vm4453, %v4650, %v4658
    %v4660 = vrot.slane %v4273, 4
    %v4661 = vsel %vm4453, %v4652, %v4660
    %v4662 = vrot.slane %v4274, 4
    %v4663 = vsel %vm4453, %v4654, %v4662
    %v4664 = vrot.slane %v4275, 4
    %v4665 = vsel %vm4453, %v4656, %v4664
    %v4666 = vrot.slane %v4276, 4
    %v4667 = vsel %vm4453, %v4658, %v4666
    %v4668 = vrot.slane %v4277, 4
    %v4669 = vsel %vm4453, %v4660, %v4668
    %v4670 = vrot.slane %v4278, 4
    %v4671 = vsel %vm4453, %v4662, %v4670
    %v4672 = vrot.slane %v4279, 4
    %v4673 = vsel %vm4453, %v4664, %v4672
    %v4674 = vrot.slane %v4280, 4
    %v4675 = vsel %vm4453, %v4666, %v4674
    %v4676 = vrot.slane %v4281, 4
    %v4677 = vsel %vm4453, %v4668, %v4676
    %v4678 = vrot.slane %v4282, 4
    %v4679 = vsel %vm4453, %v4670, %v4678
    %v4680 = vrot.slane %v4283, 4
    %v4681 = vsel %vm4453, %v4672, %v4680
    %v4682 = vrot.slane %v4284, 4
    %v4683 = vsel %vm4453, %v4674, %v4682
    %v4684 = vrot.slane %v4285, 4
    %v4685 = vsel %vm4453, %v4676, %v4684
    %v4686 = vrot.slane %v4286, 4
    %v4687 = vsel %vm4453, %v4678, %v4686
    %v4688 = vrot.slane %v4287, 4
    %v4689 = vsel %vm4453, %v4680, %v4688
    %v4690 = vrot.slane %v4288, 4
    %v4691 = vsel %vm4453, %v4682, %v4690
    %v4692 = vrot.slane %v4289, 4
    %v4693 = vsel %vm4453, %v4684, %v4692
    %v4694 = vrot.slane %v4290, 4
    %v4695 = vsel %vm4453, %v4686, %v4694
    %v4696 = vrot.slane %v4291, 4
    %v4697 = vsel %vm4453, %v4688, %v4696
    %v4698 = vrot.slane %v4292, 4
    %v4699 = vsel %vm4453, %v4690, %v4698
    %v4700 = vrot.slane %v4293, 4
    %v4701 = vsel %vm4453, %v4692, %v4700
    %v4702 = vrot.slane %v4294, 4
    %v4703 = vsel %vm4453, %v4694, %v4702
    %v4704 = vrot.slane %v4295, 4
    %v4705 = vsel %vm4453, %v4696, %v4704
    %v4706 = vrot.slane %v4296, 4
    %v4707 = vsel %vm4453, %v4698, %v4706
    %v4708 = vrot.slane %v4297, 4
    %v4709 = vsel %vm4453, %v4700, %v4708
    %v4710 = vrot.slane %v4298, 4
    %v4711 = vsel %vm4453, %v4702, %v4710
    %v4712 = vrot.slane %v4299, 4
    %v4713 = vsel %vm4453, %v4704, %v4712
    %v4714 = vrot.slane %v4300, 4
    %v4715 = vsel %vm4453, %v4706, %v4714
    %v4716 = vrot.slane %v4301, 4
    %v4717 = vsel %vm4453, %v4708, %v4716
    %v4718 = vrot.slane %v4302, 4
    %v4719 = vsel %vm4453, %v4710, %v4718
    %v4720 = vrot.slane %v4303, 4
    %v4721 = vsel %vm4453, %v4712, %v4720
    %v4722 = vrot.slane %v4304, 4
    %v4723 = vsel %vm4453, %v4714, %v4722
    %v4724 = vrot.slane %v4305, 4
    %v4725 = vsel %vm4453, %v4716, %v4724
    %v4726 = vrot.slane %v4306, 4
    %v4727 = vsel %vm4453, %v4718, %v4726
    %v4728 = vrot.slane %v4307, 4
    %v4729 = vsel %vm4453, %v4720, %v4728
    %v4862 = vsel %vm1825, %v4310, 0
    %v4864 = vsel %vm415, %v4723, 0
    %v4866 = vsel %vm415, %v4725, 0
    %v4868 = vsel %vm415, %v4727, 0
    %v4870 = vsel %vm415, %v4729, 0
    %4872 = vmatprep.subr.mxu0 %v4581
    %4873 = vmatpush1.msra.mxu0 %v4579
    %4874 = vmatprep.subr.mxu0 %v4573
    %4875 = vmatpush1.msra.mxu0 %v4571
    %4876 = vmatprep.subr.mxu0 %v4565
    %4877 = vmatpush1.msra.mxu0 %v4563
    %4878 = vmatprep.subr.mxu0 %v4557
    %4879 = vmatpush1.msra.mxu0 %v4555
    %4880 = vmatprep.subr.mxu0 %v4549
    %4881 = vmatpush1.msra.mxu0 %v4547
    %4882 = vmatprep.subr.mxu0 %v4541
    %4883 = vmatpush1.msra.mxu0 %v4539
    %4884 = vmatprep.subr.mxu0 %v4533
    %4885 = vmatpush1.msra.mxu0 %v4531
    %4886 = vmatprep.subr.mxu0 %v4525
    %4887 = vmatpush1.msra.mxu0 %v4523
    %4888 = vmatprep.subr.mxu0 %v4517
    %4889 = vmatpush1.msra.mxu0 %v4515
    %4890 = vmatprep.subr.mxu0 %v4509
    %4891 = vmatpush1.msra.mxu0 %v4507
    %4892 = vmatprep.subr.mxu0 %v4501
    %4893 = vmatpush1.msra.mxu0 %v4499
    %4894 = vmatprep.subr.mxu0 %v4493
    %4895 = vmatpush1.msra.mxu0 %v4491
    %4896 = vmatprep.subr.mxu0 %v4485
    %4897 = vmatpush1.msra.mxu0 %v4483
    %4898 = vmatprep.subr.mxu0 %v4477
    %4899 = vmatpush1.msra.mxu0 %v4475
    %4900 = vmatprep.subr.mxu0 %v4469
    %4901 = vmatpush1.msra.mxu0 %v4467
    %4902 = vmatprep.subr.mxu0 %v4459
    %4903 = vmatpush1.msra.mxu0 %v4456
    %4904 = vmatprep.subr.mxu0 %v4709
    %4905 = vmatpush2.msra.mxu0 %v4707
    %4906 = vmatprep.subr.mxu0 %v4701
    %4907 = vmatpush2.msra.mxu0 %v4699
    %4908 = vmatprep.subr.mxu0 %v4693
    %4909 = vmatpush2.msra.mxu0 %v4691
    %4910 = vmatprep.subr.mxu0 %v4685
    %4911 = vmatpush2.msra.mxu0 %v4683
    %4912 = vmatprep.subr.mxu0 %v4677
    %4913 = vmatpush2.msra.mxu0 %v4675
    %4914 = vmatprep.subr.mxu0 %v4669
    %4915 = vmatpush2.msra.mxu0 %v4667
    %4916 = vmatprep.subr.mxu0 %v4661
    %4917 = vmatpush2.msra.mxu0 %v4659
    %4918 = vmatprep.subr.mxu0 %v4653
    %4919 = vmatpush2.msra.mxu0 %v4651
    %4920 = vmatprep.subr.mxu0 %v4645
    %4921 = vmatpush2.msra.mxu0 %v4643
    %4922 = vmatprep.subr.mxu0 %v4637
    %4923 = vmatpush2.msra.mxu0 %v4635
    %4924 = vmatprep.subr.mxu0 %v4629
    %4925 = vmatpush2.msra.mxu0 %v4627
    %4926 = vmatprep.subr.mxu0 %v4621
    %4927 = vmatpush2.msra.mxu0 %v4619
    %4928 = vmatprep.subr.mxu0 %v4613
    %4929 = vmatpush2.msra.mxu0 %v4611
    %4930 = vmatprep.subr.mxu0 %v4605
    %4931 = vmatpush2.msra.mxu0 %v4603
    %4932 = vmatprep.subr.mxu0 %v4597
    %4933 = vmatpush2.msra.mxu0 %v4595
    %4934 = vmatprep.subr.mxu0 %v4589
    %4935 = vmatpush2.msra.mxu0 %v4587
    %4936 = vmatprep.mubr.f32.mxu0 %v4309
    %4937 = vmatmul.mubr.f32.gmra.mxu0 %v4308
    %v4938 = vpop.f32.mrf.mxu0
    %v4939 = vadd.f32 0.0, %v4938
    %v4940 = vpop.f32.mrf.mxu0
    %v4941 = vadd.f32 0.0, %v4940
    %4942 = vdwg.mxu0
    %4943 = vmatprep.subr.mxu0 0.0
    %4944 = vmatpush1.msra.mxu0 0.0
    %4945 = vmatprep.subr.mxu0 0.0
    %4946 = vmatpush1.msra.mxu0 0.0
    %4947 = vmatprep.subr.mxu0 0.0
    %4948 = vmatpush1.msra.mxu0 0.0
    %4949 = vmatprep.subr.mxu0 0.0
    %4950 = vmatpush1.msra.mxu0 0.0
    %4951 = vmatprep.subr.mxu0 0.0
    %4952 = vmatpush1.msra.mxu0 0.0
    %4953 = vmatprep.subr.mxu0 0.0
    %4954 = vmatpush1.msra.mxu0 0.0
    %4955 = vmatprep.subr.mxu0 0.0
    %4956 = vmatpush1.msra.mxu0 0.0
    %4957 = vmatprep.subr.mxu0 0.0
    %4958 = vmatpush1.msra.mxu0 0.0
    %4959 = vmatprep.subr.mxu0 0.0
    %4960 = vmatpush1.msra.mxu0 0.0
    %4961 = vmatprep.subr.mxu0 0.0
    %4962 = vmatpush1.msra.mxu0 0.0
    %4963 = vmatprep.subr.mxu0 0.0
    %4964 = vmatpush1.msra.mxu0 0.0
    %4965 = vmatprep.subr.mxu0 0.0
    %4966 = vmatpush1.msra.mxu0 0.0
    %4967 = vmatprep.subr.mxu0 0.0
    %4968 = vmatpush1.msra.mxu0 0.0
    %4969 = vmatprep.subr.mxu0 0.0
    %4970 = vmatpush1.msra.mxu0 0.0
    %4971 = vmatprep.subr.mxu0 %v4866
    %4972 = vmatpush1.msra.mxu0 %v4864
    %4973 = vmatprep.subr.mxu0 %v4717
    %4974 = vmatpush1.msra.mxu0 %v4715
    %4975 = vmatprep.subr.mxu0 0.0
    %4976 = vmatpush2.msra.mxu0 0.0
    %4977 = vmatprep.subr.mxu0 0.0
    %4978 = vmatpush2.msra.mxu0 0.0
    %4979 = vmatprep.subr.mxu0 0.0
    %4980 = vmatpush2.msra.mxu0 0.0
    %4981 = vmatprep.subr.mxu0 0.0
    %4982 = vmatpush2.msra.mxu0 0.0
    %4983 = vmatprep.subr.mxu0 0.0
    %4984 = vmatpush2.msra.mxu0 0.0
    %4985 = vmatprep.subr.mxu0 0.0
    %4986 = vmatpush2.msra.mxu0 0.0
    %4987 = vmatprep.subr.mxu0 0.0
    %4988 = vmatpush2.msra.mxu0 0.0
    %4989 = vmatprep.subr.mxu0 0.0
    %4990 = vmatpush2.msra.mxu0 0.0
    %4991 = vmatprep.subr.mxu0 0.0
    %4992 = vmatpush2.msra.mxu0 0.0
    %4993 = vmatprep.subr.mxu0 0.0
    %4994 = vmatpush2.msra.mxu0 0.0
    %4995 = vmatprep.subr.mxu0 0.0
    %4996 = vmatpush2.msra.mxu0 0.0
    %4997 = vmatprep.subr.mxu0 0.0
    %4998 = vmatpush2.msra.mxu0 0.0
    %4999 = vmatprep.subr.mxu0 0.0
    %5000 = vmatpush2.msra.mxu0 0.0
    %5001 = vmatprep.subr.mxu0 0.0
    %5002 = vmatpush2.msra.mxu0 0.0
    %5003 = vmatprep.subr.mxu0 0.0
    %5004 = vmatpush2.msra.mxu0 0.0
    %5005 = vmatprep.subr.mxu0 0.0
    %5006 = vmatpush2.msra.mxu0 0.0
    %5007 = vmatprep.mubr.f32.mxu0 0.0
    %5008 = vmatmul.mubr.f32.gmra.mxu0 %v4862
    %v5009 = vpop.f32.mrf.mxu0
    %v5010 = vadd.f32 %v4939, %v5009
    %v5011 = vpop.f32.mrf.mxu0
    %v5012 = vadd.f32 %v4941, %v5011
    %5013 = vdwg.mxu0
    %5014 = vmatprep.subr.mxu0 %v4585
    %5015 = vmatpush1.msra.mxu0 %v4583
    %5016 = vmatprep.subr.mxu0 %v4577
    %5017 = vmatpush1.msra.mxu0 %v4575
    %5018 = vmatprep.subr.mxu0 %v4569
    %5019 = vmatpush1.msra.mxu0 %v4567
    %5020 = vmatprep.subr.mxu0 %v4561
    %5021 = vmatpush1.msra.mxu0 %v4559
    %5022 = vmatprep.subr.mxu0 %v4553
    %5023 = vmatpush1.msra.mxu0 %v4551
    %5024 = vmatprep.subr.mxu0 %v4545
    %5025 = vmatpush1.msra.mxu0 %v4543
    %5026 = vmatprep.subr.mxu0 %v4537
    %5027 = vmatpush1.msra.mxu0 %v4535
    %5028 = vmatprep.subr.mxu0 %v4529
    %5029 = vmatpush1.msra.mxu0 %v4527
    %5030 = vmatprep.subr.mxu0 %v4521
    %5031 = vmatpush1.msra.mxu0 %v4519
    %5032 = vmatprep.subr.mxu0 %v4513
    %5033 = vmatpush1.msra.mxu0 %v4511
    %5034 = vmatprep.subr.mxu0 %v4505
    %5035 = vmatpush1.msra.mxu0 %v4503
    %5036 = vmatprep.subr.mxu0 %v4497
    %5037 = vmatpush1.msra.mxu0 %v4495
    %5038 = vmatprep.subr.mxu0 %v4489
    %5039 = vmatpush1.msra.mxu0 %v4487
    %5040 = vmatprep.subr.mxu0 %v4481
    %5041 = vmatpush1.msra.mxu0 %v4479
    %5042 = vmatprep.subr.mxu0 %v4473
    %5043 = vmatpush1.msra.mxu0 %v4471
    %5044 = vmatprep.subr.mxu0 %v4465
    %5045 = vmatpush1.msra.mxu0 %v4462
    %5046 = vmatprep.subr.mxu0 %v4713
    %5047 = vmatpush2.msra.mxu0 %v4711
    %5048 = vmatprep.subr.mxu0 %v4705
    %5049 = vmatpush2.msra.mxu0 %v4703
    %5050 = vmatprep.subr.mxu0 %v4697
    %5051 = vmatpush2.msra.mxu0 %v4695
    %5052 = vmatprep.subr.mxu0 %v4689
    %5053 = vmatpush2.msra.mxu0 %v4687
    %5054 = vmatprep.subr.mxu0 %v4681
    %5055 = vmatpush2.msra.mxu0 %v4679
    %5056 = vmatprep.subr.mxu0 %v4673
    %5057 = vmatpush2.msra.mxu0 %v4671
    %5058 = vmatprep.subr.mxu0 %v4665
    %5059 = vmatpush2.msra.mxu0 %v4663
    %5060 = vmatprep.subr.mxu0 %v4657
    %5061 = vmatpush2.msra.mxu0 %v4655
    %5062 = vmatprep.subr.mxu0 %v4649
    %5063 = vmatpush2.msra.mxu0 %v4647
    %5064 = vmatprep.subr.mxu0 %v4641
    %5065 = vmatpush2.msra.mxu0 %v4639
    %5066 = vmatprep.subr.mxu0 %v4633
    %5067 = vmatpush2.msra.mxu0 %v4631
    %5068 = vmatprep.subr.mxu0 %v4625
    %5069 = vmatpush2.msra.mxu0 %v4623
    %5070 = vmatprep.subr.mxu0 %v4617
    %5071 = vmatpush2.msra.mxu0 %v4615
    %5072 = vmatprep.subr.mxu0 %v4609
    %5073 = vmatpush2.msra.mxu0 %v4607
    %5074 = vmatprep.subr.mxu0 %v4601
    %5075 = vmatpush2.msra.mxu0 %v4599
    %5076 = vmatprep.subr.mxu0 %v4593
    %5077 = vmatpush2.msra.mxu0 %v4591
    %5078 = vmatprep.mubr.f32.mxu0 %v4309
    %5079 = vmatmul.mubr.f32.gmra.mxu0 %v4308
    %v5080 = vpop.f32.mrf.mxu0
    %v5081 = vadd.f32 0.0, %v5080
    %v5082 = vpop.f32.mrf.mxu0
    %v5083 = vadd.f32 0.0, %v5082
    %5084 = vdwg.mxu0
    %5085 = vmatprep.subr.mxu0 0.0
    %5086 = vmatpush1.msra.mxu0 0.0
    %5087 = vmatprep.subr.mxu0 0.0
    %5088 = vmatpush1.msra.mxu0 0.0
    %5089 = vmatprep.subr.mxu0 0.0
    %5090 = vmatpush1.msra.mxu0 0.0
    %5091 = vmatprep.subr.mxu0 0.0
    %5092 = vmatpush1.msra.mxu0 0.0
    %5093 = vmatprep.subr.mxu0 0.0
    %5094 = vmatpush1.msra.mxu0 0.0
    %5095 = vmatprep.subr.mxu0 0.0
    %5096 = vmatpush1.msra.mxu0 0.0
    %5097 = vmatprep.subr.mxu0 0.0
    %5098 = vmatpush1.msra.mxu0 0.0
    %5099 = vmatprep.subr.mxu0 0.0
    %5100 = vmatpush1.msra.mxu0 0.0
    %5101 = vmatprep.subr.mxu0 0.0
    %5102 = vmatpush1.msra.mxu0 0.0
    %5103 = vmatprep.subr.mxu0 0.0
    %5104 = vmatpush1.msra.mxu0 0.0
    %5105 = vmatprep.subr.mxu0 0.0
    %5106 = vmatpush1.msra.mxu0 0.0
    %5107 = vmatprep.subr.mxu0 0.0
    %5108 = vmatpush1.msra.mxu0 0.0
    %5109 = vmatprep.subr.mxu0 0.0
    %5110 = vmatpush1.msra.mxu0 0.0
    %5111 = vmatprep.subr.mxu0 0.0
    %5112 = vmatpush1.msra.mxu0 0.0
    %5113 = vmatprep.subr.mxu0 %v4870
    %5114 = vmatpush1.msra.mxu0 %v4868
    %5115 = vmatprep.subr.mxu0 %v4721
    %5116 = vmatpush1.msra.mxu0 %v4719
    %5117 = vmatprep.subr.mxu0 0.0
    %5118 = vmatpush2.msra.mxu0 0.0
    %5119 = vmatprep.subr.mxu0 0.0
    %5120 = vmatpush2.msra.mxu0 0.0
    %5121 = vmatprep.subr.mxu0 0.0
    %5122 = vmatpush2.msra.mxu0 0.0
    %5123 = vmatprep.subr.mxu0 0.0
    %5124 = vmatpush2.msra.mxu0 0.0
    %5125 = vmatprep.subr.mxu0 0.0
    %5126 = vmatpush2.msra.mxu0 0.0
    %5127 = vmatprep.subr.mxu0 0.0
    %5128 = vmatpush2.msra.mxu0 0.0
    %5129 = vmatprep.subr.mxu0 0.0
    %5130 = vmatpush2.msra.mxu0 0.0
    %5131 = vmatprep.subr.mxu0 0.0
    %5132 = vmatpush2.msra.mxu0 0.0
    %5133 = vmatprep.subr.mxu0 0.0
    %5134 = vmatpush2.msra.mxu0 0.0
    %5135 = vmatprep.subr.mxu0 0.0
    %5136 = vmatpush2.msra.mxu0 0.0
    %5137 = vmatprep.subr.mxu0 0.0
    %5138 = vmatpush2.msra.mxu0 0.0
    %5139 = vmatprep.subr.mxu0 0.0
    %5140 = vmatpush2.msra.mxu0 0.0
    %5141 = vmatprep.subr.mxu0 0.0
    %5142 = vmatpush2.msra.mxu0 0.0
    %5143 = vmatprep.subr.mxu0 0.0
    %5144 = vmatpush2.msra.mxu0 0.0
    %5145 = vmatprep.subr.mxu0 0.0
    %5146 = vmatpush2.msra.mxu0 0.0
    %5147 = vmatprep.subr.mxu0 0.0
    %5148 = vmatpush2.msra.mxu0 0.0
    %5149 = vmatprep.mubr.f32.mxu0 0.0
    %5150 = vmatmul.mubr.f32.gmra.mxu0 %v4862
    %v5151 = vpop.f32.mrf.mxu0
    %v5152 = vadd.f32 %v5081, %v5151
    %v5153 = vpop.f32.mrf.mxu0
    %v5154 = vadd.f32 %v5083, %v5153
    %5155 = vdwg.mxu0
    %v5156 = vadd.f32 %v4022, %v5010
    %v5157 = vadd.f32 %v4024, %v5012
    %v5158 = vadd.f32 %v4164, %v5152
    %v5159 = vadd.f32 %v4166, %v5154
    %v5160 = vld [vmem:[%s6 + $0xca0] sm:$0xfc]
    %v5161 = vld [vmem:[%s6 + $0xca8] sm:$0xfc]
    %v5162 = vld [vmem:[%s6 + $0xcb0] sm:$0xfc]
    %v5163 = vld [vmem:[%s6 + $0xcb8] sm:$0xfc]
    %v5164 = vld [vmem:[%s6 + $0xcc0] sm:$0xff]
    %v5165 = vld [vmem:[%s6 + $0xcc8] sm:$0xff]
    %v5166 = vld [vmem:[%s6 + $0xcd0] sm:$0xff]
    %v5167 = vld [vmem:[%s6 + $0xcd8] sm:$0xff]
    %v5168 = vld [vmem:[%s6 + $0xce0] sm:$0xff]
    %v5169 = vld [vmem:[%s6 + $0xce8] sm:$0xff]
    %v5170 = vld [vmem:[%s6 + $0xcf0] sm:$0xff]
    %v5171 = vld [vmem:[%s6 + $0xcf8] sm:$0xff]
    %v5172 = vld [vmem:[%s6 + $0xd00] sm:$0xff]
    %v5173 = vld [vmem:[%s6 + $0xd08] sm:$0xff]
    %v5174 = vld [vmem:[%s6 + $0xd10] sm:$0xff]
    %v5175 = vld [vmem:[%s6 + $0xd18] sm:$0xff]
    %v5176 = vld [vmem:[%s6 + $0xd20] sm:$0xff]
    %v5177 = vld [vmem:[%s6 + $0xd28] sm:$0xff]
    %v5178 = vld [vmem:[%s6 + $0xd30] sm:$0xff]
    %v5179 = vld [vmem:[%s6 + $0xd38] sm:$0xff]
    %v5180 = vld [vmem:[%s6 + $0xd40] sm:$0xff]
    %v5181 = vld [vmem:[%s6 + $0xd48] sm:$0xff]
    %v5182 = vld [vmem:[%s6 + $0xd50] sm:$0xff]
    %v5183 = vld [vmem:[%s6 + $0xd58] sm:$0xff]
    %v5184 = vld [vmem:[%s6 + $0xd60] sm:$0xff]
    %v5185 = vld [vmem:[%s6 + $0xd68] sm:$0xff]
    %v5186 = vld [vmem:[%s6 + $0xd70] sm:$0xff]
    %v5187 = vld [vmem:[%s6 + $0xd78] sm:$0xff]
    %v5188 = vld [vmem:[%s6 + $0xd80] sm:$0xff]
    %v5189 = vld [vmem:[%s6 + $0xd88] sm:$0xff]
    %v5190 = vld [vmem:[%s6 + $0xd90] sm:$0xff]
    %v5191 = vld [vmem:[%s6 + $0xd98] sm:$0xff]
    %v5192 = vld [vmem:[%s6 + $0xda0] sm:$0xff]
    %v5193 = vld [vmem:[%s6 + $0xda8] sm:$0xff]
    %v5194 = vld [vmem:[%s6 + $0xdb0] sm:$0xff]
    %v5195 = vld [vmem:[%s6 + $0xdb8] sm:$0xff]
    %v5196 = vld [vmem:[%s6 + $0xdc0] sm:$0xff]
    %v5197 = vld [vmem:[%s6 + $0xdc8] sm:$0xff]
    %v5198 = vld [vmem:[%s6 + $0xdd0] sm:$0xff]
    %v5199 = vld [vmem:[%s6 + $0xdd8] sm:$0xff]
    %v5200 = vld [vmem:[%s6 + $0xde0] sm:$0xff]
    %v5201 = vld [vmem:[%s6 + $0xde8] sm:$0xff]
    %v5202 = vld [vmem:[%s6 + $0xdf0] sm:$0xff]
    %v5203 = vld [vmem:[%s6 + $0xdf8] sm:$0xff]
    %v5204 = vld [vmem:[%s6 + $0xe00] sm:$0xff]
    %v5205 = vld [vmem:[%s6 + $0xe08] sm:$0xff]
    %v5206 = vld [vmem:[%s6 + $0xe10] sm:$0xff]
    %v5207 = vld [vmem:[%s6 + $0xe18] sm:$0xff]
    %v5208 = vld [vmem:[%s6 + $0xe20] sm:$0xff]
    %v5209 = vld [vmem:[%s6 + $0xe28] sm:$0xff]
    %v5210 = vld [vmem:[%s6 + $0xe30] sm:$0xff]
    %v5211 = vld [vmem:[%s6 + $0xe38] sm:$0xff]
    %v5212 = vld [vmem:[%s6 + $0xe40] sm:$0xff]
    %v5213 = vld [vmem:[%s6 + $0xe48] sm:$0xff]
    %v5214 = vld [vmem:[%s6 + $0xe50] sm:$0xff]
    %v5215 = vld [vmem:[%s6 + $0xe58] sm:$0xff]
    %v5216 = vld [vmem:[%s6 + $0xe60] sm:$0xff]
    %v5217 = vld [vmem:[%s6 + $0xe68] sm:$0xff]
    %v5218 = vld [vmem:[%s6 + $0xe70] sm:$0xff]
    %v5219 = vld [vmem:[%s6 + $0xe78] sm:$0xff]
    %v5220 = vld [vmem:[%s6 + $0xe80] sm:$0xff]
    %v5221 = vld [vmem:[%s6 + $0xe88] sm:$0xff]
    %v5222 = vld [vmem:[%s6 + $0xe90] sm:$0xff]
    %v5223 = vld [vmem:[%s6 + $0xe98] sm:$0xff]
    %v5224 = vld [vmem:[%s6 + $0xea0] sm:$0xff]
    %v5225 = vld [vmem:[%s6 + $0xea8] sm:$0xff]
    %v5226 = vld [vmem:[%s6 + $0xeb0] sm:$0xff]
    %v5227 = vld [vmem:[%s6 + $0xeb8] sm:$0xff]
    %v5228 = vld [vmem:[%s6 + $0xec0] sm:$0xff]
    %v5229 = vld [vmem:[%s6 + $0xec8] sm:$0xff]
    %v5230 = vld [vmem:[%s6 + $0xed0] sm:$0xff]
    %v5231 = vld [vmem:[%s6 + $0xed8] sm:$0xff]
    %v5232 = vld [vmem:[%s6 + $0xee0] sm:$0xff]
    %v5233 = vld [vmem:[%s6 + $0xee8] sm:$0xff]
    %v5234 = vld [vmem:[%s6 + $0xef0] sm:$0xff]
    %v5235 = vld [vmem:[%s6 + $0xef8] sm:$0xff]
    %v5236 = vld [vmem:[%s6 + $0xf00] sm:$0xff]
    %v5237 = vld [vmem:[%s6 + $0xf08] sm:$0xff]
    %v5238 = vld [vmem:[%s6 + $0xf10] sm:$0xff]
    %v5239 = vld [vmem:[%s6 + $0xf18] sm:$0xff]
    %v5240 = vld [vmem:[%s6 + $0xf20] sm:$0xff]
    %v5241 = vld [vmem:[%s6 + $0xf28] sm:$0xff]
    %v5242 = vld [vmem:[%s6 + $0xf30] sm:$0xff]
    %v5243 = vld [vmem:[%s6 + $0xf38] sm:$0xff]
    %v5244 = vld [vmem:[%s6 + $0xf40] sm:$0xff]
    %v5245 = vld [vmem:[%s6 + $0xf48] sm:$0xff]
    %v5246 = vld [vmem:[%s6 + $0xf50] sm:$0xff]
    %v5247 = vld [vmem:[%s6 + $0xf58] sm:$0xff]
    %v5248 = vld [vmem:[%s6 + $0xf60] sm:$0xff]
    %v5249 = vld [vmem:[%s6 + $0xf68] sm:$0xff]
    %v5250 = vld [vmem:[%s6 + $0xf70] sm:$0xff]
    %v5251 = vld [vmem:[%s6 + $0xf78] sm:$0xff]
    %v5252 = vld [vmem:[%s6 + $0xf80] sm:$0xff]
    %v5253 = vld [vmem:[%s6 + $0xf88] sm:$0xff]
    %v5254 = vld [vmem:[%s6 + $0xf90] sm:$0xff]
    %v5255 = vld [vmem:[%s6 + $0xf98] sm:$0xff]
    %v5256 = vld [vmem:[%s6 + $0xfa0] sm:$0xff]
    %v5257 = vld [vmem:[%s6 + $0xfa8] sm:$0xff]
    %v5258 = vld [vmem:[%s6 + $0xfb0] sm:$0xff]
    %v5259 = vld [vmem:[%s6 + $0xfb8] sm:$0xff]
    %v5260 = vld [vmem:[%s6 + $0xfc0] sm:$0xff]
    %v5261 = vld [vmem:[%s6 + $0xfc8] sm:$0xff]
    %v5262 = vld [vmem:[%s6 + $0xfd0] sm:$0xff]
    %v5263 = vld [vmem:[%s6 + $0xfd8] sm:$0xff]
    %v5264 = vld [vmem:[%s6 + $0xfe0] sm:$0xff]
    %v5265 = vld [vmem:[%s6 + $0xfe8] sm:$0xff]
    %v5266 = vld [vmem:[%s6 + $0xff0] sm:$0xff]
    %v5267 = vld [vmem:[%s6 + $0xff8] sm:$0xff]
    %v5268 = vld [vmem:[%s6 + $0x1000] sm:$0xff]
    %v5269 = vld [vmem:[%s6 + $0x1008] sm:$0xff]
    %v5270 = vld [vmem:[%s6 + $0x1010] sm:$0xff]
    %v5271 = vld [vmem:[%s6 + $0x1018] sm:$0xff]
    %v5272 = vld [vmem:[%s6 + $0x1020] sm:$0xff]
    %v5273 = vld [vmem:[%s6 + $0x1028] sm:$0xff]
    %v5274 = vld [vmem:[%s6 + $0x1030] sm:$0xff]
    %v5275 = vld [vmem:[%s6 + $0x1038] sm:$0xff]
    %v5276 = vld [vmem:[%s6 + $0x1040] sm:$0xff]
    %v5277 = vld [vmem:[%s6 + $0x1048] sm:$0xff]
    %v5278 = vld [vmem:[%s6 + $0x1050] sm:$0xff]
    %v5279 = vld [vmem:[%s6 + $0x1058] sm:$0xff]
    %v5280 = vld [vmem:[%s6 + $0x1060] sm:$0xff]
    %v5281 = vld [vmem:[%s6 + $0x1068] sm:$0xff]
    %v5282 = vld [vmem:[%s6 + $0x1070] sm:$0xff]
    %v5283 = vld [vmem:[%s6 + $0x1078] sm:$0xff]
    %v5284 = vld [vmem:[%s6 + $0x1080] sm:$0xff]
    %v5285 = vld [vmem:[%s6 + $0x1088] sm:$0xff]
    %v5286 = vld [vmem:[%s6 + $0x1090] sm:$0xff]
    %v5287 = vld [vmem:[%s6 + $0x1098] sm:$0xff]
    %v5288 = vld [vmem:[%s6 + $0x10a0] sm:$0xff]
    %v5289 = vld [vmem:[%s6 + $0x10a8] sm:$0xff]
    %v5290 = vld [vmem:[%s6 + $0x10b0] sm:$0xff]
    %v5291 = vld [vmem:[%s6 + $0x10b8] sm:$0xff]
    %v5292 = vld [vmem:[%s6 + $0x10c0] sm:$0xff]
    %v5293 = vld [vmem:[%s6 + $0x10c8] sm:$0xff]
    %v5294 = vld [vmem:[%s6 + $0x10d0] sm:$0xff]
    %v5295 = vld [vmem:[%s6 + $0x10d8] sm:$0xff]
    %v5296 = vrot.slane %v2740, 3
    %v5297 = vrot.slane %v2741, 3
    %v5298 = vrot.slane %v2742, 3
    %v5437 = vrot.slane %v5160, 2
    %v5438 = vrot.slane %v5164, 2
    %v5439 = vsel %vm415, %v5437, %v5438
    %v5440 = vrot.slane %v5161, 2
    %v5441 = vrot.slane %v5165, 2
    %v5442 = vsel %vm415, %v5440, %v5441
    %v5443 = vrot.slane %v5162, 2
    %v5444 = vrot.slane %v5166, 2
    %v5445 = vsel %vm415, %v5443, %v5444
    %v5446 = vrot.slane %v5163, 2
    %v5447 = vrot.slane %v5167, 2
    %v5448 = vsel %vm415, %v5446, %v5447
    %v5449 = vrot.slane %v5168, 2
    %v5450 = vsel %vm415, %v5438, %v5449
    %v5451 = vrot.slane %v5169, 2
    %v5452 = vsel %vm415, %v5441, %v5451
    %v5453 = vrot.slane %v5170, 2
    %v5454 = vsel %vm415, %v5444, %v5453
    %v5455 = vrot.slane %v5171, 2
    %v5456 = vsel %vm415, %v5447, %v5455
    %v5457 = vrot.slane %v5172, 2
    %v5458 = vsel %vm415, %v5449, %v5457
    %v5459 = vrot.slane %v5173, 2
    %v5460 = vsel %vm415, %v5451, %v5459
    %v5461 = vrot.slane %v5174, 2
    %v5462 = vsel %vm415, %v5453, %v5461
    %v5463 = vrot.slane %v5175, 2
    %v5464 = vsel %vm415, %v5455, %v5463
    %v5465 = vrot.slane %v5176, 2
    %v5466 = vsel %vm415, %v5457, %v5465
    %v5467 = vrot.slane %v5177, 2
    %v5468 = vsel %vm415, %v5459, %v5467
    %v5469 = vrot.slane %v5178, 2
    %v5470 = vsel %vm415, %v5461, %v5469
    %v5471 = vrot.slane %v5179, 2
    %v5472 = vsel %vm415, %v5463, %v5471
    %v5473 = vrot.slane %v5180, 2
    %v5474 = vsel %vm415, %v5465, %v5473
    %v5475 = vrot.slane %v5181, 2
    %v5476 = vsel %vm415, %v5467, %v5475
    %v5477 = vrot.slane %v5182, 2
    %v5478 = vsel %vm415, %v5469, %v5477
    %v5479 = vrot.slane %v5183, 2
    %v5480 = vsel %vm415, %v5471, %v5479
    %v5481 = vrot.slane %v5184, 2
    %v5482 = vsel %vm415, %v5473, %v5481
    %v5483 = vrot.slane %v5185, 2
    %v5484 = vsel %vm415, %v5475, %v5483
    %v5485 = vrot.slane %v5186, 2
    %v5486 = vsel %vm415, %v5477, %v5485
    %v5487 = vrot.slane %v5187, 2
    %v5488 = vsel %vm415, %v5479, %v5487
    %v5489 = vrot.slane %v5188, 2
    %v5490 = vsel %vm415, %v5481, %v5489
    %v5491 = vrot.slane %v5189, 2
    %v5492 = vsel %vm415, %v5483, %v5491
    %v5493 = vrot.slane %v5190, 2
    %v5494 = vsel %vm415, %v5485, %v5493
    %v5495 = vrot.slane %v5191, 2
    %v5496 = vsel %vm415, %v5487, %v5495
    %v5497 = vrot.slane %v5192, 2
    %v5498 = vsel %vm415, %v5489, %v5497
    %v5499 = vrot.slane %v5193, 2
    %v5500 = vsel %vm415, %v5491, %v5499
    %v5501 = vrot.slane %v5194, 2
    %v5502 = vsel %vm415, %v5493, %v5501
    %v5503 = vrot.slane %v5195, 2
    %v5504 = vsel %vm415, %v5495, %v5503
    %v5505 = vrot.slane %v5196, 2
    %v5506 = vsel %vm415, %v5497, %v5505
    %v5507 = vrot.slane %v5197, 2
    %v5508 = vsel %vm415, %v5499, %v5507
    %v5509 = vrot.slane %v5198, 2
    %v5510 = vsel %vm415, %v5501, %v5509
    %v5511 = vrot.slane %v5199, 2
    %v5512 = vsel %vm415, %v5503, %v5511
    %v5513 = vrot.slane %v5200, 2
    %v5514 = vsel %vm415, %v5505, %v5513
    %v5515 = vrot.slane %v5201, 2
    %v5516 = vsel %vm415, %v5507, %v5515
    %v5517 = vrot.slane %v5202, 2
    %v5518 = vsel %vm415, %v5509, %v5517
    %v5519 = vrot.slane %v5203, 2
    %v5520 = vsel %vm415, %v5511, %v5519
    %v5521 = vrot.slane %v5204, 2
    %v5522 = vsel %vm415, %v5513, %v5521
    %v5523 = vrot.slane %v5205, 2
    %v5524 = vsel %vm415, %v5515, %v5523
    %v5525 = vrot.slane %v5206, 2
    %v5526 = vsel %vm415, %v5517, %v5525
    %v5527 = vrot.slane %v5207, 2
    %v5528 = vsel %vm415, %v5519, %v5527
    %v5529 = vrot.slane %v5208, 2
    %v5530 = vsel %vm415, %v5521, %v5529
    %v5531 = vrot.slane %v5209, 2
    %v5532 = vsel %vm415, %v5523, %v5531
    %v5533 = vrot.slane %v5210, 2
    %v5534 = vsel %vm415, %v5525, %v5533
    %v5535 = vrot.slane %v5211, 2
    %v5536 = vsel %vm415, %v5527, %v5535
    %v5537 = vrot.slane %v5212, 2
    %v5538 = vsel %vm415, %v5529, %v5537
    %v5539 = vrot.slane %v5213, 2
    %v5540 = vsel %vm415, %v5531, %v5539
    %v5541 = vrot.slane %v5214, 2
    %v5542 = vsel %vm415, %v5533, %v5541
    %v5543 = vrot.slane %v5215, 2
    %v5544 = vsel %vm415, %v5535, %v5543
    %v5545 = vrot.slane %v5216, 2
    %v5546 = vsel %vm415, %v5537, %v5545
    %v5547 = vrot.slane %v5217, 2
    %v5548 = vsel %vm415, %v5539, %v5547
    %v5549 = vrot.slane %v5218, 2
    %v5550 = vsel %vm415, %v5541, %v5549
    %v5551 = vrot.slane %v5219, 2
    %v5552 = vsel %vm415, %v5543, %v5551
    %v5553 = vrot.slane %v5220, 2
    %v5554 = vsel %vm415, %v5545, %v5553
    %v5555 = vrot.slane %v5221, 2
    %v5556 = vsel %vm415, %v5547, %v5555
    %v5557 = vrot.slane %v5222, 2
    %v5558 = vsel %vm415, %v5549, %v5557
    %v5559 = vrot.slane %v5223, 2
    %v5560 = vsel %vm415, %v5551, %v5559
    %v5561 = vrot.slane %v5224, 2
    %v5562 = vsel %vm415, %v5553, %v5561
    %v5563 = vrot.slane %v5225, 2
    %v5564 = vsel %vm415, %v5555, %v5563
    %v5565 = vrot.slane %v5226, 2
    %v5566 = vsel %vm415, %v5557, %v5565
    %v5567 = vrot.slane %v5227, 2
    %v5568 = vsel %vm415, %v5559, %v5567
    %v5569 = vrot.slane %v5228, 2
    %v5570 = vsel %vm415, %v5561, %v5569
    %v5571 = vrot.slane %v5229, 2
    %v5572 = vsel %vm415, %v5563, %v5571
    %v5573 = vrot.slane %v5230, 2
    %v5574 = vsel %vm415, %v5565, %v5573
    %v5575 = vrot.slane %v5231, 2
    %v5576 = vsel %vm415, %v5567, %v5575
    %v5577 = vrot.slane %v5232, 2
    %v5578 = vsel %vm415, %v5569, %v5577
    %v5579 = vrot.slane %v5233, 2
    %v5580 = vsel %vm415, %v5571, %v5579
    %v5581 = vrot.slane %v5234, 2
    %v5582 = vsel %vm415, %v5573, %v5581
    %v5583 = vrot.slane %v5235, 2
    %v5584 = vsel %vm415, %v5575, %v5583
    %v5585 = vrot.slane %v5236, 2
    %v5586 = vsel %vm415, %v5577, %v5585
    %v5587 = vrot.slane %v5237, 2
    %v5588 = vsel %vm415, %v5579, %v5587
    %v5589 = vrot.slane %v5238, 2
    %v5590 = vsel %vm415, %v5581, %v5589
    %v5591 = vrot.slane %v5239, 2
    %v5592 = vsel %vm415, %v5583, %v5591
    %v5593 = vrot.slane %v5240, 2
    %v5594 = vsel %vm415, %v5585, %v5593
    %v5595 = vrot.slane %v5241, 2
    %v5596 = vsel %vm415, %v5587, %v5595
    %v5597 = vrot.slane %v5242, 2
    %v5598 = vsel %vm415, %v5589, %v5597
    %v5599 = vrot.slane %v5243, 2
    %v5600 = vsel %vm415, %v5591, %v5599
    %v5601 = vrot.slane %v5244, 2
    %v5602 = vsel %vm415, %v5593, %v5601
    %v5603 = vrot.slane %v5245, 2
    %v5604 = vsel %vm415, %v5595, %v5603
    %v5605 = vrot.slane %v5246, 2
    %v5606 = vsel %vm415, %v5597, %v5605
    %v5607 = vrot.slane %v5247, 2
    %v5608 = vsel %vm415, %v5599, %v5607
    %v5609 = vrot.slane %v5248, 2
    %v5610 = vsel %vm415, %v5601, %v5609
    %v5611 = vrot.slane %v5249, 2
    %v5612 = vsel %vm415, %v5603, %v5611
    %v5613 = vrot.slane %v5250, 2
    %v5614 = vsel %vm415, %v5605, %v5613
    %v5615 = vrot.slane %v5251, 2
    %v5616 = vsel %vm415, %v5607, %v5615
    %v5617 = vrot.slane %v5252, 2
    %v5618 = vsel %vm415, %v5609, %v5617
    %v5619 = vrot.slane %v5253, 2
    %v5620 = vsel %vm415, %v5611, %v5619
    %v5621 = vrot.slane %v5254, 2
    %v5622 = vsel %vm415, %v5613, %v5621
    %v5623 = vrot.slane %v5255, 2
    %v5624 = vsel %vm415, %v5615, %v5623
    %v5625 = vrot.slane %v5256, 2
    %v5626 = vsel %vm415, %v5617, %v5625
    %v5627 = vrot.slane %v5257, 2
    %v5628 = vsel %vm415, %v5619, %v5627
    %v5629 = vrot.slane %v5258, 2
    %v5630 = vsel %vm415, %v5621, %v5629
    %v5631 = vrot.slane %v5259, 2
    %v5632 = vsel %vm415, %v5623, %v5631
    %v5633 = vrot.slane %v5260, 2
    %v5634 = vsel %vm415, %v5625, %v5633
    %v5635 = vrot.slane %v5261, 2
    %v5636 = vsel %vm415, %v5627, %v5635
    %v5637 = vrot.slane %v5262, 2
    %v5638 = vsel %vm415, %v5629, %v5637
    %v5639 = vrot.slane %v5263, 2
    %v5640 = vsel %vm415, %v5631, %v5639
    %v5641 = vrot.slane %v5264, 2
    %v5642 = vsel %vm415, %v5633, %v5641
    %v5643 = vrot.slane %v5265, 2
    %v5644 = vsel %vm415, %v5635, %v5643
    %v5645 = vrot.slane %v5266, 2
    %v5646 = vsel %vm415, %v5637, %v5645
    %v5647 = vrot.slane %v5267, 2
    %v5648 = vsel %vm415, %v5639, %v5647
    %v5649 = vrot.slane %v5268, 2
    %v5650 = vsel %vm415, %v5641, %v5649
    %v5651 = vrot.slane %v5269, 2
    %v5652 = vsel %vm415, %v5643, %v5651
    %v5653 = vrot.slane %v5270, 2
    %v5654 = vsel %vm415, %v5645, %v5653
    %v5655 = vrot.slane %v5271, 2
    %v5656 = vsel %vm415, %v5647, %v5655
    %v5657 = vrot.slane %v5272, 2
    %v5658 = vsel %vm415, %v5649, %v5657
    %v5659 = vrot.slane %v5273, 2
    %v5660 = vsel %vm415, %v5651, %v5659
    %v5661 = vrot.slane %v5274, 2
    %v5662 = vsel %vm415, %v5653, %v5661
    %v5663 = vrot.slane %v5275, 2
    %v5664 = vsel %vm415, %v5655, %v5663
    %v5665 = vrot.slane %v5276, 2
    %v5666 = vsel %vm415, %v5657, %v5665
    %v5667 = vrot.slane %v5277, 2
    %v5668 = vsel %vm415, %v5659, %v5667
    %v5669 = vrot.slane %v5278, 2
    %v5670 = vsel %vm415, %v5661, %v5669
    %v5671 = vrot.slane %v5279, 2
    %v5672 = vsel %vm415, %v5663, %v5671
    %v5673 = vrot.slane %v5280, 2
    %v5674 = vsel %vm415, %v5665, %v5673
    %v5675 = vrot.slane %v5281, 2
    %v5676 = vsel %vm415, %v5667, %v5675
    %v5677 = vrot.slane %v5282, 2
    %v5678 = vsel %vm415, %v5669, %v5677
    %v5679 = vrot.slane %v5283, 2
    %v5680 = vsel %vm415, %v5671, %v5679
    %v5681 = vrot.slane %v5284, 2
    %v5682 = vsel %vm415, %v5673, %v5681
    %v5683 = vrot.slane %v5285, 2
    %v5684 = vsel %vm415, %v5675, %v5683
    %v5685 = vrot.slane %v5286, 2
    %v5686 = vsel %vm415, %v5677, %v5685
    %v5687 = vrot.slane %v5287, 2
    %v5688 = vsel %vm415, %v5679, %v5687
    %v5689 = vrot.slane %v5288, 2
    %v5690 = vsel %vm415, %v5681, %v5689
    %v5691 = vrot.slane %v5289, 2
    %v5692 = vsel %vm415, %v5683, %v5691
    %v5693 = vrot.slane %v5290, 2
    %v5694 = vsel %vm415, %v5685, %v5693
    %v5695 = vrot.slane %v5291, 2
    %v5696 = vsel %vm415, %v5687, %v5695
    %v5697 = vrot.slane %v5292, 2
    %v5698 = vsel %vm415, %v5689, %v5697
    %v5699 = vrot.slane %v5293, 2
    %v5700 = vsel %vm415, %v5691, %v5699
    %v5701 = vrot.slane %v5294, 2
    %v5702 = vsel %vm415, %v5693, %v5701
    %v5703 = vrot.slane %v5295, 2
    %v5704 = vsel %vm415, %v5695, %v5703
    %v5837 = vsel %vm1825, %v5298, 0
    %v5839 = vsel %vm415, %v5697, 0
    %v5841 = vsel %vm415, %v5699, 0
    %v5843 = vsel %vm415, %v5701, 0
    %v5845 = vsel %vm415, %v5703, 0
    %5847 = vmatprep.subr.mxu0 %v5564
    %5848 = vmatpush1.msra.mxu0 %v5562
    %5849 = vmatprep.subr.mxu0 %v5556
    %5850 = vmatpush1.msra.mxu0 %v5554
    %5851 = vmatprep.subr.mxu0 %v5548
    %5852 = vmatpush1.msra.mxu0 %v5546
    %5853 = vmatprep.subr.mxu0 %v5540
    %5854 = vmatpush1.msra.mxu0 %v5538
    %5855 = vmatprep.subr.mxu0 %v5532
    %5856 = vmatpush1.msra.mxu0 %v5530
    %5857 = vmatprep.subr.mxu0 %v5524
    %5858 = vmatpush1.msra.mxu0 %v5522
    %5859 = vmatprep.subr.mxu0 %v5516
    %5860 = vmatpush1.msra.mxu0 %v5514
    %5861 = vmatprep.subr.mxu0 %v5508
    %5862 = vmatpush1.msra.mxu0 %v5506
    %5863 = vmatprep.subr.mxu0 %v5500
    %5864 = vmatpush1.msra.mxu0 %v5498
    %5865 = vmatprep.subr.mxu0 %v5492
    %5866 = vmatpush1.msra.mxu0 %v5490
    %5867 = vmatprep.subr.mxu0 %v5484
    %5868 = vmatpush1.msra.mxu0 %v5482
    %5869 = vmatprep.subr.mxu0 %v5476
    %5870 = vmatpush1.msra.mxu0 %v5474
    %5871 = vmatprep.subr.mxu0 %v5468
    %5872 = vmatpush1.msra.mxu0 %v5466
    %5873 = vmatprep.subr.mxu0 %v5460
    %5874 = vmatpush1.msra.mxu0 %v5458
    %5875 = vmatprep.subr.mxu0 %v5452
    %5876 = vmatpush1.msra.mxu0 %v5450
    %5877 = vmatprep.subr.mxu0 %v5442
    %5878 = vmatpush1.msra.mxu0 %v5439
    %5879 = vmatprep.subr.mxu0 %v5692
    %5880 = vmatpush2.msra.mxu0 %v5690
    %5881 = vmatprep.subr.mxu0 %v5684
    %5882 = vmatpush2.msra.mxu0 %v5682
    %5883 = vmatprep.subr.mxu0 %v5676
    %5884 = vmatpush2.msra.mxu0 %v5674
    %5885 = vmatprep.subr.mxu0 %v5668
    %5886 = vmatpush2.msra.mxu0 %v5666
    %5887 = vmatprep.subr.mxu0 %v5660
    %5888 = vmatpush2.msra.mxu0 %v5658
    %5889 = vmatprep.subr.mxu0 %v5652
    %5890 = vmatpush2.msra.mxu0 %v5650
    %5891 = vmatprep.subr.mxu0 %v5644
    %5892 = vmatpush2.msra.mxu0 %v5642
    %5893 = vmatprep.subr.mxu0 %v5636
    %5894 = vmatpush2.msra.mxu0 %v5634
    %5895 = vmatprep.subr.mxu0 %v5628
    %5896 = vmatpush2.msra.mxu0 %v5626
    %5897 = vmatprep.subr.mxu0 %v5620
    %5898 = vmatpush2.msra.mxu0 %v5618
    %5899 = vmatprep.subr.mxu0 %v5612
    %5900 = vmatpush2.msra.mxu0 %v5610
    %5901 = vmatprep.subr.mxu0 %v5604
    %5902 = vmatpush2.msra.mxu0 %v5602
    %5903 = vmatprep.subr.mxu0 %v5596
    %5904 = vmatpush2.msra.mxu0 %v5594
    %5905 = vmatprep.subr.mxu0 %v5588
    %5906 = vmatpush2.msra.mxu0 %v5586
    %5907 = vmatprep.subr.mxu0 %v5580
    %5908 = vmatpush2.msra.mxu0 %v5578
    %5909 = vmatprep.subr.mxu0 %v5572
    %5910 = vmatpush2.msra.mxu0 %v5570
    %5911 = vmatprep.mubr.f32.mxu0 %v5297
    %5912 = vmatmul.mubr.f32.gmra.mxu0 %v5296
    %v5913 = vpop.f32.mrf.mxu0
    %v5914 = vadd.f32 0.0, %v5913
    %v5915 = vpop.f32.mrf.mxu0
    %v5916 = vadd.f32 0.0, %v5915
    %5917 = vdwg.mxu0
    %5918 = vmatprep.subr.mxu0 0.0
    %5919 = vmatpush1.msra.mxu0 0.0
    %5920 = vmatprep.subr.mxu0 0.0
    %5921 = vmatpush1.msra.mxu0 0.0
    %5922 = vmatprep.subr.mxu0 0.0
    %5923 = vmatpush1.msra.mxu0 0.0
    %5924 = vmatprep.subr.mxu0 0.0
    %5925 = vmatpush1.msra.mxu0 0.0
    %5926 = vmatprep.subr.mxu0 0.0
    %5927 = vmatpush1.msra.mxu0 0.0
    %5928 = vmatprep.subr.mxu0 0.0
    %5929 = vmatpush1.msra.mxu0 0.0
    %5930 = vmatprep.subr.mxu0 0.0
    %5931 = vmatpush1.msra.mxu0 0.0
    %5932 = vmatprep.subr.mxu0 0.0
    %5933 = vmatpush1.msra.mxu0 0.0
    %5934 = vmatprep.subr.mxu0 0.0
    %5935 = vmatpush1.msra.mxu0 0.0
    %5936 = vmatprep.subr.mxu0 0.0
    %5937 = vmatpush1.msra.mxu0 0.0
    %5938 = vmatprep.subr.mxu0 0.0
    %5939 = vmatpush1.msra.mxu0 0.0
    %5940 = vmatprep.subr.mxu0 0.0
    %5941 = vmatpush1.msra.mxu0 0.0
    %5942 = vmatprep.subr.mxu0 0.0
    %5943 = vmatpush1.msra.mxu0 0.0
    %5944 = vmatprep.subr.mxu0 0.0
    %5945 = vmatpush1.msra.mxu0 0.0
    %5946 = vmatprep.subr.mxu0 %v5841
    %5947 = vmatpush1.msra.mxu0 %v5839
    %5948 = vmatprep.subr.mxu0 %v5700
    %5949 = vmatpush1.msra.mxu0 %v5698
    %5950 = vmatprep.subr.mxu0 0.0
    %5951 = vmatpush2.msra.mxu0 0.0
    %5952 = vmatprep.subr.mxu0 0.0
    %5953 = vmatpush2.msra.mxu0 0.0
    %5954 = vmatprep.subr.mxu0 0.0
    %5955 = vmatpush2.msra.mxu0 0.0
    %5956 = vmatprep.subr.mxu0 0.0
    %5957 = vmatpush2.msra.mxu0 0.0
    %5958 = vmatprep.subr.mxu0 0.0
    %5959 = vmatpush2.msra.mxu0 0.0
    %5960 = vmatprep.subr.mxu0 0.0
    %5961 = vmatpush2.msra.mxu0 0.0
    %5962 = vmatprep.subr.mxu0 0.0
    %5963 = vmatpush2.msra.mxu0 0.0
    %5964 = vmatprep.subr.mxu0 0.0
    %5965 = vmatpush2.msra.mxu0 0.0
    %5966 = vmatprep.subr.mxu0 0.0
    %5967 = vmatpush2.msra.mxu0 0.0
    %5968 = vmatprep.subr.mxu0 0.0
    %5969 = vmatpush2.msra.mxu0 0.0
    %5970 = vmatprep.subr.mxu0 0.0
    %5971 = vmatpush2.msra.mxu0 0.0
    %5972 = vmatprep.subr.mxu0 0.0
    %5973 = vmatpush2.msra.mxu0 0.0
    %5974 = vmatprep.subr.mxu0 0.0
    %5975 = vmatpush2.msra.mxu0 0.0
    %5976 = vmatprep.subr.mxu0 0.0
    %5977 = vmatpush2.msra.mxu0 0.0
    %5978 = vmatprep.subr.mxu0 0.0
    %5979 = vmatpush2.msra.mxu0 0.0
    %5980 = vmatprep.subr.mxu0 0.0
    %5981 = vmatpush2.msra.mxu0 0.0
    %5982 = vmatprep.mubr.f32.mxu0 0.0
    %5983 = vmatmul.mubr.f32.gmra.mxu0 %v5837
    %v5984 = vpop.f32.mrf.mxu0
    %v5985 = vadd.f32 %v5914, %v5984
    %v5986 = vpop.f32.mrf.mxu0
    %v5987 = vadd.f32 %v5916, %v5986
    %5988 = vdwg.mxu0
    %5989 = vmatprep.subr.mxu0 %v5568
    %5990 = vmatpush1.msra.mxu0 %v5566
    %5991 = vmatprep.subr.mxu0 %v5560
    %5992 = vmatpush1.msra.mxu0 %v5558
    %5993 = vmatprep.subr.mxu0 %v5552
    %5994 = vmatpush1.msra.mxu0 %v5550
    %5995 = vmatprep.subr.mxu0 %v5544
    %5996 = vmatpush1.msra.mxu0 %v5542
    %5997 = vmatprep.subr.mxu0 %v5536
    %5998 = vmatpush1.msra.mxu0 %v5534
    %5999 = vmatprep.subr.mxu0 %v5528
    %6000 = vmatpush1.msra.mxu0 %v5526
    %6001 = vmatprep.subr.mxu0 %v5520
    %6002 = vmatpush1.msra.mxu0 %v5518
    %6003 = vmatprep.subr.mxu0 %v5512
    %6004 = vmatpush1.msra.mxu0 %v5510
    %6005 = vmatprep.subr.mxu0 %v5504
    %6006 = vmatpush1.msra.mxu0 %v5502
    %6007 = vmatprep.subr.mxu0 %v5496
    %6008 = vmatpush1.msra.mxu0 %v5494
    %6009 = vmatprep.subr.mxu0 %v5488
    %6010 = vmatpush1.msra.mxu0 %v5486
    %6011 = vmatprep.subr.mxu0 %v5480
    %6012 = vmatpush1.msra.mxu0 %v5478
    %6013 = vmatprep.subr.mxu0 %v5472
    %6014 = vmatpush1.msra.mxu0 %v5470
    %6015 = vmatprep.subr.mxu0 %v5464
    %6016 = vmatpush1.msra.mxu0 %v5462
    %6017 = vmatprep.subr.mxu0 %v5456
    %6018 = vmatpush1.msra.mxu0 %v5454
    %6019 = vmatprep.subr.mxu0 %v5448
    %6020 = vmatpush1.msra.mxu0 %v5445
    %6021 = vmatprep.subr.mxu0 %v5696
    %6022 = vmatpush2.msra.mxu0 %v5694
    %6023 = vmatprep.subr.mxu0 %v5688
    %6024 = vmatpush2.msra.mxu0 %v5686
    %6025 = vmatprep.subr.mxu0 %v5680
    %6026 = vmatpush2.msra.mxu0 %v5678
    %6027 = vmatprep.subr.mxu0 %v5672
    %6028 = vmatpush2.msra.mxu0 %v5670
    %6029 = vmatprep.subr.mxu0 %v5664
    %6030 = vmatpush2.msra.mxu0 %v5662
    %6031 = vmatprep.subr.mxu0 %v5656
    %6032 = vmatpush2.msra.mxu0 %v5654
    %6033 = vmatprep.subr.mxu0 %v5648
    %6034 = vmatpush2.msra.mxu0 %v5646
    %6035 = vmatprep.subr.mxu0 %v5640
    %6036 = vmatpush2.msra.mxu0 %v5638
    %6037 = vmatprep.subr.mxu0 %v5632
    %6038 = vmatpush2.msra.mxu0 %v5630
    %6039 = vmatprep.subr.mxu0 %v5624
    %6040 = vmatpush2.msra.mxu0 %v5622
    %6041 = vmatprep.subr.mxu0 %v5616
    %6042 = vmatpush2.msra.mxu0 %v5614
    %6043 = vmatprep.subr.mxu0 %v5608
    %6044 = vmatpush2.msra.mxu0 %v5606
    %6045 = vmatprep.subr.mxu0 %v5600
    %6046 = vmatpush2.msra.mxu0 %v5598
    %6047 = vmatprep.subr.mxu0 %v5592
    %6048 = vmatpush2.msra.mxu0 %v5590
    %6049 = vmatprep.subr.mxu0 %v5584
    %6050 = vmatpush2.msra.mxu0 %v5582
    %6051 = vmatprep.subr.mxu0 %v5576
    %6052 = vmatpush2.msra.mxu0 %v5574
    %6053 = vmatprep.mubr.f32.mxu0 %v5297
    %6054 = vmatmul.mubr.f32.gmra.mxu0 %v5296
    %v6055 = vpop.f32.mrf.mxu0
    %v6056 = vadd.f32 0.0, %v6055
    %v6057 = vpop.f32.mrf.mxu0
    %v6058 = vadd.f32 0.0, %v6057
    %6059 = vdwg.mxu0
    %6060 = vmatprep.subr.mxu0 0.0
    %6061 = vmatpush1.msra.mxu0 0.0
    %6062 = vmatprep.subr.mxu0 0.0
    %6063 = vmatpush1.msra.mxu0 0.0
    %6064 = vmatprep.subr.mxu0 0.0
    %6065 = vmatpush1.msra.mxu0 0.0
    %6066 = vmatprep.subr.mxu0 0.0
    %6067 = vmatpush1.msra.mxu0 0.0
    %6068 = vmatprep.subr.mxu0 0.0
    %6069 = vmatpush1.msra.mxu0 0.0
    %6070 = vmatprep.subr.mxu0 0.0
    %6071 = vmatpush1.msra.mxu0 0.0
    %6072 = vmatprep.subr.mxu0 0.0
    %6073 = vmatpush1.msra.mxu0 0.0
    %6074 = vmatprep.subr.mxu0 0.0
    %6075 = vmatpush1.msra.mxu0 0.0
    %6076 = vmatprep.subr.mxu0 0.0
    %6077 = vmatpush1.msra.mxu0 0.0
    %6078 = vmatprep.subr.mxu0 0.0
    %6079 = vmatpush1.msra.mxu0 0.0
    %6080 = vmatprep.subr.mxu0 0.0
    %6081 = vmatpush1.msra.mxu0 0.0
    %6082 = vmatprep.subr.mxu0 0.0
    %6083 = vmatpush1.msra.mxu0 0.0
    %6084 = vmatprep.subr.mxu0 0.0
    %6085 = vmatpush1.msra.mxu0 0.0
    %6086 = vmatprep.subr.mxu0 0.0
    %6087 = vmatpush1.msra.mxu0 0.0
    %6088 = vmatprep.subr.mxu0 %v5845
    %6089 = vmatpush1.msra.mxu0 %v5843
    %6090 = vmatprep.subr.mxu0 %v5704
    %6091 = vmatpush1.msra.mxu0 %v5702
    %6092 = vmatprep.subr.mxu0 0.0
    %6093 = vmatpush2.msra.mxu0 0.0
    %6094 = vmatprep.subr.mxu0 0.0
    %6095 = vmatpush2.msra.mxu0 0.0
    %6096 = vmatprep.subr.mxu0 0.0
    %6097 = vmatpush2.msra.mxu0 0.0
    %6098 = vmatprep.subr.mxu0 0.0
    %6099 = vmatpush2.msra.mxu0 0.0
    %6100 = vmatprep.subr.mxu0 0.0
    %6101 = vmatpush2.msra.mxu0 0.0
    %6102 = vmatprep.subr.mxu0 0.0
    %6103 = vmatpush2.msra.mxu0 0.0
    %6104 = vmatprep.subr.mxu0 0.0
    %6105 = vmatpush2.msra.mxu0 0.0
    %6106 = vmatprep.subr.mxu0 0.0
    %6107 = vmatpush2.msra.mxu0 0.0
    %6108 = vmatprep.subr.mxu0 0.0
    %6109 = vmatpush2.msra.mxu0 0.0
    %6110 = vmatprep.subr.mxu0 0.0
    %6111 = vmatpush2.msra.mxu0 0.0
    %6112 = vmatprep.subr.mxu0 0.0
    %6113 = vmatpush2.msra.mxu0 0.0
    %6114 = vmatprep.subr.mxu0 0.0
    %6115 = vmatpush2.msra.mxu0 0.0
    %6116 = vmatprep.subr.mxu0 0.0
    %6117 = vmatpush2.msra.mxu0 0.0
    %6118 = vmatprep.subr.mxu0 0.0
    %6119 = vmatpush2.msra.mxu0 0.0
    %6120 = vmatprep.subr.mxu0 0.0
    %6121 = vmatpush2.msra.mxu0 0.0
    %6122 = vmatprep.subr.mxu0 0.0
    %6123 = vmatpush2.msra.mxu0 0.0
    %6124 = vmatprep.mubr.f32.mxu0 0.0
    %6125 = vmatmul.mubr.f32.gmra.mxu0 %v5837
    %v6126 = vpop.f32.mrf.mxu0
    %v6127 = vadd.f32 %v6056, %v6126
    %v6128 = vpop.f32.mrf.mxu0
    %v6129 = vadd.f32 %v6058, %v6128
    %6130 = vdwg.mxu0
    %v6131 = vadd.f32 %v5156, %v5985
    %v6132 = vadd.f32 %v5157, %v5987
    %v6133 = vadd.f32 %v5158, %v6127
    %v6134 = vadd.f32 %v5159, %v6129
    %v6135 = vld [vmem:[%s6 + $0x10e0] sm:$0xff]
    %v6136 = vld [vmem:[%s6 + $0x10e8] sm:$0xff]
    %v6137 = vld [vmem:[%s6 + $0x10f0] sm:$0xff]
    %v6138 = vld [vmem:[%s6 + $0x10f8] sm:$0xff]
    %v6139 = vld [vmem:[%s6 + $0x1100] sm:$0xff]
    %v6140 = vld [vmem:[%s6 + $0x1108] sm:$0xff]
    %v6141 = vld [vmem:[%s6 + $0x1110] sm:$0xff]
    %v6142 = vld [vmem:[%s6 + $0x1118] sm:$0xff]
    %v6143 = vld [vmem:[%s6 + $0x1120] sm:$0xff]
    %v6144 = vld [vmem:[%s6 + $0x1128] sm:$0xff]
    %v6145 = vld [vmem:[%s6 + $0x1130] sm:$0xff]
    %v6146 = vld [vmem:[%s6 + $0x1138] sm:$0xff]
    %v6147 = vld [vmem:[%s6 + $0x1140] sm:$0xff]
    %v6148 = vld [vmem:[%s6 + $0x1148] sm:$0xff]
    %v6149 = vld [vmem:[%s6 + $0x1150] sm:$0xff]
    %v6150 = vld [vmem:[%s6 + $0x1158] sm:$0xff]
    %v6151 = vld [vmem:[%s6 + $0x1160] sm:$0xff]
    %v6152 = vld [vmem:[%s6 + $0x1168] sm:$0xff]
    %v6153 = vld [vmem:[%s6 + $0x1170] sm:$0xff]
    %v6154 = vld [vmem:[%s6 + $0x1178] sm:$0xff]
    %v6155 = vld [vmem:[%s6 + $0x1180] sm:$0xff]
    %v6156 = vld [vmem:[%s6 + $0x1188] sm:$0xff]
    %v6157 = vld [vmem:[%s6 + $0x1190] sm:$0xff]
    %v6158 = vld [vmem:[%s6 + $0x1198] sm:$0xff]
    %v6159 = vld [vmem:[%s6 + $0x11a0] sm:$0xff]
    %v6160 = vld [vmem:[%s6 + $0x11a8] sm:$0xff]
    %v6161 = vld [vmem:[%s6 + $0x11b0] sm:$0xff]
    %v6162 = vld [vmem:[%s6 + $0x11b8] sm:$0xff]
    %v6163 = vld [vmem:[%s6 + $0x11c0] sm:$0xff]
    %v6164 = vld [vmem:[%s6 + $0x11c8] sm:$0xff]
    %v6165 = vld [vmem:[%s6 + $0x11d0] sm:$0xff]
    %v6166 = vld [vmem:[%s6 + $0x11d8] sm:$0xff]
    %v6167 = vld [vmem:[%s6 + $0x11e0] sm:$0xff]
    %v6168 = vld [vmem:[%s6 + $0x11e8] sm:$0xff]
    %v6169 = vld [vmem:[%s6 + $0x11f0] sm:$0xff]
    %v6170 = vld [vmem:[%s6 + $0x11f8] sm:$0xff]
    %v6171 = vld [vmem:[%s6 + $0x1200] sm:$0xff]
    %v6172 = vld [vmem:[%s6 + $0x1208] sm:$0xff]
    %v6173 = vld [vmem:[%s6 + $0x1210] sm:$0xff]
    %v6174 = vld [vmem:[%s6 + $0x1218] sm:$0xff]
    %v6175 = vld [vmem:[%s6 + $0x1220] sm:$0xff]
    %v6176 = vld [vmem:[%s6 + $0x1228] sm:$0xff]
    %v6177 = vld [vmem:[%s6 + $0x1230] sm:$0xff]
    %v6178 = vld [vmem:[%s6 + $0x1238] sm:$0xff]
    %v6179 = vld [vmem:[%s6 + $0x1240] sm:$0xff]
    %v6180 = vld [vmem:[%s6 + $0x1248] sm:$0xff]
    %v6181 = vld [vmem:[%s6 + $0x1250] sm:$0xff]
    %v6182 = vld [vmem:[%s6 + $0x1258] sm:$0xff]
    %v6183 = vld [vmem:[%s6 + $0x1260] sm:$0xff]
    %v6184 = vld [vmem:[%s6 + $0x1268] sm:$0xff]
    %v6185 = vld [vmem:[%s6 + $0x1270] sm:$0xff]
    %v6186 = vld [vmem:[%s6 + $0x1278] sm:$0xff]
    %v6187 = vld [vmem:[%s6 + $0x1280] sm:$0xff]
    %v6188 = vld [vmem:[%s6 + $0x1288] sm:$0xff]
    %v6189 = vld [vmem:[%s6 + $0x1290] sm:$0xff]
    %v6190 = vld [vmem:[%s6 + $0x1298] sm:$0xff]
    %v6191 = vld [vmem:[%s6 + $0x12a0] sm:$0xff]
    %v6192 = vld [vmem:[%s6 + $0x12a8] sm:$0xff]
    %v6193 = vld [vmem:[%s6 + $0x12b0] sm:$0xff]
    %v6194 = vld [vmem:[%s6 + $0x12b8] sm:$0xff]
    %v6195 = vld [vmem:[%s6 + $0x12c0] sm:$0xff]
    %v6196 = vld [vmem:[%s6 + $0x12c8] sm:$0xff]
    %v6197 = vld [vmem:[%s6 + $0x12d0] sm:$0xff]
    %v6198 = vld [vmem:[%s6 + $0x12d8] sm:$0xff]
    %v6199 = vld [vmem:[%s6 + $0x12e0] sm:$0xff]
    %v6200 = vld [vmem:[%s6 + $0x12e8] sm:$0xff]
    %v6201 = vld [vmem:[%s6 + $0x12f0] sm:$0xff]
    %v6202 = vld [vmem:[%s6 + $0x12f8] sm:$0xff]
    %v6203 = vld [vmem:[%s6 + $0x1300] sm:$0xff]
    %v6204 = vld [vmem:[%s6 + $0x1308] sm:$0xff]
    %v6205 = vld [vmem:[%s6 + $0x1310] sm:$0xff]
    %v6206 = vld [vmem:[%s6 + $0x1318] sm:$0xff]
    %v6207 = vld [vmem:[%s6 + $0x1320] sm:$0xff]
    %v6208 = vld [vmem:[%s6 + $0x1328] sm:$0xff]
    %v6209 = vld [vmem:[%s6 + $0x1330] sm:$0xff]
    %v6210 = vld [vmem:[%s6 + $0x1338] sm:$0xff]
    %v6211 = vld [vmem:[%s6 + $0x1340] sm:$0xff]
    %v6212 = vld [vmem:[%s6 + $0x1348] sm:$0xff]
    %v6213 = vld [vmem:[%s6 + $0x1350] sm:$0xff]
    %v6214 = vld [vmem:[%s6 + $0x1358] sm:$0xff]
    %v6215 = vld [vmem:[%s6 + $0x1360] sm:$0xff]
    %v6216 = vld [vmem:[%s6 + $0x1368] sm:$0xff]
    %v6217 = vld [vmem:[%s6 + $0x1370] sm:$0xff]
    %v6218 = vld [vmem:[%s6 + $0x1378] sm:$0xff]
    %v6219 = vld [vmem:[%s6 + $0x1380] sm:$0xff]
    %v6220 = vld [vmem:[%s6 + $0x1388] sm:$0xff]
    %v6221 = vld [vmem:[%s6 + $0x1390] sm:$0xff]
    %v6222 = vld [vmem:[%s6 + $0x1398] sm:$0xff]
    %v6223 = vld [vmem:[%s6 + $0x13a0] sm:$0xff]
    %v6224 = vld [vmem:[%s6 + $0x13a8] sm:$0xff]
    %v6225 = vld [vmem:[%s6 + $0x13b0] sm:$0xff]
    %v6226 = vld [vmem:[%s6 + $0x13b8] sm:$0xff]
    %v6227 = vld [vmem:[%s6 + $0x13c0] sm:$0xff]
    %v6228 = vld [vmem:[%s6 + $0x13c8] sm:$0xff]
    %v6229 = vld [vmem:[%s6 + $0x13d0] sm:$0xff]
    %v6230 = vld [vmem:[%s6 + $0x13d8] sm:$0xff]
    %v6231 = vld [vmem:[%s6 + $0x13e0] sm:$0xff]
    %v6232 = vld [vmem:[%s6 + $0x13e8] sm:$0xff]
    %v6233 = vld [vmem:[%s6 + $0x13f0] sm:$0xff]
    %v6234 = vld [vmem:[%s6 + $0x13f8] sm:$0xff]
    %v6235 = vld [vmem:[%s6 + $0x1400] sm:$0xff]
    %v6236 = vld [vmem:[%s6 + $0x1408] sm:$0xff]
    %v6237 = vld [vmem:[%s6 + $0x1410] sm:$0xff]
    %v6238 = vld [vmem:[%s6 + $0x1418] sm:$0xff]
    %v6239 = vld [vmem:[%s6 + $0x1420] sm:$0xff]
    %v6240 = vld [vmem:[%s6 + $0x1428] sm:$0xff]
    %v6241 = vld [vmem:[%s6 + $0x1430] sm:$0xff]
    %v6242 = vld [vmem:[%s6 + $0x1438] sm:$0xff]
    %v6243 = vld [vmem:[%s6 + $0x1440] sm:$0xff]
    %v6244 = vld [vmem:[%s6 + $0x1448] sm:$0xff]
    %v6245 = vld [vmem:[%s6 + $0x1450] sm:$0xff]
    %v6246 = vld [vmem:[%s6 + $0x1458] sm:$0xff]
    %v6247 = vld [vmem:[%s6 + $0x1460] sm:$0xff]
    %v6248 = vld [vmem:[%s6 + $0x1468] sm:$0xff]
    %v6249 = vld [vmem:[%s6 + $0x1470] sm:$0xff]
    %v6250 = vld [vmem:[%s6 + $0x1478] sm:$0xff]
    %v6251 = vld [vmem:[%s6 + $0x1480] sm:$0xff]
    %v6252 = vld [vmem:[%s6 + $0x1488] sm:$0xff]
    %v6253 = vld [vmem:[%s6 + $0x1490] sm:$0xff]
    %v6254 = vld [vmem:[%s6 + $0x1498] sm:$0xff]
    %v6255 = vld [vmem:[%s6 + $0x14a0] sm:$0xff]
    %v6256 = vld [vmem:[%s6 + $0x14a8] sm:$0xff]
    %v6257 = vld [vmem:[%s6 + $0x14b0] sm:$0xff]
    %v6258 = vld [vmem:[%s6 + $0x14b8] sm:$0xff]
    %v6259 = vld [vmem:[%s6 + $0x14c0] sm:$0xff]
    %v6260 = vld [vmem:[%s6 + $0x14c8] sm:$0xff]
    %v6261 = vld [vmem:[%s6 + $0x14d0] sm:$0xff]
    %v6262 = vld [vmem:[%s6 + $0x14d8] sm:$0xff]
    %v6263 = vld [vmem:[%s6 + $0x14e0] sm:$0xff]
    %v6264 = vld [vmem:[%s6 + $0x14e8] sm:$0xff]
    %v6265 = vld [vmem:[%s6 + $0x14f0] sm:$0xff]
    %v6266 = vld [vmem:[%s6 + $0x14f8] sm:$0xff]
    %v6267 = vld [vmem:[%s6 + $0x1500] sm:$0x3f]
    %v6268 = vld [vmem:[%s6 + $0x1508] sm:$0x3f]
    %v6269 = vld [vmem:[%s6 + $0x1510] sm:$0x3f]
    %v6270 = vld [vmem:[%s6 + $0x1518] sm:$0x3f]
    %v6271 = vrot.slane %v2740, 4
    %v6272 = vrot.slane %v2741, 4
    %v6273 = vrot.slane %v2742, 4
    %v6276 = vsel %vm1825, %v6273, 0
    %v6279 = vsel %vm415, %v6267, 0
    %v6282 = vsel %vm415, %v6268, 0
    %v6285 = vsel %vm415, %v6269, 0
    %v6288 = vsel %vm415, %v6270, 0
    %6290 = vmatprep.subr.mxu0 %v6196
    %6291 = vmatpush1.msra.mxu0 %v6195
    %6292 = vmatprep.subr.mxu0 %v6192
    %6293 = vmatpush1.msra.mxu0 %v6191
    %6294 = vmatprep.subr.mxu0 %v6188
    %6295 = vmatpush1.msra.mxu0 %v6187
    %6296 = vmatprep.subr.mxu0 %v6184
    %6297 = vmatpush1.msra.mxu0 %v6183
    %6298 = vmatprep.subr.mxu0 %v6180
    %6299 = vmatpush1.msra.mxu0 %v6179
    %6300 = vmatprep.subr.mxu0 %v6176
    %6301 = vmatpush1.msra.mxu0 %v6175
    %6302 = vmatprep.subr.mxu0 %v6172
    %6303 = vmatpush1.msra.mxu0 %v6171
    %6304 = vmatprep.subr.mxu0 %v6168
    %6305 = vmatpush1.msra.mxu0 %v6167
    %6306 = vmatprep.subr.mxu0 %v6164
    %6307 = vmatpush1.msra.mxu0 %v6163
    %6308 = vmatprep.subr.mxu0 %v6160
    %6309 = vmatpush1.msra.mxu0 %v6159
    %6310 = vmatprep.subr.mxu0 %v6156
    %6311 = vmatpush1.msra.mxu0 %v6155
    %6312 = vmatprep.subr.mxu0 %v6152
    %6313 = vmatpush1.msra.mxu0 %v6151
    %6314 = vmatprep.subr.mxu0 %v6148
    %6315 = vmatpush1.msra.mxu0 %v6147
    %6316 = vmatprep.subr.mxu0 %v6144
    %6317 = vmatpush1.msra.mxu0 %v6143
    %6318 = vmatprep.subr.mxu0 %v6140
    %6319 = vmatpush1.msra.mxu0 %v6139
    %6320 = vmatprep.subr.mxu0 %v6136
    %6321 = vmatpush1.msra.mxu0 %v6135
    %6322 = vmatprep.subr.mxu0 %v6260
    %6323 = vmatpush2.msra.mxu0 %v6259
    %6324 = vmatprep.subr.mxu0 %v6256
    %6325 = vmatpush2.msra.mxu0 %v6255
    %6326 = vmatprep.subr.mxu0 %v6252
    %6327 = vmatpush2.msra.mxu0 %v6251
    %6328 = vmatprep.subr.mxu0 %v6248
    %6329 = vmatpush2.msra.mxu0 %v6247
    %6330 = vmatprep.subr.mxu0 %v6244
    %6331 = vmatpush2.msra.mxu0 %v6243
    %6332 = vmatprep.subr.mxu0 %v6240
    %6333 = vmatpush2.msra.mxu0 %v6239
    %6334 = vmatprep.subr.mxu0 %v6236
    %6335 = vmatpush2.msra.mxu0 %v6235
    %6336 = vmatprep.subr.mxu0 %v6232
    %6337 = vmatpush2.msra.mxu0 %v6231
    %6338 = vmatprep.subr.mxu0 %v6228
    %6339 = vmatpush2.msra.mxu0 %v6227
    %6340 = vmatprep.subr.mxu0 %v6224
    %6341 = vmatpush2.msra.mxu0 %v6223
    %6342 = vmatprep.subr.mxu0 %v6220
    %6343 = vmatpush2.msra.mxu0 %v6219
    %6344 = vmatprep.subr.mxu0 %v6216
    %6345 = vmatpush2.msra.mxu0 %v6215
    %6346 = vmatprep.subr.mxu0 %v6212
    %6347 = vmatpush2.msra.mxu0 %v6211
    %6348 = vmatprep.subr.mxu0 %v6208
    %6349 = vmatpush2.msra.mxu0 %v6207
    %6350 = vmatprep.subr.mxu0 %v6204
    %6351 = vmatpush2.msra.mxu0 %v6203
    %6352 = vmatprep.subr.mxu0 %v6200
    %6353 = vmatpush2.msra.mxu0 %v6199
    %6354 = vmatprep.mubr.f32.mxu0 %v6272
    %6355 = vmatmul.mubr.f32.gmra.mxu0 %v6271
    %v6356 = vpop.f32.mrf.mxu0
    %v6357 = vadd.f32 0.0, %v6356
    %v6358 = vpop.f32.mrf.mxu0
    %v6359 = vadd.f32 0.0, %v6358
    %6360 = vdwg.mxu0
    %6361 = vmatprep.subr.mxu0 0.0
    %6362 = vmatpush1.msra.mxu0 0.0
    %6363 = vmatprep.subr.mxu0 0.0
    %6364 = vmatpush1.msra.mxu0 0.0
    %6365 = vmatprep.subr.mxu0 0.0
    %6366 = vmatpush1.msra.mxu0 0.0
    %6367 = vmatprep.subr.mxu0 0.0
    %6368 = vmatpush1.msra.mxu0 0.0
    %6369 = vmatprep.subr.mxu0 0.0
    %6370 = vmatpush1.msra.mxu0 0.0
    %6371 = vmatprep.subr.mxu0 0.0
    %6372 = vmatpush1.msra.mxu0 0.0
    %6373 = vmatprep.subr.mxu0 0.0
    %6374 = vmatpush1.msra.mxu0 0.0
    %6375 = vmatprep.subr.mxu0 0.0
    %6376 = vmatpush1.msra.mxu0 0.0
    %6377 = vmatprep.subr.mxu0 0.0
    %6378 = vmatpush1.msra.mxu0 0.0
    %6379 = vmatprep.subr.mxu0 0.0
    %6380 = vmatpush1.msra.mxu0 0.0
    %6381 = vmatprep.subr.mxu0 0.0
    %6382 = vmatpush1.msra.mxu0 0.0
    %6383 = vmatprep.subr.mxu0 0.0
    %6384 = vmatpush1.msra.mxu0 0.0
    %6385 = vmatprep.subr.mxu0 0.0
    %6386 = vmatpush1.msra.mxu0 0.0
    %6387 = vmatprep.subr.mxu0 0.0
    %6388 = vmatpush1.msra.mxu0 0.0
    %6389 = vmatprep.subr.mxu0 %v6282
    %6390 = vmatpush1.msra.mxu0 %v6279
    %6391 = vmatprep.subr.mxu0 %v6264
    %6392 = vmatpush1.msra.mxu0 %v6263
    %6393 = vmatprep.subr.mxu0 0.0
    %6394 = vmatpush2.msra.mxu0 0.0
    %6395 = vmatprep.subr.mxu0 0.0
    %6396 = vmatpush2.msra.mxu0 0.0
    %6397 = vmatprep.subr.mxu0 0.0
    %6398 = vmatpush2.msra.mxu0 0.0
    %6399 = vmatprep.subr.mxu0 0.0
    %6400 = vmatpush2.msra.mxu0 0.0
    %6401 = vmatprep.subr.mxu0 0.0
    %6402 = vmatpush2.msra.mxu0 0.0
    %6403 = vmatprep.subr.mxu0 0.0
    %6404 = vmatpush2.msra.mxu0 0.0
    %6405 = vmatprep.subr.mxu0 0.0
    %6406 = vmatpush2.msra.mxu0 0.0
    %6407 = vmatprep.subr.mxu0 0.0
    %6408 = vmatpush2.msra.mxu0 0.0
    %6409 = vmatprep.subr.mxu0 0.0
    %6410 = vmatpush2.msra.mxu0 0.0
    %6411 = vmatprep.subr.mxu0 0.0
    %6412 = vmatpush2.msra.mxu0 0.0
    %6413 = vmatprep.subr.mxu0 0.0
    %6414 = vmatpush2.msra.mxu0 0.0
    %6415 = vmatprep.subr.mxu0 0.0
    %6416 = vmatpush2.msra.mxu0 0.0
    %6417 = vmatprep.subr.mxu0 0.0
    %6418 = vmatpush2.msra.mxu0 0.0
    %6419 = vmatprep.subr.mxu0 0.0
    %6420 = vmatpush2.msra.mxu0 0.0
    %6421 = vmatprep.subr.mxu0 0.0
    %6422 = vmatpush2.msra.mxu0 0.0
    %6423 = vmatprep.subr.mxu0 0.0
    %6424 = vmatpush2.msra.mxu0 0.0
    %6425 = vmatprep.mubr.f32.mxu0 0.0
    %6426 = vmatmul.mubr.f32.gmra.mxu0 %v6276
    %v6427 = vpop.f32.mrf.mxu0
    %v6428 = vadd.f32 %v6357, %v6427
    %v6429 = vpop.f32.mrf.mxu0
    %v6430 = vadd.f32 %v6359, %v6429
    %6431 = vdwg.mxu0
    %6432 = vmatprep.subr.mxu0 %v6198
    %6433 = vmatpush1.msra.mxu0 %v6197
    %6434 = vmatprep.subr.mxu0 %v6194
    %6435 = vmatpush1.msra.mxu0 %v6193
    %6436 = vmatprep.subr.mxu0 %v6190
    %6437 = vmatpush1.msra.mxu0 %v6189
    %6438 = vmatprep.subr.mxu0 %v6186
    %6439 = vmatpush1.msra.mxu0 %v6185
    %6440 = vmatprep.subr.mxu0 %v6182
    %6441 = vmatpush1.msra.mxu0 %v6181
    %6442 = vmatprep.subr.mxu0 %v6178
    %6443 = vmatpush1.msra.mxu0 %v6177
    %6444 = vmatprep.subr.mxu0 %v6174
    %6445 = vmatpush1.msra.mxu0 %v6173
    %6446 = vmatprep.subr.mxu0 %v6170
    %6447 = vmatpush1.msra.mxu0 %v6169
    %6448 = vmatprep.subr.mxu0 %v6166
    %6449 = vmatpush1.msra.mxu0 %v6165
    %6450 = vmatprep.subr.mxu0 %v6162
    %6451 = vmatpush1.msra.mxu0 %v6161
    %6452 = vmatprep.subr.mxu0 %v6158
    %6453 = vmatpush1.msra.mxu0 %v6157
    %6454 = vmatprep.subr.mxu0 %v6154
    %6455 = vmatpush1.msra.mxu0 %v6153
    %6456 = vmatprep.subr.mxu0 %v6150
    %6457 = vmatpush1.msra.mxu0 %v6149
    %6458 = vmatprep.subr.mxu0 %v6146
    %6459 = vmatpush1.msra.mxu0 %v6145
    %6460 = vmatprep.subr.mxu0 %v6142
    %6461 = vmatpush1.msra.mxu0 %v6141
    %6462 = vmatprep.subr.mxu0 %v6138
    %6463 = vmatpush1.msra.mxu0 %v6137
    %6464 = vmatprep.subr.mxu0 %v6262
    %6465 = vmatpush2.msra.mxu0 %v6261
    %6466 = vmatprep.subr.mxu0 %v6258
    %6467 = vmatpush2.msra.mxu0 %v6257
    %6468 = vmatprep.subr.mxu0 %v6254
    %6469 = vmatpush2.msra.mxu0 %v6253
    %6470 = vmatprep.subr.mxu0 %v6250
    %6471 = vmatpush2.msra.mxu0 %v6249
    %6472 = vmatprep.subr.mxu0 %v6246
    %6473 = vmatpush2.msra.mxu0 %v6245
    %6474 = vmatprep.subr.mxu0 %v6242
    %6475 = vmatpush2.msra.mxu0 %v6241
    %6476 = vmatprep.subr.mxu0 %v6238
    %6477 = vmatpush2.msra.mxu0 %v6237
    %6478 = vmatprep.subr.mxu0 %v6234
    %6479 = vmatpush2.msra.mxu0 %v6233
    %6480 = vmatprep.subr.mxu0 %v6230
    %6481 = vmatpush2.msra.mxu0 %v6229
    %6482 = vmatprep.subr.mxu0 %v6226
    %6483 = vmatpush2.msra.mxu0 %v6225
    %6484 = vmatprep.subr.mxu0 %v6222
    %6485 = vmatpush2.msra.mxu0 %v6221
    %6486 = vmatprep.subr.mxu0 %v6218
    %6487 = vmatpush2.msra.mxu0 %v6217
    %6488 = vmatprep.subr.mxu0 %v6214
    %6489 = vmatpush2.msra.mxu0 %v6213
    %6490 = vmatprep.subr.mxu0 %v6210
    %6491 = vmatpush2.msra.mxu0 %v6209
    %6492 = vmatprep.subr.mxu0 %v6206
    %6493 = vmatpush2.msra.mxu0 %v6205
    %6494 = vmatprep.subr.mxu0 %v6202
    %6495 = vmatpush2.msra.mxu0 %v6201
    %6496 = vmatprep.mubr.f32.mxu0 %v6272
    %6497 = vmatmul.mubr.f32.gmra.mxu0 %v6271
    %v6498 = vpop.f32.mrf.mxu0
    %v6499 = vadd.f32 0.0, %v6498
    %v6500 = vpop.f32.mrf.mxu0
    %v6501 = vadd.f32 0.0, %v6500
    %6502 = vdwg.mxu0
    %6503 = vmatprep.subr.mxu0 0.0
    %6504 = vmatpush1.msra.mxu0 0.0
    %6505 = vmatprep.subr.mxu0 0.0
    %6506 = vmatpush1.msra.mxu0 0.0
    %6507 = vmatprep.subr.mxu0 0.0
    %6508 = vmatpush1.msra.mxu0 0.0
    %6509 = vmatprep.subr.mxu0 0.0
    %6510 = vmatpush1.msra.mxu0 0.0
    %6511 = vmatprep.subr.mxu0 0.0
    %6512 = vmatpush1.msra.mxu0 0.0
    %6513 = vmatprep.subr.mxu0 0.0
    %6514 = vmatpush1.msra.mxu0 0.0
    %6515 = vmatprep.subr.mxu0 0.0
    %6516 = vmatpush1.msra.mxu0 0.0
    %6517 = vmatprep.subr.mxu0 0.0
    %6518 = vmatpush1.msra.mxu0 0.0
    %6519 = vmatprep.subr.mxu0 0.0
    %6520 = vmatpush1.msra.mxu0 0.0
    %6521 = vmatprep.subr.mxu0 0.0
    %6522 = vmatpush1.msra.mxu0 0.0
    %6523 = vmatprep.subr.mxu0 0.0
    %6524 = vmatpush1.msra.mxu0 0.0
    %6525 = vmatprep.subr.mxu0 0.0
    %6526 = vmatpush1.msra.mxu0 0.0
    %6527 = vmatprep.subr.mxu0 0.0
    %6528 = vmatpush1.msra.mxu0 0.0
    %6529 = vmatprep.subr.mxu0 0.0
    %6530 = vmatpush1.msra.mxu0 0.0
    %6531 = vmatprep.subr.mxu0 %v6288
    %6532 = vmatpush1.msra.mxu0 %v6285
    %6533 = vmatprep.subr.mxu0 %v6266
    %6534 = vmatpush1.msra.mxu0 %v6265
    %6535 = vmatprep.subr.mxu0 0.0
    %6536 = vmatpush2.msra.mxu0 0.0
    %6537 = vmatprep.subr.mxu0 0.0
    %6538 = vmatpush2.msra.mxu0 0.0
    %6539 = vmatprep.subr.mxu0 0.0
    %6540 = vmatpush2.msra.mxu0 0.0
    %6541 = vmatprep.subr.mxu0 0.0
    %6542 = vmatpush2.msra.mxu0 0.0
    %6543 = vmatprep.subr.mxu0 0.0
    %6544 = vmatpush2.msra.mxu0 0.0
    %6545 = vmatprep.subr.mxu0 0.0
    %6546 = vmatpush2.msra.mxu0 0.0
    %6547 = vmatprep.subr.mxu0 0.0
    %6548 = vmatpush2.msra.mxu0 0.0
    %6549 = vmatprep.subr.mxu0 0.0
    %6550 = vmatpush2.msra.mxu0 0.0
    %6551 = vmatprep.subr.mxu0 0.0
    %6552 = vmatpush2.msra.mxu0 0.0
    %6553 = vmatprep.subr.mxu0 0.0
    %6554 = vmatpush2.msra.mxu0 0.0
    %6555 = vmatprep.subr.mxu0 0.0
    %6556 = vmatpush2.msra.mxu0 0.0
    %6557 = vmatprep.subr.mxu0 0.0
    %6558 = vmatpush2.msra.mxu0 0.0
    %6559 = vmatprep.subr.mxu0 0.0
    %6560 = vmatpush2.msra.mxu0 0.0
    %6561 = vmatprep.subr.mxu0 0.0
    %6562 = vmatpush2.msra.mxu0 0.0
    %6563 = vmatprep.subr.mxu0 0.0
    %6564 = vmatpush2.msra.mxu0 0.0
    %6565 = vmatprep.subr.mxu0 0.0
    %6566 = vmatpush2.msra.mxu0 0.0
    %6567 = vmatprep.mubr.f32.mxu0 0.0
    %6568 = vmatmul.mubr.f32.gmra.mxu0 %v6276
    %v6569 = vpop.f32.mrf.mxu0
    %v6570 = vadd.f32 %v6499, %v6569
    %v6571 = vpop.f32.mrf.mxu0
    %v6572 = vadd.f32 %v6501, %v6571
    %6573 = vdwg.mxu0
    %v6574 = vadd.f32 %v6131, %v6428
    %v6575 = vadd.f32 %v6132, %v6430
    %v6576 = vadd.f32 %v6133, %v6570
    %v6577 = vadd.f32 %v6134, %v6572
    %v6582 = vcombine.low %v6574, %v6575
    %v6583 = vcombine.low %v6576, %v6577
    %v6585 = vunpack.c.l.s4 1966171168
    %v6586 = vunpack.c.0.s8 %v6585
    %v6587 = vlaneseq
    %v6588 = vshrl.u32 %v6587, 7
    %v6589 = vsub.s32 %v6586, %v6588
    %v6590 = vrot.slane %v6582, %v6589
    %v6592 = vunpack.c.l.s4 1966171168
    %v6593 = vunpack.c.0.s8 %v6592
    %v6594 = vlaneseq
    %v6595 = vshrl.u32 %v6594, 7
    %v6596 = vsub.s32 %v6593, %v6595
    %v6597 = vrot.slane %v6583, %v6596
    %v6598 = vcombine.low %v6590, %v6597
    %v6600 = vunpack.c.l.s4 1966171168
    %v6601 = vunpack.c.0.s8 %v6600
    %v6602 = vlaneseq
    %v6603 = vshrl.u32 %v6602, 7
    %v6604 = vsub.s32 %v6601, %v6603
    %v6605 = vrot.slane %v6598, %v6604
    %v6607 = vlaneseq
    %vm6608 = vcmp.ge.s32.totalorder %v6607, 0
    %vm6609 = vcmp.lt.s32.totalorder %v6607, 400
    %vm6610 = vmand %vm6608, %vm6609
    %6611 = vst.msk [vmem:[#allocation3] ss:$2 sm:$0xf] %vm6610, %v6605
    %s6612 = scalar_lea.vmem %s0, 8
    %v6613 = vld [vmem:[%s6612] sm:$0x1f]
    %v6614 = vld [vmem:[%s6612 + $0x1] sm:$0x1f]
    %s6615 = scalar_lea.vmem %s1, 8
    %v6616 = vld [vmem:[%s6615] sm:$0x1f]
    %v6617 = vld [vmem:[%s6615 + $0x1] sm:$0x1f]
    %v6619 = vsel %vm411, %v6616, 0
    %6621 = vmatprep.subr.mxu0 0.0
    %6622 = vmatpush1.msra.mxu0 0.0
    %6623 = vmatprep.subr.mxu0 0.0
    %6624 = vmatpush1.msra.mxu0 0.0
    %6625 = vmatprep.subr.mxu0 0.0
    %6626 = vmatpush1.msra.mxu0 0.0
    %6627 = vmatprep.subr.mxu0 0.0
    %6628 = vmatpush1.msra.mxu0 0.0
    %6629 = vmatprep.subr.mxu0 0.0
    %6630 = vmatpush1.msra.mxu0 0.0
    %6631 = vmatprep.subr.mxu0 0.0
    %6632 = vmatpush1.msra.mxu0 0.0
    %6633 = vmatprep.subr.mxu0 0.0
    %6634 = vmatpush1.msra.mxu0 0.0
    %6635 = vmatprep.subr.mxu0 0.0
    %6636 = vmatpush1.msra.mxu0 0.0
    %6637 = vmatprep.subr.mxu0 0.0
    %6638 = vmatpush1.msra.mxu0 0.0
    %6639 = vmatprep.subr.mxu0 0.0
    %6640 = vmatpush1.msra.mxu0 0.0
    %6641 = vmatprep.subr.mxu0 0.0
    %6642 = vmatpush1.msra.mxu0 0.0
    %6643 = vmatprep.subr.mxu0 0.0
    %6644 = vmatpush1.msra.mxu0 0.0
    %6645 = vmatprep.subr.mxu0 0.0
    %6646 = vmatpush1.msra.mxu0 0.0
    %6647 = vmatprep.subr.mxu0 %v420
    %6648 = vmatpush1.msra.mxu0 %v417
    %6649 = vmatprep.subr.mxu0 %v74
    %6650 = vmatpush1.msra.mxu0 %v73
    %6651 = vmatprep.subr.mxu0 %v69
    %6652 = vmatpush1.msra.mxu0 %v68
    %6653 = vmatprep.subr.mxu0 0.0
    %6654 = vmatpush2.msra.mxu0 0.0
    %6655 = vmatprep.subr.mxu0 0.0
    %6656 = vmatpush2.msra.mxu0 0.0
    %6657 = vmatprep.subr.mxu0 0.0
    %6658 = vmatpush2.msra.mxu0 0.0
    %6659 = vmatprep.subr.mxu0 0.0
    %6660 = vmatpush2.msra.mxu0 0.0
    %6661 = vmatprep.subr.mxu0 0.0
    %6662 = vmatpush2.msra.mxu0 0.0
    %6663 = vmatprep.subr.mxu0 0.0
    %6664 = vmatpush2.msra.mxu0 0.0
    %6665 = vmatprep.subr.mxu0 0.0
    %6666 = vmatpush2.msra.mxu0 0.0
    %6667 = vmatprep.subr.mxu0 0.0
    %6668 = vmatpush2.msra.mxu0 0.0
    %6669 = vmatprep.subr.mxu0 0.0
    %6670 = vmatpush2.msra.mxu0 0.0
    %6671 = vmatprep.subr.mxu0 0.0
    %6672 = vmatpush2.msra.mxu0 0.0
    %6673 = vmatprep.subr.mxu0 0.0
    %6674 = vmatpush2.msra.mxu0 0.0
    %6675 = vmatprep.subr.mxu0 0.0
    %6676 = vmatpush2.msra.mxu0 0.0
    %6677 = vmatprep.subr.mxu0 0.0
    %6678 = vmatpush2.msra.mxu0 0.0
    %6679 = vmatprep.subr.mxu0 0.0
    %6680 = vmatpush2.msra.mxu0 0.0
    %6681 = vmatprep.subr.mxu0 0.0
    %6682 = vmatpush2.msra.mxu0 0.0
    %6683 = vmatprep.subr.mxu0 0.0
    %6684 = vmatpush2.msra.mxu0 0.0
    %6685 = vmatprep.mubr.f32.mxu0 0.0
    %6686 = vmatmul.mubr.f32.gmra.mxu0 %v6619
    %v6687 = vpop.f32.mrf.mxu0
    %v6688 = vadd.f32 0.0, %v6687
    %v6689 = vpop.f32.mrf.mxu0
    %v6690 = vadd.f32 0.0, %v6689
    %6691 = vdwg.mxu0
    %6692 = vmatprep.subr.mxu0 0.0
    %6693 = vmatpush1.msra.mxu0 0.0
    %6694 = vmatprep.subr.mxu0 0.0
    %6695 = vmatpush1.msra.mxu0 0.0
    %6696 = vmatprep.subr.mxu0 0.0
    %6697 = vmatpush1.msra.mxu0 0.0
    %6698 = vmatprep.subr.mxu0 0.0
    %6699 = vmatpush1.msra.mxu0 0.0
    %6700 = vmatprep.subr.mxu0 0.0
    %6701 = vmatpush1.msra.mxu0 0.0
    %6702 = vmatprep.subr.mxu0 0.0
    %6703 = vmatpush1.msra.mxu0 0.0
    %6704 = vmatprep.subr.mxu0 0.0
    %6705 = vmatpush1.msra.mxu0 0.0
    %6706 = vmatprep.subr.mxu0 0.0
    %6707 = vmatpush1.msra.mxu0 0.0
    %6708 = vmatprep.subr.mxu0 0.0
    %6709 = vmatpush1.msra.mxu0 0.0
    %6710 = vmatprep.subr.mxu0 0.0
    %6711 = vmatpush1.msra.mxu0 0.0
    %6712 = vmatprep.subr.mxu0 0.0
    %6713 = vmatpush1.msra.mxu0 0.0
    %6714 = vmatprep.subr.mxu0 0.0
    %6715 = vmatpush1.msra.mxu0 0.0
    %6716 = vmatprep.subr.mxu0 0.0
    %6717 = vmatpush1.msra.mxu0 0.0
    %6718 = vmatprep.subr.mxu0 %v426
    %6719 = vmatpush1.msra.mxu0 %v423
    %6720 = vmatprep.subr.mxu0 %v76
    %6721 = vmatpush1.msra.mxu0 %v75
    %6722 = vmatprep.subr.mxu0 %v71
    %6723 = vmatpush1.msra.mxu0 %v70
    %6724 = vmatprep.subr.mxu0 0.0
    %6725 = vmatpush2.msra.mxu0 0.0
    %6726 = vmatprep.subr.mxu0 0.0
    %6727 = vmatpush2.msra.mxu0 0.0
    %6728 = vmatprep.subr.mxu0 0.0
    %6729 = vmatpush2.msra.mxu0 0.0
    %6730 = vmatprep.subr.mxu0 0.0
    %6731 = vmatpush2.msra.mxu0 0.0
    %6732 = vmatprep.subr.mxu0 0.0
    %6733 = vmatpush2.msra.mxu0 0.0
    %6734 = vmatprep.subr.mxu0 0.0
    %6735 = vmatpush2.msra.mxu0 0.0
    %6736 = vmatprep.subr.mxu0 0.0
    %6737 = vmatpush2.msra.mxu0 0.0
    %6738 = vmatprep.subr.mxu0 0.0
    %6739 = vmatpush2.msra.mxu0 0.0
    %6740 = vmatprep.subr.mxu0 0.0
    %6741 = vmatpush2.msra.mxu0 0.0
    %6742 = vmatprep.subr.mxu0 0.0
    %6743 = vmatpush2.msra.mxu0 0.0
    %6744 = vmatprep.subr.mxu0 0.0
    %6745 = vmatpush2.msra.mxu0 0.0
    %6746 = vmatprep.subr.mxu0 0.0
    %6747 = vmatpush2.msra.mxu0 0.0
    %6748 = vmatprep.subr.mxu0 0.0
    %6749 = vmatpush2.msra.mxu0 0.0
    %6750 = vmatprep.subr.mxu0 0.0
    %6751 = vmatpush2.msra.mxu0 0.0
    %6752 = vmatprep.subr.mxu0 0.0
    %6753 = vmatpush2.msra.mxu0 0.0
    %6754 = vmatprep.subr.mxu0 0.0
    %6755 = vmatpush2.msra.mxu0 0.0
    %6756 = vmatprep.mubr.f32.mxu0 0.0
    %6757 = vmatmul.mubr.f32.gmra.mxu0 %v6619
    %v6758 = vpop.f32.mrf.mxu0
    %v6759 = vadd.f32 0.0, %v6758
    %v6760 = vpop.f32.mrf.mxu0
    %v6761 = vadd.f32 0.0, %v6760
    %6762 = vdwg.mxu0
    %6763 = vmatprep.subr.mxu0 0.0
    %6764 = vmatpush1.msra.mxu0 0.0
    %6765 = vmatprep.subr.mxu0 0.0
    %6766 = vmatpush1.msra.mxu0 0.0
    %6767 = vmatprep.subr.mxu0 0.0
    %6768 = vmatpush1.msra.mxu0 0.0
    %6769 = vmatprep.subr.mxu0 0.0
    %6770 = vmatpush1.msra.mxu0 0.0
    %6771 = vmatprep.subr.mxu0 0.0
    %6772 = vmatpush1.msra.mxu0 0.0
    %6773 = vmatprep.subr.mxu0 0.0
    %6774 = vmatpush1.msra.mxu0 0.0
    %6775 = vmatprep.subr.mxu0 0.0
    %6776 = vmatpush1.msra.mxu0 0.0
    %6777 = vmatprep.subr.mxu0 0.0
    %6778 = vmatpush1.msra.mxu0 0.0
    %6779 = vmatprep.subr.mxu0 0.0
    %6780 = vmatpush1.msra.mxu0 0.0
    %6781 = vmatprep.subr.mxu0 0.0
    %6782 = vmatpush1.msra.mxu0 0.0
    %6783 = vmatprep.subr.mxu0 0.0
    %6784 = vmatpush1.msra.mxu0 0.0
    %6785 = vmatprep.subr.mxu0 0.0
    %6786 = vmatpush1.msra.mxu0 0.0
    %6787 = vmatprep.subr.mxu0 0.0
    %6788 = vmatpush1.msra.mxu0 0.0
    %6789 = vmatprep.subr.mxu0 0.0
    %6790 = vmatpush1.msra.mxu0 %v429
    %6791 = vmatprep.subr.mxu0 0.0
    %6792 = vmatpush1.msra.mxu0 %v77
    %6793 = vmatprep.subr.mxu0 0.0
    %6794 = vmatpush1.msra.mxu0 %v72
    %6795 = vmatprep.subr.mxu0 0.0
    %6796 = vmatpush2.msra.mxu0 0.0
    %6797 = vmatprep.subr.mxu0 0.0
    %6798 = vmatpush2.msra.mxu0 0.0
    %6799 = vmatprep.subr.mxu0 0.0
    %6800 = vmatpush2.msra.mxu0 0.0
    %6801 = vmatprep.subr.mxu0 0.0
    %6802 = vmatpush2.msra.mxu0 0.0
    %6803 = vmatprep.subr.mxu0 0.0
    %6804 = vmatpush2.msra.mxu0 0.0
    %6805 = vmatprep.subr.mxu0 0.0
    %6806 = vmatpush2.msra.mxu0 0.0
    %6807 = vmatprep.subr.mxu0 0.0
    %6808 = vmatpush2.msra.mxu0 0.0
    %6809 = vmatprep.subr.mxu0 0.0
    %6810 = vmatpush2.msra.mxu0 0.0
    %6811 = vmatprep.subr.mxu0 0.0
    %6812 = vmatpush2.msra.mxu0 0.0
    %6813 = vmatprep.subr.mxu0 0.0
    %6814 = vmatpush2.msra.mxu0 0.0
    %6815 = vmatprep.subr.mxu0 0.0
    %6816 = vmatpush2.msra.mxu0 0.0
    %6817 = vmatprep.subr.mxu0 0.0
    %6818 = vmatpush2.msra.mxu0 0.0
    %6819 = vmatprep.subr.mxu0 0.0
    %6820 = vmatpush2.msra.mxu0 0.0
    %6821 = vmatprep.subr.mxu0 0.0
    %6822 = vmatpush2.msra.mxu0 0.0
    %6823 = vmatprep.subr.mxu0 0.0
    %6824 = vmatpush2.msra.mxu0 0.0
    %6825 = vmatprep.subr.mxu0 0.0
    %6826 = vmatpush2.msra.mxu0 0.0
    %6827 = vmatprep.mubr.f32.mxu0 0.0
    %6828 = vmatmul.mubr.f32.gmra.mxu0 %v6619
    %v6829 = vpop.f32.mrf.mxu0
    %v6830 = vadd.f32 0.0, %v6829
    %v6831 = vpop.f32.mrf.mxu0
    %6832 = vdwg.mxu0
    %v6834 = vsel %vm411, %v6613, 0
    %6836 = vmatprep.subr.mxu0 0.0
    %6837 = vmatpush1.msra.mxu0 0.0
    %6838 = vmatprep.subr.mxu0 0.0
    %6839 = vmatpush1.msra.mxu0 0.0
    %6840 = vmatprep.subr.mxu0 0.0
    %6841 = vmatpush1.msra.mxu0 0.0
    %6842 = vmatprep.subr.mxu0 0.0
    %6843 = vmatpush1.msra.mxu0 0.0
    %6844 = vmatprep.subr.mxu0 0.0
    %6845 = vmatpush1.msra.mxu0 0.0
    %6846 = vmatprep.subr.mxu0 0.0
    %6847 = vmatpush1.msra.mxu0 0.0
    %6848 = vmatprep.subr.mxu0 0.0
    %6849 = vmatpush1.msra.mxu0 0.0
    %6850 = vmatprep.subr.mxu0 0.0
    %6851 = vmatpush1.msra.mxu0 0.0
    %6852 = vmatprep.subr.mxu0 0.0
    %6853 = vmatpush1.msra.mxu0 0.0
    %6854 = vmatprep.subr.mxu0 0.0
    %6855 = vmatpush1.msra.mxu0 0.0
    %6856 = vmatprep.subr.mxu0 0.0
    %6857 = vmatpush1.msra.mxu0 0.0
    %6858 = vmatprep.subr.mxu0 0.0
    %6859 = vmatpush1.msra.mxu0 0.0
    %6860 = vmatprep.subr.mxu0 0.0
    %6861 = vmatpush1.msra.mxu0 0.0
    %6862 = vmatprep.subr.mxu0 %v650
    %6863 = vmatpush1.msra.mxu0 %v647
    %6864 = vmatprep.subr.mxu0 %v58
    %6865 = vmatpush1.msra.mxu0 %v57
    %6866 = vmatprep.subr.mxu0 %v53
    %6867 = vmatpush1.msra.mxu0 %v52
    %6868 = vmatprep.subr.mxu0 0.0
    %6869 = vmatpush2.msra.mxu0 0.0
    %6870 = vmatprep.subr.mxu0 0.0
    %6871 = vmatpush2.msra.mxu0 0.0
    %6872 = vmatprep.subr.mxu0 0.0
    %6873 = vmatpush2.msra.mxu0 0.0
    %6874 = vmatprep.subr.mxu0 0.0
    %6875 = vmatpush2.msra.mxu0 0.0
    %6876 = vmatprep.subr.mxu0 0.0
    %6877 = vmatpush2.msra.mxu0 0.0
    %6878 = vmatprep.subr.mxu0 0.0
    %6879 = vmatpush2.msra.mxu0 0.0
    %6880 = vmatprep.subr.mxu0 0.0
    %6881 = vmatpush2.msra.mxu0 0.0
    %6882 = vmatprep.subr.mxu0 0.0
    %6883 = vmatpush2.msra.mxu0 0.0
    %6884 = vmatprep.subr.mxu0 0.0
    %6885 = vmatpush2.msra.mxu0 0.0
    %6886 = vmatprep.subr.mxu0 0.0
    %6887 = vmatpush2.msra.mxu0 0.0
    %6888 = vmatprep.subr.mxu0 0.0
    %6889 = vmatpush2.msra.mxu0 0.0
    %6890 = vmatprep.subr.mxu0 0.0
    %6891 = vmatpush2.msra.mxu0 0.0
    %6892 = vmatprep.subr.mxu0 0.0
    %6893 = vmatpush2.msra.mxu0 0.0
    %6894 = vmatprep.subr.mxu0 0.0
    %6895 = vmatpush2.msra.mxu0 0.0
    %6896 = vmatprep.subr.mxu0 0.0
    %6897 = vmatpush2.msra.mxu0 0.0
    %6898 = vmatprep.subr.mxu0 0.0
    %6899 = vmatpush2.msra.mxu0 0.0
    %6900 = vmatprep.mubr.f32.mxu0 0.0
    %6901 = vmatmul.mubr.f32.gmra.mxu0 %v6834
    %v6902 = vpop.f32.mrf.mxu0
    %v6903 = vadd.f32 %v6688, %v6902
    %v6904 = vpop.f32.mrf.mxu0
    %v6905 = vadd.f32 %v6690, %v6904
    %6906 = vdwg.mxu0
    %6907 = vmatprep.subr.mxu0 0.0
    %6908 = vmatpush1.msra.mxu0 0.0
    %6909 = vmatprep.subr.mxu0 0.0
    %6910 = vmatpush1.msra.mxu0 0.0
    %6911 = vmatprep.subr.mxu0 0.0
    %6912 = vmatpush1.msra.mxu0 0.0
    %6913 = vmatprep.subr.mxu0 0.0
    %6914 = vmatpush1.msra.mxu0 0.0
    %6915 = vmatprep.subr.mxu0 0.0
    %6916 = vmatpush1.msra.mxu0 0.0
    %6917 = vmatprep.subr.mxu0 0.0
    %6918 = vmatpush1.msra.mxu0 0.0
    %6919 = vmatprep.subr.mxu0 0.0
    %6920 = vmatpush1.msra.mxu0 0.0
    %6921 = vmatprep.subr.mxu0 0.0
    %6922 = vmatpush1.msra.mxu0 0.0
    %6923 = vmatprep.subr.mxu0 0.0
    %6924 = vmatpush1.msra.mxu0 0.0
    %6925 = vmatprep.subr.mxu0 0.0
    %6926 = vmatpush1.msra.mxu0 0.0
    %6927 = vmatprep.subr.mxu0 0.0
    %6928 = vmatpush1.msra.mxu0 0.0
    %6929 = vmatprep.subr.mxu0 0.0
    %6930 = vmatpush1.msra.mxu0 0.0
    %6931 = vmatprep.subr.mxu0 0.0
    %6932 = vmatpush1.msra.mxu0 0.0
    %6933 = vmatprep.subr.mxu0 %v656
    %6934 = vmatpush1.msra.mxu0 %v653
    %6935 = vmatprep.subr.mxu0 %v60
    %6936 = vmatpush1.msra.mxu0 %v59
    %6937 = vmatprep.subr.mxu0 %v55
    %6938 = vmatpush1.msra.mxu0 %v54
    %6939 = vmatprep.subr.mxu0 0.0
    %6940 = vmatpush2.msra.mxu0 0.0
    %6941 = vmatprep.subr.mxu0 0.0
    %6942 = vmatpush2.msra.mxu0 0.0
    %6943 = vmatprep.subr.mxu0 0.0
    %6944 = vmatpush2.msra.mxu0 0.0
    %6945 = vmatprep.subr.mxu0 0.0
    %6946 = vmatpush2.msra.mxu0 0.0
    %6947 = vmatprep.subr.mxu0 0.0
    %6948 = vmatpush2.msra.mxu0 0.0
    %6949 = vmatprep.subr.mxu0 0.0
    %6950 = vmatpush2.msra.mxu0 0.0
    %6951 = vmatprep.subr.mxu0 0.0
    %6952 = vmatpush2.msra.mxu0 0.0
    %6953 = vmatprep.subr.mxu0 0.0
    %6954 = vmatpush2.msra.mxu0 0.0
    %6955 = vmatprep.subr.mxu0 0.0
    %6956 = vmatpush2.msra.mxu0 0.0
    %6957 = vmatprep.subr.mxu0 0.0
    %6958 = vmatpush2.msra.mxu0 0.0
    %6959 = vmatprep.subr.mxu0 0.0
    %6960 = vmatpush2.msra.mxu0 0.0
    %6961 = vmatprep.subr.mxu0 0.0
    %6962 = vmatpush2.msra.mxu0 0.0
    %6963 = vmatprep.subr.mxu0 0.0
    %6964 = vmatpush2.msra.mxu0 0.0
    %6965 = vmatprep.subr.mxu0 0.0
    %6966 = vmatpush2.msra.mxu0 0.0
    %6967 = vmatprep.subr.mxu0 0.0
    %6968 = vmatpush2.msra.mxu0 0.0
    %6969 = vmatprep.subr.mxu0 0.0
    %6970 = vmatpush2.msra.mxu0 0.0
    %6971 = vmatprep.mubr.f32.mxu0 0.0
    %6972 = vmatmul.mubr.f32.gmra.mxu0 %v6834
    %v6973 = vpop.f32.mrf.mxu0
    %v6974 = vadd.f32 %v6759, %v6973
    %v6975 = vpop.f32.mrf.mxu0
    %v6976 = vadd.f32 %v6761, %v6975
    %6977 = vdwg.mxu0
    %6978 = vmatprep.subr.mxu0 0.0
    %6979 = vmatpush1.msra.mxu0 0.0
    %6980 = vmatprep.subr.mxu0 0.0
    %6981 = vmatpush1.msra.mxu0 0.0
    %6982 = vmatprep.subr.mxu0 0.0
    %6983 = vmatpush1.msra.mxu0 0.0
    %6984 = vmatprep.subr.mxu0 0.0
    %6985 = vmatpush1.msra.mxu0 0.0
    %6986 = vmatprep.subr.mxu0 0.0
    %6987 = vmatpush1.msra.mxu0 0.0
    %6988 = vmatprep.subr.mxu0 0.0
    %6989 = vmatpush1.msra.mxu0 0.0
    %6990 = vmatprep.subr.mxu0 0.0
    %6991 = vmatpush1.msra.mxu0 0.0
    %6992 = vmatprep.subr.mxu0 0.0
    %6993 = vmatpush1.msra.mxu0 0.0
    %6994 = vmatprep.subr.mxu0 0.0
    %6995 = vmatpush1.msra.mxu0 0.0
    %6996 = vmatprep.subr.mxu0 0.0
    %6997 = vmatpush1.msra.mxu0 0.0
    %6998 = vmatprep.subr.mxu0 0.0
    %6999 = vmatpush1.msra.mxu0 0.0
    %7000 = vmatprep.subr.mxu0 0.0
    %7001 = vmatpush1.msra.mxu0 0.0
    %7002 = vmatprep.subr.mxu0 0.0
    %7003 = vmatpush1.msra.mxu0 0.0
    %7004 = vmatprep.subr.mxu0 0.0
    %7005 = vmatpush1.msra.mxu0 %v659
    %7006 = vmatprep.subr.mxu0 0.0
    %7007 = vmatpush1.msra.mxu0 %v61
    %7008 = vmatprep.subr.mxu0 0.0
    %7009 = vmatpush1.msra.mxu0 %v56
    %7010 = vmatprep.subr.mxu0 0.0
    %7011 = vmatpush2.msra.mxu0 0.0
    %7012 = vmatprep.subr.mxu0 0.0
    %7013 = vmatpush2.msra.mxu0 0.0
    %7014 = vmatprep.subr.mxu0 0.0
    %7015 = vmatpush2.msra.mxu0 0.0
    %7016 = vmatprep.subr.mxu0 0.0
    %7017 = vmatpush2.msra.mxu0 0.0
    %7018 = vmatprep.subr.mxu0 0.0
    %7019 = vmatpush2.msra.mxu0 0.0
    %7020 = vmatprep.subr.mxu0 0.0
    %7021 = vmatpush2.msra.mxu0 0.0
    %7022 = vmatprep.subr.mxu0 0.0
    %7023 = vmatpush2.msra.mxu0 0.0
    %7024 = vmatprep.subr.mxu0 0.0
    %7025 = vmatpush2.msra.mxu0 0.0
    %7026 = vmatprep.subr.mxu0 0.0
    %7027 = vmatpush2.msra.mxu0 0.0
    %7028 = vmatprep.subr.mxu0 0.0
    %7029 = vmatpush2.msra.mxu0 0.0
    %7030 = vmatprep.subr.mxu0 0.0
    %7031 = vmatpush2.msra.mxu0 0.0
    %7032 = vmatprep.subr.mxu0 0.0
    %7033 = vmatpush2.msra.mxu0 0.0
    %7034 = vmatprep.subr.mxu0 0.0
    %7035 = vmatpush2.msra.mxu0 0.0
    %7036 = vmatprep.subr.mxu0 0.0
    %7037 = vmatpush2.msra.mxu0 0.0
    %7038 = vmatprep.subr.mxu0 0.0
    %7039 = vmatpush2.msra.mxu0 0.0
    %7040 = vmatprep.subr.mxu0 0.0
    %7041 = vmatpush2.msra.mxu0 0.0
    %7042 = vmatprep.mubr.f32.mxu0 0.0
    %7043 = vmatmul.mubr.f32.gmra.mxu0 %v6834
    %v7044 = vpop.f32.mrf.mxu0
    %v7045 = vadd.f32 %v6830, %v7044
    %v7046 = vpop.f32.mrf.mxu0
    %7047 = vdwg.mxu0
    %v7049 = vsel %vm411, %v6614, 0
    %7051 = vmatprep.subr.mxu0 0.0
    %7052 = vmatpush1.msra.mxu0 0.0
    %7053 = vmatprep.subr.mxu0 0.0
    %7054 = vmatpush1.msra.mxu0 0.0
    %7055 = vmatprep.subr.mxu0 0.0
    %7056 = vmatpush1.msra.mxu0 0.0
    %7057 = vmatprep.subr.mxu0 0.0
    %7058 = vmatpush1.msra.mxu0 0.0
    %7059 = vmatprep.subr.mxu0 0.0
    %7060 = vmatpush1.msra.mxu0 0.0
    %7061 = vmatprep.subr.mxu0 0.0
    %7062 = vmatpush1.msra.mxu0 0.0
    %7063 = vmatprep.subr.mxu0 0.0
    %7064 = vmatpush1.msra.mxu0 0.0
    %7065 = vmatprep.subr.mxu0 0.0
    %7066 = vmatpush1.msra.mxu0 0.0
    %7067 = vmatprep.subr.mxu0 0.0
    %7068 = vmatpush1.msra.mxu0 0.0
    %7069 = vmatprep.subr.mxu0 0.0
    %7070 = vmatpush1.msra.mxu0 0.0
    %7071 = vmatprep.subr.mxu0 0.0
    %7072 = vmatpush1.msra.mxu0 0.0
    %7073 = vmatprep.subr.mxu0 0.0
    %7074 = vmatpush1.msra.mxu0 0.0
    %7075 = vmatprep.subr.mxu0 0.0
    %7076 = vmatpush1.msra.mxu0 0.0
    %7077 = vmatprep.subr.mxu0 %v880
    %7078 = vmatpush1.msra.mxu0 %v877
    %7079 = vmatprep.subr.mxu0 %v90
    %7080 = vmatpush1.msra.mxu0 %v89
    %7081 = vmatprep.subr.mxu0 %v85
    %7082 = vmatpush1.msra.mxu0 %v84
    %7083 = vmatprep.subr.mxu0 0.0
    %7084 = vmatpush2.msra.mxu0 0.0
    %7085 = vmatprep.subr.mxu0 0.0
    %7086 = vmatpush2.msra.mxu0 0.0
    %7087 = vmatprep.subr.mxu0 0.0
    %7088 = vmatpush2.msra.mxu0 0.0
    %7089 = vmatprep.subr.mxu0 0.0
    %7090 = vmatpush2.msra.mxu0 0.0
    %7091 = vmatprep.subr.mxu0 0.0
    %7092 = vmatpush2.msra.mxu0 0.0
    %7093 = vmatprep.subr.mxu0 0.0
    %7094 = vmatpush2.msra.mxu0 0.0
    %7095 = vmatprep.subr.mxu0 0.0
    %7096 = vmatpush2.msra.mxu0 0.0
    %7097 = vmatprep.subr.mxu0 0.0
    %7098 = vmatpush2.msra.mxu0 0.0
    %7099 = vmatprep.subr.mxu0 0.0
    %7100 = vmatpush2.msra.mxu0 0.0
    %7101 = vmatprep.subr.mxu0 0.0
    %7102 = vmatpush2.msra.mxu0 0.0
    %7103 = vmatprep.subr.mxu0 0.0
    %7104 = vmatpush2.msra.mxu0 0.0
    %7105 = vmatprep.subr.mxu0 0.0
    %7106 = vmatpush2.msra.mxu0 0.0
    %7107 = vmatprep.subr.mxu0 0.0
    %7108 = vmatpush2.msra.mxu0 0.0
    %7109 = vmatprep.subr.mxu0 0.0
    %7110 = vmatpush2.msra.mxu0 0.0
    %7111 = vmatprep.subr.mxu0 0.0
    %7112 = vmatpush2.msra.mxu0 0.0
    %7113 = vmatprep.subr.mxu0 0.0
    %7114 = vmatpush2.msra.mxu0 0.0
    %7115 = vmatprep.mubr.f32.mxu0 0.0
    %7116 = vmatmul.mubr.f32.gmra.mxu0 %v7049
    %v7117 = vpop.f32.mrf.mxu0
    %v7118 = vadd.f32 0.0, %v7117
    %v7119 = vpop.f32.mrf.mxu0
    %v7120 = vadd.f32 0.0, %v7119
    %7121 = vdwg.mxu0
    %7122 = vmatprep.subr.mxu0 0.0
    %7123 = vmatpush1.msra.mxu0 0.0
    %7124 = vmatprep.subr.mxu0 0.0
    %7125 = vmatpush1.msra.mxu0 0.0
    %7126 = vmatprep.subr.mxu0 0.0
    %7127 = vmatpush1.msra.mxu0 0.0
    %7128 = vmatprep.subr.mxu0 0.0
    %7129 = vmatpush1.msra.mxu0 0.0
    %7130 = vmatprep.subr.mxu0 0.0
    %7131 = vmatpush1.msra.mxu0 0.0
    %7132 = vmatprep.subr.mxu0 0.0
    %7133 = vmatpush1.msra.mxu0 0.0
    %7134 = vmatprep.subr.mxu0 0.0
    %7135 = vmatpush1.msra.mxu0 0.0
    %7136 = vmatprep.subr.mxu0 0.0
    %7137 = vmatpush1.msra.mxu0 0.0
    %7138 = vmatprep.subr.mxu0 0.0
    %7139 = vmatpush1.msra.mxu0 0.0
    %7140 = vmatprep.subr.mxu0 0.0
    %7141 = vmatpush1.msra.mxu0 0.0
    %7142 = vmatprep.subr.mxu0 0.0
    %7143 = vmatpush1.msra.mxu0 0.0
    %7144 = vmatprep.subr.mxu0 0.0
    %7145 = vmatpush1.msra.mxu0 0.0
    %7146 = vmatprep.subr.mxu0 0.0
    %7147 = vmatpush1.msra.mxu0 0.0
    %7148 = vmatprep.subr.mxu0 %v886
    %7149 = vmatpush1.msra.mxu0 %v883
    %7150 = vmatprep.subr.mxu0 %v92
    %7151 = vmatpush1.msra.mxu0 %v91
    %7152 = vmatprep.subr.mxu0 %v87
    %7153 = vmatpush1.msra.mxu0 %v86
    %7154 = vmatprep.subr.mxu0 0.0
    %7155 = vmatpush2.msra.mxu0 0.0
    %7156 = vmatprep.subr.mxu0 0.0
    %7157 = vmatpush2.msra.mxu0 0.0
    %7158 = vmatprep.subr.mxu0 0.0
    %7159 = vmatpush2.msra.mxu0 0.0
    %7160 = vmatprep.subr.mxu0 0.0
    %7161 = vmatpush2.msra.mxu0 0.0
    %7162 = vmatprep.subr.mxu0 0.0
    %7163 = vmatpush2.msra.mxu0 0.0
    %7164 = vmatprep.subr.mxu0 0.0
    %7165 = vmatpush2.msra.mxu0 0.0
    %7166 = vmatprep.subr.mxu0 0.0
    %7167 = vmatpush2.msra.mxu0 0.0
    %7168 = vmatprep.subr.mxu0 0.0
    %7169 = vmatpush2.msra.mxu0 0.0
    %7170 = vmatprep.subr.mxu0 0.0
    %7171 = vmatpush2.msra.mxu0 0.0
    %7172 = vmatprep.subr.mxu0 0.0
    %7173 = vmatpush2.msra.mxu0 0.0
    %7174 = vmatprep.subr.mxu0 0.0
    %7175 = vmatpush2.msra.mxu0 0.0
    %7176 = vmatprep.subr.mxu0 0.0
    %7177 = vmatpush2.msra.mxu0 0.0
    %7178 = vmatprep.subr.mxu0 0.0
    %7179 = vmatpush2.msra.mxu0 0.0
    %7180 = vmatprep.subr.mxu0 0.0
    %7181 = vmatpush2.msra.mxu0 0.0
    %7182 = vmatprep.subr.mxu0 0.0
    %7183 = vmatpush2.msra.mxu0 0.0
    %7184 = vmatprep.subr.mxu0 0.0
    %7185 = vmatpush2.msra.mxu0 0.0
    %7186 = vmatprep.mubr.f32.mxu0 0.0
    %7187 = vmatmul.mubr.f32.gmra.mxu0 %v7049
    %v7188 = vpop.f32.mrf.mxu0
    %v7189 = vadd.f32 0.0, %v7188
    %v7190 = vpop.f32.mrf.mxu0
    %v7191 = vadd.f32 0.0, %v7190
    %7192 = vdwg.mxu0
    %7193 = vmatprep.subr.mxu0 0.0
    %7194 = vmatpush1.msra.mxu0 0.0
    %7195 = vmatprep.subr.mxu0 0.0
    %7196 = vmatpush1.msra.mxu0 0.0
    %7197 = vmatprep.subr.mxu0 0.0
    %7198 = vmatpush1.msra.mxu0 0.0
    %7199 = vmatprep.subr.mxu0 0.0
    %7200 = vmatpush1.msra.mxu0 0.0
    %7201 = vmatprep.subr.mxu0 0.0
    %7202 = vmatpush1.msra.mxu0 0.0
    %7203 = vmatprep.subr.mxu0 0.0
    %7204 = vmatpush1.msra.mxu0 0.0
    %7205 = vmatprep.subr.mxu0 0.0
    %7206 = vmatpush1.msra.mxu0 0.0
    %7207 = vmatprep.subr.mxu0 0.0
    %7208 = vmatpush1.msra.mxu0 0.0
    %7209 = vmatprep.subr.mxu0 0.0
    %7210 = vmatpush1.msra.mxu0 0.0
    %7211 = vmatprep.subr.mxu0 0.0
    %7212 = vmatpush1.msra.mxu0 0.0
    %7213 = vmatprep.subr.mxu0 0.0
    %7214 = vmatpush1.msra.mxu0 0.0
    %7215 = vmatprep.subr.mxu0 0.0
    %7216 = vmatpush1.msra.mxu0 0.0
    %7217 = vmatprep.subr.mxu0 0.0
    %7218 = vmatpush1.msra.mxu0 0.0
    %7219 = vmatprep.subr.mxu0 0.0
    %7220 = vmatpush1.msra.mxu0 %v889
    %7221 = vmatprep.subr.mxu0 0.0
    %7222 = vmatpush1.msra.mxu0 %v93
    %7223 = vmatprep.subr.mxu0 0.0
    %7224 = vmatpush1.msra.mxu0 %v88
    %7225 = vmatprep.subr.mxu0 0.0
    %7226 = vmatpush2.msra.mxu0 0.0
    %7227 = vmatprep.subr.mxu0 0.0
    %7228 = vmatpush2.msra.mxu0 0.0
    %7229 = vmatprep.subr.mxu0 0.0
    %7230 = vmatpush2.msra.mxu0 0.0
    %7231 = vmatprep.subr.mxu0 0.0
    %7232 = vmatpush2.msra.mxu0 0.0
    %7233 = vmatprep.subr.mxu0 0.0
    %7234 = vmatpush2.msra.mxu0 0.0
    %7235 = vmatprep.subr.mxu0 0.0
    %7236 = vmatpush2.msra.mxu0 0.0
    %7237 = vmatprep.subr.mxu0 0.0
    %7238 = vmatpush2.msra.mxu0 0.0
    %7239 = vmatprep.subr.mxu0 0.0
    %7240 = vmatpush2.msra.mxu0 0.0
    %7241 = vmatprep.subr.mxu0 0.0
    %7242 = vmatpush2.msra.mxu0 0.0
    %7243 = vmatprep.subr.mxu0 0.0
    %7244 = vmatpush2.msra.mxu0 0.0
    %7245 = vmatprep.subr.mxu0 0.0
    %7246 = vmatpush2.msra.mxu0 0.0
    %7247 = vmatprep.subr.mxu0 0.0
    %7248 = vmatpush2.msra.mxu0 0.0
    %7249 = vmatprep.subr.mxu0 0.0
    %7250 = vmatpush2.msra.mxu0 0.0
    %7251 = vmatprep.subr.mxu0 0.0
    %7252 = vmatpush2.msra.mxu0 0.0
    %7253 = vmatprep.subr.mxu0 0.0
    %7254 = vmatpush2.msra.mxu0 0.0
    %7255 = vmatprep.subr.mxu0 0.0
    %7256 = vmatpush2.msra.mxu0 0.0
    %7257 = vmatprep.mubr.f32.mxu0 0.0
    %7258 = vmatmul.mubr.f32.gmra.mxu0 %v7049
    %v7259 = vpop.f32.mrf.mxu0
    %v7260 = vadd.f32 0.0, %v7259
    %v7261 = vpop.f32.mrf.mxu0
    %7262 = vdwg.mxu0
    %v7263 = vadd.f32 %v6903, %v7118
    %v7264 = vadd.f32 %v6905, %v7120
    %v7265 = vadd.f32 %v6974, %v7189
    %v7266 = vadd.f32 %v6976, %v7191
    %v7267 = vadd.f32 %v7045, %v7260
    %7268 = vmatprep.subr.mxu0 0.0
    %7269 = vmatpush1.msra.mxu0 0.0
    %7270 = vmatprep.subr.mxu0 0.0
    %7271 = vmatpush1.msra.mxu0 0.0
    %7272 = vmatprep.subr.mxu0 0.0
    %7273 = vmatpush1.msra.mxu0 0.0
    %7274 = vmatprep.subr.mxu0 0.0
    %7275 = vmatpush1.msra.mxu0 0.0
    %7276 = vmatprep.subr.mxu0 0.0
    %7277 = vmatpush1.msra.mxu0 0.0
    %7278 = vmatprep.subr.mxu0 0.0
    %7279 = vmatpush1.msra.mxu0 0.0
    %7280 = vmatprep.subr.mxu0 0.0
    %7281 = vmatpush1.msra.mxu0 0.0
    %7282 = vmatprep.subr.mxu0 0.0
    %7283 = vmatpush1.msra.mxu0 0.0
    %7284 = vmatprep.subr.mxu0 0.0
    %7285 = vmatpush1.msra.mxu0 0.0
    %7286 = vmatprep.subr.mxu0 0.0
    %7287 = vmatpush1.msra.mxu0 0.0
    %7288 = vmatprep.subr.mxu0 0.0
    %7289 = vmatpush1.msra.mxu0 0.0
    %7290 = vmatprep.subr.mxu0 0.0
    %7291 = vmatpush1.msra.mxu0 0.0
    %7292 = vmatprep.subr.mxu0 0.0
    %7293 = vmatpush1.msra.mxu0 0.0
    %7294 = vmatprep.subr.mxu0 %v420
    %7295 = vmatpush1.msra.mxu0 %v417
    %7296 = vmatprep.subr.mxu0 %v74
    %7297 = vmatpush1.msra.mxu0 %v73
    %7298 = vmatprep.subr.mxu0 %v69
    %7299 = vmatpush1.msra.mxu0 %v68
    %7300 = vmatprep.subr.mxu0 0.0
    %7301 = vmatpush2.msra.mxu0 0.0
    %7302 = vmatprep.subr.mxu0 0.0
    %7303 = vmatpush2.msra.mxu0 0.0
    %7304 = vmatprep.subr.mxu0 0.0
    %7305 = vmatpush2.msra.mxu0 0.0
    %7306 = vmatprep.subr.mxu0 0.0
    %7307 = vmatpush2.msra.mxu0 0.0
    %7308 = vmatprep.subr.mxu0 0.0
    %7309 = vmatpush2.msra.mxu0 0.0
    %7310 = vmatprep.subr.mxu0 0.0
    %7311 = vmatpush2.msra.mxu0 0.0
    %7312 = vmatprep.subr.mxu0 0.0
    %7313 = vmatpush2.msra.mxu0 0.0
    %7314 = vmatprep.subr.mxu0 0.0
    %7315 = vmatpush2.msra.mxu0 0.0
    %7316 = vmatprep.subr.mxu0 0.0
    %7317 = vmatpush2.msra.mxu0 0.0
    %7318 = vmatprep.subr.mxu0 0.0
    %7319 = vmatpush2.msra.mxu0 0.0
    %7320 = vmatprep.subr.mxu0 0.0
    %7321 = vmatpush2.msra.mxu0 0.0
    %7322 = vmatprep.subr.mxu0 0.0
    %7323 = vmatpush2.msra.mxu0 0.0
    %7324 = vmatprep.subr.mxu0 0.0
    %7325 = vmatpush2.msra.mxu0 0.0
    %7326 = vmatprep.subr.mxu0 0.0
    %7327 = vmatpush2.msra.mxu0 0.0
    %7328 = vmatprep.subr.mxu0 0.0
    %7329 = vmatpush2.msra.mxu0 0.0
    %7330 = vmatprep.subr.mxu0 0.0
    %7331 = vmatpush2.msra.mxu0 0.0
    %7332 = vmatprep.mubr.f32.mxu0 0.0
    %7333 = vmatmul.mubr.f32.gmra.mxu0 %v7049
    %v7334 = vpop.f32.mrf.mxu0
    %v7335 = vadd.f32 0.0, %v7334
    %v7336 = vpop.f32.mrf.mxu0
    %v7337 = vadd.f32 0.0, %v7336
    %7338 = vdwg.mxu0
    %7339 = vmatprep.subr.mxu0 0.0
    %7340 = vmatpush1.msra.mxu0 0.0
    %7341 = vmatprep.subr.mxu0 0.0
    %7342 = vmatpush1.msra.mxu0 0.0
    %7343 = vmatprep.subr.mxu0 0.0
    %7344 = vmatpush1.msra.mxu0 0.0
    %7345 = vmatprep.subr.mxu0 0.0
    %7346 = vmatpush1.msra.mxu0 0.0
    %7347 = vmatprep.subr.mxu0 0.0
    %7348 = vmatpush1.msra.mxu0 0.0
    %7349 = vmatprep.subr.mxu0 0.0
    %7350 = vmatpush1.msra.mxu0 0.0
    %7351 = vmatprep.subr.mxu0 0.0
    %7352 = vmatpush1.msra.mxu0 0.0
    %7353 = vmatprep.subr.mxu0 0.0
    %7354 = vmatpush1.msra.mxu0 0.0
    %7355 = vmatprep.subr.mxu0 0.0
    %7356 = vmatpush1.msra.mxu0 0.0
    %7357 = vmatprep.subr.mxu0 0.0
    %7358 = vmatpush1.msra.mxu0 0.0
    %7359 = vmatprep.subr.mxu0 0.0
    %7360 = vmatpush1.msra.mxu0 0.0
    %7361 = vmatprep.subr.mxu0 0.0
    %7362 = vmatpush1.msra.mxu0 0.0
    %7363 = vmatprep.subr.mxu0 0.0
    %7364 = vmatpush1.msra.mxu0 0.0
    %7365 = vmatprep.subr.mxu0 %v426
    %7366 = vmatpush1.msra.mxu0 %v423
    %7367 = vmatprep.subr.mxu0 %v76
    %7368 = vmatpush1.msra.mxu0 %v75
    %7369 = vmatprep.subr.mxu0 %v71
    %7370 = vmatpush1.msra.mxu0 %v70
    %7371 = vmatprep.subr.mxu0 0.0
    %7372 = vmatpush2.msra.mxu0 0.0
    %7373 = vmatprep.subr.mxu0 0.0
    %7374 = vmatpush2.msra.mxu0 0.0
    %7375 = vmatprep.subr.mxu0 0.0
    %7376 = vmatpush2.msra.mxu0 0.0
    %7377 = vmatprep.subr.mxu0 0.0
    %7378 = vmatpush2.msra.mxu0 0.0
    %7379 = vmatprep.subr.mxu0 0.0
    %7380 = vmatpush2.msra.mxu0 0.0
    %7381 = vmatprep.subr.mxu0 0.0
    %7382 = vmatpush2.msra.mxu0 0.0
    %7383 = vmatprep.subr.mxu0 0.0
    %7384 = vmatpush2.msra.mxu0 0.0
    %7385 = vmatprep.subr.mxu0 0.0
    %7386 = vmatpush2.msra.mxu0 0.0
    %7387 = vmatprep.subr.mxu0 0.0
    %7388 = vmatpush2.msra.mxu0 0.0
    %7389 = vmatprep.subr.mxu0 0.0
    %7390 = vmatpush2.msra.mxu0 0.0
    %7391 = vmatprep.subr.mxu0 0.0
    %7392 = vmatpush2.msra.mxu0 0.0
    %7393 = vmatprep.subr.mxu0 0.0
    %7394 = vmatpush2.msra.mxu0 0.0
    %7395 = vmatprep.subr.mxu0 0.0
    %7396 = vmatpush2.msra.mxu0 0.0
    %7397 = vmatprep.subr.mxu0 0.0
    %7398 = vmatpush2.msra.mxu0 0.0
    %7399 = vmatprep.subr.mxu0 0.0
    %7400 = vmatpush2.msra.mxu0 0.0
    %7401 = vmatprep.subr.mxu0 0.0
    %7402 = vmatpush2.msra.mxu0 0.0
    %7403 = vmatprep.mubr.f32.mxu0 0.0
    %7404 = vmatmul.mubr.f32.gmra.mxu0 %v7049
    %v7405 = vpop.f32.mrf.mxu0
    %v7406 = vadd.f32 0.0, %v7405
    %v7407 = vpop.f32.mrf.mxu0
    %v7408 = vadd.f32 0.0, %v7407
    %7409 = vdwg.mxu0
    %7410 = vmatprep.subr.mxu0 0.0
    %7411 = vmatpush1.msra.mxu0 0.0
    %7412 = vmatprep.subr.mxu0 0.0
    %7413 = vmatpush1.msra.mxu0 0.0
    %7414 = vmatprep.subr.mxu0 0.0
    %7415 = vmatpush1.msra.mxu0 0.0
    %7416 = vmatprep.subr.mxu0 0.0
    %7417 = vmatpush1.msra.mxu0 0.0
    %7418 = vmatprep.subr.mxu0 0.0
    %7419 = vmatpush1.msra.mxu0 0.0
    %7420 = vmatprep.subr.mxu0 0.0
    %7421 = vmatpush1.msra.mxu0 0.0
    %7422 = vmatprep.subr.mxu0 0.0
    %7423 = vmatpush1.msra.mxu0 0.0
    %7424 = vmatprep.subr.mxu0 0.0
    %7425 = vmatpush1.msra.mxu0 0.0
    %7426 = vmatprep.subr.mxu0 0.0
    %7427 = vmatpush1.msra.mxu0 0.0
    %7428 = vmatprep.subr.mxu0 0.0
    %7429 = vmatpush1.msra.mxu0 0.0
    %7430 = vmatprep.subr.mxu0 0.0
    %7431 = vmatpush1.msra.mxu0 0.0
    %7432 = vmatprep.subr.mxu0 0.0
    %7433 = vmatpush1.msra.mxu0 0.0
    %7434 = vmatprep.subr.mxu0 0.0
    %7435 = vmatpush1.msra.mxu0 0.0
    %7436 = vmatprep.subr.mxu0 0.0
    %7437 = vmatpush1.msra.mxu0 %v429
    %7438 = vmatprep.subr.mxu0 0.0
    %7439 = vmatpush1.msra.mxu0 %v77
    %7440 = vmatprep.subr.mxu0 0.0
    %7441 = vmatpush1.msra.mxu0 %v72
    %7442 = vmatprep.subr.mxu0 0.0
    %7443 = vmatpush2.msra.mxu0 0.0
    %7444 = vmatprep.subr.mxu0 0.0
    %7445 = vmatpush2.msra.mxu0 0.0
    %7446 = vmatprep.subr.mxu0 0.0
    %7447 = vmatpush2.msra.mxu0 0.0
    %7448 = vmatprep.subr.mxu0 0.0
    %7449 = vmatpush2.msra.mxu0 0.0
    %7450 = vmatprep.subr.mxu0 0.0
    %7451 = vmatpush2.msra.mxu0 0.0
    %7452 = vmatprep.subr.mxu0 0.0
    %7453 = vmatpush2.msra.mxu0 0.0
    %7454 = vmatprep.subr.mxu0 0.0
    %7455 = vmatpush2.msra.mxu0 0.0
    %7456 = vmatprep.subr.mxu0 0.0
    %7457 = vmatpush2.msra.mxu0 0.0
    %7458 = vmatprep.subr.mxu0 0.0
    %7459 = vmatpush2.msra.mxu0 0.0
    %7460 = vmatprep.subr.mxu0 0.0
    %7461 = vmatpush2.msra.mxu0 0.0
    %7462 = vmatprep.subr.mxu0 0.0
    %7463 = vmatpush2.msra.mxu0 0.0
    %7464 = vmatprep.subr.mxu0 0.0
    %7465 = vmatpush2.msra.mxu0 0.0
    %7466 = vmatprep.subr.mxu0 0.0
    %7467 = vmatpush2.msra.mxu0 0.0
    %7468 = vmatprep.subr.mxu0 0.0
    %7469 = vmatpush2.msra.mxu0 0.0
    %7470 = vmatprep.subr.mxu0 0.0
    %7471 = vmatpush2.msra.mxu0 0.0
    %7472 = vmatprep.subr.mxu0 0.0
    %7473 = vmatpush2.msra.mxu0 0.0
    %7474 = vmatprep.mubr.f32.mxu0 0.0
    %7475 = vmatmul.mubr.f32.gmra.mxu0 %v7049
    %v7476 = vpop.f32.mrf.mxu0
    %v7477 = vadd.f32 0.0, %v7476
    %v7478 = vpop.f32.mrf.mxu0
    %7479 = vdwg.mxu0
    %7480 = vmatprep.subr.mxu0 0.0
    %7481 = vmatpush1.msra.mxu0 0.0
    %7482 = vmatprep.subr.mxu0 0.0
    %7483 = vmatpush1.msra.mxu0 0.0
    %7484 = vmatprep.subr.mxu0 0.0
    %7485 = vmatpush1.msra.mxu0 0.0
    %7486 = vmatprep.subr.mxu0 0.0
    %7487 = vmatpush1.msra.mxu0 0.0
    %7488 = vmatprep.subr.mxu0 0.0
    %7489 = vmatpush1.msra.mxu0 0.0
    %7490 = vmatprep.subr.mxu0 0.0
    %7491 = vmatpush1.msra.mxu0 0.0
    %7492 = vmatprep.subr.mxu0 0.0
    %7493 = vmatpush1.msra.mxu0 0.0
    %7494 = vmatprep.subr.mxu0 0.0
    %7495 = vmatpush1.msra.mxu0 0.0
    %7496 = vmatprep.subr.mxu0 0.0
    %7497 = vmatpush1.msra.mxu0 0.0
    %7498 = vmatprep.subr.mxu0 0.0
    %7499 = vmatpush1.msra.mxu0 0.0
    %7500 = vmatprep.subr.mxu0 0.0
    %7501 = vmatpush1.msra.mxu0 0.0
    %7502 = vmatprep.subr.mxu0 0.0
    %7503 = vmatpush1.msra.mxu0 0.0
    %7504 = vmatprep.subr.mxu0 0.0
    %7505 = vmatpush1.msra.mxu0 0.0
    %7506 = vmatprep.subr.mxu0 %v650
    %7507 = vmatpush1.msra.mxu0 %v647
    %7508 = vmatprep.subr.mxu0 %v58
    %7509 = vmatpush1.msra.mxu0 %v57
    %7510 = vmatprep.subr.mxu0 %v53
    %7511 = vmatpush1.msra.mxu0 %v52
    %7512 = vmatprep.subr.mxu0 0.0
    %7513 = vmatpush2.msra.mxu0 0.0
    %7514 = vmatprep.subr.mxu0 0.0
    %7515 = vmatpush2.msra.mxu0 0.0
    %7516 = vmatprep.subr.mxu0 0.0
    %7517 = vmatpush2.msra.mxu0 0.0
    %7518 = vmatprep.subr.mxu0 0.0
    %7519 = vmatpush2.msra.mxu0 0.0
    %7520 = vmatprep.subr.mxu0 0.0
    %7521 = vmatpush2.msra.mxu0 0.0
    %7522 = vmatprep.subr.mxu0 0.0
    %7523 = vmatpush2.msra.mxu0 0.0
    %7524 = vmatprep.subr.mxu0 0.0
    %7525 = vmatpush2.msra.mxu0 0.0
    %7526 = vmatprep.subr.mxu0 0.0
    %7527 = vmatpush2.msra.mxu0 0.0
    %7528 = vmatprep.subr.mxu0 0.0
    %7529 = vmatpush2.msra.mxu0 0.0
    %7530 = vmatprep.subr.mxu0 0.0
    %7531 = vmatpush2.msra.mxu0 0.0
    %7532 = vmatprep.subr.mxu0 0.0
    %7533 = vmatpush2.msra.mxu0 0.0
    %7534 = vmatprep.subr.mxu0 0.0
    %7535 = vmatpush2.msra.mxu0 0.0
    %7536 = vmatprep.subr.mxu0 0.0
    %7537 = vmatpush2.msra.mxu0 0.0
    %7538 = vmatprep.subr.mxu0 0.0
    %7539 = vmatpush2.msra.mxu0 0.0
    %7540 = vmatprep.subr.mxu0 0.0
    %7541 = vmatpush2.msra.mxu0 0.0
    %7542 = vmatprep.subr.mxu0 0.0
    %7543 = vmatpush2.msra.mxu0 0.0
    %7544 = vmatprep.mubr.f32.mxu0 0.0
    %7545 = vmatmul.mubr.f32.gmra.mxu0 %v6619
    %v7546 = vpop.f32.mrf.mxu0
    %v7547 = vadd.f32 %v7335, %v7546
    %v7548 = vpop.f32.mrf.mxu0
    %v7549 = vadd.f32 %v7337, %v7548
    %7550 = vdwg.mxu0
    %7551 = vmatprep.subr.mxu0 0.0
    %7552 = vmatpush1.msra.mxu0 0.0
    %7553 = vmatprep.subr.mxu0 0.0
    %7554 = vmatpush1.msra.mxu0 0.0
    %7555 = vmatprep.subr.mxu0 0.0
    %7556 = vmatpush1.msra.mxu0 0.0
    %7557 = vmatprep.subr.mxu0 0.0
    %7558 = vmatpush1.msra.mxu0 0.0
    %7559 = vmatprep.subr.mxu0 0.0
    %7560 = vmatpush1.msra.mxu0 0.0
    %7561 = vmatprep.subr.mxu0 0.0
    %7562 = vmatpush1.msra.mxu0 0.0
    %7563 = vmatprep.subr.mxu0 0.0
    %7564 = vmatpush1.msra.mxu0 0.0
    %7565 = vmatprep.subr.mxu0 0.0
    %7566 = vmatpush1.msra.mxu0 0.0
    %7567 = vmatprep.subr.mxu0 0.0
    %7568 = vmatpush1.msra.mxu0 0.0
    %7569 = vmatprep.subr.mxu0 0.0
    %7570 = vmatpush1.msra.mxu0 0.0
    %7571 = vmatprep.subr.mxu0 0.0
    %7572 = vmatpush1.msra.mxu0 0.0
    %7573 = vmatprep.subr.mxu0 0.0
    %7574 = vmatpush1.msra.mxu0 0.0
    %7575 = vmatprep.subr.mxu0 0.0
    %7576 = vmatpush1.msra.mxu0 0.0
    %7577 = vmatprep.subr.mxu0 %v656
    %7578 = vmatpush1.msra.mxu0 %v653
    %7579 = vmatprep.subr.mxu0 %v60
    %7580 = vmatpush1.msra.mxu0 %v59
    %7581 = vmatprep.subr.mxu0 %v55
    %7582 = vmatpush1.msra.mxu0 %v54
    %7583 = vmatprep.subr.mxu0 0.0
    %7584 = vmatpush2.msra.mxu0 0.0
    %7585 = vmatprep.subr.mxu0 0.0
    %7586 = vmatpush2.msra.mxu0 0.0
    %7587 = vmatprep.subr.mxu0 0.0
    %7588 = vmatpush2.msra.mxu0 0.0
    %7589 = vmatprep.subr.mxu0 0.0
    %7590 = vmatpush2.msra.mxu0 0.0
    %7591 = vmatprep.subr.mxu0 0.0
    %7592 = vmatpush2.msra.mxu0 0.0
    %7593 = vmatprep.subr.mxu0 0.0
    %7594 = vmatpush2.msra.mxu0 0.0
    %7595 = vmatprep.subr.mxu0 0.0
    %7596 = vmatpush2.msra.mxu0 0.0
    %7597 = vmatprep.subr.mxu0 0.0
    %7598 = vmatpush2.msra.mxu0 0.0
    %7599 = vmatprep.subr.mxu0 0.0
    %7600 = vmatpush2.msra.mxu0 0.0
    %7601 = vmatprep.subr.mxu0 0.0
    %7602 = vmatpush2.msra.mxu0 0.0
    %7603 = vmatprep.subr.mxu0 0.0
    %7604 = vmatpush2.msra.mxu0 0.0
    %7605 = vmatprep.subr.mxu0 0.0
    %7606 = vmatpush2.msra.mxu0 0.0
    %7607 = vmatprep.subr.mxu0 0.0
    %7608 = vmatpush2.msra.mxu0 0.0
    %7609 = vmatprep.subr.mxu0 0.0
    %7610 = vmatpush2.msra.mxu0 0.0
    %7611 = vmatprep.subr.mxu0 0.0
    %7612 = vmatpush2.msra.mxu0 0.0
    %7613 = vmatprep.subr.mxu0 0.0
    %7614 = vmatpush2.msra.mxu0 0.0
    %7615 = vmatprep.mubr.f32.mxu0 0.0
    %7616 = vmatmul.mubr.f32.gmra.mxu0 %v6619
    %v7617 = vpop.f32.mrf.mxu0
    %v7618 = vadd.f32 %v7406, %v7617
    %v7619 = vpop.f32.mrf.mxu0
    %v7620 = vadd.f32 %v7408, %v7619
    %7621 = vdwg.mxu0
    %7622 = vmatprep.subr.mxu0 0.0
    %7623 = vmatpush1.msra.mxu0 0.0
    %7624 = vmatprep.subr.mxu0 0.0
    %7625 = vmatpush1.msra.mxu0 0.0
    %7626 = vmatprep.subr.mxu0 0.0
    %7627 = vmatpush1.msra.mxu0 0.0
    %7628 = vmatprep.subr.mxu0 0.0
    %7629 = vmatpush1.msra.mxu0 0.0
    %7630 = vmatprep.subr.mxu0 0.0
    %7631 = vmatpush1.msra.mxu0 0.0
    %7632 = vmatprep.subr.mxu0 0.0
    %7633 = vmatpush1.msra.mxu0 0.0
    %7634 = vmatprep.subr.mxu0 0.0
    %7635 = vmatpush1.msra.mxu0 0.0
    %7636 = vmatprep.subr.mxu0 0.0
    %7637 = vmatpush1.msra.mxu0 0.0
    %7638 = vmatprep.subr.mxu0 0.0
    %7639 = vmatpush1.msra.mxu0 0.0
    %7640 = vmatprep.subr.mxu0 0.0
    %7641 = vmatpush1.msra.mxu0 0.0
    %7642 = vmatprep.subr.mxu0 0.0
    %7643 = vmatpush1.msra.mxu0 0.0
    %7644 = vmatprep.subr.mxu0 0.0
    %7645 = vmatpush1.msra.mxu0 0.0
    %7646 = vmatprep.subr.mxu0 0.0
    %7647 = vmatpush1.msra.mxu0 0.0
    %7648 = vmatprep.subr.mxu0 0.0
    %7649 = vmatpush1.msra.mxu0 %v659
    %7650 = vmatprep.subr.mxu0 0.0
    %7651 = vmatpush1.msra.mxu0 %v61
    %7652 = vmatprep.subr.mxu0 0.0
    %7653 = vmatpush1.msra.mxu0 %v56
    %7654 = vmatprep.subr.mxu0 0.0
    %7655 = vmatpush2.msra.mxu0 0.0
    %7656 = vmatprep.subr.mxu0 0.0
    %7657 = vmatpush2.msra.mxu0 0.0
    %7658 = vmatprep.subr.mxu0 0.0
    %7659 = vmatpush2.msra.mxu0 0.0
    %7660 = vmatprep.subr.mxu0 0.0
    %7661 = vmatpush2.msra.mxu0 0.0
    %7662 = vmatprep.subr.mxu0 0.0
    %7663 = vmatpush2.msra.mxu0 0.0
    %7664 = vmatprep.subr.mxu0 0.0
    %7665 = vmatpush2.msra.mxu0 0.0
    %7666 = vmatprep.subr.mxu0 0.0
    %7667 = vmatpush2.msra.mxu0 0.0
    %7668 = vmatprep.subr.mxu0 0.0
    %7669 = vmatpush2.msra.mxu0 0.0
    %7670 = vmatprep.subr.mxu0 0.0
    %7671 = vmatpush2.msra.mxu0 0.0
    %7672 = vmatprep.subr.mxu0 0.0
    %7673 = vmatpush2.msra.mxu0 0.0
    %7674 = vmatprep.subr.mxu0 0.0
    %7675 = vmatpush2.msra.mxu0 0.0
    %7676 = vmatprep.subr.mxu0 0.0
    %7677 = vmatpush2.msra.mxu0 0.0
    %7678 = vmatprep.subr.mxu0 0.0
    %7679 = vmatpush2.msra.mxu0 0.0
    %7680 = vmatprep.subr.mxu0 0.0
    %7681 = vmatpush2.msra.mxu0 0.0
    %7682 = vmatprep.subr.mxu0 0.0
    %7683 = vmatpush2.msra.mxu0 0.0
    %7684 = vmatprep.subr.mxu0 0.0
    %7685 = vmatpush2.msra.mxu0 0.0
    %7686 = vmatprep.mubr.f32.mxu0 0.0
    %7687 = vmatmul.mubr.f32.gmra.mxu0 %v6619
    %v7688 = vpop.f32.mrf.mxu0
    %v7689 = vadd.f32 %v7477, %v7688
    %v7690 = vpop.f32.mrf.mxu0
    %7691 = vdwg.mxu0
    %v7693 = vsel %vm411, %v6617, 0
    %7695 = vmatprep.subr.mxu0 0.0
    %7696 = vmatpush1.msra.mxu0 0.0
    %7697 = vmatprep.subr.mxu0 0.0
    %7698 = vmatpush1.msra.mxu0 0.0
    %7699 = vmatprep.subr.mxu0 0.0
    %7700 = vmatpush1.msra.mxu0 0.0
    %7701 = vmatprep.subr.mxu0 0.0
    %7702 = vmatpush1.msra.mxu0 0.0
    %7703 = vmatprep.subr.mxu0 0.0
    %7704 = vmatpush1.msra.mxu0 0.0
    %7705 = vmatprep.subr.mxu0 0.0
    %7706 = vmatpush1.msra.mxu0 0.0
    %7707 = vmatprep.subr.mxu0 0.0
    %7708 = vmatpush1.msra.mxu0 0.0
    %7709 = vmatprep.subr.mxu0 0.0
    %7710 = vmatpush1.msra.mxu0 0.0
    %7711 = vmatprep.subr.mxu0 0.0
    %7712 = vmatpush1.msra.mxu0 0.0
    %7713 = vmatprep.subr.mxu0 0.0
    %7714 = vmatpush1.msra.mxu0 0.0
    %7715 = vmatprep.subr.mxu0 0.0
    %7716 = vmatpush1.msra.mxu0 0.0
    %7717 = vmatprep.subr.mxu0 0.0
    %7718 = vmatpush1.msra.mxu0 0.0
    %7719 = vmatprep.subr.mxu0 0.0
    %7720 = vmatpush1.msra.mxu0 0.0
    %7721 = vmatprep.subr.mxu0 %v880
    %7722 = vmatpush1.msra.mxu0 %v877
    %7723 = vmatprep.subr.mxu0 %v90
    %7724 = vmatpush1.msra.mxu0 %v89
    %7725 = vmatprep.subr.mxu0 %v85
    %7726 = vmatpush1.msra.mxu0 %v84
    %7727 = vmatprep.subr.mxu0 0.0
    %7728 = vmatpush2.msra.mxu0 0.0
    %7729 = vmatprep.subr.mxu0 0.0
    %7730 = vmatpush2.msra.mxu0 0.0
    %7731 = vmatprep.subr.mxu0 0.0
    %7732 = vmatpush2.msra.mxu0 0.0
    %7733 = vmatprep.subr.mxu0 0.0
    %7734 = vmatpush2.msra.mxu0 0.0
    %7735 = vmatprep.subr.mxu0 0.0
    %7736 = vmatpush2.msra.mxu0 0.0
    %7737 = vmatprep.subr.mxu0 0.0
    %7738 = vmatpush2.msra.mxu0 0.0
    %7739 = vmatprep.subr.mxu0 0.0
    %7740 = vmatpush2.msra.mxu0 0.0
    %7741 = vmatprep.subr.mxu0 0.0
    %7742 = vmatpush2.msra.mxu0 0.0
    %7743 = vmatprep.subr.mxu0 0.0
    %7744 = vmatpush2.msra.mxu0 0.0
    %7745 = vmatprep.subr.mxu0 0.0
    %7746 = vmatpush2.msra.mxu0 0.0
    %7747 = vmatprep.subr.mxu0 0.0
    %7748 = vmatpush2.msra.mxu0 0.0
    %7749 = vmatprep.subr.mxu0 0.0
    %7750 = vmatpush2.msra.mxu0 0.0
    %7751 = vmatprep.subr.mxu0 0.0
    %7752 = vmatpush2.msra.mxu0 0.0
    %7753 = vmatprep.subr.mxu0 0.0
    %7754 = vmatpush2.msra.mxu0 0.0
    %7755 = vmatprep.subr.mxu0 0.0
    %7756 = vmatpush2.msra.mxu0 0.0
    %7757 = vmatprep.subr.mxu0 0.0
    %7758 = vmatpush2.msra.mxu0 0.0
    %7759 = vmatprep.mubr.f32.mxu0 0.0
    %7760 = vmatmul.mubr.f32.gmra.mxu0 %v7693
    %v7761 = vpop.f32.mrf.mxu0
    %v7762 = vadd.f32 0.0, %v7761
    %v7763 = vpop.f32.mrf.mxu0
    %v7764 = vadd.f32 0.0, %v7763
    %7765 = vdwg.mxu0
    %7766 = vmatprep.subr.mxu0 0.0
    %7767 = vmatpush1.msra.mxu0 0.0
    %7768 = vmatprep.subr.mxu0 0.0
    %7769 = vmatpush1.msra.mxu0 0.0
    %7770 = vmatprep.subr.mxu0 0.0
    %7771 = vmatpush1.msra.mxu0 0.0
    %7772 = vmatprep.subr.mxu0 0.0
    %7773 = vmatpush1.msra.mxu0 0.0
    %7774 = vmatprep.subr.mxu0 0.0
    %7775 = vmatpush1.msra.mxu0 0.0
    %7776 = vmatprep.subr.mxu0 0.0
    %7777 = vmatpush1.msra.mxu0 0.0
    %7778 = vmatprep.subr.mxu0 0.0
    %7779 = vmatpush1.msra.mxu0 0.0
    %7780 = vmatprep.subr.mxu0 0.0
    %7781 = vmatpush1.msra.mxu0 0.0
    %7782 = vmatprep.subr.mxu0 0.0
    %7783 = vmatpush1.msra.mxu0 0.0
    %7784 = vmatprep.subr.mxu0 0.0
    %7785 = vmatpush1.msra.mxu0 0.0
    %7786 = vmatprep.subr.mxu0 0.0
    %7787 = vmatpush1.msra.mxu0 0.0
    %7788 = vmatprep.subr.mxu0 0.0
    %7789 = vmatpush1.msra.mxu0 0.0
    %7790 = vmatprep.subr.mxu0 0.0
    %7791 = vmatpush1.msra.mxu0 0.0
    %7792 = vmatprep.subr.mxu0 %v886
    %7793 = vmatpush1.msra.mxu0 %v883
    %7794 = vmatprep.subr.mxu0 %v92
    %7795 = vmatpush1.msra.mxu0 %v91
    %7796 = vmatprep.subr.mxu0 %v87
    %7797 = vmatpush1.msra.mxu0 %v86
    %7798 = vmatprep.subr.mxu0 0.0
    %7799 = vmatpush2.msra.mxu0 0.0
    %7800 = vmatprep.subr.mxu0 0.0
    %7801 = vmatpush2.msra.mxu0 0.0
    %7802 = vmatprep.subr.mxu0 0.0
    %7803 = vmatpush2.msra.mxu0 0.0
    %7804 = vmatprep.subr.mxu0 0.0
    %7805 = vmatpush2.msra.mxu0 0.0
    %7806 = vmatprep.subr.mxu0 0.0
    %7807 = vmatpush2.msra.mxu0 0.0
    %7808 = vmatprep.subr.mxu0 0.0
    %7809 = vmatpush2.msra.mxu0 0.0
    %7810 = vmatprep.subr.mxu0 0.0
    %7811 = vmatpush2.msra.mxu0 0.0
    %7812 = vmatprep.subr.mxu0 0.0
    %7813 = vmatpush2.msra.mxu0 0.0
    %7814 = vmatprep.subr.mxu0 0.0
    %7815 = vmatpush2.msra.mxu0 0.0
    %7816 = vmatprep.subr.mxu0 0.0
    %7817 = vmatpush2.msra.mxu0 0.0
    %7818 = vmatprep.subr.mxu0 0.0
    %7819 = vmatpush2.msra.mxu0 0.0
    %7820 = vmatprep.subr.mxu0 0.0
    %7821 = vmatpush2.msra.mxu0 0.0
    %7822 = vmatprep.subr.mxu0 0.0
    %7823 = vmatpush2.msra.mxu0 0.0
    %7824 = vmatprep.subr.mxu0 0.0
    %7825 = vmatpush2.msra.mxu0 0.0
    %7826 = vmatprep.subr.mxu0 0.0
    %7827 = vmatpush2.msra.mxu0 0.0
    %7828 = vmatprep.subr.mxu0 0.0
    %7829 = vmatpush2.msra.mxu0 0.0
    %7830 = vmatprep.mubr.f32.mxu0 0.0
    %7831 = vmatmul.mubr.f32.gmra.mxu0 %v7693
    %v7832 = vpop.f32.mrf.mxu0
    %v7833 = vadd.f32 0.0, %v7832
    %v7834 = vpop.f32.mrf.mxu0
    %v7835 = vadd.f32 0.0, %v7834
    %7836 = vdwg.mxu0
    %7837 = vmatprep.subr.mxu0 0.0
    %7838 = vmatpush1.msra.mxu0 0.0
    %7839 = vmatprep.subr.mxu0 0.0
    %7840 = vmatpush1.msra.mxu0 0.0
    %7841 = vmatprep.subr.mxu0 0.0
    %7842 = vmatpush1.msra.mxu0 0.0
    %7843 = vmatprep.subr.mxu0 0.0
    %7844 = vmatpush1.msra.mxu0 0.0
    %7845 = vmatprep.subr.mxu0 0.0
    %7846 = vmatpush1.msra.mxu0 0.0
    %7847 = vmatprep.subr.mxu0 0.0
    %7848 = vmatpush1.msra.mxu0 0.0
    %7849 = vmatprep.subr.mxu0 0.0
    %7850 = vmatpush1.msra.mxu0 0.0
    %7851 = vmatprep.subr.mxu0 0.0
    %7852 = vmatpush1.msra.mxu0 0.0
    %7853 = vmatprep.subr.mxu0 0.0
    %7854 = vmatpush1.msra.mxu0 0.0
    %7855 = vmatprep.subr.mxu0 0.0
    %7856 = vmatpush1.msra.mxu0 0.0
    %7857 = vmatprep.subr.mxu0 0.0
    %7858 = vmatpush1.msra.mxu0 0.0
    %7859 = vmatprep.subr.mxu0 0.0
    %7860 = vmatpush1.msra.mxu0 0.0
    %7861 = vmatprep.subr.mxu0 0.0
    %7862 = vmatpush1.msra.mxu0 0.0
    %7863 = vmatprep.subr.mxu0 0.0
    %7864 = vmatpush1.msra.mxu0 %v889
    %7865 = vmatprep.subr.mxu0 0.0
    %7866 = vmatpush1.msra.mxu0 %v93
    %7867 = vmatprep.subr.mxu0 0.0
    %7868 = vmatpush1.msra.mxu0 %v88
    %7869 = vmatprep.subr.mxu0 0.0
    %7870 = vmatpush2.msra.mxu0 0.0
    %7871 = vmatprep.subr.mxu0 0.0
    %7872 = vmatpush2.msra.mxu0 0.0
    %7873 = vmatprep.subr.mxu0 0.0
    %7874 = vmatpush2.msra.mxu0 0.0
    %7875 = vmatprep.subr.mxu0 0.0
    %7876 = vmatpush2.msra.mxu0 0.0
    %7877 = vmatprep.subr.mxu0 0.0
    %7878 = vmatpush2.msra.mxu0 0.0
    %7879 = vmatprep.subr.mxu0 0.0
    %7880 = vmatpush2.msra.mxu0 0.0
    %7881 = vmatprep.subr.mxu0 0.0
    %7882 = vmatpush2.msra.mxu0 0.0
    %7883 = vmatprep.subr.mxu0 0.0
    %7884 = vmatpush2.msra.mxu0 0.0
    %7885 = vmatprep.subr.mxu0 0.0
    %7886 = vmatpush2.msra.mxu0 0.0
    %7887 = vmatprep.subr.mxu0 0.0
    %7888 = vmatpush2.msra.mxu0 0.0
    %7889 = vmatprep.subr.mxu0 0.0
    %7890 = vmatpush2.msra.mxu0 0.0
    %7891 = vmatprep.subr.mxu0 0.0
    %7892 = vmatpush2.msra.mxu0 0.0
    %7893 = vmatprep.subr.mxu0 0.0
    %7894 = vmatpush2.msra.mxu0 0.0
    %7895 = vmatprep.subr.mxu0 0.0
    %7896 = vmatpush2.msra.mxu0 0.0
    %7897 = vmatprep.subr.mxu0 0.0
    %7898 = vmatpush2.msra.mxu0 0.0
    %7899 = vmatprep.subr.mxu0 0.0
    %7900 = vmatpush2.msra.mxu0 0.0
    %7901 = vmatprep.mubr.f32.mxu0 0.0
    %7902 = vmatmul.mubr.f32.gmra.mxu0 %v7693
    %v7903 = vpop.f32.mrf.mxu0
    %v7904 = vadd.f32 0.0, %v7903
    %v7905 = vpop.f32.mrf.mxu0
    %7906 = vdwg.mxu0
    %v7907 = vadd.f32 %v7547, %v7762
    %v7908 = vadd.f32 %v7549, %v7764
    %v7909 = vadd.f32 %v7618, %v7833
    %v7910 = vadd.f32 %v7620, %v7835
    %v7911 = vadd.f32 %v7689, %v7904
    %v7912 = vmax.f32 %v7263, %v7907
    %v7913 = vmax.f32 %v7264, %v7908
    %v7914 = vmax.f32 %v7265, %v7909
    %v7915 = vmax.f32 %v7266, %v7910
    %v7916 = vmax.f32 %v7267, %v7911
    %7920 = vrot.lane.b32.xlu0 %v7914, 114
    %v7921 = vpop.permute.xlu0 %7920
    %7922 = vrot.lane.b32.xlu0 %v7915, 114
    %v7923 = vpop.permute.xlu0 %7922
    %7924 = vrot.lane.b32.xlu0 %v7916, 114
    %v7925 = vpop.permute.xlu0 %7924
    %v7926 = vsel %vm1766, %v7921, %v7923
    %v7927 = vsel %vm1766, %v7923, %v7925
    %v7931 = vmax.f32 %v7912, %v7926
    %v7932 = vmax.f32 %v7913, %v7927
    %v7933 = vmax.f32 %v7914, %v7925
    %v7934 = vld [vmem:[%s3] sm:$0x7]
    %v7936 = vlaneseq
    %v7937 = vshrl.u32 %v7936, 7
    %v7938 = vsub.s32 0, %v7937
    %v7939 = vrot.slane %v7934, %v7938
    %v7940 = vlaneseq
    %v7941 = vshrl.u32 %v7940, 7
    %v7942 = vsub.s32 1, %v7941
    %v7943 = vrot.slane %v7934, %v7942
    %v7944 = vlaneseq
    %v7945 = vshrl.u32 %v7944, 7
    %v7946 = vsub.s32 2, %v7945
    %v7947 = vrot.slane %v7934, %v7946
    %v7951 = vadd.f32 %v7931, %v7939
    %v7952 = vadd.f32 %v7932, %v7943
    %v7953 = vadd.f32 %v7933, %v7947
    %v7954 = vmax.f32 %v7951, 0.0
    %v7955 = vmax.f32 %v7952, 0.0
    %v7956 = vmax.f32 %v7953, 0.0
    %v7960 = vrot.slane %v7954, 7
    %v7961 = vrot.slane %v7955, 7
    %v7962 = vrot.slane %v7956, 7
    %7966 = vst [vmem:[#allocation2] sm:$0x3e] %v7960
    %7967 = vst [vmem:[#allocation2 + $0x8] sm:$0x3e] %v7961
    %7968 = vst.msk [vmem:[#allocation2 + $0x10] sm:$0x3e] %vm1809, %v7962
    %v7969 = vld [vmem:[#allocation2] sm:$0x1f]
    %v7970 = vld [vmem:[#allocation2 + $0x8] sm:$0x1f]
    %v7971 = vld [vmem:[#allocation2 + $0x10] sm:$0x1f]
    %v7972 = vld [vmem:[#allocation2] sm:$0x3e]
    %v7973 = vld [vmem:[#allocation2 + $0x8] sm:$0x3e]
    %v7974 = vld [vmem:[#allocation2 + $0x10] sm:$0x3e]
    %v7978 = vrot.slane %v7972, 1
    %v7979 = vrot.slane %v7973, 1
    %v7980 = vrot.slane %v7974, 1
    %v7983 = vsel %vm1825, %v7980, 0
    %7985 = vmatprep.subr.mxu0 %v248
    %7986 = vmatpush1.msra.mxu0 %v247
    %7987 = vmatprep.subr.mxu0 %v245
    %7988 = vmatpush1.msra.mxu0 %v244
    %7989 = vmatprep.subr.mxu0 %v242
    %7990 = vmatpush1.msra.mxu0 %v241
    %7991 = vmatprep.subr.mxu0 %v239
    %7992 = vmatpush1.msra.mxu0 %v238
    %7993 = vmatprep.subr.mxu0 %v236
    %7994 = vmatpush1.msra.mxu0 %v235
    %7995 = vmatprep.subr.mxu0 %v233
    %7996 = vmatpush1.msra.mxu0 %v232
    %7997 = vmatprep.subr.mxu0 %v230
    %7998 = vmatpush1.msra.mxu0 %v229
    %7999 = vmatprep.subr.mxu0 %v227
    %8000 = vmatpush1.msra.mxu0 %v226
    %8001 = vmatprep.subr.mxu0 %v224
    %8002 = vmatpush1.msra.mxu0 %v223
    %8003 = vmatprep.subr.mxu0 %v221
    %8004 = vmatpush1.msra.mxu0 %v220
    %8005 = vmatprep.subr.mxu0 %v218
    %8006 = vmatpush1.msra.mxu0 %v217
    %8007 = vmatprep.subr.mxu0 %v215
    %8008 = vmatpush1.msra.mxu0 %v214
    %8009 = vmatprep.subr.mxu0 %v212
    %8010 = vmatpush1.msra.mxu0 %v211
    %8011 = vmatprep.subr.mxu0 %v209
    %8012 = vmatpush1.msra.mxu0 %v208
    %8013 = vmatprep.subr.mxu0 %v206
    %8014 = vmatpush1.msra.mxu0 %v205
    %8015 = vmatprep.subr.mxu0 %v203
    %8016 = vmatpush1.msra.mxu0 %v202
    %8017 = vmatprep.subr.mxu0 %v296
    %8018 = vmatpush2.msra.mxu0 %v295
    %8019 = vmatprep.subr.mxu0 %v293
    %8020 = vmatpush2.msra.mxu0 %v292
    %8021 = vmatprep.subr.mxu0 %v290
    %8022 = vmatpush2.msra.mxu0 %v289
    %8023 = vmatprep.subr.mxu0 %v287
    %8024 = vmatpush2.msra.mxu0 %v286
    %8025 = vmatprep.subr.mxu0 %v284
    %8026 = vmatpush2.msra.mxu0 %v283
    %8027 = vmatprep.subr.mxu0 %v281
    %8028 = vmatpush2.msra.mxu0 %v280
    %8029 = vmatprep.subr.mxu0 %v278
    %8030 = vmatpush2.msra.mxu0 %v277
    %8031 = vmatprep.subr.mxu0 %v275
    %8032 = vmatpush2.msra.mxu0 %v274
    %8033 = vmatprep.subr.mxu0 %v272
    %8034 = vmatpush2.msra.mxu0 %v271
    %8035 = vmatprep.subr.mxu0 %v269
    %8036 = vmatpush2.msra.mxu0 %v268
    %8037 = vmatprep.subr.mxu0 %v266
    %8038 = vmatpush2.msra.mxu0 %v265
    %8039 = vmatprep.subr.mxu0 %v263
    %8040 = vmatpush2.msra.mxu0 %v262
    %8041 = vmatprep.subr.mxu0 %v260
    %8042 = vmatpush2.msra.mxu0 %v259
    %8043 = vmatprep.subr.mxu0 %v257
    %8044 = vmatpush2.msra.mxu0 %v256
    %8045 = vmatprep.subr.mxu0 %v254
    %8046 = vmatpush2.msra.mxu0 %v253
    %8047 = vmatprep.subr.mxu0 %v251
    %8048 = vmatpush2.msra.mxu0 %v250
    %8049 = vmatprep.mubr.f32.mxu0 %v7979
    %8050 = vmatmul.mubr.f32.gmra.mxu0 %v7978
    %v8051 = vpop.f32.mrf.mxu0
    %v8052 = vadd.f32 0.0, %v8051
    %v8053 = vpop.f32.mrf.mxu0
    %v8054 = vadd.f32 0.0, %v8053
    %8055 = vdwg.mxu0
    %8056 = vmatprep.subr.mxu0 0.0
    %8057 = vmatpush1.msra.mxu0 0.0
    %8058 = vmatprep.subr.mxu0 0.0
    %8059 = vmatpush1.msra.mxu0 0.0
    %8060 = vmatprep.subr.mxu0 0.0
    %8061 = vmatpush1.msra.mxu0 0.0
    %8062 = vmatprep.subr.mxu0 0.0
    %8063 = vmatpush1.msra.mxu0 0.0
    %8064 = vmatprep.subr.mxu0 0.0
    %8065 = vmatpush1.msra.mxu0 0.0
    %8066 = vmatprep.subr.mxu0 0.0
    %8067 = vmatpush1.msra.mxu0 0.0
    %8068 = vmatprep.subr.mxu0 0.0
    %8069 = vmatpush1.msra.mxu0 0.0
    %8070 = vmatprep.subr.mxu0 0.0
    %8071 = vmatpush1.msra.mxu0 0.0
    %8072 = vmatprep.subr.mxu0 0.0
    %8073 = vmatpush1.msra.mxu0 0.0
    %8074 = vmatprep.subr.mxu0 0.0
    %8075 = vmatpush1.msra.mxu0 0.0
    %8076 = vmatprep.subr.mxu0 0.0
    %8077 = vmatpush1.msra.mxu0 0.0
    %8078 = vmatprep.subr.mxu0 0.0
    %8079 = vmatpush1.msra.mxu0 0.0
    %8080 = vmatprep.subr.mxu0 0.0
    %8081 = vmatpush1.msra.mxu0 0.0
    %8082 = vmatprep.subr.mxu0 0.0
    %8083 = vmatpush1.msra.mxu0 0.0
    %8084 = vmatprep.subr.mxu0 %v1832
    %8085 = vmatpush1.msra.mxu0 %v1829
    %8086 = vmatprep.subr.mxu0 %v299
    %8087 = vmatpush1.msra.mxu0 %v298
    %8088 = vmatprep.subr.mxu0 0.0
    %8089 = vmatpush2.msra.mxu0 0.0
    %8090 = vmatprep.subr.mxu0 0.0
    %8091 = vmatpush2.msra.mxu0 0.0
    %8092 = vmatprep.subr.mxu0 0.0
    %8093 = vmatpush2.msra.mxu0 0.0
    %8094 = vmatprep.subr.mxu0 0.0
    %8095 = vmatpush2.msra.mxu0 0.0
    %8096 = vmatprep.subr.mxu0 0.0
    %8097 = vmatpush2.msra.mxu0 0.0
    %8098 = vmatprep.subr.mxu0 0.0
    %8099 = vmatpush2.msra.mxu0 0.0
    %8100 = vmatprep.subr.mxu0 0.0
    %8101 = vmatpush2.msra.mxu0 0.0
    %8102 = vmatprep.subr.mxu0 0.0
    %8103 = vmatpush2.msra.mxu0 0.0
    %8104 = vmatprep.subr.mxu0 0.0
    %8105 = vmatpush2.msra.mxu0 0.0
    %8106 = vmatprep.subr.mxu0 0.0
    %8107 = vmatpush2.msra.mxu0 0.0
    %8108 = vmatprep.subr.mxu0 0.0
    %8109 = vmatpush2.msra.mxu0 0.0
    %8110 = vmatprep.subr.mxu0 0.0
    %8111 = vmatpush2.msra.mxu0 0.0
    %8112 = vmatprep.subr.mxu0 0.0
    %8113 = vmatpush2.msra.mxu0 0.0
    %8114 = vmatprep.subr.mxu0 0.0
    %8115 = vmatpush2.msra.mxu0 0.0
    %8116 = vmatprep.subr.mxu0 0.0
    %8117 = vmatpush2.msra.mxu0 0.0
    %8118 = vmatprep.subr.mxu0 0.0
    %8119 = vmatpush2.msra.mxu0 0.0
    %8120 = vmatprep.mubr.f32.mxu0 0.0
    %8121 = vmatmul.mubr.f32.gmra.mxu0 %v7983
    %v8122 = vpop.f32.mrf.mxu0
    %v8123 = vadd.f32 %v8052, %v8122
    %v8124 = vpop.f32.mrf.mxu0
    %v8125 = vadd.f32 %v8054, %v8124
    %8126 = vdwg.mxu0
    %8127 = vmatprep.subr.mxu0 0.0
    %8128 = vmatpush1.msra.mxu0 %v249
    %8129 = vmatprep.subr.mxu0 0.0
    %8130 = vmatpush1.msra.mxu0 %v246
    %8131 = vmatprep.subr.mxu0 0.0
    %8132 = vmatpush1.msra.mxu0 %v243
    %8133 = vmatprep.subr.mxu0 0.0
    %8134 = vmatpush1.msra.mxu0 %v240
    %8135 = vmatprep.subr.mxu0 0.0
    %8136 = vmatpush1.msra.mxu0 %v237
    %8137 = vmatprep.subr.mxu0 0.0
    %8138 = vmatpush1.msra.mxu0 %v234
    %8139 = vmatprep.subr.mxu0 0.0
    %8140 = vmatpush1.msra.mxu0 %v231
    %8141 = vmatprep.subr.mxu0 0.0
    %8142 = vmatpush1.msra.mxu0 %v228
    %8143 = vmatprep.subr.mxu0 0.0
    %8144 = vmatpush1.msra.mxu0 %v225
    %8145 = vmatprep.subr.mxu0 0.0
    %8146 = vmatpush1.msra.mxu0 %v222
    %8147 = vmatprep.subr.mxu0 0.0
    %8148 = vmatpush1.msra.mxu0 %v219
    %8149 = vmatprep.subr.mxu0 0.0
    %8150 = vmatpush1.msra.mxu0 %v216
    %8151 = vmatprep.subr.mxu0 0.0
    %8152 = vmatpush1.msra.mxu0 %v213
    %8153 = vmatprep.subr.mxu0 0.0
    %8154 = vmatpush1.msra.mxu0 %v210
    %8155 = vmatprep.subr.mxu0 0.0
    %8156 = vmatpush1.msra.mxu0 %v207
    %8157 = vmatprep.subr.mxu0 0.0
    %8158 = vmatpush1.msra.mxu0 %v204
    %8159 = vmatprep.subr.mxu0 0.0
    %8160 = vmatpush2.msra.mxu0 %v297
    %8161 = vmatprep.subr.mxu0 0.0
    %8162 = vmatpush2.msra.mxu0 %v294
    %8163 = vmatprep.subr.mxu0 0.0
    %8164 = vmatpush2.msra.mxu0 %v291
    %8165 = vmatprep.subr.mxu0 0.0
    %8166 = vmatpush2.msra.mxu0 %v288
    %8167 = vmatprep.subr.mxu0 0.0
    %8168 = vmatpush2.msra.mxu0 %v285
    %8169 = vmatprep.subr.mxu0 0.0
    %8170 = vmatpush2.msra.mxu0 %v282
    %8171 = vmatprep.subr.mxu0 0.0
    %8172 = vmatpush2.msra.mxu0 %v279
    %8173 = vmatprep.subr.mxu0 0.0
    %8174 = vmatpush2.msra.mxu0 %v276
    %8175 = vmatprep.subr.mxu0 0.0
    %8176 = vmatpush2.msra.mxu0 %v273
    %8177 = vmatprep.subr.mxu0 0.0
    %8178 = vmatpush2.msra.mxu0 %v270
    %8179 = vmatprep.subr.mxu0 0.0
    %8180 = vmatpush2.msra.mxu0 %v267
    %8181 = vmatprep.subr.mxu0 0.0
    %8182 = vmatpush2.msra.mxu0 %v264
    %8183 = vmatprep.subr.mxu0 0.0
    %8184 = vmatpush2.msra.mxu0 %v261
    %8185 = vmatprep.subr.mxu0 0.0
    %8186 = vmatpush2.msra.mxu0 %v258
    %8187 = vmatprep.subr.mxu0 0.0
    %8188 = vmatpush2.msra.mxu0 %v255
    %8189 = vmatprep.subr.mxu0 0.0
    %8190 = vmatpush2.msra.mxu0 %v252
    %8191 = vmatprep.mubr.f32.mxu0 %v7979
    %8192 = vmatmul.mubr.f32.gmra.mxu0 %v7978
    %v8193 = vpop.f32.mrf.mxu0
    %v8194 = vadd.f32 0.0, %v8193
    %v8195 = vpop.f32.mrf.mxu0
    %8196 = vdwg.mxu0
    %8197 = vmatprep.subr.mxu0 0.0
    %8198 = vmatpush1.msra.mxu0 0.0
    %8199 = vmatprep.subr.mxu0 0.0
    %8200 = vmatpush1.msra.mxu0 0.0
    %8201 = vmatprep.subr.mxu0 0.0
    %8202 = vmatpush1.msra.mxu0 0.0
    %8203 = vmatprep.subr.mxu0 0.0
    %8204 = vmatpush1.msra.mxu0 0.0
    %8205 = vmatprep.subr.mxu0 0.0
    %8206 = vmatpush1.msra.mxu0 0.0
    %8207 = vmatprep.subr.mxu0 0.0
    %8208 = vmatpush1.msra.mxu0 0.0
    %8209 = vmatprep.subr.mxu0 0.0
    %8210 = vmatpush1.msra.mxu0 0.0
    %8211 = vmatprep.subr.mxu0 0.0
    %8212 = vmatpush1.msra.mxu0 0.0
    %8213 = vmatprep.subr.mxu0 0.0
    %8214 = vmatpush1.msra.mxu0 0.0
    %8215 = vmatprep.subr.mxu0 0.0
    %8216 = vmatpush1.msra.mxu0 0.0
    %8217 = vmatprep.subr.mxu0 0.0
    %8218 = vmatpush1.msra.mxu0 0.0
    %8219 = vmatprep.subr.mxu0 0.0
    %8220 = vmatpush1.msra.mxu0 0.0
    %8221 = vmatprep.subr.mxu0 0.0
    %8222 = vmatpush1.msra.mxu0 0.0
    %8223 = vmatprep.subr.mxu0 0.0
    %8224 = vmatpush1.msra.mxu0 0.0
    %8225 = vmatprep.subr.mxu0 0.0
    %8226 = vmatpush1.msra.mxu0 %v1835
    %8227 = vmatprep.subr.mxu0 0.0
    %8228 = vmatpush1.msra.mxu0 %v300
    %8229 = vmatprep.subr.mxu0 0.0
    %8230 = vmatpush2.msra.mxu0 0.0
    %8231 = vmatprep.subr.mxu0 0.0
    %8232 = vmatpush2.msra.mxu0 0.0
    %8233 = vmatprep.subr.mxu0 0.0
    %8234 = vmatpush2.msra.mxu0 0.0
    %8235 = vmatprep.subr.mxu0 0.0
    %8236 = vmatpush2.msra.mxu0 0.0
    %8237 = vmatprep.subr.mxu0 0.0
    %8238 = vmatpush2.msra.mxu0 0.0
    %8239 = vmatprep.subr.mxu0 0.0
    %8240 = vmatpush2.msra.mxu0 0.0
    %8241 = vmatprep.subr.mxu0 0.0
    %8242 = vmatpush2.msra.mxu0 0.0
    %8243 = vmatprep.subr.mxu0 0.0
    %8244 = vmatpush2.msra.mxu0 0.0
    %8245 = vmatprep.subr.mxu0 0.0
    %8246 = vmatpush2.msra.mxu0 0.0
    %8247 = vmatprep.subr.mxu0 0.0
    %8248 = vmatpush2.msra.mxu0 0.0
    %8249 = vmatprep.subr.mxu0 0.0
    %8250 = vmatpush2.msra.mxu0 0.0
    %8251 = vmatprep.subr.mxu0 0.0
    %8252 = vmatpush2.msra.mxu0 0.0
    %8253 = vmatprep.subr.mxu0 0.0
    %8254 = vmatpush2.msra.mxu0 0.0
    %8255 = vmatprep.subr.mxu0 0.0
    %8256 = vmatpush2.msra.mxu0 0.0
    %8257 = vmatprep.subr.mxu0 0.0
    %8258 = vmatpush2.msra.mxu0 0.0
    %8259 = vmatprep.subr.mxu0 0.0
    %8260 = vmatpush2.msra.mxu0 0.0
    %8261 = vmatprep.mubr.f32.mxu0 0.0
    %8262 = vmatmul.mubr.f32.gmra.mxu0 %v7983
    %v8263 = vpop.f32.mrf.mxu0
    %v8264 = vadd.f32 %v8194, %v8263
    %v8265 = vpop.f32.mrf.mxu0
    %8266 = vdwg.mxu0
    %v8268 = vsel %vm1825, %v7971, 0
    %8270 = vmatprep.subr.mxu0 %v145
    %8271 = vmatpush1.msra.mxu0 %v144
    %8272 = vmatprep.subr.mxu0 %v142
    %8273 = vmatpush1.msra.mxu0 %v141
    %8274 = vmatprep.subr.mxu0 %v139
    %8275 = vmatpush1.msra.mxu0 %v138
    %8276 = vmatprep.subr.mxu0 %v136
    %8277 = vmatpush1.msra.mxu0 %v135
    %8278 = vmatprep.subr.mxu0 %v133
    %8279 = vmatpush1.msra.mxu0 %v132
    %8280 = vmatprep.subr.mxu0 %v130
    %8281 = vmatpush1.msra.mxu0 %v129
    %8282 = vmatprep.subr.mxu0 %v127
    %8283 = vmatpush1.msra.mxu0 %v126
    %8284 = vmatprep.subr.mxu0 %v124
    %8285 = vmatpush1.msra.mxu0 %v123
    %8286 = vmatprep.subr.mxu0 %v121
    %8287 = vmatpush1.msra.mxu0 %v120
    %8288 = vmatprep.subr.mxu0 %v118
    %8289 = vmatpush1.msra.mxu0 %v117
    %8290 = vmatprep.subr.mxu0 %v115
    %8291 = vmatpush1.msra.mxu0 %v114
    %8292 = vmatprep.subr.mxu0 %v112
    %8293 = vmatpush1.msra.mxu0 %v111
    %8294 = vmatprep.subr.mxu0 %v109
    %8295 = vmatpush1.msra.mxu0 %v108
    %8296 = vmatprep.subr.mxu0 %v106
    %8297 = vmatpush1.msra.mxu0 %v105
    %8298 = vmatprep.subr.mxu0 %v103
    %8299 = vmatpush1.msra.mxu0 %v102
    %8300 = vmatprep.subr.mxu0 %v100
    %8301 = vmatpush1.msra.mxu0 %v99
    %8302 = vmatprep.subr.mxu0 %v193
    %8303 = vmatpush2.msra.mxu0 %v192
    %8304 = vmatprep.subr.mxu0 %v190
    %8305 = vmatpush2.msra.mxu0 %v189
    %8306 = vmatprep.subr.mxu0 %v187
    %8307 = vmatpush2.msra.mxu0 %v186
    %8308 = vmatprep.subr.mxu0 %v184
    %8309 = vmatpush2.msra.mxu0 %v183
    %8310 = vmatprep.subr.mxu0 %v181
    %8311 = vmatpush2.msra.mxu0 %v180
    %8312 = vmatprep.subr.mxu0 %v178
    %8313 = vmatpush2.msra.mxu0 %v177
    %8314 = vmatprep.subr.mxu0 %v175
    %8315 = vmatpush2.msra.mxu0 %v174
    %8316 = vmatprep.subr.mxu0 %v172
    %8317 = vmatpush2.msra.mxu0 %v171
    %8318 = vmatprep.subr.mxu0 %v169
    %8319 = vmatpush2.msra.mxu0 %v168
    %8320 = vmatprep.subr.mxu0 %v166
    %8321 = vmatpush2.msra.mxu0 %v165
    %8322 = vmatprep.subr.mxu0 %v163
    %8323 = vmatpush2.msra.mxu0 %v162
    %8324 = vmatprep.subr.mxu0 %v160
    %8325 = vmatpush2.msra.mxu0 %v159
    %8326 = vmatprep.subr.mxu0 %v157
    %8327 = vmatpush2.msra.mxu0 %v156
    %8328 = vmatprep.subr.mxu0 %v154
    %8329 = vmatpush2.msra.mxu0 %v153
    %8330 = vmatprep.subr.mxu0 %v151
    %8331 = vmatpush2.msra.mxu0 %v150
    %8332 = vmatprep.subr.mxu0 %v148
    %8333 = vmatpush2.msra.mxu0 %v147
    %8334 = vmatprep.mubr.f32.mxu0 %v7970
    %8335 = vmatmul.mubr.f32.gmra.mxu0 %v7969
    %v8336 = vpop.f32.mrf.mxu0
    %v8337 = vadd.f32 %v8123, %v8336
    %v8338 = vpop.f32.mrf.mxu0
    %v8339 = vadd.f32 %v8125, %v8338
    %8340 = vdwg.mxu0
    %8341 = vmatprep.subr.mxu0 0.0
    %8342 = vmatpush1.msra.mxu0 0.0
    %8343 = vmatprep.subr.mxu0 0.0
    %8344 = vmatpush1.msra.mxu0 0.0
    %8345 = vmatprep.subr.mxu0 0.0
    %8346 = vmatpush1.msra.mxu0 0.0
    %8347 = vmatprep.subr.mxu0 0.0
    %8348 = vmatpush1.msra.mxu0 0.0
    %8349 = vmatprep.subr.mxu0 0.0
    %8350 = vmatpush1.msra.mxu0 0.0
    %8351 = vmatprep.subr.mxu0 0.0
    %8352 = vmatpush1.msra.mxu0 0.0
    %8353 = vmatprep.subr.mxu0 0.0
    %8354 = vmatpush1.msra.mxu0 0.0
    %8355 = vmatprep.subr.mxu0 0.0
    %8356 = vmatpush1.msra.mxu0 0.0
    %8357 = vmatprep.subr.mxu0 0.0
    %8358 = vmatpush1.msra.mxu0 0.0
    %8359 = vmatprep.subr.mxu0 0.0
    %8360 = vmatpush1.msra.mxu0 0.0
    %8361 = vmatprep.subr.mxu0 0.0
    %8362 = vmatpush1.msra.mxu0 0.0
    %8363 = vmatprep.subr.mxu0 0.0
    %8364 = vmatpush1.msra.mxu0 0.0
    %8365 = vmatprep.subr.mxu0 0.0
    %8366 = vmatpush1.msra.mxu0 0.0
    %8367 = vmatprep.subr.mxu0 0.0
    %8368 = vmatpush1.msra.mxu0 0.0
    %8369 = vmatprep.subr.mxu0 %v2126
    %8370 = vmatpush1.msra.mxu0 %v2123
    %8371 = vmatprep.subr.mxu0 %v196
    %8372 = vmatpush1.msra.mxu0 %v195
    %8373 = vmatprep.subr.mxu0 0.0
    %8374 = vmatpush2.msra.mxu0 0.0
    %8375 = vmatprep.subr.mxu0 0.0
    %8376 = vmatpush2.msra.mxu0 0.0
    %8377 = vmatprep.subr.mxu0 0.0
    %8378 = vmatpush2.msra.mxu0 0.0
    %8379 = vmatprep.subr.mxu0 0.0
    %8380 = vmatpush2.msra.mxu0 0.0
    %8381 = vmatprep.subr.mxu0 0.0
    %8382 = vmatpush2.msra.mxu0 0.0
    %8383 = vmatprep.subr.mxu0 0.0
    %8384 = vmatpush2.msra.mxu0 0.0
    %8385 = vmatprep.subr.mxu0 0.0
    %8386 = vmatpush2.msra.mxu0 0.0
    %8387 = vmatprep.subr.mxu0 0.0
    %8388 = vmatpush2.msra.mxu0 0.0
    %8389 = vmatprep.subr.mxu0 0.0
    %8390 = vmatpush2.msra.mxu0 0.0
    %8391 = vmatprep.subr.mxu0 0.0
    %8392 = vmatpush2.msra.mxu0 0.0
    %8393 = vmatprep.subr.mxu0 0.0
    %8394 = vmatpush2.msra.mxu0 0.0
    %8395 = vmatprep.subr.mxu0 0.0
    %8396 = vmatpush2.msra.mxu0 0.0
    %8397 = vmatprep.subr.mxu0 0.0
    %8398 = vmatpush2.msra.mxu0 0.0
    %8399 = vmatprep.subr.mxu0 0.0
    %8400 = vmatpush2.msra.mxu0 0.0
    %8401 = vmatprep.subr.mxu0 0.0
    %8402 = vmatpush2.msra.mxu0 0.0
    %8403 = vmatprep.subr.mxu0 0.0
    %8404 = vmatpush2.msra.mxu0 0.0
    %8405 = vmatprep.mubr.f32.mxu0 0.0
    %8406 = vmatmul.mubr.f32.gmra.mxu0 %v8268
    %v8407 = vpop.f32.mrf.mxu0
    %v8408 = vadd.f32 %v8337, %v8407
    %v8409 = vpop.f32.mrf.mxu0
    %v8410 = vadd.f32 %v8339, %v8409
    %8411 = vdwg.mxu0
    %8412 = vmatprep.subr.mxu0 0.0
    %8413 = vmatpush1.msra.mxu0 %v146
    %8414 = vmatprep.subr.mxu0 0.0
    %8415 = vmatpush1.msra.mxu0 %v143
    %8416 = vmatprep.subr.mxu0 0.0
    %8417 = vmatpush1.msra.mxu0 %v140
    %8418 = vmatprep.subr.mxu0 0.0
    %8419 = vmatpush1.msra.mxu0 %v137
    %8420 = vmatprep.subr.mxu0 0.0
    %8421 = vmatpush1.msra.mxu0 %v134
    %8422 = vmatprep.subr.mxu0 0.0
    %8423 = vmatpush1.msra.mxu0 %v131
    %8424 = vmatprep.subr.mxu0 0.0
    %8425 = vmatpush1.msra.mxu0 %v128
    %8426 = vmatprep.subr.mxu0 0.0
    %8427 = vmatpush1.msra.mxu0 %v125
    %8428 = vmatprep.subr.mxu0 0.0
    %8429 = vmatpush1.msra.mxu0 %v122
    %8430 = vmatprep.subr.mxu0 0.0
    %8431 = vmatpush1.msra.mxu0 %v119
    %8432 = vmatprep.subr.mxu0 0.0
    %8433 = vmatpush1.msra.mxu0 %v116
    %8434 = vmatprep.subr.mxu0 0.0
    %8435 = vmatpush1.msra.mxu0 %v113
    %8436 = vmatprep.subr.mxu0 0.0
    %8437 = vmatpush1.msra.mxu0 %v110
    %8438 = vmatprep.subr.mxu0 0.0
    %8439 = vmatpush1.msra.mxu0 %v107
    %8440 = vmatprep.subr.mxu0 0.0
    %8441 = vmatpush1.msra.mxu0 %v104
    %8442 = vmatprep.subr.mxu0 0.0
    %8443 = vmatpush1.msra.mxu0 %v101
    %8444 = vmatprep.subr.mxu0 0.0
    %8445 = vmatpush2.msra.mxu0 %v194
    %8446 = vmatprep.subr.mxu0 0.0
    %8447 = vmatpush2.msra.mxu0 %v191
    %8448 = vmatprep.subr.mxu0 0.0
    %8449 = vmatpush2.msra.mxu0 %v188
    %8450 = vmatprep.subr.mxu0 0.0
    %8451 = vmatpush2.msra.mxu0 %v185
    %8452 = vmatprep.subr.mxu0 0.0
    %8453 = vmatpush2.msra.mxu0 %v182
    %8454 = vmatprep.subr.mxu0 0.0
    %8455 = vmatpush2.msra.mxu0 %v179
    %8456 = vmatprep.subr.mxu0 0.0
    %8457 = vmatpush2.msra.mxu0 %v176
    %8458 = vmatprep.subr.mxu0 0.0
    %8459 = vmatpush2.msra.mxu0 %v173
    %8460 = vmatprep.subr.mxu0 0.0
    %8461 = vmatpush2.msra.mxu0 %v170
    %8462 = vmatprep.subr.mxu0 0.0
    %8463 = vmatpush2.msra.mxu0 %v167
    %8464 = vmatprep.subr.mxu0 0.0
    %8465 = vmatpush2.msra.mxu0 %v164
    %8466 = vmatprep.subr.mxu0 0.0
    %8467 = vmatpush2.msra.mxu0 %v161
    %8468 = vmatprep.subr.mxu0 0.0
    %8469 = vmatpush2.msra.mxu0 %v158
    %8470 = vmatprep.subr.mxu0 0.0
    %8471 = vmatpush2.msra.mxu0 %v155
    %8472 = vmatprep.subr.mxu0 0.0
    %8473 = vmatpush2.msra.mxu0 %v152
    %8474 = vmatprep.subr.mxu0 0.0
    %8475 = vmatpush2.msra.mxu0 %v149
    %8476 = vmatprep.mubr.f32.mxu0 %v7970
    %8477 = vmatmul.mubr.f32.gmra.mxu0 %v7969
    %v8478 = vpop.f32.mrf.mxu0
    %v8479 = vadd.f32 %v8264, %v8478
    %v8480 = vpop.f32.mrf.mxu0
    %8481 = vdwg.mxu0
    %8482 = vmatprep.subr.mxu0 0.0
    %8483 = vmatpush1.msra.mxu0 0.0
    %8484 = vmatprep.subr.mxu0 0.0
    %8485 = vmatpush1.msra.mxu0 0.0
    %8486 = vmatprep.subr.mxu0 0.0
    %8487 = vmatpush1.msra.mxu0 0.0
    %8488 = vmatprep.subr.mxu0 0.0
    %8489 = vmatpush1.msra.mxu0 0.0
    %8490 = vmatprep.subr.mxu0 0.0
    %8491 = vmatpush1.msra.mxu0 0.0
    %8492 = vmatprep.subr.mxu0 0.0
    %8493 = vmatpush1.msra.mxu0 0.0
    %8494 = vmatprep.subr.mxu0 0.0
    %8495 = vmatpush1.msra.mxu0 0.0
    %8496 = vmatprep.subr.mxu0 0.0
    %8497 = vmatpush1.msra.mxu0 0.0
    %8498 = vmatprep.subr.mxu0 0.0
    %8499 = vmatpush1.msra.mxu0 0.0
    %8500 = vmatprep.subr.mxu0 0.0
    %8501 = vmatpush1.msra.mxu0 0.0
    %8502 = vmatprep.subr.mxu0 0.0
    %8503 = vmatpush1.msra.mxu0 0.0
    %8504 = vmatprep.subr.mxu0 0.0
    %8505 = vmatpush1.msra.mxu0 0.0
    %8506 = vmatprep.subr.mxu0 0.0
    %8507 = vmatpush1.msra.mxu0 0.0
    %8508 = vmatprep.subr.mxu0 0.0
    %8509 = vmatpush1.msra.mxu0 0.0
    %8510 = vmatprep.subr.mxu0 0.0
    %8511 = vmatpush1.msra.mxu0 %v2129
    %8512 = vmatprep.subr.mxu0 0.0
    %8513 = vmatpush1.msra.mxu0 %v197
    %8514 = vmatprep.subr.mxu0 0.0
    %8515 = vmatpush2.msra.mxu0 0.0
    %8516 = vmatprep.subr.mxu0 0.0
    %8517 = vmatpush2.msra.mxu0 0.0
    %8518 = vmatprep.subr.mxu0 0.0
    %8519 = vmatpush2.msra.mxu0 0.0
    %8520 = vmatprep.subr.mxu0 0.0
    %8521 = vmatpush2.msra.mxu0 0.0
    %8522 = vmatprep.subr.mxu0 0.0
    %8523 = vmatpush2.msra.mxu0 0.0
    %8524 = vmatprep.subr.mxu0 0.0
    %8525 = vmatpush2.msra.mxu0 0.0
    %8526 = vmatprep.subr.mxu0 0.0
    %8527 = vmatpush2.msra.mxu0 0.0
    %8528 = vmatprep.subr.mxu0 0.0
    %8529 = vmatpush2.msra.mxu0 0.0
    %8530 = vmatprep.subr.mxu0 0.0
    %8531 = vmatpush2.msra.mxu0 0.0
    %8532 = vmatprep.subr.mxu0 0.0
    %8533 = vmatpush2.msra.mxu0 0.0
    %8534 = vmatprep.subr.mxu0 0.0
    %8535 = vmatpush2.msra.mxu0 0.0
    %8536 = vmatprep.subr.mxu0 0.0
    %8537 = vmatpush2.msra.mxu0 0.0
    %8538 = vmatprep.subr.mxu0 0.0
    %8539 = vmatpush2.msra.mxu0 0.0
    %8540 = vmatprep.subr.mxu0 0.0
    %8541 = vmatpush2.msra.mxu0 0.0
    %8542 = vmatprep.subr.mxu0 0.0
    %8543 = vmatpush2.msra.mxu0 0.0
    %8544 = vmatprep.subr.mxu0 0.0
    %8545 = vmatpush2.msra.mxu0 0.0
    %8546 = vmatprep.mubr.f32.mxu0 0.0
    %8547 = vmatmul.mubr.f32.gmra.mxu0 %v8268
    %v8548 = vpop.f32.mrf.mxu0
    %v8549 = vadd.f32 %v8479, %v8548
    %v8550 = vpop.f32.mrf.mxu0
    %8551 = vdwg.mxu0
    %v8552 = vld [vmem:[#allocation2] sm:$0x7c]
    %v8553 = vld [vmem:[#allocation2 + $0x8] sm:$0x7c]
    %v8554 = vld [vmem:[#allocation2 + $0x10] sm:$0x7c]
    %v8558 = vrot.slane %v8552, 2
    %v8559 = vrot.slane %v8553, 2
    %v8560 = vrot.slane %v8554, 2
    %v8563 = vsel %vm1825, %v8560, 0
    %8565 = vmatprep.subr.mxu0 %v351
    %8566 = vmatpush1.msra.mxu0 %v350
    %8567 = vmatprep.subr.mxu0 %v348
    %8568 = vmatpush1.msra.mxu0 %v347
    %8569 = vmatprep.subr.mxu0 %v345
    %8570 = vmatpush1.msra.mxu0 %v344
    %8571 = vmatprep.subr.mxu0 %v342
    %8572 = vmatpush1.msra.mxu0 %v341
    %8573 = vmatprep.subr.mxu0 %v339
    %8574 = vmatpush1.msra.mxu0 %v338
    %8575 = vmatprep.subr.mxu0 %v336
    %8576 = vmatpush1.msra.mxu0 %v335
    %8577 = vmatprep.subr.mxu0 %v333
    %8578 = vmatpush1.msra.mxu0 %v332
    %8579 = vmatprep.subr.mxu0 %v330
    %8580 = vmatpush1.msra.mxu0 %v329
    %8581 = vmatprep.subr.mxu0 %v327
    %8582 = vmatpush1.msra.mxu0 %v326
    %8583 = vmatprep.subr.mxu0 %v324
    %8584 = vmatpush1.msra.mxu0 %v323
    %8585 = vmatprep.subr.mxu0 %v321
    %8586 = vmatpush1.msra.mxu0 %v320
    %8587 = vmatprep.subr.mxu0 %v318
    %8588 = vmatpush1.msra.mxu0 %v317
    %8589 = vmatprep.subr.mxu0 %v315
    %8590 = vmatpush1.msra.mxu0 %v314
    %8591 = vmatprep.subr.mxu0 %v312
    %8592 = vmatpush1.msra.mxu0 %v311
    %8593 = vmatprep.subr.mxu0 %v309
    %8594 = vmatpush1.msra.mxu0 %v308
    %8595 = vmatprep.subr.mxu0 %v306
    %8596 = vmatpush1.msra.mxu0 %v305
    %8597 = vmatprep.subr.mxu0 %v399
    %8598 = vmatpush2.msra.mxu0 %v398
    %8599 = vmatprep.subr.mxu0 %v396
    %8600 = vmatpush2.msra.mxu0 %v395
    %8601 = vmatprep.subr.mxu0 %v393
    %8602 = vmatpush2.msra.mxu0 %v392
    %8603 = vmatprep.subr.mxu0 %v390
    %8604 = vmatpush2.msra.mxu0 %v389
    %8605 = vmatprep.subr.mxu0 %v387
    %8606 = vmatpush2.msra.mxu0 %v386
    %8607 = vmatprep.subr.mxu0 %v384
    %8608 = vmatpush2.msra.mxu0 %v383
    %8609 = vmatprep.subr.mxu0 %v381
    %8610 = vmatpush2.msra.mxu0 %v380
    %8611 = vmatprep.subr.mxu0 %v378
    %8612 = vmatpush2.msra.mxu0 %v377
    %8613 = vmatprep.subr.mxu0 %v375
    %8614 = vmatpush2.msra.mxu0 %v374
    %8615 = vmatprep.subr.mxu0 %v372
    %8616 = vmatpush2.msra.mxu0 %v371
    %8617 = vmatprep.subr.mxu0 %v369
    %8618 = vmatpush2.msra.mxu0 %v368
    %8619 = vmatprep.subr.mxu0 %v366
    %8620 = vmatpush2.msra.mxu0 %v365
    %8621 = vmatprep.subr.mxu0 %v363
    %8622 = vmatpush2.msra.mxu0 %v362
    %8623 = vmatprep.subr.mxu0 %v360
    %8624 = vmatpush2.msra.mxu0 %v359
    %8625 = vmatprep.subr.mxu0 %v357
    %8626 = vmatpush2.msra.mxu0 %v356
    %8627 = vmatprep.subr.mxu0 %v354
    %8628 = vmatpush2.msra.mxu0 %v353
    %8629 = vmatprep.mubr.f32.mxu0 %v8559
    %8630 = vmatmul.mubr.f32.gmra.mxu0 %v8558
    %v8631 = vpop.f32.mrf.mxu0
    %v8632 = vadd.f32 0.0, %v8631
    %v8633 = vpop.f32.mrf.mxu0
    %v8634 = vadd.f32 0.0, %v8633
    %8635 = vdwg.mxu0
    %8636 = vmatprep.subr.mxu0 0.0
    %8637 = vmatpush1.msra.mxu0 0.0
    %8638 = vmatprep.subr.mxu0 0.0
    %8639 = vmatpush1.msra.mxu0 0.0
    %8640 = vmatprep.subr.mxu0 0.0
    %8641 = vmatpush1.msra.mxu0 0.0
    %8642 = vmatprep.subr.mxu0 0.0
    %8643 = vmatpush1.msra.mxu0 0.0
    %8644 = vmatprep.subr.mxu0 0.0
    %8645 = vmatpush1.msra.mxu0 0.0
    %8646 = vmatprep.subr.mxu0 0.0
    %8647 = vmatpush1.msra.mxu0 0.0
    %8648 = vmatprep.subr.mxu0 0.0
    %8649 = vmatpush1.msra.mxu0 0.0
    %8650 = vmatprep.subr.mxu0 0.0
    %8651 = vmatpush1.msra.mxu0 0.0
    %8652 = vmatprep.subr.mxu0 0.0
    %8653 = vmatpush1.msra.mxu0 0.0
    %8654 = vmatprep.subr.mxu0 0.0
    %8655 = vmatpush1.msra.mxu0 0.0
    %8656 = vmatprep.subr.mxu0 0.0
    %8657 = vmatpush1.msra.mxu0 0.0
    %8658 = vmatprep.subr.mxu0 0.0
    %8659 = vmatpush1.msra.mxu0 0.0
    %8660 = vmatprep.subr.mxu0 0.0
    %8661 = vmatpush1.msra.mxu0 0.0
    %8662 = vmatprep.subr.mxu0 0.0
    %8663 = vmatpush1.msra.mxu0 0.0
    %8664 = vmatprep.subr.mxu0 %v2430
    %8665 = vmatpush1.msra.mxu0 %v2427
    %8666 = vmatprep.subr.mxu0 %v402
    %8667 = vmatpush1.msra.mxu0 %v401
    %8668 = vmatprep.subr.mxu0 0.0
    %8669 = vmatpush2.msra.mxu0 0.0
    %8670 = vmatprep.subr.mxu0 0.0
    %8671 = vmatpush2.msra.mxu0 0.0
    %8672 = vmatprep.subr.mxu0 0.0
    %8673 = vmatpush2.msra.mxu0 0.0
    %8674 = vmatprep.subr.mxu0 0.0
    %8675 = vmatpush2.msra.mxu0 0.0
    %8676 = vmatprep.subr.mxu0 0.0
    %8677 = vmatpush2.msra.mxu0 0.0
    %8678 = vmatprep.subr.mxu0 0.0
    %8679 = vmatpush2.msra.mxu0 0.0
    %8680 = vmatprep.subr.mxu0 0.0
    %8681 = vmatpush2.msra.mxu0 0.0
    %8682 = vmatprep.subr.mxu0 0.0
    %8683 = vmatpush2.msra.mxu0 0.0
    %8684 = vmatprep.subr.mxu0 0.0
    %8685 = vmatpush2.msra.mxu0 0.0
    %8686 = vmatprep.subr.mxu0 0.0
    %8687 = vmatpush2.msra.mxu0 0.0
    %8688 = vmatprep.subr.mxu0 0.0
    %8689 = vmatpush2.msra.mxu0 0.0
    %8690 = vmatprep.subr.mxu0 0.0
    %8691 = vmatpush2.msra.mxu0 0.0
    %8692 = vmatprep.subr.mxu0 0.0
    %8693 = vmatpush2.msra.mxu0 0.0
    %8694 = vmatprep.subr.mxu0 0.0
    %8695 = vmatpush2.msra.mxu0 0.0
    %8696 = vmatprep.subr.mxu0 0.0
    %8697 = vmatpush2.msra.mxu0 0.0
    %8698 = vmatprep.subr.mxu0 0.0
    %8699 = vmatpush2.msra.mxu0 0.0
    %8700 = vmatprep.mubr.f32.mxu0 0.0
    %8701 = vmatmul.mubr.f32.gmra.mxu0 %v8563
    %v8702 = vpop.f32.mrf.mxu0
    %v8703 = vadd.f32 %v8632, %v8702
    %v8704 = vpop.f32.mrf.mxu0
    %v8705 = vadd.f32 %v8634, %v8704
    %8706 = vdwg.mxu0
    %8707 = vmatprep.subr.mxu0 0.0
    %8708 = vmatpush1.msra.mxu0 %v352
    %8709 = vmatprep.subr.mxu0 0.0
    %8710 = vmatpush1.msra.mxu0 %v349
    %8711 = vmatprep.subr.mxu0 0.0
    %8712 = vmatpush1.msra.mxu0 %v346
    %8713 = vmatprep.subr.mxu0 0.0
    %8714 = vmatpush1.msra.mxu0 %v343
    %8715 = vmatprep.subr.mxu0 0.0
    %8716 = vmatpush1.msra.mxu0 %v340
    %8717 = vmatprep.subr.mxu0 0.0
    %8718 = vmatpush1.msra.mxu0 %v337
    %8719 = vmatprep.subr.mxu0 0.0
    %8720 = vmatpush1.msra.mxu0 %v334
    %8721 = vmatprep.subr.mxu0 0.0
    %8722 = vmatpush1.msra.mxu0 %v331
    %8723 = vmatprep.subr.mxu0 0.0
    %8724 = vmatpush1.msra.mxu0 %v328
    %8725 = vmatprep.subr.mxu0 0.0
    %8726 = vmatpush1.msra.mxu0 %v325
    %8727 = vmatprep.subr.mxu0 0.0
    %8728 = vmatpush1.msra.mxu0 %v322
    %8729 = vmatprep.subr.mxu0 0.0
    %8730 = vmatpush1.msra.mxu0 %v319
    %8731 = vmatprep.subr.mxu0 0.0
    %8732 = vmatpush1.msra.mxu0 %v316
    %8733 = vmatprep.subr.mxu0 0.0
    %8734 = vmatpush1.msra.mxu0 %v313
    %8735 = vmatprep.subr.mxu0 0.0
    %8736 = vmatpush1.msra.mxu0 %v310
    %8737 = vmatprep.subr.mxu0 0.0
    %8738 = vmatpush1.msra.mxu0 %v307
    %8739 = vmatprep.subr.mxu0 0.0
    %8740 = vmatpush2.msra.mxu0 %v400
    %8741 = vmatprep.subr.mxu0 0.0
    %8742 = vmatpush2.msra.mxu0 %v397
    %8743 = vmatprep.subr.mxu0 0.0
    %8744 = vmatpush2.msra.mxu0 %v394
    %8745 = vmatprep.subr.mxu0 0.0
    %8746 = vmatpush2.msra.mxu0 %v391
    %8747 = vmatprep.subr.mxu0 0.0
    %8748 = vmatpush2.msra.mxu0 %v388
    %8749 = vmatprep.subr.mxu0 0.0
    %8750 = vmatpush2.msra.mxu0 %v385
    %8751 = vmatprep.subr.mxu0 0.0
    %8752 = vmatpush2.msra.mxu0 %v382
    %8753 = vmatprep.subr.mxu0 0.0
    %8754 = vmatpush2.msra.mxu0 %v379
    %8755 = vmatprep.subr.mxu0 0.0
    %8756 = vmatpush2.msra.mxu0 %v376
    %8757 = vmatprep.subr.mxu0 0.0
    %8758 = vmatpush2.msra.mxu0 %v373
    %8759 = vmatprep.subr.mxu0 0.0
    %8760 = vmatpush2.msra.mxu0 %v370
    %8761 = vmatprep.subr.mxu0 0.0
    %8762 = vmatpush2.msra.mxu0 %v367
    %8763 = vmatprep.subr.mxu0 0.0
    %8764 = vmatpush2.msra.mxu0 %v364
    %8765 = vmatprep.subr.mxu0 0.0
    %8766 = vmatpush2.msra.mxu0 %v361
    %8767 = vmatprep.subr.mxu0 0.0
    %8768 = vmatpush2.msra.mxu0 %v358
    %8769 = vmatprep.subr.mxu0 0.0
    %8770 = vmatpush2.msra.mxu0 %v355
    %8771 = vmatprep.mubr.f32.mxu0 %v8559
    %8772 = vmatmul.mubr.f32.gmra.mxu0 %v8558
    %v8773 = vpop.f32.mrf.mxu0
    %v8774 = vadd.f32 0.0, %v8773
    %v8775 = vpop.f32.mrf.mxu0
    %8776 = vdwg.mxu0
    %8777 = vmatprep.subr.mxu0 0.0
    %8778 = vmatpush1.msra.mxu0 0.0
    %8779 = vmatprep.subr.mxu0 0.0
    %8780 = vmatpush1.msra.mxu0 0.0
    %8781 = vmatprep.subr.mxu0 0.0
    %8782 = vmatpush1.msra.mxu0 0.0
    %8783 = vmatprep.subr.mxu0 0.0
    %8784 = vmatpush1.msra.mxu0 0.0
    %8785 = vmatprep.subr.mxu0 0.0
    %8786 = vmatpush1.msra.mxu0 0.0
    %8787 = vmatprep.subr.mxu0 0.0
    %8788 = vmatpush1.msra.mxu0 0.0
    %8789 = vmatprep.subr.mxu0 0.0
    %8790 = vmatpush1.msra.mxu0 0.0
    %8791 = vmatprep.subr.mxu0 0.0
    %8792 = vmatpush1.msra.mxu0 0.0
    %8793 = vmatprep.subr.mxu0 0.0
    %8794 = vmatpush1.msra.mxu0 0.0
    %8795 = vmatprep.subr.mxu0 0.0
    %8796 = vmatpush1.msra.mxu0 0.0
    %8797 = vmatprep.subr.mxu0 0.0
    %8798 = vmatpush1.msra.mxu0 0.0
    %8799 = vmatprep.subr.mxu0 0.0
    %8800 = vmatpush1.msra.mxu0 0.0
    %8801 = vmatprep.subr.mxu0 0.0
    %8802 = vmatpush1.msra.mxu0 0.0
    %8803 = vmatprep.subr.mxu0 0.0
    %8804 = vmatpush1.msra.mxu0 0.0
    %8805 = vmatprep.subr.mxu0 0.0
    %8806 = vmatpush1.msra.mxu0 %v2433
    %8807 = vmatprep.subr.mxu0 0.0
    %8808 = vmatpush1.msra.mxu0 %v403
    %8809 = vmatprep.subr.mxu0 0.0
    %8810 = vmatpush2.msra.mxu0 0.0
    %8811 = vmatprep.subr.mxu0 0.0
    %8812 = vmatpush2.msra.mxu0 0.0
    %8813 = vmatprep.subr.mxu0 0.0
    %8814 = vmatpush2.msra.mxu0 0.0
    %8815 = vmatprep.subr.mxu0 0.0
    %8816 = vmatpush2.msra.mxu0 0.0
    %8817 = vmatprep.subr.mxu0 0.0
    %8818 = vmatpush2.msra.mxu0 0.0
    %8819 = vmatprep.subr.mxu0 0.0
    %8820 = vmatpush2.msra.mxu0 0.0
    %8821 = vmatprep.subr.mxu0 0.0
    %8822 = vmatpush2.msra.mxu0 0.0
    %8823 = vmatprep.subr.mxu0 0.0
    %8824 = vmatpush2.msra.mxu0 0.0
    %8825 = vmatprep.subr.mxu0 0.0
    %8826 = vmatpush2.msra.mxu0 0.0
    %8827 = vmatprep.subr.mxu0 0.0
    %8828 = vmatpush2.msra.mxu0 0.0
    %8829 = vmatprep.subr.mxu0 0.0
    %8830 = vmatpush2.msra.mxu0 0.0
    %8831 = vmatprep.subr.mxu0 0.0
    %8832 = vmatpush2.msra.mxu0 0.0
    %8833 = vmatprep.subr.mxu0 0.0
    %8834 = vmatpush2.msra.mxu0 0.0
    %8835 = vmatprep.subr.mxu0 0.0
    %8836 = vmatpush2.msra.mxu0 0.0
    %8837 = vmatprep.subr.mxu0 0.0
    %8838 = vmatpush2.msra.mxu0 0.0
    %8839 = vmatprep.subr.mxu0 0.0
    %8840 = vmatpush2.msra.mxu0 0.0
    %8841 = vmatprep.mubr.f32.mxu0 0.0
    %8842 = vmatmul.mubr.f32.gmra.mxu0 %v8563
    %v8843 = vpop.f32.mrf.mxu0
    %v8844 = vadd.f32 %v8774, %v8843
    %v8845 = vpop.f32.mrf.mxu0
    %8846 = vdwg.mxu0
    %v8847 = vadd.f32 %v8408, %v8703
    %v8848 = vadd.f32 %v8410, %v8705
    %v8849 = vadd.f32 %v8549, %v8844
    %v8850 = vld [vmem:[%s5] sm:$0x7]
    %v8852 = vlaneseq
    %v8853 = vshrl.u32 %v8852, 7
    %v8854 = vsub.s32 0, %v8853
    %v8855 = vrot.slane %v8850, %v8854
    %v8856 = vlaneseq
    %v8857 = vshrl.u32 %v8856, 7
    %v8858 = vsub.s32 1, %v8857
    %v8859 = vrot.slane %v8850, %v8858
    %v8860 = vlaneseq
    %v8861 = vshrl.u32 %v8860, 7
    %v8862 = vsub.s32 2, %v8861
    %v8863 = vrot.slane %v8850, %v8862
    %v8867 = vadd.f32 %v8847, %v8855
    %v8868 = vadd.f32 %v8848, %v8859
    %v8869 = vadd.f32 %v8849, %v8863
    %v8870 = vmax.f32 %v8867, 0.0
    %v8871 = vmax.f32 %v8868, 0.0
    %v8872 = vmax.f32 %v8869, 0.0
    %v8873 = vld [vmem:[%s6] sm:$0xff]
    %v8874 = vld [vmem:[%s6 + $0x8] sm:$0xff]
    %v8875 = vld [vmem:[%s6 + $0x10] sm:$0xff]
    %v8876 = vld [vmem:[%s6 + $0x18] sm:$0xff]
    %v8877 = vld [vmem:[%s6 + $0x20] sm:$0xff]
    %v8878 = vld [vmem:[%s6 + $0x28] sm:$0xff]
    %v8879 = vld [vmem:[%s6 + $0x30] sm:$0xff]
    %v8880 = vld [vmem:[%s6 + $0x38] sm:$0xff]
    %v8881 = vld [vmem:[%s6 + $0x40] sm:$0xff]
    %v8882 = vld [vmem:[%s6 + $0x48] sm:$0xff]
    %v8883 = vld [vmem:[%s6 + $0x50] sm:$0xff]
    %v8884 = vld [vmem:[%s6 + $0x58] sm:$0xff]
    %v8885 = vld [vmem:[%s6 + $0x60] sm:$0xff]
    %v8886 = vld [vmem:[%s6 + $0x68] sm:$0xff]
    %v8887 = vld [vmem:[%s6 + $0x70] sm:$0xff]
    %v8888 = vld [vmem:[%s6 + $0x78] sm:$0xff]
    %v8889 = vld [vmem:[%s6 + $0x80] sm:$0xff]
    %v8890 = vld [vmem:[%s6 + $0x88] sm:$0xff]
    %v8891 = vld [vmem:[%s6 + $0x90] sm:$0xff]
    %v8892 = vld [vmem:[%s6 + $0x98] sm:$0xff]
    %v8893 = vld [vmem:[%s6 + $0xa0] sm:$0xff]
    %v8894 = vld [vmem:[%s6 + $0xa8] sm:$0xff]
    %v8895 = vld [vmem:[%s6 + $0xb0] sm:$0xff]
    %v8896 = vld [vmem:[%s6 + $0xb8] sm:$0xff]
    %v8897 = vld [vmem:[%s6 + $0xc0] sm:$0xff]
    %v8898 = vld [vmem:[%s6 + $0xc8] sm:$0xff]
    %v8899 = vld [vmem:[%s6 + $0xd0] sm:$0xff]
    %v8900 = vld [vmem:[%s6 + $0xd8] sm:$0xff]
    %v8901 = vld [vmem:[%s6 + $0xe0] sm:$0xff]
    %v8902 = vld [vmem:[%s6 + $0xe8] sm:$0xff]
    %v8903 = vld [vmem:[%s6 + $0xf0] sm:$0xff]
    %v8904 = vld [vmem:[%s6 + $0xf8] sm:$0xff]
    %v8905 = vld [vmem:[%s6 + $0x100] sm:$0xff]
    %v8906 = vld [vmem:[%s6 + $0x108] sm:$0xff]
    %v8907 = vld [vmem:[%s6 + $0x110] sm:$0xff]
    %v8908 = vld [vmem:[%s6 + $0x118] sm:$0xff]
    %v8909 = vld [vmem:[%s6 + $0x120] sm:$0xff]
    %v8910 = vld [vmem:[%s6 + $0x128] sm:$0xff]
    %v8911 = vld [vmem:[%s6 + $0x130] sm:$0xff]
    %v8912 = vld [vmem:[%s6 + $0x138] sm:$0xff]
    %v8913 = vld [vmem:[%s6 + $0x140] sm:$0xff]
    %v8914 = vld [vmem:[%s6 + $0x148] sm:$0xff]
    %v8915 = vld [vmem:[%s6 + $0x150] sm:$0xff]
    %v8916 = vld [vmem:[%s6 + $0x158] sm:$0xff]
    %v8917 = vld [vmem:[%s6 + $0x160] sm:$0xff]
    %v8918 = vld [vmem:[%s6 + $0x168] sm:$0xff]
    %v8919 = vld [vmem:[%s6 + $0x170] sm:$0xff]
    %v8920 = vld [vmem:[%s6 + $0x178] sm:$0xff]
    %v8921 = vld [vmem:[%s6 + $0x180] sm:$0xff]
    %v8922 = vld [vmem:[%s6 + $0x188] sm:$0xff]
    %v8923 = vld [vmem:[%s6 + $0x190] sm:$0xff]
    %v8924 = vld [vmem:[%s6 + $0x198] sm:$0xff]
    %v8925 = vld [vmem:[%s6 + $0x1a0] sm:$0xff]
    %v8926 = vld [vmem:[%s6 + $0x1a8] sm:$0xff]
    %v8927 = vld [vmem:[%s6 + $0x1b0] sm:$0xff]
    %v8928 = vld [vmem:[%s6 + $0x1b8] sm:$0xff]
    %v8929 = vld [vmem:[%s6 + $0x1c0] sm:$0xff]
    %v8930 = vld [vmem:[%s6 + $0x1c8] sm:$0xff]
    %v8931 = vld [vmem:[%s6 + $0x1d0] sm:$0xff]
    %v8932 = vld [vmem:[%s6 + $0x1d8] sm:$0xff]
    %v8933 = vld [vmem:[%s6 + $0x1e0] sm:$0xff]
    %v8934 = vld [vmem:[%s6 + $0x1e8] sm:$0xff]
    %v8935 = vld [vmem:[%s6 + $0x1f0] sm:$0xff]
    %v8936 = vld [vmem:[%s6 + $0x1f8] sm:$0xff]
    %v8937 = vld [vmem:[%s6 + $0x200] sm:$0xff]
    %v8938 = vld [vmem:[%s6 + $0x208] sm:$0xff]
    %v8939 = vld [vmem:[%s6 + $0x210] sm:$0xff]
    %v8940 = vld [vmem:[%s6 + $0x218] sm:$0xff]
    %v8941 = vld [vmem:[%s6 + $0x220] sm:$0xff]
    %v8942 = vld [vmem:[%s6 + $0x228] sm:$0xff]
    %v8943 = vld [vmem:[%s6 + $0x230] sm:$0xff]
    %v8944 = vld [vmem:[%s6 + $0x238] sm:$0xff]
    %v8945 = vld [vmem:[%s6 + $0x240] sm:$0xff]
    %v8946 = vld [vmem:[%s6 + $0x248] sm:$0xff]
    %v8947 = vld [vmem:[%s6 + $0x250] sm:$0xff]
    %v8948 = vld [vmem:[%s6 + $0x258] sm:$0xff]
    %v8949 = vld [vmem:[%s6 + $0x260] sm:$0xff]
    %v8950 = vld [vmem:[%s6 + $0x268] sm:$0xff]
    %v8951 = vld [vmem:[%s6 + $0x270] sm:$0xff]
    %v8952 = vld [vmem:[%s6 + $0x278] sm:$0xff]
    %v8953 = vld [vmem:[%s6 + $0x280] sm:$0xff]
    %v8954 = vld [vmem:[%s6 + $0x288] sm:$0xff]
    %v8955 = vld [vmem:[%s6 + $0x290] sm:$0xff]
    %v8956 = vld [vmem:[%s6 + $0x298] sm:$0xff]
    %v8957 = vld [vmem:[%s6 + $0x2a0] sm:$0xff]
    %v8958 = vld [vmem:[%s6 + $0x2a8] sm:$0xff]
    %v8959 = vld [vmem:[%s6 + $0x2b0] sm:$0xff]
    %v8960 = vld [vmem:[%s6 + $0x2b8] sm:$0xff]
    %v8961 = vld [vmem:[%s6 + $0x2c0] sm:$0xff]
    %v8962 = vld [vmem:[%s6 + $0x2c8] sm:$0xff]
    %v8963 = vld [vmem:[%s6 + $0x2d0] sm:$0xff]
    %v8964 = vld [vmem:[%s6 + $0x2d8] sm:$0xff]
    %v8965 = vld [vmem:[%s6 + $0x2e0] sm:$0xff]
    %v8966 = vld [vmem:[%s6 + $0x2e8] sm:$0xff]
    %v8967 = vld [vmem:[%s6 + $0x2f0] sm:$0xff]
    %v8968 = vld [vmem:[%s6 + $0x2f8] sm:$0xff]
    %v8969 = vld [vmem:[%s6 + $0x300] sm:$0xff]
    %v8970 = vld [vmem:[%s6 + $0x308] sm:$0xff]
    %v8971 = vld [vmem:[%s6 + $0x310] sm:$0xff]
    %v8972 = vld [vmem:[%s6 + $0x318] sm:$0xff]
    %v8973 = vld [vmem:[%s6 + $0x320] sm:$0xff]
    %v8974 = vld [vmem:[%s6 + $0x328] sm:$0xff]
    %v8975 = vld [vmem:[%s6 + $0x330] sm:$0xff]
    %v8976 = vld [vmem:[%s6 + $0x338] sm:$0xff]
    %v8977 = vld [vmem:[%s6 + $0x340] sm:$0xff]
    %v8978 = vld [vmem:[%s6 + $0x348] sm:$0xff]
    %v8979 = vld [vmem:[%s6 + $0x350] sm:$0xff]
    %v8980 = vld [vmem:[%s6 + $0x358] sm:$0xff]
    %v8981 = vld [vmem:[%s6 + $0x360] sm:$0xff]
    %v8982 = vld [vmem:[%s6 + $0x368] sm:$0xff]
    %v8983 = vld [vmem:[%s6 + $0x370] sm:$0xff]
    %v8984 = vld [vmem:[%s6 + $0x378] sm:$0xff]
    %v8985 = vld [vmem:[%s6 + $0x380] sm:$0xff]
    %v8986 = vld [vmem:[%s6 + $0x388] sm:$0xff]
    %v8987 = vld [vmem:[%s6 + $0x390] sm:$0xff]
    %v8988 = vld [vmem:[%s6 + $0x398] sm:$0xff]
    %v8989 = vld [vmem:[%s6 + $0x3a0] sm:$0xff]
    %v8990 = vld [vmem:[%s6 + $0x3a8] sm:$0xff]
    %v8991 = vld [vmem:[%s6 + $0x3b0] sm:$0xff]
    %v8992 = vld [vmem:[%s6 + $0x3b8] sm:$0xff]
    %v8993 = vld [vmem:[%s6 + $0x3c0] sm:$0xff]
    %v8994 = vld [vmem:[%s6 + $0x3c8] sm:$0xff]
    %v8995 = vld [vmem:[%s6 + $0x3d0] sm:$0xff]
    %v8996 = vld [vmem:[%s6 + $0x3d8] sm:$0xff]
    %v8997 = vld [vmem:[%s6 + $0x3e0] sm:$0xff]
    %v8998 = vld [vmem:[%s6 + $0x3e8] sm:$0xff]
    %v8999 = vld [vmem:[%s6 + $0x3f0] sm:$0xff]
    %v9000 = vld [vmem:[%s6 + $0x3f8] sm:$0xff]
    %v9001 = vld [vmem:[%s6 + $0x400] sm:$0xff]
    %v9002 = vld [vmem:[%s6 + $0x408] sm:$0xff]
    %v9003 = vld [vmem:[%s6 + $0x410] sm:$0xff]
    %v9004 = vld [vmem:[%s6 + $0x418] sm:$0xff]
    %v9005 = vld [vmem:[%s6 + $0x420] sm:$0x3f]
    %v9006 = vld [vmem:[%s6 + $0x428] sm:$0x3f]
    %v9007 = vld [vmem:[%s6 + $0x430] sm:$0x3f]
    %v9008 = vld [vmem:[%s6 + $0x438] sm:$0x3f]
    %v9009 = vld [vmem:[%s6 + $0x420] sm:$0xc0]
    %v9010 = vld [vmem:[%s6 + $0x428] sm:$0xc0]
    %v9011 = vld [vmem:[%s6 + $0x430] sm:$0xc0]
    %v9012 = vld [vmem:[%s6 + $0x438] sm:$0xc0]
    %v9013 = vld [vmem:[%s6 + $0x440] sm:$0xff]
    %v9014 = vld [vmem:[%s6 + $0x448] sm:$0xff]
    %v9015 = vld [vmem:[%s6 + $0x450] sm:$0xff]
    %v9016 = vld [vmem:[%s6 + $0x458] sm:$0xff]
    %v9017 = vld [vmem:[%s6 + $0x460] sm:$0xff]
    %v9018 = vld [vmem:[%s6 + $0x468] sm:$0xff]
    %v9019 = vld [vmem:[%s6 + $0x470] sm:$0xff]
    %v9020 = vld [vmem:[%s6 + $0x478] sm:$0xff]
    %v9021 = vld [vmem:[%s6 + $0x480] sm:$0xff]
    %v9022 = vld [vmem:[%s6 + $0x488] sm:$0xff]
    %v9023 = vld [vmem:[%s6 + $0x490] sm:$0xff]
    %v9024 = vld [vmem:[%s6 + $0x498] sm:$0xff]
    %v9025 = vld [vmem:[%s6 + $0x4a0] sm:$0xff]
    %v9026 = vld [vmem:[%s6 + $0x4a8] sm:$0xff]
    %v9027 = vld [vmem:[%s6 + $0x4b0] sm:$0xff]
    %v9028 = vld [vmem:[%s6 + $0x4b8] sm:$0xff]
    %v9029 = vld [vmem:[%s6 + $0x4c0] sm:$0xff]
    %v9030 = vld [vmem:[%s6 + $0x4c8] sm:$0xff]
    %v9031 = vld [vmem:[%s6 + $0x4d0] sm:$0xff]
    %v9032 = vld [vmem:[%s6 + $0x4d8] sm:$0xff]
    %v9033 = vld [vmem:[%s6 + $0x4e0] sm:$0xff]
    %v9034 = vld [vmem:[%s6 + $0x4e8] sm:$0xff]
    %v9035 = vld [vmem:[%s6 + $0x4f0] sm:$0xff]
    %v9036 = vld [vmem:[%s6 + $0x4f8] sm:$0xff]
    %v9037 = vld [vmem:[%s6 + $0x500] sm:$0xff]
    %v9038 = vld [vmem:[%s6 + $0x508] sm:$0xff]
    %v9039 = vld [vmem:[%s6 + $0x510] sm:$0xff]
    %v9040 = vld [vmem:[%s6 + $0x518] sm:$0xff]
    %v9041 = vld [vmem:[%s6 + $0x520] sm:$0xff]
    %v9042 = vld [vmem:[%s6 + $0x528] sm:$0xff]
    %v9043 = vld [vmem:[%s6 + $0x530] sm:$0xff]
    %v9044 = vld [vmem:[%s6 + $0x538] sm:$0xff]
    %v9045 = vld [vmem:[%s6 + $0x540] sm:$0xff]
    %v9046 = vld [vmem:[%s6 + $0x548] sm:$0xff]
    %v9047 = vld [vmem:[%s6 + $0x550] sm:$0xff]
    %v9048 = vld [vmem:[%s6 + $0x558] sm:$0xff]
    %v9049 = vld [vmem:[%s6 + $0x560] sm:$0xff]
    %v9050 = vld [vmem:[%s6 + $0x568] sm:$0xff]
    %v9051 = vld [vmem:[%s6 + $0x570] sm:$0xff]
    %v9052 = vld [vmem:[%s6 + $0x578] sm:$0xff]
    %v9053 = vld [vmem:[%s6 + $0x580] sm:$0xff]
    %v9054 = vld [vmem:[%s6 + $0x588] sm:$0xff]
    %v9055 = vld [vmem:[%s6 + $0x590] sm:$0xff]
    %v9056 = vld [vmem:[%s6 + $0x598] sm:$0xff]
    %v9057 = vld [vmem:[%s6 + $0x5a0] sm:$0xff]
    %v9058 = vld [vmem:[%s6 + $0x5a8] sm:$0xff]
    %v9059 = vld [vmem:[%s6 + $0x5b0] sm:$0xff]
    %v9060 = vld [vmem:[%s6 + $0x5b8] sm:$0xff]
    %v9061 = vld [vmem:[%s6 + $0x5c0] sm:$0xff]
    %v9062 = vld [vmem:[%s6 + $0x5c8] sm:$0xff]
    %v9063 = vld [vmem:[%s6 + $0x5d0] sm:$0xff]
    %v9064 = vld [vmem:[%s6 + $0x5d8] sm:$0xff]
    %v9065 = vld [vmem:[%s6 + $0x5e0] sm:$0xff]
    %v9066 = vld [vmem:[%s6 + $0x5e8] sm:$0xff]
    %v9067 = vld [vmem:[%s6 + $0x5f0] sm:$0xff]
    %v9068 = vld [vmem:[%s6 + $0x5f8] sm:$0xff]
    %v9069 = vld [vmem:[%s6 + $0x600] sm:$0xff]
    %v9070 = vld [vmem:[%s6 + $0x608] sm:$0xff]
    %v9071 = vld [vmem:[%s6 + $0x610] sm:$0xff]
    %v9072 = vld [vmem:[%s6 + $0x618] sm:$0xff]
    %v9073 = vld [vmem:[%s6 + $0x620] sm:$0xff]
    %v9074 = vld [vmem:[%s6 + $0x628] sm:$0xff]
    %v9075 = vld [vmem:[%s6 + $0x630] sm:$0xff]
    %v9076 = vld [vmem:[%s6 + $0x638] sm:$0xff]
    %v9077 = vld [vmem:[%s6 + $0x640] sm:$0xff]
    %v9078 = vld [vmem:[%s6 + $0x648] sm:$0xff]
    %v9079 = vld [vmem:[%s6 + $0x650] sm:$0xff]
    %v9080 = vld [vmem:[%s6 + $0x658] sm:$0xff]
    %v9081 = vld [vmem:[%s6 + $0x660] sm:$0xff]
    %v9082 = vld [vmem:[%s6 + $0x668] sm:$0xff]
    %v9083 = vld [vmem:[%s6 + $0x670] sm:$0xff]
    %v9084 = vld [vmem:[%s6 + $0x678] sm:$0xff]
    %v9085 = vld [vmem:[%s6 + $0x680] sm:$0xff]
    %v9086 = vld [vmem:[%s6 + $0x688] sm:$0xff]
    %v9087 = vld [vmem:[%s6 + $0x690] sm:$0xff]
    %v9088 = vld [vmem:[%s6 + $0x698] sm:$0xff]
    %v9089 = vld [vmem:[%s6 + $0x6a0] sm:$0xff]
    %v9090 = vld [vmem:[%s6 + $0x6a8] sm:$0xff]
    %v9091 = vld [vmem:[%s6 + $0x6b0] sm:$0xff]
    %v9092 = vld [vmem:[%s6 + $0x6b8] sm:$0xff]
    %v9093 = vld [vmem:[%s6 + $0x6c0] sm:$0xff]
    %v9094 = vld [vmem:[%s6 + $0x6c8] sm:$0xff]
    %v9095 = vld [vmem:[%s6 + $0x6d0] sm:$0xff]
    %v9096 = vld [vmem:[%s6 + $0x6d8] sm:$0xff]
    %v9097 = vld [vmem:[%s6 + $0x6e0] sm:$0xff]
    %v9098 = vld [vmem:[%s6 + $0x6e8] sm:$0xff]
    %v9099 = vld [vmem:[%s6 + $0x6f0] sm:$0xff]
    %v9100 = vld [vmem:[%s6 + $0x6f8] sm:$0xff]
    %v9101 = vld [vmem:[%s6 + $0x700] sm:$0xff]
    %v9102 = vld [vmem:[%s6 + $0x708] sm:$0xff]
    %v9103 = vld [vmem:[%s6 + $0x710] sm:$0xff]
    %v9104 = vld [vmem:[%s6 + $0x718] sm:$0xff]
    %v9105 = vld [vmem:[%s6 + $0x720] sm:$0xff]
    %v9106 = vld [vmem:[%s6 + $0x728] sm:$0xff]
    %v9107 = vld [vmem:[%s6 + $0x730] sm:$0xff]
    %v9108 = vld [vmem:[%s6 + $0x738] sm:$0xff]
    %v9109 = vld [vmem:[%s6 + $0x740] sm:$0xff]
    %v9110 = vld [vmem:[%s6 + $0x748] sm:$0xff]
    %v9111 = vld [vmem:[%s6 + $0x750] sm:$0xff]
    %v9112 = vld [vmem:[%s6 + $0x758] sm:$0xff]
    %v9113 = vld [vmem:[%s6 + $0x760] sm:$0xff]
    %v9114 = vld [vmem:[%s6 + $0x768] sm:$0xff]
    %v9115 = vld [vmem:[%s6 + $0x770] sm:$0xff]
    %v9116 = vld [vmem:[%s6 + $0x778] sm:$0xff]
    %v9117 = vld [vmem:[%s6 + $0x780] sm:$0xff]
    %v9118 = vld [vmem:[%s6 + $0x788] sm:$0xff]
    %v9119 = vld [vmem:[%s6 + $0x790] sm:$0xff]
    %v9120 = vld [vmem:[%s6 + $0x798] sm:$0xff]
    %v9121 = vld [vmem:[%s6 + $0x7a0] sm:$0xff]
    %v9122 = vld [vmem:[%s6 + $0x7a8] sm:$0xff]
    %v9123 = vld [vmem:[%s6 + $0x7b0] sm:$0xff]
    %v9124 = vld [vmem:[%s6 + $0x7b8] sm:$0xff]
    %v9125 = vld [vmem:[%s6 + $0x7c0] sm:$0xff]
    %v9126 = vld [vmem:[%s6 + $0x7c8] sm:$0xff]
    %v9127 = vld [vmem:[%s6 + $0x7d0] sm:$0xff]
    %v9128 = vld [vmem:[%s6 + $0x7d8] sm:$0xff]
    %v9129 = vld [vmem:[%s6 + $0x7e0] sm:$0xff]
    %v9130 = vld [vmem:[%s6 + $0x7e8] sm:$0xff]
    %v9131 = vld [vmem:[%s6 + $0x7f0] sm:$0xff]
    %v9132 = vld [vmem:[%s6 + $0x7f8] sm:$0xff]
    %v9133 = vld [vmem:[%s6 + $0x800] sm:$0xff]
    %v9134 = vld [vmem:[%s6 + $0x808] sm:$0xff]
    %v9135 = vld [vmem:[%s6 + $0x810] sm:$0xff]
    %v9136 = vld [vmem:[%s6 + $0x818] sm:$0xff]
    %v9137 = vld [vmem:[%s6 + $0x820] sm:$0xff]
    %v9138 = vld [vmem:[%s6 + $0x828] sm:$0xff]
    %v9139 = vld [vmem:[%s6 + $0x830] sm:$0xff]
    %v9140 = vld [vmem:[%s6 + $0x838] sm:$0xff]
    %v9141 = vld [vmem:[%s6 + $0x840] sm:$0xff]
    %v9142 = vld [vmem:[%s6 + $0x848] sm:$0xff]
    %v9143 = vld [vmem:[%s6 + $0x850] sm:$0xff]
    %v9144 = vld [vmem:[%s6 + $0x858] sm:$0xff]
    %v9145 = vld [vmem:[%s6 + $0x860] sm:$0xf]
    %v9146 = vld [vmem:[%s6 + $0x868] sm:$0xf]
    %v9147 = vld [vmem:[%s6 + $0x870] sm:$0xf]
    %v9148 = vld [vmem:[%s6 + $0x878] sm:$0xf]
    %v9152 = vrot.slane %v8870, 1
    %v9153 = vrot.slane %v8871, 1
    %v9154 = vrot.slane %v8872, 1
    %v9297 = vrot.slane %v9009, 6
    %v9298 = vrot.slane %v9013, 6
    %v9299 = vsel %vm3167, %v9297, %v9298
    %v9300 = vrot.slane %v9010, 6
    %v9301 = vrot.slane %v9014, 6
    %v9302 = vsel %vm3167, %v9300, %v9301
    %v9303 = vrot.slane %v9011, 6
    %v9304 = vrot.slane %v9015, 6
    %v9305 = vsel %vm3167, %v9303, %v9304
    %v9306 = vrot.slane %v9012, 6
    %v9307 = vrot.slane %v9016, 6
    %v9308 = vsel %vm3167, %v9306, %v9307
    %v9309 = vrot.slane %v9017, 6
    %v9310 = vsel %vm3167, %v9298, %v9309
    %v9311 = vrot.slane %v9018, 6
    %v9312 = vsel %vm3167, %v9301, %v9311
    %v9313 = vrot.slane %v9019, 6
    %v9314 = vsel %vm3167, %v9304, %v9313
    %v9315 = vrot.slane %v9020, 6
    %v9316 = vsel %vm3167, %v9307, %v9315
    %v9317 = vrot.slane %v9021, 6
    %v9318 = vsel %vm3167, %v9309, %v9317
    %v9319 = vrot.slane %v9022, 6
    %v9320 = vsel %vm3167, %v9311, %v9319
    %v9321 = vrot.slane %v9023, 6
    %v9322 = vsel %vm3167, %v9313, %v9321
    %v9323 = vrot.slane %v9024, 6
    %v9324 = vsel %vm3167, %v9315, %v9323
    %v9325 = vrot.slane %v9025, 6
    %v9326 = vsel %vm3167, %v9317, %v9325
    %v9327 = vrot.slane %v9026, 6
    %v9328 = vsel %vm3167, %v9319, %v9327
    %v9329 = vrot.slane %v9027, 6
    %v9330 = vsel %vm3167, %v9321, %v9329
    %v9331 = vrot.slane %v9028, 6
    %v9332 = vsel %vm3167, %v9323, %v9331
    %v9333 = vrot.slane %v9029, 6
    %v9334 = vsel %vm3167, %v9325, %v9333
    %v9335 = vrot.slane %v9030, 6
    %v9336 = vsel %vm3167, %v9327, %v9335
    %v9337 = vrot.slane %v9031, 6
    %v9338 = vsel %vm3167, %v9329, %v9337
    %v9339 = vrot.slane %v9032, 6
    %v9340 = vsel %vm3167, %v9331, %v9339
    %v9341 = vrot.slane %v9033, 6
    %v9342 = vsel %vm3167, %v9333, %v9341
    %v9343 = vrot.slane %v9034, 6
    %v9344 = vsel %vm3167, %v9335, %v9343
    %v9345 = vrot.slane %v9035, 6
    %v9346 = vsel %vm3167, %v9337, %v9345
    %v9347 = vrot.slane %v9036, 6
    %v9348 = vsel %vm3167, %v9339, %v9347
    %v9349 = vrot.slane %v9037, 6
    %v9350 = vsel %vm3167, %v9341, %v9349
    %v9351 = vrot.slane %v9038, 6
    %v9352 = vsel %vm3167, %v9343, %v9351
    %v9353 = vrot.slane %v9039, 6
    %v9354 = vsel %vm3167, %v9345, %v9353
    %v9355 = vrot.slane %v9040, 6
    %v9356 = vsel %vm3167, %v9347, %v9355
    %v9357 = vrot.slane %v9041, 6
    %v9358 = vsel %vm3167, %v9349, %v9357
    %v9359 = vrot.slane %v9042, 6
    %v9360 = vsel %vm3167, %v9351, %v9359
    %v9361 = vrot.slane %v9043, 6
    %v9362 = vsel %vm3167, %v9353, %v9361
    %v9363 = vrot.slane %v9044, 6
    %v9364 = vsel %vm3167, %v9355, %v9363
    %v9365 = vrot.slane %v9045, 6
    %v9366 = vsel %vm3167, %v9357, %v9365
    %v9367 = vrot.slane %v9046, 6
    %v9368 = vsel %vm3167, %v9359, %v9367
    %v9369 = vrot.slane %v9047, 6
    %v9370 = vsel %vm3167, %v9361, %v9369
    %v9371 = vrot.slane %v9048, 6
    %v9372 = vsel %vm3167, %v9363, %v9371
    %v9373 = vrot.slane %v9049, 6
    %v9374 = vsel %vm3167, %v9365, %v9373
    %v9375 = vrot.slane %v9050, 6
    %v9376 = vsel %vm3167, %v9367, %v9375
    %v9377 = vrot.slane %v9051, 6
    %v9378 = vsel %vm3167, %v9369, %v9377
    %v9379 = vrot.slane %v9052, 6
    %v9380 = vsel %vm3167, %v9371, %v9379
    %v9381 = vrot.slane %v9053, 6
    %v9382 = vsel %vm3167, %v9373, %v9381
    %v9383 = vrot.slane %v9054, 6
    %v9384 = vsel %vm3167, %v9375, %v9383
    %v9385 = vrot.slane %v9055, 6
    %v9386 = vsel %vm3167, %v9377, %v9385
    %v9387 = vrot.slane %v9056, 6
    %v9388 = vsel %vm3167, %v9379, %v9387
    %v9389 = vrot.slane %v9057, 6
    %v9390 = vsel %vm3167, %v9381, %v9389
    %v9391 = vrot.slane %v9058, 6
    %v9392 = vsel %vm3167, %v9383, %v9391
    %v9393 = vrot.slane %v9059, 6
    %v9394 = vsel %vm3167, %v9385, %v9393
    %v9395 = vrot.slane %v9060, 6
    %v9396 = vsel %vm3167, %v9387, %v9395
    %v9397 = vrot.slane %v9061, 6
    %v9398 = vsel %vm3167, %v9389, %v9397
    %v9399 = vrot.slane %v9062, 6
    %v9400 = vsel %vm3167, %v9391, %v9399
    %v9401 = vrot.slane %v9063, 6
    %v9402 = vsel %vm3167, %v9393, %v9401
    %v9403 = vrot.slane %v9064, 6
    %v9404 = vsel %vm3167, %v9395, %v9403
    %v9405 = vrot.slane %v9065, 6
    %v9406 = vsel %vm3167, %v9397, %v9405
    %v9407 = vrot.slane %v9066, 6
    %v9408 = vsel %vm3167, %v9399, %v9407
    %v9409 = vrot.slane %v9067, 6
    %v9410 = vsel %vm3167, %v9401, %v9409
    %v9411 = vrot.slane %v9068, 6
    %v9412 = vsel %vm3167, %v9403, %v9411
    %v9413 = vrot.slane %v9069, 6
    %v9414 = vsel %vm3167, %v9405, %v9413
    %v9415 = vrot.slane %v9070, 6
    %v9416 = vsel %vm3167, %v9407, %v9415
    %v9417 = vrot.slane %v9071, 6
    %v9418 = vsel %vm3167, %v9409, %v9417
    %v9419 = vrot.slane %v9072, 6
    %v9420 = vsel %vm3167, %v9411, %v9419
    %v9421 = vrot.slane %v9073, 6
    %v9422 = vsel %vm3167, %v9413, %v9421
    %v9423 = vrot.slane %v9074, 6
    %v9424 = vsel %vm3167, %v9415, %v9423
    %v9425 = vrot.slane %v9075, 6
    %v9426 = vsel %vm3167, %v9417, %v9425
    %v9427 = vrot.slane %v9076, 6
    %v9428 = vsel %vm3167, %v9419, %v9427
    %v9429 = vrot.slane %v9077, 6
    %v9430 = vsel %vm3167, %v9421, %v9429
    %v9431 = vrot.slane %v9078, 6
    %v9432 = vsel %vm3167, %v9423, %v9431
    %v9433 = vrot.slane %v9079, 6
    %v9434 = vsel %vm3167, %v9425, %v9433
    %v9435 = vrot.slane %v9080, 6
    %v9436 = vsel %vm3167, %v9427, %v9435
    %v9437 = vrot.slane %v9081, 6
    %v9438 = vsel %vm3167, %v9429, %v9437
    %v9439 = vrot.slane %v9082, 6
    %v9440 = vsel %vm3167, %v9431, %v9439
    %v9441 = vrot.slane %v9083, 6
    %v9442 = vsel %vm3167, %v9433, %v9441
    %v9443 = vrot.slane %v9084, 6
    %v9444 = vsel %vm3167, %v9435, %v9443
    %v9445 = vrot.slane %v9085, 6
    %v9446 = vsel %vm3167, %v9437, %v9445
    %v9447 = vrot.slane %v9086, 6
    %v9448 = vsel %vm3167, %v9439, %v9447
    %v9449 = vrot.slane %v9087, 6
    %v9450 = vsel %vm3167, %v9441, %v9449
    %v9451 = vrot.slane %v9088, 6
    %v9452 = vsel %vm3167, %v9443, %v9451
    %v9453 = vrot.slane %v9089, 6
    %v9454 = vsel %vm3167, %v9445, %v9453
    %v9455 = vrot.slane %v9090, 6
    %v9456 = vsel %vm3167, %v9447, %v9455
    %v9457 = vrot.slane %v9091, 6
    %v9458 = vsel %vm3167, %v9449, %v9457
    %v9459 = vrot.slane %v9092, 6
    %v9460 = vsel %vm3167, %v9451, %v9459
    %v9461 = vrot.slane %v9093, 6
    %v9462 = vsel %vm3167, %v9453, %v9461
    %v9463 = vrot.slane %v9094, 6
    %v9464 = vsel %vm3167, %v9455, %v9463
    %v9465 = vrot.slane %v9095, 6
    %v9466 = vsel %vm3167, %v9457, %v9465
    %v9467 = vrot.slane %v9096, 6
    %v9468 = vsel %vm3167, %v9459, %v9467
    %v9469 = vrot.slane %v9097, 6
    %v9470 = vsel %vm3167, %v9461, %v9469
    %v9471 = vrot.slane %v9098, 6
    %v9472 = vsel %vm3167, %v9463, %v9471
    %v9473 = vrot.slane %v9099, 6
    %v9474 = vsel %vm3167, %v9465, %v9473
    %v9475 = vrot.slane %v9100, 6
    %v9476 = vsel %vm3167, %v9467, %v9475
    %v9477 = vrot.slane %v9101, 6
    %v9478 = vsel %vm3167, %v9469, %v9477
    %v9479 = vrot.slane %v9102, 6
    %v9480 = vsel %vm3167, %v9471, %v9479
    %v9481 = vrot.slane %v9103, 6
    %v9482 = vsel %vm3167, %v9473, %v9481
    %v9483 = vrot.slane %v9104, 6
    %v9484 = vsel %vm3167, %v9475, %v9483
    %v9485 = vrot.slane %v9105, 6
    %v9486 = vsel %vm3167, %v9477, %v9485
    %v9487 = vrot.slane %v9106, 6
    %v9488 = vsel %vm3167, %v9479, %v9487
    %v9489 = vrot.slane %v9107, 6
    %v9490 = vsel %vm3167, %v9481, %v9489
    %v9491 = vrot.slane %v9108, 6
    %v9492 = vsel %vm3167, %v9483, %v9491
    %v9493 = vrot.slane %v9109, 6
    %v9494 = vsel %vm3167, %v9485, %v9493
    %v9495 = vrot.slane %v9110, 6
    %v9496 = vsel %vm3167, %v9487, %v9495
    %v9497 = vrot.slane %v9111, 6
    %v9498 = vsel %vm3167, %v9489, %v9497
    %v9499 = vrot.slane %v9112, 6
    %v9500 = vsel %vm3167, %v9491, %v9499
    %v9501 = vrot.slane %v9113, 6
    %v9502 = vsel %vm3167, %v9493, %v9501
    %v9503 = vrot.slane %v9114, 6
    %v9504 = vsel %vm3167, %v9495, %v9503
    %v9505 = vrot.slane %v9115, 6
    %v9506 = vsel %vm3167, %v9497, %v9505
    %v9507 = vrot.slane %v9116, 6
    %v9508 = vsel %vm3167, %v9499, %v9507
    %v9509 = vrot.slane %v9117, 6
    %v9510 = vsel %vm3167, %v9501, %v9509
    %v9511 = vrot.slane %v9118, 6
    %v9512 = vsel %vm3167, %v9503, %v9511
    %v9513 = vrot.slane %v9119, 6
    %v9514 = vsel %vm3167, %v9505, %v9513
    %v9515 = vrot.slane %v9120, 6
    %v9516 = vsel %vm3167, %v9507, %v9515
    %v9517 = vrot.slane %v9121, 6
    %v9518 = vsel %vm3167, %v9509, %v9517
    %v9519 = vrot.slane %v9122, 6
    %v9520 = vsel %vm3167, %v9511, %v9519
    %v9521 = vrot.slane %v9123, 6
    %v9522 = vsel %vm3167, %v9513, %v9521
    %v9523 = vrot.slane %v9124, 6
    %v9524 = vsel %vm3167, %v9515, %v9523
    %v9525 = vrot.slane %v9125, 6
    %v9526 = vsel %vm3167, %v9517, %v9525
    %v9527 = vrot.slane %v9126, 6
    %v9528 = vsel %vm3167, %v9519, %v9527
    %v9529 = vrot.slane %v9127, 6
    %v9530 = vsel %vm3167, %v9521, %v9529
    %v9531 = vrot.slane %v9128, 6
    %v9532 = vsel %vm3167, %v9523, %v9531
    %v9533 = vrot.slane %v9129, 6
    %v9534 = vsel %vm3167, %v9525, %v9533
    %v9535 = vrot.slane %v9130, 6
    %v9536 = vsel %vm3167, %v9527, %v9535
    %v9537 = vrot.slane %v9131, 6
    %v9538 = vsel %vm3167, %v9529, %v9537
    %v9539 = vrot.slane %v9132, 6
    %v9540 = vsel %vm3167, %v9531, %v9539
    %v9541 = vrot.slane %v9133, 6
    %v9542 = vsel %vm3167, %v9533, %v9541
    %v9543 = vrot.slane %v9134, 6
    %v9544 = vsel %vm3167, %v9535, %v9543
    %v9545 = vrot.slane %v9135, 6
    %v9546 = vsel %vm3167, %v9537, %v9545
    %v9547 = vrot.slane %v9136, 6
    %v9548 = vsel %vm3167, %v9539, %v9547
    %v9549 = vrot.slane %v9137, 6
    %v9550 = vsel %vm3167, %v9541, %v9549
    %v9551 = vrot.slane %v9138, 6
    %v9552 = vsel %vm3167, %v9543, %v9551
    %v9553 = vrot.slane %v9139, 6
    %v9554 = vsel %vm3167, %v9545, %v9553
    %v9555 = vrot.slane %v9140, 6
    %v9556 = vsel %vm3167, %v9547, %v9555
    %v9557 = vrot.slane %v9141, 6
    %v9558 = vsel %vm3167, %v9549, %v9557
    %v9559 = vrot.slane %v9142, 6
    %v9560 = vsel %vm3167, %v9551, %v9559
    %v9561 = vrot.slane %v9143, 6
    %v9562 = vsel %vm3167, %v9553, %v9561
    %v9563 = vrot.slane %v9144, 6
    %v9564 = vsel %vm3167, %v9555, %v9563
    %v9565 = vrot.slane %v9145, 6
    %v9566 = vsel %vm3167, %v9557, %v9565
    %v9567 = vrot.slane %v9146, 6
    %v9568 = vsel %vm3167, %v9559, %v9567
    %v9569 = vrot.slane %v9147, 6
    %v9570 = vsel %vm3167, %v9561, %v9569
    %v9571 = vrot.slane %v9148, 6
    %v9572 = vsel %vm3167, %v9563, %v9571
    %v9705 = vsel %vm1825, %v9154, 0
    %v9707 = vsel %vm415, %v9566, 0
    %v9709 = vsel %vm415, %v9568, 0
    %v9711 = vsel %vm415, %v9570, 0
    %v9713 = vsel %vm415, %v9572, 0
    %9715 = vmatprep.subr.mxu0 %v9424
    %9716 = vmatpush1.msra.mxu0 %v9422
    %9717 = vmatprep.subr.mxu0 %v9416
    %9718 = vmatpush1.msra.mxu0 %v9414
    %9719 = vmatprep.subr.mxu0 %v9408
    %9720 = vmatpush1.msra.mxu0 %v9406
    %9721 = vmatprep.subr.mxu0 %v9400
    %9722 = vmatpush1.msra.mxu0 %v9398
    %9723 = vmatprep.subr.mxu0 %v9392
    %9724 = vmatpush1.msra.mxu0 %v9390
    %9725 = vmatprep.subr.mxu0 %v9384
    %9726 = vmatpush1.msra.mxu0 %v9382
    %9727 = vmatprep.subr.mxu0 %v9376
    %9728 = vmatpush1.msra.mxu0 %v9374
    %9729 = vmatprep.subr.mxu0 %v9368
    %9730 = vmatpush1.msra.mxu0 %v9366
    %9731 = vmatprep.subr.mxu0 %v9360
    %9732 = vmatpush1.msra.mxu0 %v9358
    %9733 = vmatprep.subr.mxu0 %v9352
    %9734 = vmatpush1.msra.mxu0 %v9350
    %9735 = vmatprep.subr.mxu0 %v9344
    %9736 = vmatpush1.msra.mxu0 %v9342
    %9737 = vmatprep.subr.mxu0 %v9336
    %9738 = vmatpush1.msra.mxu0 %v9334
    %9739 = vmatprep.subr.mxu0 %v9328
    %9740 = vmatpush1.msra.mxu0 %v9326
    %9741 = vmatprep.subr.mxu0 %v9320
    %9742 = vmatpush1.msra.mxu0 %v9318
    %9743 = vmatprep.subr.mxu0 %v9312
    %9744 = vmatpush1.msra.mxu0 %v9310
    %9745 = vmatprep.subr.mxu0 %v9302
    %9746 = vmatpush1.msra.mxu0 %v9299
    %9747 = vmatprep.subr.mxu0 %v9552
    %9748 = vmatpush2.msra.mxu0 %v9550
    %9749 = vmatprep.subr.mxu0 %v9544
    %9750 = vmatpush2.msra.mxu0 %v9542
    %9751 = vmatprep.subr.mxu0 %v9536
    %9752 = vmatpush2.msra.mxu0 %v9534
    %9753 = vmatprep.subr.mxu0 %v9528
    %9754 = vmatpush2.msra.mxu0 %v9526
    %9755 = vmatprep.subr.mxu0 %v9520
    %9756 = vmatpush2.msra.mxu0 %v9518
    %9757 = vmatprep.subr.mxu0 %v9512
    %9758 = vmatpush2.msra.mxu0 %v9510
    %9759 = vmatprep.subr.mxu0 %v9504
    %9760 = vmatpush2.msra.mxu0 %v9502
    %9761 = vmatprep.subr.mxu0 %v9496
    %9762 = vmatpush2.msra.mxu0 %v9494
    %9763 = vmatprep.subr.mxu0 %v9488
    %9764 = vmatpush2.msra.mxu0 %v9486
    %9765 = vmatprep.subr.mxu0 %v9480
    %9766 = vmatpush2.msra.mxu0 %v9478
    %9767 = vmatprep.subr.mxu0 %v9472
    %9768 = vmatpush2.msra.mxu0 %v9470
    %9769 = vmatprep.subr.mxu0 %v9464
    %9770 = vmatpush2.msra.mxu0 %v9462
    %9771 = vmatprep.subr.mxu0 %v9456
    %9772 = vmatpush2.msra.mxu0 %v9454
    %9773 = vmatprep.subr.mxu0 %v9448
    %9774 = vmatpush2.msra.mxu0 %v9446
    %9775 = vmatprep.subr.mxu0 %v9440
    %9776 = vmatpush2.msra.mxu0 %v9438
    %9777 = vmatprep.subr.mxu0 %v9432
    %9778 = vmatpush2.msra.mxu0 %v9430
    %9779 = vmatprep.mubr.f32.mxu0 %v9153
    %9780 = vmatmul.mubr.f32.gmra.mxu0 %v9152
    %v9781 = vpop.f32.mrf.mxu0
    %v9782 = vadd.f32 0.0, %v9781
    %v9783 = vpop.f32.mrf.mxu0
    %v9784 = vadd.f32 0.0, %v9783
    %9785 = vdwg.mxu0
    %9786 = vmatprep.subr.mxu0 0.0
    %9787 = vmatpush1.msra.mxu0 0.0
    %9788 = vmatprep.subr.mxu0 0.0
    %9789 = vmatpush1.msra.mxu0 0.0
    %9790 = vmatprep.subr.mxu0 0.0
    %9791 = vmatpush1.msra.mxu0 0.0
    %9792 = vmatprep.subr.mxu0 0.0
    %9793 = vmatpush1.msra.mxu0 0.0
    %9794 = vmatprep.subr.mxu0 0.0
    %9795 = vmatpush1.msra.mxu0 0.0
    %9796 = vmatprep.subr.mxu0 0.0
    %9797 = vmatpush1.msra.mxu0 0.0
    %9798 = vmatprep.subr.mxu0 0.0
    %9799 = vmatpush1.msra.mxu0 0.0
    %9800 = vmatprep.subr.mxu0 0.0
    %9801 = vmatpush1.msra.mxu0 0.0
    %9802 = vmatprep.subr.mxu0 0.0
    %9803 = vmatpush1.msra.mxu0 0.0
    %9804 = vmatprep.subr.mxu0 0.0
    %9805 = vmatpush1.msra.mxu0 0.0
    %9806 = vmatprep.subr.mxu0 0.0
    %9807 = vmatpush1.msra.mxu0 0.0
    %9808 = vmatprep.subr.mxu0 0.0
    %9809 = vmatpush1.msra.mxu0 0.0
    %9810 = vmatprep.subr.mxu0 0.0
    %9811 = vmatpush1.msra.mxu0 0.0
    %9812 = vmatprep.subr.mxu0 0.0
    %9813 = vmatpush1.msra.mxu0 0.0
    %9814 = vmatprep.subr.mxu0 %v9709
    %9815 = vmatpush1.msra.mxu0 %v9707
    %9816 = vmatprep.subr.mxu0 %v9560
    %9817 = vmatpush1.msra.mxu0 %v9558
    %9818 = vmatprep.subr.mxu0 0.0
    %9819 = vmatpush2.msra.mxu0 0.0
    %9820 = vmatprep.subr.mxu0 0.0
    %9821 = vmatpush2.msra.mxu0 0.0
    %9822 = vmatprep.subr.mxu0 0.0
    %9823 = vmatpush2.msra.mxu0 0.0
    %9824 = vmatprep.subr.mxu0 0.0
    %9825 = vmatpush2.msra.mxu0 0.0
    %9826 = vmatprep.subr.mxu0 0.0
    %9827 = vmatpush2.msra.mxu0 0.0
    %9828 = vmatprep.subr.mxu0 0.0
    %9829 = vmatpush2.msra.mxu0 0.0
    %9830 = vmatprep.subr.mxu0 0.0
    %9831 = vmatpush2.msra.mxu0 0.0
    %9832 = vmatprep.subr.mxu0 0.0
    %9833 = vmatpush2.msra.mxu0 0.0
    %9834 = vmatprep.subr.mxu0 0.0
    %9835 = vmatpush2.msra.mxu0 0.0
    %9836 = vmatprep.subr.mxu0 0.0
    %9837 = vmatpush2.msra.mxu0 0.0
    %9838 = vmatprep.subr.mxu0 0.0
    %9839 = vmatpush2.msra.mxu0 0.0
    %9840 = vmatprep.subr.mxu0 0.0
    %9841 = vmatpush2.msra.mxu0 0.0
    %9842 = vmatprep.subr.mxu0 0.0
    %9843 = vmatpush2.msra.mxu0 0.0
    %9844 = vmatprep.subr.mxu0 0.0
    %9845 = vmatpush2.msra.mxu0 0.0
    %9846 = vmatprep.subr.mxu0 0.0
    %9847 = vmatpush2.msra.mxu0 0.0
    %9848 = vmatprep.subr.mxu0 0.0
    %9849 = vmatpush2.msra.mxu0 0.0
    %9850 = vmatprep.mubr.f32.mxu0 0.0
    %9851 = vmatmul.mubr.f32.gmra.mxu0 %v9705
    %v9852 = vpop.f32.mrf.mxu0
    %v9853 = vadd.f32 %v9782, %v9852
    %v9854 = vpop.f32.mrf.mxu0
    %v9855 = vadd.f32 %v9784, %v9854
    %9856 = vdwg.mxu0
    %9857 = vmatprep.subr.mxu0 %v9428
    %9858 = vmatpush1.msra.mxu0 %v9426
    %9859 = vmatprep.subr.mxu0 %v9420
    %9860 = vmatpush1.msra.mxu0 %v9418
    %9861 = vmatprep.subr.mxu0 %v9412
    %9862 = vmatpush1.msra.mxu0 %v9410
    %9863 = vmatprep.subr.mxu0 %v9404
    %9864 = vmatpush1.msra.mxu0 %v9402
    %9865 = vmatprep.subr.mxu0 %v9396
    %9866 = vmatpush1.msra.mxu0 %v9394
    %9867 = vmatprep.subr.mxu0 %v9388
    %9868 = vmatpush1.msra.mxu0 %v9386
    %9869 = vmatprep.subr.mxu0 %v9380
    %9870 = vmatpush1.msra.mxu0 %v9378
    %9871 = vmatprep.subr.mxu0 %v9372
    %9872 = vmatpush1.msra.mxu0 %v9370
    %9873 = vmatprep.subr.mxu0 %v9364
    %9874 = vmatpush1.msra.mxu0 %v9362
    %9875 = vmatprep.subr.mxu0 %v9356
    %9876 = vmatpush1.msra.mxu0 %v9354
    %9877 = vmatprep.subr.mxu0 %v9348
    %9878 = vmatpush1.msra.mxu0 %v9346
    %9879 = vmatprep.subr.mxu0 %v9340
    %9880 = vmatpush1.msra.mxu0 %v9338
    %9881 = vmatprep.subr.mxu0 %v9332
    %9882 = vmatpush1.msra.mxu0 %v9330
    %9883 = vmatprep.subr.mxu0 %v9324
    %9884 = vmatpush1.msra.mxu0 %v9322
    %9885 = vmatprep.subr.mxu0 %v9316
    %9886 = vmatpush1.msra.mxu0 %v9314
    %9887 = vmatprep.subr.mxu0 %v9308
    %9888 = vmatpush1.msra.mxu0 %v9305
    %9889 = vmatprep.subr.mxu0 %v9556
    %9890 = vmatpush2.msra.mxu0 %v9554
    %9891 = vmatprep.subr.mxu0 %v9548
    %9892 = vmatpush2.msra.mxu0 %v9546
    %9893 = vmatprep.subr.mxu0 %v9540
    %9894 = vmatpush2.msra.mxu0 %v9538
    %9895 = vmatprep.subr.mxu0 %v9532
    %9896 = vmatpush2.msra.mxu0 %v9530
    %9897 = vmatprep.subr.mxu0 %v9524
    %9898 = vmatpush2.msra.mxu0 %v9522
    %9899 = vmatprep.subr.mxu0 %v9516
    %9900 = vmatpush2.msra.mxu0 %v9514
    %9901 = vmatprep.subr.mxu0 %v9508
    %9902 = vmatpush2.msra.mxu0 %v9506
    %9903 = vmatprep.subr.mxu0 %v9500
    %9904 = vmatpush2.msra.mxu0 %v9498
    %9905 = vmatprep.subr.mxu0 %v9492
    %9906 = vmatpush2.msra.mxu0 %v9490
    %9907 = vmatprep.subr.mxu0 %v9484
    %9908 = vmatpush2.msra.mxu0 %v9482
    %9909 = vmatprep.subr.mxu0 %v9476
    %9910 = vmatpush2.msra.mxu0 %v9474
    %9911 = vmatprep.subr.mxu0 %v9468
    %9912 = vmatpush2.msra.mxu0 %v9466
    %9913 = vmatprep.subr.mxu0 %v9460
    %9914 = vmatpush2.msra.mxu0 %v9458
    %9915 = vmatprep.subr.mxu0 %v9452
    %9916 = vmatpush2.msra.mxu0 %v9450
    %9917 = vmatprep.subr.mxu0 %v9444
    %9918 = vmatpush2.msra.mxu0 %v9442
    %9919 = vmatprep.subr.mxu0 %v9436
    %9920 = vmatpush2.msra.mxu0 %v9434
    %9921 = vmatprep.mubr.f32.mxu0 %v9153
    %9922 = vmatmul.mubr.f32.gmra.mxu0 %v9152
    %v9923 = vpop.f32.mrf.mxu0
    %v9924 = vadd.f32 0.0, %v9923
    %v9925 = vpop.f32.mrf.mxu0
    %v9926 = vadd.f32 0.0, %v9925
    %9927 = vdwg.mxu0
    %9928 = vmatprep.subr.mxu0 0.0
    %9929 = vmatpush1.msra.mxu0 0.0
    %9930 = vmatprep.subr.mxu0 0.0
    %9931 = vmatpush1.msra.mxu0 0.0
    %9932 = vmatprep.subr.mxu0 0.0
    %9933 = vmatpush1.msra.mxu0 0.0
    %9934 = vmatprep.subr.mxu0 0.0
    %9935 = vmatpush1.msra.mxu0 0.0
    %9936 = vmatprep.subr.mxu0 0.0
    %9937 = vmatpush1.msra.mxu0 0.0
    %9938 = vmatprep.subr.mxu0 0.0
    %9939 = vmatpush1.msra.mxu0 0.0
    %9940 = vmatprep.subr.mxu0 0.0
    %9941 = vmatpush1.msra.mxu0 0.0
    %9942 = vmatprep.subr.mxu0 0.0
    %9943 = vmatpush1.msra.mxu0 0.0
    %9944 = vmatprep.subr.mxu0 0.0
    %9945 = vmatpush1.msra.mxu0 0.0
    %9946 = vmatprep.subr.mxu0 0.0
    %9947 = vmatpush1.msra.mxu0 0.0
    %9948 = vmatprep.subr.mxu0 0.0
    %9949 = vmatpush1.msra.mxu0 0.0
    %9950 = vmatprep.subr.mxu0 0.0
    %9951 = vmatpush1.msra.mxu0 0.0
    %9952 = vmatprep.subr.mxu0 0.0
    %9953 = vmatpush1.msra.mxu0 0.0
    %9954 = vmatprep.subr.mxu0 0.0
    %9955 = vmatpush1.msra.mxu0 0.0
    %9956 = vmatprep.subr.mxu0 %v9713
    %9957 = vmatpush1.msra.mxu0 %v9711
    %9958 = vmatprep.subr.mxu0 %v9564
    %9959 = vmatpush1.msra.mxu0 %v9562
    %9960 = vmatprep.subr.mxu0 0.0
    %9961 = vmatpush2.msra.mxu0 0.0
    %9962 = vmatprep.subr.mxu0 0.0
    %9963 = vmatpush2.msra.mxu0 0.0
    %9964 = vmatprep.subr.mxu0 0.0
    %9965 = vmatpush2.msra.mxu0 0.0
    %9966 = vmatprep.subr.mxu0 0.0
    %9967 = vmatpush2.msra.mxu0 0.0
    %9968 = vmatprep.subr.mxu0 0.0
    %9969 = vmatpush2.msra.mxu0 0.0
    %9970 = vmatprep.subr.mxu0 0.0
    %9971 = vmatpush2.msra.mxu0 0.0
    %9972 = vmatprep.subr.mxu0 0.0
    %9973 = vmatpush2.msra.mxu0 0.0
    %9974 = vmatprep.subr.mxu0 0.0
    %9975 = vmatpush2.msra.mxu0 0.0
    %9976 = vmatprep.subr.mxu0 0.0
    %9977 = vmatpush2.msra.mxu0 0.0
    %9978 = vmatprep.subr.mxu0 0.0
    %9979 = vmatpush2.msra.mxu0 0.0
    %9980 = vmatprep.subr.mxu0 0.0
    %9981 = vmatpush2.msra.mxu0 0.0
    %9982 = vmatprep.subr.mxu0 0.0
    %9983 = vmatpush2.msra.mxu0 0.0
    %9984 = vmatprep.subr.mxu0 0.0
    %9985 = vmatpush2.msra.mxu0 0.0
    %9986 = vmatprep.subr.mxu0 0.0
    %9987 = vmatpush2.msra.mxu0 0.0
    %9988 = vmatprep.subr.mxu0 0.0
    %9989 = vmatpush2.msra.mxu0 0.0
    %9990 = vmatprep.subr.mxu0 0.0
    %9991 = vmatpush2.msra.mxu0 0.0
    %9992 = vmatprep.mubr.f32.mxu0 0.0
    %9993 = vmatmul.mubr.f32.gmra.mxu0 %v9705
    %v9994 = vpop.f32.mrf.mxu0
    %v9995 = vadd.f32 %v9924, %v9994
    %v9996 = vpop.f32.mrf.mxu0
    %v9997 = vadd.f32 %v9926, %v9996
    %9998 = vdwg.mxu0
    %v9999 = vsel %vm1825, %v8872, 0
    %v10002 = vsel %vm415, %v9005, 0
    %v10005 = vsel %vm415, %v9006, 0
    %v10008 = vsel %vm415, %v9007, 0
    %v10011 = vsel %vm415, %v9008, 0
    %10013 = vmatprep.subr.mxu0 %v8934
    %10014 = vmatpush1.msra.mxu0 %v8933
    %10015 = vmatprep.subr.mxu0 %v8930
    %10016 = vmatpush1.msra.mxu0 %v8929
    %10017 = vmatprep.subr.mxu0 %v8926
    %10018 = vmatpush1.msra.mxu0 %v8925
    %10019 = vmatprep.subr.mxu0 %v8922
    %10020 = vmatpush1.msra.mxu0 %v8921
    %10021 = vmatprep.subr.mxu0 %v8918
    %10022 = vmatpush1.msra.mxu0 %v8917
    %10023 = vmatprep.subr.mxu0 %v8914
    %10024 = vmatpush1.msra.mxu0 %v8913
    %10025 = vmatprep.subr.mxu0 %v8910
    %10026 = vmatpush1.msra.mxu0 %v8909
    %10027 = vmatprep.subr.mxu0 %v8906
    %10028 = vmatpush1.msra.mxu0 %v8905
    %10029 = vmatprep.subr.mxu0 %v8902
    %10030 = vmatpush1.msra.mxu0 %v8901
    %10031 = vmatprep.subr.mxu0 %v8898
    %10032 = vmatpush1.msra.mxu0 %v8897
    %10033 = vmatprep.subr.mxu0 %v8894
    %10034 = vmatpush1.msra.mxu0 %v8893
    %10035 = vmatprep.subr.mxu0 %v8890
    %10036 = vmatpush1.msra.mxu0 %v8889
    %10037 = vmatprep.subr.mxu0 %v8886
    %10038 = vmatpush1.msra.mxu0 %v8885
    %10039 = vmatprep.subr.mxu0 %v8882
    %10040 = vmatpush1.msra.mxu0 %v8881
    %10041 = vmatprep.subr.mxu0 %v8878
    %10042 = vmatpush1.msra.mxu0 %v8877
    %10043 = vmatprep.subr.mxu0 %v8874
    %10044 = vmatpush1.msra.mxu0 %v8873
    %10045 = vmatprep.subr.mxu0 %v8998
    %10046 = vmatpush2.msra.mxu0 %v8997
    %10047 = vmatprep.subr.mxu0 %v8994
    %10048 = vmatpush2.msra.mxu0 %v8993
    %10049 = vmatprep.subr.mxu0 %v8990
    %10050 = vmatpush2.msra.mxu0 %v8989
    %10051 = vmatprep.subr.mxu0 %v8986
    %10052 = vmatpush2.msra.mxu0 %v8985
    %10053 = vmatprep.subr.mxu0 %v8982
    %10054 = vmatpush2.msra.mxu0 %v8981
    %10055 = vmatprep.subr.mxu0 %v8978
    %10056 = vmatpush2.msra.mxu0 %v8977
    %10057 = vmatprep.subr.mxu0 %v8974
    %10058 = vmatpush2.msra.mxu0 %v8973
    %10059 = vmatprep.subr.mxu0 %v8970
    %10060 = vmatpush2.msra.mxu0 %v8969
    %10061 = vmatprep.subr.mxu0 %v8966
    %10062 = vmatpush2.msra.mxu0 %v8965
    %10063 = vmatprep.subr.mxu0 %v8962
    %10064 = vmatpush2.msra.mxu0 %v8961
    %10065 = vmatprep.subr.mxu0 %v8958
    %10066 = vmatpush2.msra.mxu0 %v8957
    %10067 = vmatprep.subr.mxu0 %v8954
    %10068 = vmatpush2.msra.mxu0 %v8953
    %10069 = vmatprep.subr.mxu0 %v8950
    %10070 = vmatpush2.msra.mxu0 %v8949
    %10071 = vmatprep.subr.mxu0 %v8946
    %10072 = vmatpush2.msra.mxu0 %v8945
    %10073 = vmatprep.subr.mxu0 %v8942
    %10074 = vmatpush2.msra.mxu0 %v8941
    %10075 = vmatprep.subr.mxu0 %v8938
    %10076 = vmatpush2.msra.mxu0 %v8937
    %10077 = vmatprep.mubr.f32.mxu0 %v8871
    %10078 = vmatmul.mubr.f32.gmra.mxu0 %v8870
    %v10079 = vpop.f32.mrf.mxu0
    %v10080 = vadd.f32 %v9853, %v10079
    %v10081 = vpop.f32.mrf.mxu0
    %v10082 = vadd.f32 %v9855, %v10081
    %10083 = vdwg.mxu0
    %10084 = vmatprep.subr.mxu0 0.0
    %10085 = vmatpush1.msra.mxu0 0.0
    %10086 = vmatprep.subr.mxu0 0.0
    %10087 = vmatpush1.msra.mxu0 0.0
    %10088 = vmatprep.subr.mxu0 0.0
    %10089 = vmatpush1.msra.mxu0 0.0
    %10090 = vmatprep.subr.mxu0 0.0
    %10091 = vmatpush1.msra.mxu0 0.0
    %10092 = vmatprep.subr.mxu0 0.0
    %10093 = vmatpush1.msra.mxu0 0.0
    %10094 = vmatprep.subr.mxu0 0.0
    %10095 = vmatpush1.msra.mxu0 0.0
    %10096 = vmatprep.subr.mxu0 0.0
    %10097 = vmatpush1.msra.mxu0 0.0
    %10098 = vmatprep.subr.mxu0 0.0
    %10099 = vmatpush1.msra.mxu0 0.0
    %10100 = vmatprep.subr.mxu0 0.0
    %10101 = vmatpush1.msra.mxu0 0.0
    %10102 = vmatprep.subr.mxu0 0.0
    %10103 = vmatpush1.msra.mxu0 0.0
    %10104 = vmatprep.subr.mxu0 0.0
    %10105 = vmatpush1.msra.mxu0 0.0
    %10106 = vmatprep.subr.mxu0 0.0
    %10107 = vmatpush1.msra.mxu0 0.0
    %10108 = vmatprep.subr.mxu0 0.0
    %10109 = vmatpush1.msra.mxu0 0.0
    %10110 = vmatprep.subr.mxu0 0.0
    %10111 = vmatpush1.msra.mxu0 0.0
    %10112 = vmatprep.subr.mxu0 %v10005
    %10113 = vmatpush1.msra.mxu0 %v10002
    %10114 = vmatprep.subr.mxu0 %v9002
    %10115 = vmatpush1.msra.mxu0 %v9001
    %10116 = vmatprep.subr.mxu0 0.0
    %10117 = vmatpush2.msra.mxu0 0.0
    %10118 = vmatprep.subr.mxu0 0.0
    %10119 = vmatpush2.msra.mxu0 0.0
    %10120 = vmatprep.subr.mxu0 0.0
    %10121 = vmatpush2.msra.mxu0 0.0
    %10122 = vmatprep.subr.mxu0 0.0
    %10123 = vmatpush2.msra.mxu0 0.0
    %10124 = vmatprep.subr.mxu0 0.0
    %10125 = vmatpush2.msra.mxu0 0.0
    %10126 = vmatprep.subr.mxu0 0.0
    %10127 = vmatpush2.msra.mxu0 0.0
    %10128 = vmatprep.subr.mxu0 0.0
    %10129 = vmatpush2.msra.mxu0 0.0
    %10130 = vmatprep.subr.mxu0 0.0
    %10131 = vmatpush2.msra.mxu0 0.0
    %10132 = vmatprep.subr.mxu0 0.0
    %10133 = vmatpush2.msra.mxu0 0.0
    %10134 = vmatprep.subr.mxu0 0.0
    %10135 = vmatpush2.msra.mxu0 0.0
    %10136 = vmatprep.subr.mxu0 0.0
    %10137 = vmatpush2.msra.mxu0 0.0
    %10138 = vmatprep.subr.mxu0 0.0
    %10139 = vmatpush2.msra.mxu0 0.0
    %10140 = vmatprep.subr.mxu0 0.0
    %10141 = vmatpush2.msra.mxu0 0.0
    %10142 = vmatprep.subr.mxu0 0.0
    %10143 = vmatpush2.msra.mxu0 0.0
    %10144 = vmatprep.subr.mxu0 0.0
    %10145 = vmatpush2.msra.mxu0 0.0
    %10146 = vmatprep.subr.mxu0 0.0
    %10147 = vmatpush2.msra.mxu0 0.0
    %10148 = vmatprep.mubr.f32.mxu0 0.0
    %10149 = vmatmul.mubr.f32.gmra.mxu0 %v9999
    %v10150 = vpop.f32.mrf.mxu0
    %v10151 = vadd.f32 %v10080, %v10150
    %v10152 = vpop.f32.mrf.mxu0
    %v10153 = vadd.f32 %v10082, %v10152
    %10154 = vdwg.mxu0
    %10155 = vmatprep.subr.mxu0 %v8936
    %10156 = vmatpush1.msra.mxu0 %v8935
    %10157 = vmatprep.subr.mxu0 %v8932
    %10158 = vmatpush1.msra.mxu0 %v8931
    %10159 = vmatprep.subr.mxu0 %v8928
    %10160 = vmatpush1.msra.mxu0 %v8927
    %10161 = vmatprep.subr.mxu0 %v8924
    %10162 = vmatpush1.msra.mxu0 %v8923
    %10163 = vmatprep.subr.mxu0 %v8920
    %10164 = vmatpush1.msra.mxu0 %v8919
    %10165 = vmatprep.subr.mxu0 %v8916
    %10166 = vmatpush1.msra.mxu0 %v8915
    %10167 = vmatprep.subr.mxu0 %v8912
    %10168 = vmatpush1.msra.mxu0 %v8911
    %10169 = vmatprep.subr.mxu0 %v8908
    %10170 = vmatpush1.msra.mxu0 %v8907
    %10171 = vmatprep.subr.mxu0 %v8904
    %10172 = vmatpush1.msra.mxu0 %v8903
    %10173 = vmatprep.subr.mxu0 %v8900
    %10174 = vmatpush1.msra.mxu0 %v8899
    %10175 = vmatprep.subr.mxu0 %v8896
    %10176 = vmatpush1.msra.mxu0 %v8895
    %10177 = vmatprep.subr.mxu0 %v8892
    %10178 = vmatpush1.msra.mxu0 %v8891
    %10179 = vmatprep.subr.mxu0 %v8888
    %10180 = vmatpush1.msra.mxu0 %v8887
    %10181 = vmatprep.subr.mxu0 %v8884
    %10182 = vmatpush1.msra.mxu0 %v8883
    %10183 = vmatprep.subr.mxu0 %v8880
    %10184 = vmatpush1.msra.mxu0 %v8879
    %10185 = vmatprep.subr.mxu0 %v8876
    %10186 = vmatpush1.msra.mxu0 %v8875
    %10187 = vmatprep.subr.mxu0 %v9000
    %10188 = vmatpush2.msra.mxu0 %v8999
    %10189 = vmatprep.subr.mxu0 %v8996
    %10190 = vmatpush2.msra.mxu0 %v8995
    %10191 = vmatprep.subr.mxu0 %v8992
    %10192 = vmatpush2.msra.mxu0 %v8991
    %10193 = vmatprep.subr.mxu0 %v8988
    %10194 = vmatpush2.msra.mxu0 %v8987
    %10195 = vmatprep.subr.mxu0 %v8984
    %10196 = vmatpush2.msra.mxu0 %v8983
    %10197 = vmatprep.subr.mxu0 %v8980
    %10198 = vmatpush2.msra.mxu0 %v8979
    %10199 = vmatprep.subr.mxu0 %v8976
    %10200 = vmatpush2.msra.mxu0 %v8975
    %10201 = vmatprep.subr.mxu0 %v8972
    %10202 = vmatpush2.msra.mxu0 %v8971
    %10203 = vmatprep.subr.mxu0 %v8968
    %10204 = vmatpush2.msra.mxu0 %v8967
    %10205 = vmatprep.subr.mxu0 %v8964
    %10206 = vmatpush2.msra.mxu0 %v8963
    %10207 = vmatprep.subr.mxu0 %v8960
    %10208 = vmatpush2.msra.mxu0 %v8959
    %10209 = vmatprep.subr.mxu0 %v8956
    %10210 = vmatpush2.msra.mxu0 %v8955
    %10211 = vmatprep.subr.mxu0 %v8952
    %10212 = vmatpush2.msra.mxu0 %v8951
    %10213 = vmatprep.subr.mxu0 %v8948
    %10214 = vmatpush2.msra.mxu0 %v8947
    %10215 = vmatprep.subr.mxu0 %v8944
    %10216 = vmatpush2.msra.mxu0 %v8943
    %10217 = vmatprep.subr.mxu0 %v8940
    %10218 = vmatpush2.msra.mxu0 %v8939
    %10219 = vmatprep.mubr.f32.mxu0 %v8871
    %10220 = vmatmul.mubr.f32.gmra.mxu0 %v8870
    %v10221 = vpop.f32.mrf.mxu0
    %v10222 = vadd.f32 %v9995, %v10221
    %v10223 = vpop.f32.mrf.mxu0
    %v10224 = vadd.f32 %v9997, %v10223
    %10225 = vdwg.mxu0
    %10226 = vmatprep.subr.mxu0 0.0
    %10227 = vmatpush1.msra.mxu0 0.0
    %10228 = vmatprep.subr.mxu0 0.0
    %10229 = vmatpush1.msra.mxu0 0.0
    %10230 = vmatprep.subr.mxu0 0.0
    %10231 = vmatpush1.msra.mxu0 0.0
    %10232 = vmatprep.subr.mxu0 0.0
    %10233 = vmatpush1.msra.mxu0 0.0
    %10234 = vmatprep.subr.mxu0 0.0
    %10235 = vmatpush1.msra.mxu0 0.0
    %10236 = vmatprep.subr.mxu0 0.0
    %10237 = vmatpush1.msra.mxu0 0.0
    %10238 = vmatprep.subr.mxu0 0.0
    %10239 = vmatpush1.msra.mxu0 0.0
    %10240 = vmatprep.subr.mxu0 0.0
    %10241 = vmatpush1.msra.mxu0 0.0
    %10242 = vmatprep.subr.mxu0 0.0
    %10243 = vmatpush1.msra.mxu0 0.0
    %10244 = vmatprep.subr.mxu0 0.0
    %10245 = vmatpush1.msra.mxu0 0.0
    %10246 = vmatprep.subr.mxu0 0.0
    %10247 = vmatpush1.msra.mxu0 0.0
    %10248 = vmatprep.subr.mxu0 0.0
    %10249 = vmatpush1.msra.mxu0 0.0
    %10250 = vmatprep.subr.mxu0 0.0
    %10251 = vmatpush1.msra.mxu0 0.0
    %10252 = vmatprep.subr.mxu0 0.0
    %10253 = vmatpush1.msra.mxu0 0.0
    %10254 = vmatprep.subr.mxu0 %v10011
    %10255 = vmatpush1.msra.mxu0 %v10008
    %10256 = vmatprep.subr.mxu0 %v9004
    %10257 = vmatpush1.msra.mxu0 %v9003
    %10258 = vmatprep.subr.mxu0 0.0
    %10259 = vmatpush2.msra.mxu0 0.0
    %10260 = vmatprep.subr.mxu0 0.0
    %10261 = vmatpush2.msra.mxu0 0.0
    %10262 = vmatprep.subr.mxu0 0.0
    %10263 = vmatpush2.msra.mxu0 0.0
    %10264 = vmatprep.subr.mxu0 0.0
    %10265 = vmatpush2.msra.mxu0 0.0
    %10266 = vmatprep.subr.mxu0 0.0
    %10267 = vmatpush2.msra.mxu0 0.0
    %10268 = vmatprep.subr.mxu0 0.0
    %10269 = vmatpush2.msra.mxu0 0.0
    %10270 = vmatprep.subr.mxu0 0.0
    %10271 = vmatpush2.msra.mxu0 0.0
    %10272 = vmatprep.subr.mxu0 0.0
    %10273 = vmatpush2.msra.mxu0 0.0
    %10274 = vmatprep.subr.mxu0 0.0
    %10275 = vmatpush2.msra.mxu0 0.0
    %10276 = vmatprep.subr.mxu0 0.0
    %10277 = vmatpush2.msra.mxu0 0.0
    %10278 = vmatprep.subr.mxu0 0.0
    %10279 = vmatpush2.msra.mxu0 0.0
    %10280 = vmatprep.subr.mxu0 0.0
    %10281 = vmatpush2.msra.mxu0 0.0
    %10282 = vmatprep.subr.mxu0 0.0
    %10283 = vmatpush2.msra.mxu0 0.0
    %10284 = vmatprep.subr.mxu0 0.0
    %10285 = vmatpush2.msra.mxu0 0.0
    %10286 = vmatprep.subr.mxu0 0.0
    %10287 = vmatpush2.msra.mxu0 0.0
    %10288 = vmatprep.subr.mxu0 0.0
    %10289 = vmatpush2.msra.mxu0 0.0
    %10290 = vmatprep.mubr.f32.mxu0 0.0
    %10291 = vmatmul.mubr.f32.gmra.mxu0 %v9999
    %v10292 = vpop.f32.mrf.mxu0
    %v10293 = vadd.f32 %v10222, %v10292
    %v10294 = vpop.f32.mrf.mxu0
    %v10295 = vadd.f32 %v10224, %v10294
    %10296 = vdwg.mxu0
    %v10297 = vld [vmem:[%s6 + $0x860] sm:$0xf0]
    %v10298 = vld [vmem:[%s6 + $0x868] sm:$0xf0]
    %v10299 = vld [vmem:[%s6 + $0x870] sm:$0xf0]
    %v10300 = vld [vmem:[%s6 + $0x878] sm:$0xf0]
    %v10301 = vld [vmem:[%s6 + $0x880] sm:$0xff]
    %v10302 = vld [vmem:[%s6 + $0x888] sm:$0xff]
    %v10303 = vld [vmem:[%s6 + $0x890] sm:$0xff]
    %v10304 = vld [vmem:[%s6 + $0x898] sm:$0xff]
    %v10305 = vld [vmem:[%s6 + $0x8a0] sm:$0xff]
    %v10306 = vld [vmem:[%s6 + $0x8a8] sm:$0xff]
    %v10307 = vld [vmem:[%s6 + $0x8b0] sm:$0xff]
    %v10308 = vld [vmem:[%s6 + $0x8b8] sm:$0xff]
    %v10309 = vld [vmem:[%s6 + $0x8c0] sm:$0xff]
    %v10310 = vld [vmem:[%s6 + $0x8c8] sm:$0xff]
    %v10311 = vld [vmem:[%s6 + $0x8d0] sm:$0xff]
    %v10312 = vld [vmem:[%s6 + $0x8d8] sm:$0xff]
    %v10313 = vld [vmem:[%s6 + $0x8e0] sm:$0xff]
    %v10314 = vld [vmem:[%s6 + $0x8e8] sm:$0xff]
    %v10315 = vld [vmem:[%s6 + $0x8f0] sm:$0xff]
    %v10316 = vld [vmem:[%s6 + $0x8f8] sm:$0xff]
    %v10317 = vld [vmem:[%s6 + $0x900] sm:$0xff]
    %v10318 = vld [vmem:[%s6 + $0x908] sm:$0xff]
    %v10319 = vld [vmem:[%s6 + $0x910] sm:$0xff]
    %v10320 = vld [vmem:[%s6 + $0x918] sm:$0xff]
    %v10321 = vld [vmem:[%s6 + $0x920] sm:$0xff]
    %v10322 = vld [vmem:[%s6 + $0x928] sm:$0xff]
    %v10323 = vld [vmem:[%s6 + $0x930] sm:$0xff]
    %v10324 = vld [vmem:[%s6 + $0x938] sm:$0xff]
    %v10325 = vld [vmem:[%s6 + $0x940] sm:$0xff]
    %v10326 = vld [vmem:[%s6 + $0x948] sm:$0xff]
    %v10327 = vld [vmem:[%s6 + $0x950] sm:$0xff]
    %v10328 = vld [vmem:[%s6 + $0x958] sm:$0xff]
    %v10329 = vld [vmem:[%s6 + $0x960] sm:$0xff]
    %v10330 = vld [vmem:[%s6 + $0x968] sm:$0xff]
    %v10331 = vld [vmem:[%s6 + $0x970] sm:$0xff]
    %v10332 = vld [vmem:[%s6 + $0x978] sm:$0xff]
    %v10333 = vld [vmem:[%s6 + $0x980] sm:$0xff]
    %v10334 = vld [vmem:[%s6 + $0x988] sm:$0xff]
    %v10335 = vld [vmem:[%s6 + $0x990] sm:$0xff]
    %v10336 = vld [vmem:[%s6 + $0x998] sm:$0xff]
    %v10337 = vld [vmem:[%s6 + $0x9a0] sm:$0xff]
    %v10338 = vld [vmem:[%s6 + $0x9a8] sm:$0xff]
    %v10339 = vld [vmem:[%s6 + $0x9b0] sm:$0xff]
    %v10340 = vld [vmem:[%s6 + $0x9b8] sm:$0xff]
    %v10341 = vld [vmem:[%s6 + $0x9c0] sm:$0xff]
    %v10342 = vld [vmem:[%s6 + $0x9c8] sm:$0xff]
    %v10343 = vld [vmem:[%s6 + $0x9d0] sm:$0xff]
    %v10344 = vld [vmem:[%s6 + $0x9d8] sm:$0xff]
    %v10345 = vld [vmem:[%s6 + $0x9e0] sm:$0xff]
    %v10346 = vld [vmem:[%s6 + $0x9e8] sm:$0xff]
    %v10347 = vld [vmem:[%s6 + $0x9f0] sm:$0xff]
    %v10348 = vld [vmem:[%s6 + $0x9f8] sm:$0xff]
    %v10349 = vld [vmem:[%s6 + $0xa00] sm:$0xff]
    %v10350 = vld [vmem:[%s6 + $0xa08] sm:$0xff]
    %v10351 = vld [vmem:[%s6 + $0xa10] sm:$0xff]
    %v10352 = vld [vmem:[%s6 + $0xa18] sm:$0xff]
    %v10353 = vld [vmem:[%s6 + $0xa20] sm:$0xff]
    %v10354 = vld [vmem:[%s6 + $0xa28] sm:$0xff]
    %v10355 = vld [vmem:[%s6 + $0xa30] sm:$0xff]
    %v10356 = vld [vmem:[%s6 + $0xa38] sm:$0xff]
    %v10357 = vld [vmem:[%s6 + $0xa40] sm:$0xff]
    %v10358 = vld [vmem:[%s6 + $0xa48] sm:$0xff]
    %v10359 = vld [vmem:[%s6 + $0xa50] sm:$0xff]
    %v10360 = vld [vmem:[%s6 + $0xa58] sm:$0xff]
    %v10361 = vld [vmem:[%s6 + $0xa60] sm:$0xff]
    %v10362 = vld [vmem:[%s6 + $0xa68] sm:$0xff]
    %v10363 = vld [vmem:[%s6 + $0xa70] sm:$0xff]
    %v10364 = vld [vmem:[%s6 + $0xa78] sm:$0xff]
    %v10365 = vld [vmem:[%s6 + $0xa80] sm:$0xff]
    %v10366 = vld [vmem:[%s6 + $0xa88] sm:$0xff]
    %v10367 = vld [vmem:[%s6 + $0xa90] sm:$0xff]
    %v10368 = vld [vmem:[%s6 + $0xa98] sm:$0xff]
    %v10369 = vld [vmem:[%s6 + $0xaa0] sm:$0xff]
    %v10370 = vld [vmem:[%s6 + $0xaa8] sm:$0xff]
    %v10371 = vld [vmem:[%s6 + $0xab0] sm:$0xff]
    %v10372 = vld [vmem:[%s6 + $0xab8] sm:$0xff]
    %v10373 = vld [vmem:[%s6 + $0xac0] sm:$0xff]
    %v10374 = vld [vmem:[%s6 + $0xac8] sm:$0xff]
    %v10375 = vld [vmem:[%s6 + $0xad0] sm:$0xff]
    %v10376 = vld [vmem:[%s6 + $0xad8] sm:$0xff]
    %v10377 = vld [vmem:[%s6 + $0xae0] sm:$0xff]
    %v10378 = vld [vmem:[%s6 + $0xae8] sm:$0xff]
    %v10379 = vld [vmem:[%s6 + $0xaf0] sm:$0xff]
    %v10380 = vld [vmem:[%s6 + $0xaf8] sm:$0xff]
    %v10381 = vld [vmem:[%s6 + $0xb00] sm:$0xff]
    %v10382 = vld [vmem:[%s6 + $0xb08] sm:$0xff]
    %v10383 = vld [vmem:[%s6 + $0xb10] sm:$0xff]
    %v10384 = vld [vmem:[%s6 + $0xb18] sm:$0xff]
    %v10385 = vld [vmem:[%s6 + $0xb20] sm:$0xff]
    %v10386 = vld [vmem:[%s6 + $0xb28] sm:$0xff]
    %v10387 = vld [vmem:[%s6 + $0xb30] sm:$0xff]
    %v10388 = vld [vmem:[%s6 + $0xb38] sm:$0xff]
    %v10389 = vld [vmem:[%s6 + $0xb40] sm:$0xff]
    %v10390 = vld [vmem:[%s6 + $0xb48] sm:$0xff]
    %v10391 = vld [vmem:[%s6 + $0xb50] sm:$0xff]
    %v10392 = vld [vmem:[%s6 + $0xb58] sm:$0xff]
    %v10393 = vld [vmem:[%s6 + $0xb60] sm:$0xff]
    %v10394 = vld [vmem:[%s6 + $0xb68] sm:$0xff]
    %v10395 = vld [vmem:[%s6 + $0xb70] sm:$0xff]
    %v10396 = vld [vmem:[%s6 + $0xb78] sm:$0xff]
    %v10397 = vld [vmem:[%s6 + $0xb80] sm:$0xff]
    %v10398 = vld [vmem:[%s6 + $0xb88] sm:$0xff]
    %v10399 = vld [vmem:[%s6 + $0xb90] sm:$0xff]
    %v10400 = vld [vmem:[%s6 + $0xb98] sm:$0xff]
    %v10401 = vld [vmem:[%s6 + $0xba0] sm:$0xff]
    %v10402 = vld [vmem:[%s6 + $0xba8] sm:$0xff]
    %v10403 = vld [vmem:[%s6 + $0xbb0] sm:$0xff]
    %v10404 = vld [vmem:[%s6 + $0xbb8] sm:$0xff]
    %v10405 = vld [vmem:[%s6 + $0xbc0] sm:$0xff]
    %v10406 = vld [vmem:[%s6 + $0xbc8] sm:$0xff]
    %v10407 = vld [vmem:[%s6 + $0xbd0] sm:$0xff]
    %v10408 = vld [vmem:[%s6 + $0xbd8] sm:$0xff]
    %v10409 = vld [vmem:[%s6 + $0xbe0] sm:$0xff]
    %v10410 = vld [vmem:[%s6 + $0xbe8] sm:$0xff]
    %v10411 = vld [vmem:[%s6 + $0xbf0] sm:$0xff]
    %v10412 = vld [vmem:[%s6 + $0xbf8] sm:$0xff]
    %v10413 = vld [vmem:[%s6 + $0xc00] sm:$0xff]
    %v10414 = vld [vmem:[%s6 + $0xc08] sm:$0xff]
    %v10415 = vld [vmem:[%s6 + $0xc10] sm:$0xff]
    %v10416 = vld [vmem:[%s6 + $0xc18] sm:$0xff]
    %v10417 = vld [vmem:[%s6 + $0xc20] sm:$0xff]
    %v10418 = vld [vmem:[%s6 + $0xc28] sm:$0xff]
    %v10419 = vld [vmem:[%s6 + $0xc30] sm:$0xff]
    %v10420 = vld [vmem:[%s6 + $0xc38] sm:$0xff]
    %v10421 = vld [vmem:[%s6 + $0xc40] sm:$0xff]
    %v10422 = vld [vmem:[%s6 + $0xc48] sm:$0xff]
    %v10423 = vld [vmem:[%s6 + $0xc50] sm:$0xff]
    %v10424 = vld [vmem:[%s6 + $0xc58] sm:$0xff]
    %v10425 = vld [vmem:[%s6 + $0xc60] sm:$0xff]
    %v10426 = vld [vmem:[%s6 + $0xc68] sm:$0xff]
    %v10427 = vld [vmem:[%s6 + $0xc70] sm:$0xff]
    %v10428 = vld [vmem:[%s6 + $0xc78] sm:$0xff]
    %v10429 = vld [vmem:[%s6 + $0xc80] sm:$0xff]
    %v10430 = vld [vmem:[%s6 + $0xc88] sm:$0xff]
    %v10431 = vld [vmem:[%s6 + $0xc90] sm:$0xff]
    %v10432 = vld [vmem:[%s6 + $0xc98] sm:$0xff]
    %v10433 = vld [vmem:[%s6 + $0xca0] sm:$0x3]
    %v10434 = vld [vmem:[%s6 + $0xca8] sm:$0x3]
    %v10435 = vld [vmem:[%s6 + $0xcb0] sm:$0x3]
    %v10436 = vld [vmem:[%s6 + $0xcb8] sm:$0x3]
    %v10437 = vrot.slane %v8870, 2
    %v10438 = vrot.slane %v8871, 2
    %v10439 = vrot.slane %v8872, 2
    %v10582 = vrot.slane %v10297, 4
    %v10583 = vrot.slane %v10301, 4
    %v10584 = vsel %vm4453, %v10582, %v10583
    %v10585 = vrot.slane %v10298, 4
    %v10586 = vrot.slane %v10302, 4
    %v10587 = vsel %vm4453, %v10585, %v10586
    %v10588 = vrot.slane %v10299, 4
    %v10589 = vrot.slane %v10303, 4
    %v10590 = vsel %vm4453, %v10588, %v10589
    %v10591 = vrot.slane %v10300, 4
    %v10592 = vrot.slane %v10304, 4
    %v10593 = vsel %vm4453, %v10591, %v10592
    %v10594 = vrot.slane %v10305, 4
    %v10595 = vsel %vm4453, %v10583, %v10594
    %v10596 = vrot.slane %v10306, 4
    %v10597 = vsel %vm4453, %v10586, %v10596
    %v10598 = vrot.slane %v10307, 4
    %v10599 = vsel %vm4453, %v10589, %v10598
    %v10600 = vrot.slane %v10308, 4
    %v10601 = vsel %vm4453, %v10592, %v10600
    %v10602 = vrot.slane %v10309, 4
    %v10603 = vsel %vm4453, %v10594, %v10602
    %v10604 = vrot.slane %v10310, 4
    %v10605 = vsel %vm4453, %v10596, %v10604
    %v10606 = vrot.slane %v10311, 4
    %v10607 = vsel %vm4453, %v10598, %v10606
    %v10608 = vrot.slane %v10312, 4
    %v10609 = vsel %vm4453, %v10600, %v10608
    %v10610 = vrot.slane %v10313, 4
    %v10611 = vsel %vm4453, %v10602, %v10610
    %v10612 = vrot.slane %v10314, 4
    %v10613 = vsel %vm4453, %v10604, %v10612
    %v10614 = vrot.slane %v10315, 4
    %v10615 = vsel %vm4453, %v10606, %v10614
    %v10616 = vrot.slane %v10316, 4
    %v10617 = vsel %vm4453, %v10608, %v10616
    %v10618 = vrot.slane %v10317, 4
    %v10619 = vsel %vm4453, %v10610, %v10618
    %v10620 = vrot.slane %v10318, 4
    %v10621 = vsel %vm4453, %v10612, %v10620
    %v10622 = vrot.slane %v10319, 4
    %v10623 = vsel %vm4453, %v10614, %v10622
    %v10624 = vrot.slane %v10320, 4
    %v10625 = vsel %vm4453, %v10616, %v10624
    %v10626 = vrot.slane %v10321, 4
    %v10627 = vsel %vm4453, %v10618, %v10626
    %v10628 = vrot.slane %v10322, 4
    %v10629 = vsel %vm4453, %v10620, %v10628
    %v10630 = vrot.slane %v10323, 4
    %v10631 = vsel %vm4453, %v10622, %v10630
    %v10632 = vrot.slane %v10324, 4
    %v10633 = vsel %vm4453, %v10624, %v10632
    %v10634 = vrot.slane %v10325, 4
    %v10635 = vsel %vm4453, %v10626, %v10634
    %v10636 = vrot.slane %v10326, 4
    %v10637 = vsel %vm4453, %v10628, %v10636
    %v10638 = vrot.slane %v10327, 4
    %v10639 = vsel %vm4453, %v10630, %v10638
    %v10640 = vrot.slane %v10328, 4
    %v10641 = vsel %vm4453, %v10632, %v10640
    %v10642 = vrot.slane %v10329, 4
    %v10643 = vsel %vm4453, %v10634, %v10642
    %v10644 = vrot.slane %v10330, 4
    %v10645 = vsel %vm4453, %v10636, %v10644
    %v10646 = vrot.slane %v10331, 4
    %v10647 = vsel %vm4453, %v10638, %v10646
    %v10648 = vrot.slane %v10332, 4
    %v10649 = vsel %vm4453, %v10640, %v10648
    %v10650 = vrot.slane %v10333, 4
    %v10651 = vsel %vm4453, %v10642, %v10650
    %v10652 = vrot.slane %v10334, 4
    %v10653 = vsel %vm4453, %v10644, %v10652
    %v10654 = vrot.slane %v10335, 4
    %v10655 = vsel %vm4453, %v10646, %v10654
    %v10656 = vrot.slane %v10336, 4
    %v10657 = vsel %vm4453, %v10648, %v10656
    %v10658 = vrot.slane %v10337, 4
    %v10659 = vsel %vm4453, %v10650, %v10658
    %v10660 = vrot.slane %v10338, 4
    %v10661 = vsel %vm4453, %v10652, %v10660
    %v10662 = vrot.slane %v10339, 4
    %v10663 = vsel %vm4453, %v10654, %v10662
    %v10664 = vrot.slane %v10340, 4
    %v10665 = vsel %vm4453, %v10656, %v10664
    %v10666 = vrot.slane %v10341, 4
    %v10667 = vsel %vm4453, %v10658, %v10666
    %v10668 = vrot.slane %v10342, 4
    %v10669 = vsel %vm4453, %v10660, %v10668
    %v10670 = vrot.slane %v10343, 4
    %v10671 = vsel %vm4453, %v10662, %v10670
    %v10672 = vrot.slane %v10344, 4
    %v10673 = vsel %vm4453, %v10664, %v10672
    %v10674 = vrot.slane %v10345, 4
    %v10675 = vsel %vm4453, %v10666, %v10674
    %v10676 = vrot.slane %v10346, 4
    %v10677 = vsel %vm4453, %v10668, %v10676
    %v10678 = vrot.slane %v10347, 4
    %v10679 = vsel %vm4453, %v10670, %v10678
    %v10680 = vrot.slane %v10348, 4
    %v10681 = vsel %vm4453, %v10672, %v10680
    %v10682 = vrot.slane %v10349, 4
    %v10683 = vsel %vm4453, %v10674, %v10682
    %v10684 = vrot.slane %v10350, 4
    %v10685 = vsel %vm4453, %v10676, %v10684
    %v10686 = vrot.slane %v10351, 4
    %v10687 = vsel %vm4453, %v10678, %v10686
    %v10688 = vrot.slane %v10352, 4
    %v10689 = vsel %vm4453, %v10680, %v10688
    %v10690 = vrot.slane %v10353, 4
    %v10691 = vsel %vm4453, %v10682, %v10690
    %v10692 = vrot.slane %v10354, 4
    %v10693 = vsel %vm4453, %v10684, %v10692
    %v10694 = vrot.slane %v10355, 4
    %v10695 = vsel %vm4453, %v10686, %v10694
    %v10696 = vrot.slane %v10356, 4
    %v10697 = vsel %vm4453, %v10688, %v10696
    %v10698 = vrot.slane %v10357, 4
    %v10699 = vsel %vm4453, %v10690, %v10698
    %v10700 = vrot.slane %v10358, 4
    %v10701 = vsel %vm4453, %v10692, %v10700
    %v10702 = vrot.slane %v10359, 4
    %v10703 = vsel %vm4453, %v10694, %v10702
    %v10704 = vrot.slane %v10360, 4
    %v10705 = vsel %vm4453, %v10696, %v10704
    %v10706 = vrot.slane %v10361, 4
    %v10707 = vsel %vm4453, %v10698, %v10706
    %v10708 = vrot.slane %v10362, 4
    %v10709 = vsel %vm4453, %v10700, %v10708
    %v10710 = vrot.slane %v10363, 4
    %v10711 = vsel %vm4453, %v10702, %v10710
    %v10712 = vrot.slane %v10364, 4
    %v10713 = vsel %vm4453, %v10704, %v10712
    %v10714 = vrot.slane %v10365, 4
    %v10715 = vsel %vm4453, %v10706, %v10714
    %v10716 = vrot.slane %v10366, 4
    %v10717 = vsel %vm4453, %v10708, %v10716
    %v10718 = vrot.slane %v10367, 4
    %v10719 = vsel %vm4453, %v10710, %v10718
    %v10720 = vrot.slane %v10368, 4
    %v10721 = vsel %vm4453, %v10712, %v10720
    %v10722 = vrot.slane %v10369, 4
    %v10723 = vsel %vm4453, %v10714, %v10722
    %v10724 = vrot.slane %v10370, 4
    %v10725 = vsel %vm4453, %v10716, %v10724
    %v10726 = vrot.slane %v10371, 4
    %v10727 = vsel %vm4453, %v10718, %v10726
    %v10728 = vrot.slane %v10372, 4
    %v10729 = vsel %vm4453, %v10720, %v10728
    %v10730 = vrot.slane %v10373, 4
    %v10731 = vsel %vm4453, %v10722, %v10730
    %v10732 = vrot.slane %v10374, 4
    %v10733 = vsel %vm4453, %v10724, %v10732
    %v10734 = vrot.slane %v10375, 4
    %v10735 = vsel %vm4453, %v10726, %v10734
    %v10736 = vrot.slane %v10376, 4
    %v10737 = vsel %vm4453, %v10728, %v10736
    %v10738 = vrot.slane %v10377, 4
    %v10739 = vsel %vm4453, %v10730, %v10738
    %v10740 = vrot.slane %v10378, 4
    %v10741 = vsel %vm4453, %v10732, %v10740
    %v10742 = vrot.slane %v10379, 4
    %v10743 = vsel %vm4453, %v10734, %v10742
    %v10744 = vrot.slane %v10380, 4
    %v10745 = vsel %vm4453, %v10736, %v10744
    %v10746 = vrot.slane %v10381, 4
    %v10747 = vsel %vm4453, %v10738, %v10746
    %v10748 = vrot.slane %v10382, 4
    %v10749 = vsel %vm4453, %v10740, %v10748
    %v10750 = vrot.slane %v10383, 4
    %v10751 = vsel %vm4453, %v10742, %v10750
    %v10752 = vrot.slane %v10384, 4
    %v10753 = vsel %vm4453, %v10744, %v10752
    %v10754 = vrot.slane %v10385, 4
    %v10755 = vsel %vm4453, %v10746, %v10754
    %v10756 = vrot.slane %v10386, 4
    %v10757 = vsel %vm4453, %v10748, %v10756
    %v10758 = vrot.slane %v10387, 4
    %v10759 = vsel %vm4453, %v10750, %v10758
    %v10760 = vrot.slane %v10388, 4
    %v10761 = vsel %vm4453, %v10752, %v10760
    %v10762 = vrot.slane %v10389, 4
    %v10763 = vsel %vm4453, %v10754, %v10762
    %v10764 = vrot.slane %v10390, 4
    %v10765 = vsel %vm4453, %v10756, %v10764
    %v10766 = vrot.slane %v10391, 4
    %v10767 = vsel %vm4453, %v10758, %v10766
    %v10768 = vrot.slane %v10392, 4
    %v10769 = vsel %vm4453, %v10760, %v10768
    %v10770 = vrot.slane %v10393, 4
    %v10771 = vsel %vm4453, %v10762, %v10770
    %v10772 = vrot.slane %v10394, 4
    %v10773 = vsel %vm4453, %v10764, %v10772
    %v10774 = vrot.slane %v10395, 4
    %v10775 = vsel %vm4453, %v10766, %v10774
    %v10776 = vrot.slane %v10396, 4
    %v10777 = vsel %vm4453, %v10768, %v10776
    %v10778 = vrot.slane %v10397, 4
    %v10779 = vsel %vm4453, %v10770, %v10778
    %v10780 = vrot.slane %v10398, 4
    %v10781 = vsel %vm4453, %v10772, %v10780
    %v10782 = vrot.slane %v10399, 4
    %v10783 = vsel %vm4453, %v10774, %v10782
    %v10784 = vrot.slane %v10400, 4
    %v10785 = vsel %vm4453, %v10776, %v10784
    %v10786 = vrot.slane %v10401, 4
    %v10787 = vsel %vm4453, %v10778, %v10786
    %v10788 = vrot.slane %v10402, 4
    %v10789 = vsel %vm4453, %v10780, %v10788
    %v10790 = vrot.slane %v10403, 4
    %v10791 = vsel %vm4453, %v10782, %v10790
    %v10792 = vrot.slane %v10404, 4
    %v10793 = vsel %vm4453, %v10784, %v10792
    %v10794 = vrot.slane %v10405, 4
    %v10795 = vsel %vm4453, %v10786, %v10794
    %v10796 = vrot.slane %v10406, 4
    %v10797 = vsel %vm4453, %v10788, %v10796
    %v10798 = vrot.slane %v10407, 4
    %v10799 = vsel %vm4453, %v10790, %v10798
    %v10800 = vrot.slane %v10408, 4
    %v10801 = vsel %vm4453, %v10792, %v10800
    %v10802 = vrot.slane %v10409, 4
    %v10803 = vsel %vm4453, %v10794, %v10802
    %v10804 = vrot.slane %v10410, 4
    %v10805 = vsel %vm4453, %v10796, %v10804
    %v10806 = vrot.slane %v10411, 4
    %v10807 = vsel %vm4453, %v10798, %v10806
    %v10808 = vrot.slane %v10412, 4
    %v10809 = vsel %vm4453, %v10800, %v10808
    %v10810 = vrot.slane %v10413, 4
    %v10811 = vsel %vm4453, %v10802, %v10810
    %v10812 = vrot.slane %v10414, 4
    %v10813 = vsel %vm4453, %v10804, %v10812
    %v10814 = vrot.slane %v10415, 4
    %v10815 = vsel %vm4453, %v10806, %v10814
    %v10816 = vrot.slane %v10416, 4
    %v10817 = vsel %vm4453, %v10808, %v10816
    %v10818 = vrot.slane %v10417, 4
    %v10819 = vsel %vm4453, %v10810, %v10818
    %v10820 = vrot.slane %v10418, 4
    %v10821 = vsel %vm4453, %v10812, %v10820
    %v10822 = vrot.slane %v10419, 4
    %v10823 = vsel %vm4453, %v10814, %v10822
    %v10824 = vrot.slane %v10420, 4
    %v10825 = vsel %vm4453, %v10816, %v10824
    %v10826 = vrot.slane %v10421, 4
    %v10827 = vsel %vm4453, %v10818, %v10826
    %v10828 = vrot.slane %v10422, 4
    %v10829 = vsel %vm4453, %v10820, %v10828
    %v10830 = vrot.slane %v10423, 4
    %v10831 = vsel %vm4453, %v10822, %v10830
    %v10832 = vrot.slane %v10424, 4
    %v10833 = vsel %vm4453, %v10824, %v10832
    %v10834 = vrot.slane %v10425, 4
    %v10835 = vsel %vm4453, %v10826, %v10834
    %v10836 = vrot.slane %v10426, 4
    %v10837 = vsel %vm4453, %v10828, %v10836
    %v10838 = vrot.slane %v10427, 4
    %v10839 = vsel %vm4453, %v10830, %v10838
    %v10840 = vrot.slane %v10428, 4
    %v10841 = vsel %vm4453, %v10832, %v10840
    %v10842 = vrot.slane %v10429, 4
    %v10843 = vsel %vm4453, %v10834, %v10842
    %v10844 = vrot.slane %v10430, 4
    %v10845 = vsel %vm4453, %v10836, %v10844
    %v10846 = vrot.slane %v10431, 4
    %v10847 = vsel %vm4453, %v10838, %v10846
    %v10848 = vrot.slane %v10432, 4
    %v10849 = vsel %vm4453, %v10840, %v10848
    %v10850 = vrot.slane %v10433, 4
    %v10851 = vsel %vm4453, %v10842, %v10850
    %v10852 = vrot.slane %v10434, 4
    %v10853 = vsel %vm4453, %v10844, %v10852
    %v10854 = vrot.slane %v10435, 4
    %v10855 = vsel %vm4453, %v10846, %v10854
    %v10856 = vrot.slane %v10436, 4
    %v10857 = vsel %vm4453, %v10848, %v10856
    %v10990 = vsel %vm1825, %v10439, 0
    %v10992 = vsel %vm415, %v10851, 0
    %v10994 = vsel %vm415, %v10853, 0
    %v10996 = vsel %vm415, %v10855, 0
    %v10998 = vsel %vm415, %v10857, 0
    %11000 = vmatprep.subr.mxu0 %v10709
    %11001 = vmatpush1.msra.mxu0 %v10707
    %11002 = vmatprep.subr.mxu0 %v10701
    %11003 = vmatpush1.msra.mxu0 %v10699
    %11004 = vmatprep.subr.mxu0 %v10693
    %11005 = vmatpush1.msra.mxu0 %v10691
    %11006 = vmatprep.subr.mxu0 %v10685
    %11007 = vmatpush1.msra.mxu0 %v10683
    %11008 = vmatprep.subr.mxu0 %v10677
    %11009 = vmatpush1.msra.mxu0 %v10675
    %11010 = vmatprep.subr.mxu0 %v10669
    %11011 = vmatpush1.msra.mxu0 %v10667
    %11012 = vmatprep.subr.mxu0 %v10661
    %11013 = vmatpush1.msra.mxu0 %v10659
    %11014 = vmatprep.subr.mxu0 %v10653
    %11015 = vmatpush1.msra.mxu0 %v10651
    %11016 = vmatprep.subr.mxu0 %v10645
    %11017 = vmatpush1.msra.mxu0 %v10643
    %11018 = vmatprep.subr.mxu0 %v10637
    %11019 = vmatpush1.msra.mxu0 %v10635
    %11020 = vmatprep.subr.mxu0 %v10629
    %11021 = vmatpush1.msra.mxu0 %v10627
    %11022 = vmatprep.subr.mxu0 %v10621
    %11023 = vmatpush1.msra.mxu0 %v10619
    %11024 = vmatprep.subr.mxu0 %v10613
    %11025 = vmatpush1.msra.mxu0 %v10611
    %11026 = vmatprep.subr.mxu0 %v10605
    %11027 = vmatpush1.msra.mxu0 %v10603
    %11028 = vmatprep.subr.mxu0 %v10597
    %11029 = vmatpush1.msra.mxu0 %v10595
    %11030 = vmatprep.subr.mxu0 %v10587
    %11031 = vmatpush1.msra.mxu0 %v10584
    %11032 = vmatprep.subr.mxu0 %v10837
    %11033 = vmatpush2.msra.mxu0 %v10835
    %11034 = vmatprep.subr.mxu0 %v10829
    %11035 = vmatpush2.msra.mxu0 %v10827
    %11036 = vmatprep.subr.mxu0 %v10821
    %11037 = vmatpush2.msra.mxu0 %v10819
    %11038 = vmatprep.subr.mxu0 %v10813
    %11039 = vmatpush2.msra.mxu0 %v10811
    %11040 = vmatprep.subr.mxu0 %v10805
    %11041 = vmatpush2.msra.mxu0 %v10803
    %11042 = vmatprep.subr.mxu0 %v10797
    %11043 = vmatpush2.msra.mxu0 %v10795
    %11044 = vmatprep.subr.mxu0 %v10789
    %11045 = vmatpush2.msra.mxu0 %v10787
    %11046 = vmatprep.subr.mxu0 %v10781
    %11047 = vmatpush2.msra.mxu0 %v10779
    %11048 = vmatprep.subr.mxu0 %v10773
    %11049 = vmatpush2.msra.mxu0 %v10771
    %11050 = vmatprep.subr.mxu0 %v10765
    %11051 = vmatpush2.msra.mxu0 %v10763
    %11052 = vmatprep.subr.mxu0 %v10757
    %11053 = vmatpush2.msra.mxu0 %v10755
    %11054 = vmatprep.subr.mxu0 %v10749
    %11055 = vmatpush2.msra.mxu0 %v10747
    %11056 = vmatprep.subr.mxu0 %v10741
    %11057 = vmatpush2.msra.mxu0 %v10739
    %11058 = vmatprep.subr.mxu0 %v10733
    %11059 = vmatpush2.msra.mxu0 %v10731
    %11060 = vmatprep.subr.mxu0 %v10725
    %11061 = vmatpush2.msra.mxu0 %v10723
    %11062 = vmatprep.subr.mxu0 %v10717
    %11063 = vmatpush2.msra.mxu0 %v10715
    %11064 = vmatprep.mubr.f32.mxu0 %v10438
    %11065 = vmatmul.mubr.f32.gmra.mxu0 %v10437
    %v11066 = vpop.f32.mrf.mxu0
    %v11067 = vadd.f32 0.0, %v11066
    %v11068 = vpop.f32.mrf.mxu0
    %v11069 = vadd.f32 0.0, %v11068
    %11070 = vdwg.mxu0
    %11071 = vmatprep.subr.mxu0 0.0
    %11072 = vmatpush1.msra.mxu0 0.0
    %11073 = vmatprep.subr.mxu0 0.0
    %11074 = vmatpush1.msra.mxu0 0.0
    %11075 = vmatprep.subr.mxu0 0.0
    %11076 = vmatpush1.msra.mxu0 0.0
    %11077 = vmatprep.subr.mxu0 0.0
    %11078 = vmatpush1.msra.mxu0 0.0
    %11079 = vmatprep.subr.mxu0 0.0
    %11080 = vmatpush1.msra.mxu0 0.0
    %11081 = vmatprep.subr.mxu0 0.0
    %11082 = vmatpush1.msra.mxu0 0.0
    %11083 = vmatprep.subr.mxu0 0.0
    %11084 = vmatpush1.msra.mxu0 0.0
    %11085 = vmatprep.subr.mxu0 0.0
    %11086 = vmatpush1.msra.mxu0 0.0
    %11087 = vmatprep.subr.mxu0 0.0
    %11088 = vmatpush1.msra.mxu0 0.0
    %11089 = vmatprep.subr.mxu0 0.0
    %11090 = vmatpush1.msra.mxu0 0.0
    %11091 = vmatprep.subr.mxu0 0.0
    %11092 = vmatpush1.msra.mxu0 0.0
    %11093 = vmatprep.subr.mxu0 0.0
    %11094 = vmatpush1.msra.mxu0 0.0
    %11095 = vmatprep.subr.mxu0 0.0
    %11096 = vmatpush1.msra.mxu0 0.0
    %11097 = vmatprep.subr.mxu0 0.0
    %11098 = vmatpush1.msra.mxu0 0.0
    %11099 = vmatprep.subr.mxu0 %v10994
    %11100 = vmatpush1.msra.mxu0 %v10992
    %11101 = vmatprep.subr.mxu0 %v10845
    %11102 = vmatpush1.msra.mxu0 %v10843
    %11103 = vmatprep.subr.mxu0 0.0
    %11104 = vmatpush2.msra.mxu0 0.0
    %11105 = vmatprep.subr.mxu0 0.0
    %11106 = vmatpush2.msra.mxu0 0.0
    %11107 = vmatprep.subr.mxu0 0.0
    %11108 = vmatpush2.msra.mxu0 0.0
    %11109 = vmatprep.subr.mxu0 0.0
    %11110 = vmatpush2.msra.mxu0 0.0
    %11111 = vmatprep.subr.mxu0 0.0
    %11112 = vmatpush2.msra.mxu0 0.0
    %11113 = vmatprep.subr.mxu0 0.0
    %11114 = vmatpush2.msra.mxu0 0.0
    %11115 = vmatprep.subr.mxu0 0.0
    %11116 = vmatpush2.msra.mxu0 0.0
    %11117 = vmatprep.subr.mxu0 0.0
    %11118 = vmatpush2.msra.mxu0 0.0
    %11119 = vmatprep.subr.mxu0 0.0
    %11120 = vmatpush2.msra.mxu0 0.0
    %11121 = vmatprep.subr.mxu0 0.0
    %11122 = vmatpush2.msra.mxu0 0.0
    %11123 = vmatprep.subr.mxu0 0.0
    %11124 = vmatpush2.msra.mxu0 0.0
    %11125 = vmatprep.subr.mxu0 0.0
    %11126 = vmatpush2.msra.mxu0 0.0
    %11127 = vmatprep.subr.mxu0 0.0
    %11128 = vmatpush2.msra.mxu0 0.0
    %11129 = vmatprep.subr.mxu0 0.0
    %11130 = vmatpush2.msra.mxu0 0.0
    %11131 = vmatprep.subr.mxu0 0.0
    %11132 = vmatpush2.msra.mxu0 0.0
    %11133 = vmatprep.subr.mxu0 0.0
    %11134 = vmatpush2.msra.mxu0 0.0
    %11135 = vmatprep.mubr.f32.mxu0 0.0
    %11136 = vmatmul.mubr.f32.gmra.mxu0 %v10990
    %v11137 = vpop.f32.mrf.mxu0
    %v11138 = vadd.f32 %v11067, %v11137
    %v11139 = vpop.f32.mrf.mxu0
    %v11140 = vadd.f32 %v11069, %v11139
    %11141 = vdwg.mxu0
    %11142 = vmatprep.subr.mxu0 %v10713
    %11143 = vmatpush1.msra.mxu0 %v10711
    %11144 = vmatprep.subr.mxu0 %v10705
    %11145 = vmatpush1.msra.mxu0 %v10703
    %11146 = vmatprep.subr.mxu0 %v10697
    %11147 = vmatpush1.msra.mxu0 %v10695
    %11148 = vmatprep.subr.mxu0 %v10689
    %11149 = vmatpush1.msra.mxu0 %v10687
    %11150 = vmatprep.subr.mxu0 %v10681
    %11151 = vmatpush1.msra.mxu0 %v10679
    %11152 = vmatprep.subr.mxu0 %v10673
    %11153 = vmatpush1.msra.mxu0 %v10671
    %11154 = vmatprep.subr.mxu0 %v10665
    %11155 = vmatpush1.msra.mxu0 %v10663
    %11156 = vmatprep.subr.mxu0 %v10657
    %11157 = vmatpush1.msra.mxu0 %v10655
    %11158 = vmatprep.subr.mxu0 %v10649
    %11159 = vmatpush1.msra.mxu0 %v10647
    %11160 = vmatprep.subr.mxu0 %v10641
    %11161 = vmatpush1.msra.mxu0 %v10639
    %11162 = vmatprep.subr.mxu0 %v10633
    %11163 = vmatpush1.msra.mxu0 %v10631
    %11164 = vmatprep.subr.mxu0 %v10625
    %11165 = vmatpush1.msra.mxu0 %v10623
    %11166 = vmatprep.subr.mxu0 %v10617
    %11167 = vmatpush1.msra.mxu0 %v10615
    %11168 = vmatprep.subr.mxu0 %v10609
    %11169 = vmatpush1.msra.mxu0 %v10607
    %11170 = vmatprep.subr.mxu0 %v10601
    %11171 = vmatpush1.msra.mxu0 %v10599
    %11172 = vmatprep.subr.mxu0 %v10593
    %11173 = vmatpush1.msra.mxu0 %v10590
    %11174 = vmatprep.subr.mxu0 %v10841
    %11175 = vmatpush2.msra.mxu0 %v10839
    %11176 = vmatprep.subr.mxu0 %v10833
    %11177 = vmatpush2.msra.mxu0 %v10831
    %11178 = vmatprep.subr.mxu0 %v10825
    %11179 = vmatpush2.msra.mxu0 %v10823
    %11180 = vmatprep.subr.mxu0 %v10817
    %11181 = vmatpush2.msra.mxu0 %v10815
    %11182 = vmatprep.subr.mxu0 %v10809
    %11183 = vmatpush2.msra.mxu0 %v10807
    %11184 = vmatprep.subr.mxu0 %v10801
    %11185 = vmatpush2.msra.mxu0 %v10799
    %11186 = vmatprep.subr.mxu0 %v10793
    %11187 = vmatpush2.msra.mxu0 %v10791
    %11188 = vmatprep.subr.mxu0 %v10785
    %11189 = vmatpush2.msra.mxu0 %v10783
    %11190 = vmatprep.subr.mxu0 %v10777
    %11191 = vmatpush2.msra.mxu0 %v10775
    %11192 = vmatprep.subr.mxu0 %v10769
    %11193 = vmatpush2.msra.mxu0 %v10767
    %11194 = vmatprep.subr.mxu0 %v10761
    %11195 = vmatpush2.msra.mxu0 %v10759
    %11196 = vmatprep.subr.mxu0 %v10753
    %11197 = vmatpush2.msra.mxu0 %v10751
    %11198 = vmatprep.subr.mxu0 %v10745
    %11199 = vmatpush2.msra.mxu0 %v10743
    %11200 = vmatprep.subr.mxu0 %v10737
    %11201 = vmatpush2.msra.mxu0 %v10735
    %11202 = vmatprep.subr.mxu0 %v10729
    %11203 = vmatpush2.msra.mxu0 %v10727
    %11204 = vmatprep.subr.mxu0 %v10721
    %11205 = vmatpush2.msra.mxu0 %v10719
    %11206 = vmatprep.mubr.f32.mxu0 %v10438
    %11207 = vmatmul.mubr.f32.gmra.mxu0 %v10437
    %v11208 = vpop.f32.mrf.mxu0
    %v11209 = vadd.f32 0.0, %v11208
    %v11210 = vpop.f32.mrf.mxu0
    %v11211 = vadd.f32 0.0, %v11210
    %11212 = vdwg.mxu0
    %11213 = vmatprep.subr.mxu0 0.0
    %11214 = vmatpush1.msra.mxu0 0.0
    %11215 = vmatprep.subr.mxu0 0.0
    %11216 = vmatpush1.msra.mxu0 0.0
    %11217 = vmatprep.subr.mxu0 0.0
    %11218 = vmatpush1.msra.mxu0 0.0
    %11219 = vmatprep.subr.mxu0 0.0
    %11220 = vmatpush1.msra.mxu0 0.0
    %11221 = vmatprep.subr.mxu0 0.0
    %11222 = vmatpush1.msra.mxu0 0.0
    %11223 = vmatprep.subr.mxu0 0.0
    %11224 = vmatpush1.msra.mxu0 0.0
    %11225 = vmatprep.subr.mxu0 0.0
    %11226 = vmatpush1.msra.mxu0 0.0
    %11227 = vmatprep.subr.mxu0 0.0
    %11228 = vmatpush1.msra.mxu0 0.0
    %11229 = vmatprep.subr.mxu0 0.0
    %11230 = vmatpush1.msra.mxu0 0.0
    %11231 = vmatprep.subr.mxu0 0.0
    %11232 = vmatpush1.msra.mxu0 0.0
    %11233 = vmatprep.subr.mxu0 0.0
    %11234 = vmatpush1.msra.mxu0 0.0
    %11235 = vmatprep.subr.mxu0 0.0
    %11236 = vmatpush1.msra.mxu0 0.0
    %11237 = vmatprep.subr.mxu0 0.0
    %11238 = vmatpush1.msra.mxu0 0.0
    %11239 = vmatprep.subr.mxu0 0.0
    %11240 = vmatpush1.msra.mxu0 0.0
    %11241 = vmatprep.subr.mxu0 %v10998
    %11242 = vmatpush1.msra.mxu0 %v10996
    %11243 = vmatprep.subr.mxu0 %v10849
    %11244 = vmatpush1.msra.mxu0 %v10847
    %11245 = vmatprep.subr.mxu0 0.0
    %11246 = vmatpush2.msra.mxu0 0.0
    %11247 = vmatprep.subr.mxu0 0.0
    %11248 = vmatpush2.msra.mxu0 0.0
    %11249 = vmatprep.subr.mxu0 0.0
    %11250 = vmatpush2.msra.mxu0 0.0
    %11251 = vmatprep.subr.mxu0 0.0
    %11252 = vmatpush2.msra.mxu0 0.0
    %11253 = vmatprep.subr.mxu0 0.0
    %11254 = vmatpush2.msra.mxu0 0.0
    %11255 = vmatprep.subr.mxu0 0.0
    %11256 = vmatpush2.msra.mxu0 0.0
    %11257 = vmatprep.subr.mxu0 0.0
    %11258 = vmatpush2.msra.mxu0 0.0
    %11259 = vmatprep.subr.mxu0 0.0
    %11260 = vmatpush2.msra.mxu0 0.0
    %11261 = vmatprep.subr.mxu0 0.0
    %11262 = vmatpush2.msra.mxu0 0.0
    %11263 = vmatprep.subr.mxu0 0.0
    %11264 = vmatpush2.msra.mxu0 0.0
    %11265 = vmatprep.subr.mxu0 0.0
    %11266 = vmatpush2.msra.mxu0 0.0
    %11267 = vmatprep.subr.mxu0 0.0
    %11268 = vmatpush2.msra.mxu0 0.0
    %11269 = vmatprep.subr.mxu0 0.0
    %11270 = vmatpush2.msra.mxu0 0.0
    %11271 = vmatprep.subr.mxu0 0.0
    %11272 = vmatpush2.msra.mxu0 0.0
    %11273 = vmatprep.subr.mxu0 0.0
    %11274 = vmatpush2.msra.mxu0 0.0
    %11275 = vmatprep.subr.mxu0 0.0
    %11276 = vmatpush2.msra.mxu0 0.0
    %11277 = vmatprep.mubr.f32.mxu0 0.0
    %11278 = vmatmul.mubr.f32.gmra.mxu0 %v10990
    %v11279 = vpop.f32.mrf.mxu0
    %v11280 = vadd.f32 %v11209, %v11279
    %v11281 = vpop.f32.mrf.mxu0
    %v11282 = vadd.f32 %v11211, %v11281
    %11283 = vdwg.mxu0
    %v11284 = vadd.f32 %v10151, %v11138
    %v11285 = vadd.f32 %v10153, %v11140
    %v11286 = vadd.f32 %v10293, %v11280
    %v11287 = vadd.f32 %v10295, %v11282
    %v11288 = vld [vmem:[%s6 + $0xca0] sm:$0xfc]
    %v11289 = vld [vmem:[%s6 + $0xca8] sm:$0xfc]
    %v11290 = vld [vmem:[%s6 + $0xcb0] sm:$0xfc]
    %v11291 = vld [vmem:[%s6 + $0xcb8] sm:$0xfc]
    %v11292 = vld [vmem:[%s6 + $0xcc0] sm:$0xff]
    %v11293 = vld [vmem:[%s6 + $0xcc8] sm:$0xff]
    %v11294 = vld [vmem:[%s6 + $0xcd0] sm:$0xff]
    %v11295 = vld [vmem:[%s6 + $0xcd8] sm:$0xff]
    %v11296 = vld [vmem:[%s6 + $0xce0] sm:$0xff]
    %v11297 = vld [vmem:[%s6 + $0xce8] sm:$0xff]
    %v11298 = vld [vmem:[%s6 + $0xcf0] sm:$0xff]
    %v11299 = vld [vmem:[%s6 + $0xcf8] sm:$0xff]
    %v11300 = vld [vmem:[%s6 + $0xd00] sm:$0xff]
    %v11301 = vld [vmem:[%s6 + $0xd08] sm:$0xff]
    %v11302 = vld [vmem:[%s6 + $0xd10] sm:$0xff]
    %v11303 = vld [vmem:[%s6 + $0xd18] sm:$0xff]
    %v11304 = vld [vmem:[%s6 + $0xd20] sm:$0xff]
    %v11305 = vld [vmem:[%s6 + $0xd28] sm:$0xff]
    %v11306 = vld [vmem:[%s6 + $0xd30] sm:$0xff]
    %v11307 = vld [vmem:[%s6 + $0xd38] sm:$0xff]
    %v11308 = vld [vmem:[%s6 + $0xd40] sm:$0xff]
    %v11309 = vld [vmem:[%s6 + $0xd48] sm:$0xff]
    %v11310 = vld [vmem:[%s6 + $0xd50] sm:$0xff]
    %v11311 = vld [vmem:[%s6 + $0xd58] sm:$0xff]
    %v11312 = vld [vmem:[%s6 + $0xd60] sm:$0xff]
    %v11313 = vld [vmem:[%s6 + $0xd68] sm:$0xff]
    %v11314 = vld [vmem:[%s6 + $0xd70] sm:$0xff]
    %v11315 = vld [vmem:[%s6 + $0xd78] sm:$0xff]
    %v11316 = vld [vmem:[%s6 + $0xd80] sm:$0xff]
    %v11317 = vld [vmem:[%s6 + $0xd88] sm:$0xff]
    %v11318 = vld [vmem:[%s6 + $0xd90] sm:$0xff]
    %v11319 = vld [vmem:[%s6 + $0xd98] sm:$0xff]
    %v11320 = vld [vmem:[%s6 + $0xda0] sm:$0xff]
    %v11321 = vld [vmem:[%s6 + $0xda8] sm:$0xff]
    %v11322 = vld [vmem:[%s6 + $0xdb0] sm:$0xff]
    %v11323 = vld [vmem:[%s6 + $0xdb8] sm:$0xff]
    %v11324 = vld [vmem:[%s6 + $0xdc0] sm:$0xff]
    %v11325 = vld [vmem:[%s6 + $0xdc8] sm:$0xff]
    %v11326 = vld [vmem:[%s6 + $0xdd0] sm:$0xff]
    %v11327 = vld [vmem:[%s6 + $0xdd8] sm:$0xff]
    %v11328 = vld [vmem:[%s6 + $0xde0] sm:$0xff]
    %v11329 = vld [vmem:[%s6 + $0xde8] sm:$0xff]
    %v11330 = vld [vmem:[%s6 + $0xdf0] sm:$0xff]
    %v11331 = vld [vmem:[%s6 + $0xdf8] sm:$0xff]
    %v11332 = vld [vmem:[%s6 + $0xe00] sm:$0xff]
    %v11333 = vld [vmem:[%s6 + $0xe08] sm:$0xff]
    %v11334 = vld [vmem:[%s6 + $0xe10] sm:$0xff]
    %v11335 = vld [vmem:[%s6 + $0xe18] sm:$0xff]
    %v11336 = vld [vmem:[%s6 + $0xe20] sm:$0xff]
    %v11337 = vld [vmem:[%s6 + $0xe28] sm:$0xff]
    %v11338 = vld [vmem:[%s6 + $0xe30] sm:$0xff]
    %v11339 = vld [vmem:[%s6 + $0xe38] sm:$0xff]
    %v11340 = vld [vmem:[%s6 + $0xe40] sm:$0xff]
    %v11341 = vld [vmem:[%s6 + $0xe48] sm:$0xff]
    %v11342 = vld [vmem:[%s6 + $0xe50] sm:$0xff]
    %v11343 = vld [vmem:[%s6 + $0xe58] sm:$0xff]
    %v11344 = vld [vmem:[%s6 + $0xe60] sm:$0xff]
    %v11345 = vld [vmem:[%s6 + $0xe68] sm:$0xff]
    %v11346 = vld [vmem:[%s6 + $0xe70] sm:$0xff]
    %v11347 = vld [vmem:[%s6 + $0xe78] sm:$0xff]
    %v11348 = vld [vmem:[%s6 + $0xe80] sm:$0xff]
    %v11349 = vld [vmem:[%s6 + $0xe88] sm:$0xff]
    %v11350 = vld [vmem:[%s6 + $0xe90] sm:$0xff]
    %v11351 = vld [vmem:[%s6 + $0xe98] sm:$0xff]
    %v11352 = vld [vmem:[%s6 + $0xea0] sm:$0xff]
    %v11353 = vld [vmem:[%s6 + $0xea8] sm:$0xff]
    %v11354 = vld [vmem:[%s6 + $0xeb0] sm:$0xff]
    %v11355 = vld [vmem:[%s6 + $0xeb8] sm:$0xff]
    %v11356 = vld [vmem:[%s6 + $0xec0] sm:$0xff]
    %v11357 = vld [vmem:[%s6 + $0xec8] sm:$0xff]
    %v11358 = vld [vmem:[%s6 + $0xed0] sm:$0xff]
    %v11359 = vld [vmem:[%s6 + $0xed8] sm:$0xff]
    %v11360 = vld [vmem:[%s6 + $0xee0] sm:$0xff]
    %v11361 = vld [vmem:[%s6 + $0xee8] sm:$0xff]
    %v11362 = vld [vmem:[%s6 + $0xef0] sm:$0xff]
    %v11363 = vld [vmem:[%s6 + $0xef8] sm:$0xff]
    %v11364 = vld [vmem:[%s6 + $0xf00] sm:$0xff]
    %v11365 = vld [vmem:[%s6 + $0xf08] sm:$0xff]
    %v11366 = vld [vmem:[%s6 + $0xf10] sm:$0xff]
    %v11367 = vld [vmem:[%s6 + $0xf18] sm:$0xff]
    %v11368 = vld [vmem:[%s6 + $0xf20] sm:$0xff]
    %v11369 = vld [vmem:[%s6 + $0xf28] sm:$0xff]
    %v11370 = vld [vmem:[%s6 + $0xf30] sm:$0xff]
    %v11371 = vld [vmem:[%s6 + $0xf38] sm:$0xff]
    %v11372 = vld [vmem:[%s6 + $0xf40] sm:$0xff]
    %v11373 = vld [vmem:[%s6 + $0xf48] sm:$0xff]
    %v11374 = vld [vmem:[%s6 + $0xf50] sm:$0xff]
    %v11375 = vld [vmem:[%s6 + $0xf58] sm:$0xff]
    %v11376 = vld [vmem:[%s6 + $0xf60] sm:$0xff]
    %v11377 = vld [vmem:[%s6 + $0xf68] sm:$0xff]
    %v11378 = vld [vmem:[%s6 + $0xf70] sm:$0xff]
    %v11379 = vld [vmem:[%s6 + $0xf78] sm:$0xff]
    %v11380 = vld [vmem:[%s6 + $0xf80] sm:$0xff]
    %v11381 = vld [vmem:[%s6 + $0xf88] sm:$0xff]
    %v11382 = vld [vmem:[%s6 + $0xf90] sm:$0xff]
    %v11383 = vld [vmem:[%s6 + $0xf98] sm:$0xff]
    %v11384 = vld [vmem:[%s6 + $0xfa0] sm:$0xff]
    %v11385 = vld [vmem:[%s6 + $0xfa8] sm:$0xff]
    %v11386 = vld [vmem:[%s6 + $0xfb0] sm:$0xff]
    %v11387 = vld [vmem:[%s6 + $0xfb8] sm:$0xff]
    %v11388 = vld [vmem:[%s6 + $0xfc0] sm:$0xff]
    %v11389 = vld [vmem:[%s6 + $0xfc8] sm:$0xff]
    %v11390 = vld [vmem:[%s6 + $0xfd0] sm:$0xff]
    %v11391 = vld [vmem:[%s6 + $0xfd8] sm:$0xff]
    %v11392 = vld [vmem:[%s6 + $0xfe0] sm:$0xff]
    %v11393 = vld [vmem:[%s6 + $0xfe8] sm:$0xff]
    %v11394 = vld [vmem:[%s6 + $0xff0] sm:$0xff]
    %v11395 = vld [vmem:[%s6 + $0xff8] sm:$0xff]
    %v11396 = vld [vmem:[%s6 + $0x1000] sm:$0xff]
    %v11397 = vld [vmem:[%s6 + $0x1008] sm:$0xff]
    %v11398 = vld [vmem:[%s6 + $0x1010] sm:$0xff]
    %v11399 = vld [vmem:[%s6 + $0x1018] sm:$0xff]
    %v11400 = vld [vmem:[%s6 + $0x1020] sm:$0xff]
    %v11401 = vld [vmem:[%s6 + $0x1028] sm:$0xff]
    %v11402 = vld [vmem:[%s6 + $0x1030] sm:$0xff]
    %v11403 = vld [vmem:[%s6 + $0x1038] sm:$0xff]
    %v11404 = vld [vmem:[%s6 + $0x1040] sm:$0xff]
    %v11405 = vld [vmem:[%s6 + $0x1048] sm:$0xff]
    %v11406 = vld [vmem:[%s6 + $0x1050] sm:$0xff]
    %v11407 = vld [vmem:[%s6 + $0x1058] sm:$0xff]
    %v11408 = vld [vmem:[%s6 + $0x1060] sm:$0xff]
    %v11409 = vld [vmem:[%s6 + $0x1068] sm:$0xff]
    %v11410 = vld [vmem:[%s6 + $0x1070] sm:$0xff]
    %v11411 = vld [vmem:[%s6 + $0x1078] sm:$0xff]
    %v11412 = vld [vmem:[%s6 + $0x1080] sm:$0xff]
    %v11413 = vld [vmem:[%s6 + $0x1088] sm:$0xff]
    %v11414 = vld [vmem:[%s6 + $0x1090] sm:$0xff]
    %v11415 = vld [vmem:[%s6 + $0x1098] sm:$0xff]
    %v11416 = vld [vmem:[%s6 + $0x10a0] sm:$0xff]
    %v11417 = vld [vmem:[%s6 + $0x10a8] sm:$0xff]
    %v11418 = vld [vmem:[%s6 + $0x10b0] sm:$0xff]
    %v11419 = vld [vmem:[%s6 + $0x10b8] sm:$0xff]
    %v11420 = vld [vmem:[%s6 + $0x10c0] sm:$0xff]
    %v11421 = vld [vmem:[%s6 + $0x10c8] sm:$0xff]
    %v11422 = vld [vmem:[%s6 + $0x10d0] sm:$0xff]
    %v11423 = vld [vmem:[%s6 + $0x10d8] sm:$0xff]
    %v11424 = vrot.slane %v8870, 3
    %v11425 = vrot.slane %v8871, 3
    %v11426 = vrot.slane %v8872, 3
    %v11565 = vrot.slane %v11288, 2
    %v11566 = vrot.slane %v11292, 2
    %v11567 = vsel %vm415, %v11565, %v11566
    %v11568 = vrot.slane %v11289, 2
    %v11569 = vrot.slane %v11293, 2
    %v11570 = vsel %vm415, %v11568, %v11569
    %v11571 = vrot.slane %v11290, 2
    %v11572 = vrot.slane %v11294, 2
    %v11573 = vsel %vm415, %v11571, %v11572
    %v11574 = vrot.slane %v11291, 2
    %v11575 = vrot.slane %v11295, 2
    %v11576 = vsel %vm415, %v11574, %v11575
    %v11577 = vrot.slane %v11296, 2
    %v11578 = vsel %vm415, %v11566, %v11577
    %v11579 = vrot.slane %v11297, 2
    %v11580 = vsel %vm415, %v11569, %v11579
    %v11581 = vrot.slane %v11298, 2
    %v11582 = vsel %vm415, %v11572, %v11581
    %v11583 = vrot.slane %v11299, 2
    %v11584 = vsel %vm415, %v11575, %v11583
    %v11585 = vrot.slane %v11300, 2
    %v11586 = vsel %vm415, %v11577, %v11585
    %v11587 = vrot.slane %v11301, 2
    %v11588 = vsel %vm415, %v11579, %v11587
    %v11589 = vrot.slane %v11302, 2
    %v11590 = vsel %vm415, %v11581, %v11589
    %v11591 = vrot.slane %v11303, 2
    %v11592 = vsel %vm415, %v11583, %v11591
    %v11593 = vrot.slane %v11304, 2
    %v11594 = vsel %vm415, %v11585, %v11593
    %v11595 = vrot.slane %v11305, 2
    %v11596 = vsel %vm415, %v11587, %v11595
    %v11597 = vrot.slane %v11306, 2
    %v11598 = vsel %vm415, %v11589, %v11597
    %v11599 = vrot.slane %v11307, 2
    %v11600 = vsel %vm415, %v11591, %v11599
    %v11601 = vrot.slane %v11308, 2
    %v11602 = vsel %vm415, %v11593, %v11601
    %v11603 = vrot.slane %v11309, 2
    %v11604 = vsel %vm415, %v11595, %v11603
    %v11605 = vrot.slane %v11310, 2
    %v11606 = vsel %vm415, %v11597, %v11605
    %v11607 = vrot.slane %v11311, 2
    %v11608 = vsel %vm415, %v11599, %v11607
    %v11609 = vrot.slane %v11312, 2
    %v11610 = vsel %vm415, %v11601, %v11609
    %v11611 = vrot.slane %v11313, 2
    %v11612 = vsel %vm415, %v11603, %v11611
    %v11613 = vrot.slane %v11314, 2
    %v11614 = vsel %vm415, %v11605, %v11613
    %v11615 = vrot.slane %v11315, 2
    %v11616 = vsel %vm415, %v11607, %v11615
    %v11617 = vrot.slane %v11316, 2
    %v11618 = vsel %vm415, %v11609, %v11617
    %v11619 = vrot.slane %v11317, 2
    %v11620 = vsel %vm415, %v11611, %v11619
    %v11621 = vrot.slane %v11318, 2
    %v11622 = vsel %vm415, %v11613, %v11621
    %v11623 = vrot.slane %v11319, 2
    %v11624 = vsel %vm415, %v11615, %v11623
    %v11625 = vrot.slane %v11320, 2
    %v11626 = vsel %vm415, %v11617, %v11625
    %v11627 = vrot.slane %v11321, 2
    %v11628 = vsel %vm415, %v11619, %v11627
    %v11629 = vrot.slane %v11322, 2
    %v11630 = vsel %vm415, %v11621, %v11629
    %v11631 = vrot.slane %v11323, 2
    %v11632 = vsel %vm415, %v11623, %v11631
    %v11633 = vrot.slane %v11324, 2
    %v11634 = vsel %vm415, %v11625, %v11633
    %v11635 = vrot.slane %v11325, 2
    %v11636 = vsel %vm415, %v11627, %v11635
    %v11637 = vrot.slane %v11326, 2
    %v11638 = vsel %vm415, %v11629, %v11637
    %v11639 = vrot.slane %v11327, 2
    %v11640 = vsel %vm415, %v11631, %v11639
    %v11641 = vrot.slane %v11328, 2
    %v11642 = vsel %vm415, %v11633, %v11641
    %v11643 = vrot.slane %v11329, 2
    %v11644 = vsel %vm415, %v11635, %v11643
    %v11645 = vrot.slane %v11330, 2
    %v11646 = vsel %vm415, %v11637, %v11645
    %v11647 = vrot.slane %v11331, 2
    %v11648 = vsel %vm415, %v11639, %v11647
    %v11649 = vrot.slane %v11332, 2
    %v11650 = vsel %vm415, %v11641, %v11649
    %v11651 = vrot.slane %v11333, 2
    %v11652 = vsel %vm415, %v11643, %v11651
    %v11653 = vrot.slane %v11334, 2
    %v11654 = vsel %vm415, %v11645, %v11653
    %v11655 = vrot.slane %v11335, 2
    %v11656 = vsel %vm415, %v11647, %v11655
    %v11657 = vrot.slane %v11336, 2
    %v11658 = vsel %vm415, %v11649, %v11657
    %v11659 = vrot.slane %v11337, 2
    %v11660 = vsel %vm415, %v11651, %v11659
    %v11661 = vrot.slane %v11338, 2
    %v11662 = vsel %vm415, %v11653, %v11661
    %v11663 = vrot.slane %v11339, 2
    %v11664 = vsel %vm415, %v11655, %v11663
    %v11665 = vrot.slane %v11340, 2
    %v11666 = vsel %vm415, %v11657, %v11665
    %v11667 = vrot.slane %v11341, 2
    %v11668 = vsel %vm415, %v11659, %v11667
    %v11669 = vrot.slane %v11342, 2
    %v11670 = vsel %vm415, %v11661, %v11669
    %v11671 = vrot.slane %v11343, 2
    %v11672 = vsel %vm415, %v11663, %v11671
    %v11673 = vrot.slane %v11344, 2
    %v11674 = vsel %vm415, %v11665, %v11673
    %v11675 = vrot.slane %v11345, 2
    %v11676 = vsel %vm415, %v11667, %v11675
    %v11677 = vrot.slane %v11346, 2
    %v11678 = vsel %vm415, %v11669, %v11677
    %v11679 = vrot.slane %v11347, 2
    %v11680 = vsel %vm415, %v11671, %v11679
    %v11681 = vrot.slane %v11348, 2
    %v11682 = vsel %vm415, %v11673, %v11681
    %v11683 = vrot.slane %v11349, 2
    %v11684 = vsel %vm415, %v11675, %v11683
    %v11685 = vrot.slane %v11350, 2
    %v11686 = vsel %vm415, %v11677, %v11685
    %v11687 = vrot.slane %v11351, 2
    %v11688 = vsel %vm415, %v11679, %v11687
    %v11689 = vrot.slane %v11352, 2
    %v11690 = vsel %vm415, %v11681, %v11689
    %v11691 = vrot.slane %v11353, 2
    %v11692 = vsel %vm415, %v11683, %v11691
    %v11693 = vrot.slane %v11354, 2
    %v11694 = vsel %vm415, %v11685, %v11693
    %v11695 = vrot.slane %v11355, 2
    %v11696 = vsel %vm415, %v11687, %v11695
    %v11697 = vrot.slane %v11356, 2
    %v11698 = vsel %vm415, %v11689, %v11697
    %v11699 = vrot.slane %v11357, 2
    %v11700 = vsel %vm415, %v11691, %v11699
    %v11701 = vrot.slane %v11358, 2
    %v11702 = vsel %vm415, %v11693, %v11701
    %v11703 = vrot.slane %v11359, 2
    %v11704 = vsel %vm415, %v11695, %v11703
    %v11705 = vrot.slane %v11360, 2
    %v11706 = vsel %vm415, %v11697, %v11705
    %v11707 = vrot.slane %v11361, 2
    %v11708 = vsel %vm415, %v11699, %v11707
    %v11709 = vrot.slane %v11362, 2
    %v11710 = vsel %vm415, %v11701, %v11709
    %v11711 = vrot.slane %v11363, 2
    %v11712 = vsel %vm415, %v11703, %v11711
    %v11713 = vrot.slane %v11364, 2
    %v11714 = vsel %vm415, %v11705, %v11713
    %v11715 = vrot.slane %v11365, 2
    %v11716 = vsel %vm415, %v11707, %v11715
    %v11717 = vrot.slane %v11366, 2
    %v11718 = vsel %vm415, %v11709, %v11717
    %v11719 = vrot.slane %v11367, 2
    %v11720 = vsel %vm415, %v11711, %v11719
    %v11721 = vrot.slane %v11368, 2
    %v11722 = vsel %vm415, %v11713, %v11721
    %v11723 = vrot.slane %v11369, 2
    %v11724 = vsel %vm415, %v11715, %v11723
    %v11725 = vrot.slane %v11370, 2
    %v11726 = vsel %vm415, %v11717, %v11725
    %v11727 = vrot.slane %v11371, 2
    %v11728 = vsel %vm415, %v11719, %v11727
    %v11729 = vrot.slane %v11372, 2
    %v11730 = vsel %vm415, %v11721, %v11729
    %v11731 = vrot.slane %v11373, 2
    %v11732 = vsel %vm415, %v11723, %v11731
    %v11733 = vrot.slane %v11374, 2
    %v11734 = vsel %vm415, %v11725, %v11733
    %v11735 = vrot.slane %v11375, 2
    %v11736 = vsel %vm415, %v11727, %v11735
    %v11737 = vrot.slane %v11376, 2
    %v11738 = vsel %vm415, %v11729, %v11737
    %v11739 = vrot.slane %v11377, 2
    %v11740 = vsel %vm415, %v11731, %v11739
    %v11741 = vrot.slane %v11378, 2
    %v11742 = vsel %vm415, %v11733, %v11741
    %v11743 = vrot.slane %v11379, 2
    %v11744 = vsel %vm415, %v11735, %v11743
    %v11745 = vrot.slane %v11380, 2
    %v11746 = vsel %vm415, %v11737, %v11745
    %v11747 = vrot.slane %v11381, 2
    %v11748 = vsel %vm415, %v11739, %v11747
    %v11749 = vrot.slane %v11382, 2
    %v11750 = vsel %vm415, %v11741, %v11749
    %v11751 = vrot.slane %v11383, 2
    %v11752 = vsel %vm415, %v11743, %v11751
    %v11753 = vrot.slane %v11384, 2
    %v11754 = vsel %vm415, %v11745, %v11753
    %v11755 = vrot.slane %v11385, 2
    %v11756 = vsel %vm415, %v11747, %v11755
    %v11757 = vrot.slane %v11386, 2
    %v11758 = vsel %vm415, %v11749, %v11757
    %v11759 = vrot.slane %v11387, 2
    %v11760 = vsel %vm415, %v11751, %v11759
    %v11761 = vrot.slane %v11388, 2
    %v11762 = vsel %vm415, %v11753, %v11761
    %v11763 = vrot.slane %v11389, 2
    %v11764 = vsel %vm415, %v11755, %v11763
    %v11765 = vrot.slane %v11390, 2
    %v11766 = vsel %vm415, %v11757, %v11765
    %v11767 = vrot.slane %v11391, 2
    %v11768 = vsel %vm415, %v11759, %v11767
    %v11769 = vrot.slane %v11392, 2
    %v11770 = vsel %vm415, %v11761, %v11769
    %v11771 = vrot.slane %v11393, 2
    %v11772 = vsel %vm415, %v11763, %v11771
    %v11773 = vrot.slane %v11394, 2
    %v11774 = vsel %vm415, %v11765, %v11773
    %v11775 = vrot.slane %v11395, 2
    %v11776 = vsel %vm415, %v11767, %v11775
    %v11777 = vrot.slane %v11396, 2
    %v11778 = vsel %vm415, %v11769, %v11777
    %v11779 = vrot.slane %v11397, 2
    %v11780 = vsel %vm415, %v11771, %v11779
    %v11781 = vrot.slane %v11398, 2
    %v11782 = vsel %vm415, %v11773, %v11781
    %v11783 = vrot.slane %v11399, 2
    %v11784 = vsel %vm415, %v11775, %v11783
    %v11785 = vrot.slane %v11400, 2
    %v11786 = vsel %vm415, %v11777, %v11785
    %v11787 = vrot.slane %v11401, 2
    %v11788 = vsel %vm415, %v11779, %v11787
    %v11789 = vrot.slane %v11402, 2
    %v11790 = vsel %vm415, %v11781, %v11789
    %v11791 = vrot.slane %v11403, 2
    %v11792 = vsel %vm415, %v11783, %v11791
    %v11793 = vrot.slane %v11404, 2
    %v11794 = vsel %vm415, %v11785, %v11793
    %v11795 = vrot.slane %v11405, 2
    %v11796 = vsel %vm415, %v11787, %v11795
    %v11797 = vrot.slane %v11406, 2
    %v11798 = vsel %vm415, %v11789, %v11797
    %v11799 = vrot.slane %v11407, 2
    %v11800 = vsel %vm415, %v11791, %v11799
    %v11801 = vrot.slane %v11408, 2
    %v11802 = vsel %vm415, %v11793, %v11801
    %v11803 = vrot.slane %v11409, 2
    %v11804 = vsel %vm415, %v11795, %v11803
    %v11805 = vrot.slane %v11410, 2
    %v11806 = vsel %vm415, %v11797, %v11805
    %v11807 = vrot.slane %v11411, 2
    %v11808 = vsel %vm415, %v11799, %v11807
    %v11809 = vrot.slane %v11412, 2
    %v11810 = vsel %vm415, %v11801, %v11809
    %v11811 = vrot.slane %v11413, 2
    %v11812 = vsel %vm415, %v11803, %v11811
    %v11813 = vrot.slane %v11414, 2
    %v11814 = vsel %vm415, %v11805, %v11813
    %v11815 = vrot.slane %v11415, 2
    %v11816 = vsel %vm415, %v11807, %v11815
    %v11817 = vrot.slane %v11416, 2
    %v11818 = vsel %vm415, %v11809, %v11817
    %v11819 = vrot.slane %v11417, 2
    %v11820 = vsel %vm415, %v11811, %v11819
    %v11821 = vrot.slane %v11418, 2
    %v11822 = vsel %vm415, %v11813, %v11821
    %v11823 = vrot.slane %v11419, 2
    %v11824 = vsel %vm415, %v11815, %v11823
    %v11825 = vrot.slane %v11420, 2
    %v11826 = vsel %vm415, %v11817, %v11825
    %v11827 = vrot.slane %v11421, 2
    %v11828 = vsel %vm415, %v11819, %v11827
    %v11829 = vrot.slane %v11422, 2
    %v11830 = vsel %vm415, %v11821, %v11829
    %v11831 = vrot.slane %v11423, 2
    %v11832 = vsel %vm415, %v11823, %v11831
    %v11965 = vsel %vm1825, %v11426, 0
    %v11967 = vsel %vm415, %v11825, 0
    %v11969 = vsel %vm415, %v11827, 0
    %v11971 = vsel %vm415, %v11829, 0
    %v11973 = vsel %vm415, %v11831, 0
    %11975 = vmatprep.subr.mxu0 %v11692
    %11976 = vmatpush1.msra.mxu0 %v11690
    %11977 = vmatprep.subr.mxu0 %v11684
    %11978 = vmatpush1.msra.mxu0 %v11682
    %11979 = vmatprep.subr.mxu0 %v11676
    %11980 = vmatpush1.msra.mxu0 %v11674
    %11981 = vmatprep.subr.mxu0 %v11668
    %11982 = vmatpush1.msra.mxu0 %v11666
    %11983 = vmatprep.subr.mxu0 %v11660
    %11984 = vmatpush1.msra.mxu0 %v11658
    %11985 = vmatprep.subr.mxu0 %v11652
    %11986 = vmatpush1.msra.mxu0 %v11650
    %11987 = vmatprep.subr.mxu0 %v11644
    %11988 = vmatpush1.msra.mxu0 %v11642
    %11989 = vmatprep.subr.mxu0 %v11636
    %11990 = vmatpush1.msra.mxu0 %v11634
    %11991 = vmatprep.subr.mxu0 %v11628
    %11992 = vmatpush1.msra.mxu0 %v11626
    %11993 = vmatprep.subr.mxu0 %v11620
    %11994 = vmatpush1.msra.mxu0 %v11618
    %11995 = vmatprep.subr.mxu0 %v11612
    %11996 = vmatpush1.msra.mxu0 %v11610
    %11997 = vmatprep.subr.mxu0 %v11604
    %11998 = vmatpush1.msra.mxu0 %v11602
    %11999 = vmatprep.subr.mxu0 %v11596
    %12000 = vmatpush1.msra.mxu0 %v11594
    %12001 = vmatprep.subr.mxu0 %v11588
    %12002 = vmatpush1.msra.mxu0 %v11586
    %12003 = vmatprep.subr.mxu0 %v11580
    %12004 = vmatpush1.msra.mxu0 %v11578
    %12005 = vmatprep.subr.mxu0 %v11570
    %12006 = vmatpush1.msra.mxu0 %v11567
    %12007 = vmatprep.subr.mxu0 %v11820
    %12008 = vmatpush2.msra.mxu0 %v11818
    %12009 = vmatprep.subr.mxu0 %v11812
    %12010 = vmatpush2.msra.mxu0 %v11810
    %12011 = vmatprep.subr.mxu0 %v11804
    %12012 = vmatpush2.msra.mxu0 %v11802
    %12013 = vmatprep.subr.mxu0 %v11796
    %12014 = vmatpush2.msra.mxu0 %v11794
    %12015 = vmatprep.subr.mxu0 %v11788
    %12016 = vmatpush2.msra.mxu0 %v11786
    %12017 = vmatprep.subr.mxu0 %v11780
    %12018 = vmatpush2.msra.mxu0 %v11778
    %12019 = vmatprep.subr.mxu0 %v11772
    %12020 = vmatpush2.msra.mxu0 %v11770
    %12021 = vmatprep.subr.mxu0 %v11764
    %12022 = vmatpush2.msra.mxu0 %v11762
    %12023 = vmatprep.subr.mxu0 %v11756
    %12024 = vmatpush2.msra.mxu0 %v11754
    %12025 = vmatprep.subr.mxu0 %v11748
    %12026 = vmatpush2.msra.mxu0 %v11746
    %12027 = vmatprep.subr.mxu0 %v11740
    %12028 = vmatpush2.msra.mxu0 %v11738
    %12029 = vmatprep.subr.mxu0 %v11732
    %12030 = vmatpush2.msra.mxu0 %v11730
    %12031 = vmatprep.subr.mxu0 %v11724
    %12032 = vmatpush2.msra.mxu0 %v11722
    %12033 = vmatprep.subr.mxu0 %v11716
    %12034 = vmatpush2.msra.mxu0 %v11714
    %12035 = vmatprep.subr.mxu0 %v11708
    %12036 = vmatpush2.msra.mxu0 %v11706
    %12037 = vmatprep.subr.mxu0 %v11700
    %12038 = vmatpush2.msra.mxu0 %v11698
    %12039 = vmatprep.mubr.f32.mxu0 %v11425
    %12040 = vmatmul.mubr.f32.gmra.mxu0 %v11424
    %v12041 = vpop.f32.mrf.mxu0
    %v12042 = vadd.f32 0.0, %v12041
    %v12043 = vpop.f32.mrf.mxu0
    %v12044 = vadd.f32 0.0, %v12043
    %12045 = vdwg.mxu0
    %12046 = vmatprep.subr.mxu0 0.0
    %12047 = vmatpush1.msra.mxu0 0.0
    %12048 = vmatprep.subr.mxu0 0.0
    %12049 = vmatpush1.msra.mxu0 0.0
    %12050 = vmatprep.subr.mxu0 0.0
    %12051 = vmatpush1.msra.mxu0 0.0
    %12052 = vmatprep.subr.mxu0 0.0
    %12053 = vmatpush1.msra.mxu0 0.0
    %12054 = vmatprep.subr.mxu0 0.0
    %12055 = vmatpush1.msra.mxu0 0.0
    %12056 = vmatprep.subr.mxu0 0.0
    %12057 = vmatpush1.msra.mxu0 0.0
    %12058 = vmatprep.subr.mxu0 0.0
    %12059 = vmatpush1.msra.mxu0 0.0
    %12060 = vmatprep.subr.mxu0 0.0
    %12061 = vmatpush1.msra.mxu0 0.0
    %12062 = vmatprep.subr.mxu0 0.0
    %12063 = vmatpush1.msra.mxu0 0.0
    %12064 = vmatprep.subr.mxu0 0.0
    %12065 = vmatpush1.msra.mxu0 0.0
    %12066 = vmatprep.subr.mxu0 0.0
    %12067 = vmatpush1.msra.mxu0 0.0
    %12068 = vmatprep.subr.mxu0 0.0
    %12069 = vmatpush1.msra.mxu0 0.0
    %12070 = vmatprep.subr.mxu0 0.0
    %12071 = vmatpush1.msra.mxu0 0.0
    %12072 = vmatprep.subr.mxu0 0.0
    %12073 = vmatpush1.msra.mxu0 0.0
    %12074 = vmatprep.subr.mxu0 %v11969
    %12075 = vmatpush1.msra.mxu0 %v11967
    %12076 = vmatprep.subr.mxu0 %v11828
    %12077 = vmatpush1.msra.mxu0 %v11826
    %12078 = vmatprep.subr.mxu0 0.0
    %12079 = vmatpush2.msra.mxu0 0.0
    %12080 = vmatprep.subr.mxu0 0.0
    %12081 = vmatpush2.msra.mxu0 0.0
    %12082 = vmatprep.subr.mxu0 0.0
    %12083 = vmatpush2.msra.mxu0 0.0
    %12084 = vmatprep.subr.mxu0 0.0
    %12085 = vmatpush2.msra.mxu0 0.0
    %12086 = vmatprep.subr.mxu0 0.0
    %12087 = vmatpush2.msra.mxu0 0.0
    %12088 = vmatprep.subr.mxu0 0.0
    %12089 = vmatpush2.msra.mxu0 0.0
    %12090 = vmatprep.subr.mxu0 0.0
    %12091 = vmatpush2.msra.mxu0 0.0
    %12092 = vmatprep.subr.mxu0 0.0
    %12093 = vmatpush2.msra.mxu0 0.0
    %12094 = vmatprep.subr.mxu0 0.0
    %12095 = vmatpush2.msra.mxu0 0.0
    %12096 = vmatprep.subr.mxu0 0.0
    %12097 = vmatpush2.msra.mxu0 0.0
    %12098 = vmatprep.subr.mxu0 0.0
    %12099 = vmatpush2.msra.mxu0 0.0
    %12100 = vmatprep.subr.mxu0 0.0
    %12101 = vmatpush2.msra.mxu0 0.0
    %12102 = vmatprep.subr.mxu0 0.0
    %12103 = vmatpush2.msra.mxu0 0.0
    %12104 = vmatprep.subr.mxu0 0.0
    %12105 = vmatpush2.msra.mxu0 0.0
    %12106 = vmatprep.subr.mxu0 0.0
    %12107 = vmatpush2.msra.mxu0 0.0
    %12108 = vmatprep.subr.mxu0 0.0
    %12109 = vmatpush2.msra.mxu0 0.0
    %12110 = vmatprep.mubr.f32.mxu0 0.0
    %12111 = vmatmul.mubr.f32.gmra.mxu0 %v11965
    %v12112 = vpop.f32.mrf.mxu0
    %v12113 = vadd.f32 %v12042, %v12112
    %v12114 = vpop.f32.mrf.mxu0
    %v12115 = vadd.f32 %v12044, %v12114
    %12116 = vdwg.mxu0
    %12117 = vmatprep.subr.mxu0 %v11696
    %12118 = vmatpush1.msra.mxu0 %v11694
    %12119 = vmatprep.subr.mxu0 %v11688
    %12120 = vmatpush1.msra.mxu0 %v11686
    %12121 = vmatprep.subr.mxu0 %v11680
    %12122 = vmatpush1.msra.mxu0 %v11678
    %12123 = vmatprep.subr.mxu0 %v11672
    %12124 = vmatpush1.msra.mxu0 %v11670
    %12125 = vmatprep.subr.mxu0 %v11664
    %12126 = vmatpush1.msra.mxu0 %v11662
    %12127 = vmatprep.subr.mxu0 %v11656
    %12128 = vmatpush1.msra.mxu0 %v11654
    %12129 = vmatprep.subr.mxu0 %v11648
    %12130 = vmatpush1.msra.mxu0 %v11646
    %12131 = vmatprep.subr.mxu0 %v11640
    %12132 = vmatpush1.msra.mxu0 %v11638
    %12133 = vmatprep.subr.mxu0 %v11632
    %12134 = vmatpush1.msra.mxu0 %v11630
    %12135 = vmatprep.subr.mxu0 %v11624
    %12136 = vmatpush1.msra.mxu0 %v11622
    %12137 = vmatprep.subr.mxu0 %v11616
    %12138 = vmatpush1.msra.mxu0 %v11614
    %12139 = vmatprep.subr.mxu0 %v11608
    %12140 = vmatpush1.msra.mxu0 %v11606
    %12141 = vmatprep.subr.mxu0 %v11600
    %12142 = vmatpush1.msra.mxu0 %v11598
    %12143 = vmatprep.subr.mxu0 %v11592
    %12144 = vmatpush1.msra.mxu0 %v11590
    %12145 = vmatprep.subr.mxu0 %v11584
    %12146 = vmatpush1.msra.mxu0 %v11582
    %12147 = vmatprep.subr.mxu0 %v11576
    %12148 = vmatpush1.msra.mxu0 %v11573
    %12149 = vmatprep.subr.mxu0 %v11824
    %12150 = vmatpush2.msra.mxu0 %v11822
    %12151 = vmatprep.subr.mxu0 %v11816
    %12152 = vmatpush2.msra.mxu0 %v11814
    %12153 = vmatprep.subr.mxu0 %v11808
    %12154 = vmatpush2.msra.mxu0 %v11806
    %12155 = vmatprep.subr.mxu0 %v11800
    %12156 = vmatpush2.msra.mxu0 %v11798
    %12157 = vmatprep.subr.mxu0 %v11792
    %12158 = vmatpush2.msra.mxu0 %v11790
    %12159 = vmatprep.subr.mxu0 %v11784
    %12160 = vmatpush2.msra.mxu0 %v11782
    %12161 = vmatprep.subr.mxu0 %v11776
    %12162 = vmatpush2.msra.mxu0 %v11774
    %12163 = vmatprep.subr.mxu0 %v11768
    %12164 = vmatpush2.msra.mxu0 %v11766
    %12165 = vmatprep.subr.mxu0 %v11760
    %12166 = vmatpush2.msra.mxu0 %v11758
    %12167 = vmatprep.subr.mxu0 %v11752
    %12168 = vmatpush2.msra.mxu0 %v11750
    %12169 = vmatprep.subr.mxu0 %v11744
    %12170 = vmatpush2.msra.mxu0 %v11742
    %12171 = vmatprep.subr.mxu0 %v11736
    %12172 = vmatpush2.msra.mxu0 %v11734
    %12173 = vmatprep.subr.mxu0 %v11728
    %12174 = vmatpush2.msra.mxu0 %v11726
    %12175 = vmatprep.subr.mxu0 %v11720
    %12176 = vmatpush2.msra.mxu0 %v11718
    %12177 = vmatprep.subr.mxu0 %v11712
    %12178 = vmatpush2.msra.mxu0 %v11710
    %12179 = vmatprep.subr.mxu0 %v11704
    %12180 = vmatpush2.msra.mxu0 %v11702
    %12181 = vmatprep.mubr.f32.mxu0 %v11425
    %12182 = vmatmul.mubr.f32.gmra.mxu0 %v11424
    %v12183 = vpop.f32.mrf.mxu0
    %v12184 = vadd.f32 0.0, %v12183
    %v12185 = vpop.f32.mrf.mxu0
    %v12186 = vadd.f32 0.0, %v12185
    %12187 = vdwg.mxu0
    %12188 = vmatprep.subr.mxu0 0.0
    %12189 = vmatpush1.msra.mxu0 0.0
    %12190 = vmatprep.subr.mxu0 0.0
    %12191 = vmatpush1.msra.mxu0 0.0
    %12192 = vmatprep.subr.mxu0 0.0
    %12193 = vmatpush1.msra.mxu0 0.0
    %12194 = vmatprep.subr.mxu0 0.0
    %12195 = vmatpush1.msra.mxu0 0.0
    %12196 = vmatprep.subr.mxu0 0.0
    %12197 = vmatpush1.msra.mxu0 0.0
    %12198 = vmatprep.subr.mxu0 0.0
    %12199 = vmatpush1.msra.mxu0 0.0
    %12200 = vmatprep.subr.mxu0 0.0
    %12201 = vmatpush1.msra.mxu0 0.0
    %12202 = vmatprep.subr.mxu0 0.0
    %12203 = vmatpush1.msra.mxu0 0.0
    %12204 = vmatprep.subr.mxu0 0.0
    %12205 = vmatpush1.msra.mxu0 0.0
    %12206 = vmatprep.subr.mxu0 0.0
    %12207 = vmatpush1.msra.mxu0 0.0
    %12208 = vmatprep.subr.mxu0 0.0
    %12209 = vmatpush1.msra.mxu0 0.0
    %12210 = vmatprep.subr.mxu0 0.0
    %12211 = vmatpush1.msra.mxu0 0.0
    %12212 = vmatprep.subr.mxu0 0.0
    %12213 = vmatpush1.msra.mxu0 0.0
    %12214 = vmatprep.subr.mxu0 0.0
    %12215 = vmatpush1.msra.mxu0 0.0
    %12216 = vmatprep.subr.mxu0 %v11973
    %12217 = vmatpush1.msra.mxu0 %v11971
    %12218 = vmatprep.subr.mxu0 %v11832
    %12219 = vmatpush1.msra.mxu0 %v11830
    %12220 = vmatprep.subr.mxu0 0.0
    %12221 = vmatpush2.msra.mxu0 0.0
    %12222 = vmatprep.subr.mxu0 0.0
    %12223 = vmatpush2.msra.mxu0 0.0
    %12224 = vmatprep.subr.mxu0 0.0
    %12225 = vmatpush2.msra.mxu0 0.0
    %12226 = vmatprep.subr.mxu0 0.0
    %12227 = vmatpush2.msra.mxu0 0.0
    %12228 = vmatprep.subr.mxu0 0.0
    %12229 = vmatpush2.msra.mxu0 0.0
    %12230 = vmatprep.subr.mxu0 0.0
    %12231 = vmatpush2.msra.mxu0 0.0
    %12232 = vmatprep.subr.mxu0 0.0
    %12233 = vmatpush2.msra.mxu0 0.0
    %12234 = vmatprep.subr.mxu0 0.0
    %12235 = vmatpush2.msra.mxu0 0.0
    %12236 = vmatprep.subr.mxu0 0.0
    %12237 = vmatpush2.msra.mxu0 0.0
    %12238 = vmatprep.subr.mxu0 0.0
    %12239 = vmatpush2.msra.mxu0 0.0
    %12240 = vmatprep.subr.mxu0 0.0
    %12241 = vmatpush2.msra.mxu0 0.0
    %12242 = vmatprep.subr.mxu0 0.0
    %12243 = vmatpush2.msra.mxu0 0.0
    %12244 = vmatprep.subr.mxu0 0.0
    %12245 = vmatpush2.msra.mxu0 0.0
    %12246 = vmatprep.subr.mxu0 0.0
    %12247 = vmatpush2.msra.mxu0 0.0
    %12248 = vmatprep.subr.mxu0 0.0
    %12249 = vmatpush2.msra.mxu0 0.0
    %12250 = vmatprep.subr.mxu0 0.0
    %12251 = vmatpush2.msra.mxu0 0.0
    %12252 = vmatprep.mubr.f32.mxu0 0.0
    %12253 = vmatmul.mubr.f32.gmra.mxu0 %v11965
    %v12254 = vpop.f32.mrf.mxu0
    %v12255 = vadd.f32 %v12184, %v12254
    %v12256 = vpop.f32.mrf.mxu0
    %v12257 = vadd.f32 %v12186, %v12256
    %12258 = vdwg.mxu0
    %v12259 = vadd.f32 %v11284, %v12113
    %v12260 = vadd.f32 %v11285, %v12115
    %v12261 = vadd.f32 %v11286, %v12255
    %v12262 = vadd.f32 %v11287, %v12257
    %v12263 = vld [vmem:[%s6 + $0x10e0] sm:$0xff]
    %v12264 = vld [vmem:[%s6 + $0x10e8] sm:$0xff]
    %v12265 = vld [vmem:[%s6 + $0x10f0] sm:$0xff]
    %v12266 = vld [vmem:[%s6 + $0x10f8] sm:$0xff]
    %v12267 = vld [vmem:[%s6 + $0x1100] sm:$0xff]
    %v12268 = vld [vmem:[%s6 + $0x1108] sm:$0xff]
    %v12269 = vld [vmem:[%s6 + $0x1110] sm:$0xff]
    %v12270 = vld [vmem:[%s6 + $0x1118] sm:$0xff]
    %v12271 = vld [vmem:[%s6 + $0x1120] sm:$0xff]
    %v12272 = vld [vmem:[%s6 + $0x1128] sm:$0xff]
    %v12273 = vld [vmem:[%s6 + $0x1130] sm:$0xff]
    %v12274 = vld [vmem:[%s6 + $0x1138] sm:$0xff]
    %v12275 = vld [vmem:[%s6 + $0x1140] sm:$0xff]
    %v12276 = vld [vmem:[%s6 + $0x1148] sm:$0xff]
    %v12277 = vld [vmem:[%s6 + $0x1150] sm:$0xff]
    %v12278 = vld [vmem:[%s6 + $0x1158] sm:$0xff]
    %v12279 = vld [vmem:[%s6 + $0x1160] sm:$0xff]
    %v12280 = vld [vmem:[%s6 + $0x1168] sm:$0xff]
    %v12281 = vld [vmem:[%s6 + $0x1170] sm:$0xff]
    %v12282 = vld [vmem:[%s6 + $0x1178] sm:$0xff]
    %v12283 = vld [vmem:[%s6 + $0x1180] sm:$0xff]
    %v12284 = vld [vmem:[%s6 + $0x1188] sm:$0xff]
    %v12285 = vld [vmem:[%s6 + $0x1190] sm:$0xff]
    %v12286 = vld [vmem:[%s6 + $0x1198] sm:$0xff]
    %v12287 = vld [vmem:[%s6 + $0x11a0] sm:$0xff]
    %v12288 = vld [vmem:[%s6 + $0x11a8] sm:$0xff]
    %v12289 = vld [vmem:[%s6 + $0x11b0] sm:$0xff]
    %v12290 = vld [vmem:[%s6 + $0x11b8] sm:$0xff]
    %v12291 = vld [vmem:[%s6 + $0x11c0] sm:$0xff]
    %v12292 = vld [vmem:[%s6 + $0x11c8] sm:$0xff]
    %v12293 = vld [vmem:[%s6 + $0x11d0] sm:$0xff]
    %v12294 = vld [vmem:[%s6 + $0x11d8] sm:$0xff]
    %v12295 = vld [vmem:[%s6 + $0x11e0] sm:$0xff]
    %v12296 = vld [vmem:[%s6 + $0x11e8] sm:$0xff]
    %v12297 = vld [vmem:[%s6 + $0x11f0] sm:$0xff]
    %v12298 = vld [vmem:[%s6 + $0x11f8] sm:$0xff]
    %v12299 = vld [vmem:[%s6 + $0x1200] sm:$0xff]
    %v12300 = vld [vmem:[%s6 + $0x1208] sm:$0xff]
    %v12301 = vld [vmem:[%s6 + $0x1210] sm:$0xff]
    %v12302 = vld [vmem:[%s6 + $0x1218] sm:$0xff]
    %v12303 = vld [vmem:[%s6 + $0x1220] sm:$0xff]
    %v12304 = vld [vmem:[%s6 + $0x1228] sm:$0xff]
    %v12305 = vld [vmem:[%s6 + $0x1230] sm:$0xff]
    %v12306 = vld [vmem:[%s6 + $0x1238] sm:$0xff]
    %v12307 = vld [vmem:[%s6 + $0x1240] sm:$0xff]
    %v12308 = vld [vmem:[%s6 + $0x1248] sm:$0xff]
    %v12309 = vld [vmem:[%s6 + $0x1250] sm:$0xff]
    %v12310 = vld [vmem:[%s6 + $0x1258] sm:$0xff]
    %v12311 = vld [vmem:[%s6 + $0x1260] sm:$0xff]
    %v12312 = vld [vmem:[%s6 + $0x1268] sm:$0xff]
    %v12313 = vld [vmem:[%s6 + $0x1270] sm:$0xff]
    %v12314 = vld [vmem:[%s6 + $0x1278] sm:$0xff]
    %v12315 = vld [vmem:[%s6 + $0x1280] sm:$0xff]
    %v12316 = vld [vmem:[%s6 + $0x1288] sm:$0xff]
    %v12317 = vld [vmem:[%s6 + $0x1290] sm:$0xff]
    %v12318 = vld [vmem:[%s6 + $0x1298] sm:$0xff]
    %v12319 = vld [vmem:[%s6 + $0x12a0] sm:$0xff]
    %v12320 = vld [vmem:[%s6 + $0x12a8] sm:$0xff]
    %v12321 = vld [vmem:[%s6 + $0x12b0] sm:$0xff]
    %v12322 = vld [vmem:[%s6 + $0x12b8] sm:$0xff]
    %v12323 = vld [vmem:[%s6 + $0x12c0] sm:$0xff]
    %v12324 = vld [vmem:[%s6 + $0x12c8] sm:$0xff]
    %v12325 = vld [vmem:[%s6 + $0x12d0] sm:$0xff]
    %v12326 = vld [vmem:[%s6 + $0x12d8] sm:$0xff]
    %v12327 = vld [vmem:[%s6 + $0x12e0] sm:$0xff]
    %v12328 = vld [vmem:[%s6 + $0x12e8] sm:$0xff]
    %v12329 = vld [vmem:[%s6 + $0x12f0] sm:$0xff]
    %v12330 = vld [vmem:[%s6 + $0x12f8] sm:$0xff]
    %v12331 = vld [vmem:[%s6 + $0x1300] sm:$0xff]
    %v12332 = vld [vmem:[%s6 + $0x1308] sm:$0xff]
    %v12333 = vld [vmem:[%s6 + $0x1310] sm:$0xff]
    %v12334 = vld [vmem:[%s6 + $0x1318] sm:$0xff]
    %v12335 = vld [vmem:[%s6 + $0x1320] sm:$0xff]
    %v12336 = vld [vmem:[%s6 + $0x1328] sm:$0xff]
    %v12337 = vld [vmem:[%s6 + $0x1330] sm:$0xff]
    %v12338 = vld [vmem:[%s6 + $0x1338] sm:$0xff]
    %v12339 = vld [vmem:[%s6 + $0x1340] sm:$0xff]
    %v12340 = vld [vmem:[%s6 + $0x1348] sm:$0xff]
    %v12341 = vld [vmem:[%s6 + $0x1350] sm:$0xff]
    %v12342 = vld [vmem:[%s6 + $0x1358] sm:$0xff]
    %v12343 = vld [vmem:[%s6 + $0x1360] sm:$0xff]
    %v12344 = vld [vmem:[%s6 + $0x1368] sm:$0xff]
    %v12345 = vld [vmem:[%s6 + $0x1370] sm:$0xff]
    %v12346 = vld [vmem:[%s6 + $0x1378] sm:$0xff]
    %v12347 = vld [vmem:[%s6 + $0x1380] sm:$0xff]
    %v12348 = vld [vmem:[%s6 + $0x1388] sm:$0xff]
    %v12349 = vld [vmem:[%s6 + $0x1390] sm:$0xff]
    %v12350 = vld [vmem:[%s6 + $0x1398] sm:$0xff]
    %v12351 = vld [vmem:[%s6 + $0x13a0] sm:$0xff]
    %v12352 = vld [vmem:[%s6 + $0x13a8] sm:$0xff]
    %v12353 = vld [vmem:[%s6 + $0x13b0] sm:$0xff]
    %v12354 = vld [vmem:[%s6 + $0x13b8] sm:$0xff]
    %v12355 = vld [vmem:[%s6 + $0x13c0] sm:$0xff]
    %v12356 = vld [vmem:[%s6 + $0x13c8] sm:$0xff]
    %v12357 = vld [vmem:[%s6 + $0x13d0] sm:$0xff]
    %v12358 = vld [vmem:[%s6 + $0x13d8] sm:$0xff]
    %v12359 = vld [vmem:[%s6 + $0x13e0] sm:$0xff]
    %v12360 = vld [vmem:[%s6 + $0x13e8] sm:$0xff]
    %v12361 = vld [vmem:[%s6 + $0x13f0] sm:$0xff]
    %v12362 = vld [vmem:[%s6 + $0x13f8] sm:$0xff]
    %v12363 = vld [vmem:[%s6 + $0x1400] sm:$0xff]
    %v12364 = vld [vmem:[%s6 + $0x1408] sm:$0xff]
    %v12365 = vld [vmem:[%s6 + $0x1410] sm:$0xff]
    %v12366 = vld [vmem:[%s6 + $0x1418] sm:$0xff]
    %v12367 = vld [vmem:[%s6 + $0x1420] sm:$0xff]
    %v12368 = vld [vmem:[%s6 + $0x1428] sm:$0xff]
    %v12369 = vld [vmem:[%s6 + $0x1430] sm:$0xff]
    %v12370 = vld [vmem:[%s6 + $0x1438] sm:$0xff]
    %v12371 = vld [vmem:[%s6 + $0x1440] sm:$0xff]
    %v12372 = vld [vmem:[%s6 + $0x1448] sm:$0xff]
    %v12373 = vld [vmem:[%s6 + $0x1450] sm:$0xff]
    %v12374 = vld [vmem:[%s6 + $0x1458] sm:$0xff]
    %v12375 = vld [vmem:[%s6 + $0x1460] sm:$0xff]
    %v12376 = vld [vmem:[%s6 + $0x1468] sm:$0xff]
    %v12377 = vld [vmem:[%s6 + $0x1470] sm:$0xff]
    %v12378 = vld [vmem:[%s6 + $0x1478] sm:$0xff]
    %v12379 = vld [vmem:[%s6 + $0x1480] sm:$0xff]
    %v12380 = vld [vmem:[%s6 + $0x1488] sm:$0xff]
    %v12381 = vld [vmem:[%s6 + $0x1490] sm:$0xff]
    %v12382 = vld [vmem:[%s6 + $0x1498] sm:$0xff]
    %v12383 = vld [vmem:[%s6 + $0x14a0] sm:$0xff]
    %v12384 = vld [vmem:[%s6 + $0x14a8] sm:$0xff]
    %v12385 = vld [vmem:[%s6 + $0x14b0] sm:$0xff]
    %v12386 = vld [vmem:[%s6 + $0x14b8] sm:$0xff]
    %v12387 = vld [vmem:[%s6 + $0x14c0] sm:$0xff]
    %v12388 = vld [vmem:[%s6 + $0x14c8] sm:$0xff]
    %v12389 = vld [vmem:[%s6 + $0x14d0] sm:$0xff]
    %v12390 = vld [vmem:[%s6 + $0x14d8] sm:$0xff]
    %v12391 = vld [vmem:[%s6 + $0x14e0] sm:$0xff]
    %v12392 = vld [vmem:[%s6 + $0x14e8] sm:$0xff]
    %v12393 = vld [vmem:[%s6 + $0x14f0] sm:$0xff]
    %v12394 = vld [vmem:[%s6 + $0x14f8] sm:$0xff]
    %v12395 = vld [vmem:[%s6 + $0x1500] sm:$0x3f]
    %v12396 = vld [vmem:[%s6 + $0x1508] sm:$0x3f]
    %v12397 = vld [vmem:[%s6 + $0x1510] sm:$0x3f]
    %v12398 = vld [vmem:[%s6 + $0x1518] sm:$0x3f]
    %v12399 = vrot.slane %v8870, 4
    %v12400 = vrot.slane %v8871, 4
    %v12401 = vrot.slane %v8872, 4
    %v12404 = vsel %vm1825, %v12401, 0
    %v12407 = vsel %vm415, %v12395, 0
    %v12410 = vsel %vm415, %v12396, 0
    %v12413 = vsel %vm415, %v12397, 0
    %v12416 = vsel %vm415, %v12398, 0
    %12418 = vmatprep.subr.mxu0 %v12324
    %12419 = vmatpush1.msra.mxu0 %v12323
    %12420 = vmatprep.subr.mxu0 %v12320
    %12421 = vmatpush1.msra.mxu0 %v12319
    %12422 = vmatprep.subr.mxu0 %v12316
    %12423 = vmatpush1.msra.mxu0 %v12315
    %12424 = vmatprep.subr.mxu0 %v12312
    %12425 = vmatpush1.msra.mxu0 %v12311
    %12426 = vmatprep.subr.mxu0 %v12308
    %12427 = vmatpush1.msra.mxu0 %v12307
    %12428 = vmatprep.subr.mxu0 %v12304
    %12429 = vmatpush1.msra.mxu0 %v12303
    %12430 = vmatprep.subr.mxu0 %v12300
    %12431 = vmatpush1.msra.mxu0 %v12299
    %12432 = vmatprep.subr.mxu0 %v12296
    %12433 = vmatpush1.msra.mxu0 %v12295
    %12434 = vmatprep.subr.mxu0 %v12292
    %12435 = vmatpush1.msra.mxu0 %v12291
    %12436 = vmatprep.subr.mxu0 %v12288
    %12437 = vmatpush1.msra.mxu0 %v12287
    %12438 = vmatprep.subr.mxu0 %v12284
    %12439 = vmatpush1.msra.mxu0 %v12283
    %12440 = vmatprep.subr.mxu0 %v12280
    %12441 = vmatpush1.msra.mxu0 %v12279
    %12442 = vmatprep.subr.mxu0 %v12276
    %12443 = vmatpush1.msra.mxu0 %v12275
    %12444 = vmatprep.subr.mxu0 %v12272
    %12445 = vmatpush1.msra.mxu0 %v12271
    %12446 = vmatprep.subr.mxu0 %v12268
    %12447 = vmatpush1.msra.mxu0 %v12267
    %12448 = vmatprep.subr.mxu0 %v12264
    %12449 = vmatpush1.msra.mxu0 %v12263
    %12450 = vmatprep.subr.mxu0 %v12388
    %12451 = vmatpush2.msra.mxu0 %v12387
    %12452 = vmatprep.subr.mxu0 %v12384
    %12453 = vmatpush2.msra.mxu0 %v12383
    %12454 = vmatprep.subr.mxu0 %v12380
    %12455 = vmatpush2.msra.mxu0 %v12379
    %12456 = vmatprep.subr.mxu0 %v12376
    %12457 = vmatpush2.msra.mxu0 %v12375
    %12458 = vmatprep.subr.mxu0 %v12372
    %12459 = vmatpush2.msra.mxu0 %v12371
    %12460 = vmatprep.subr.mxu0 %v12368
    %12461 = vmatpush2.msra.mxu0 %v12367
    %12462 = vmatprep.subr.mxu0 %v12364
    %12463 = vmatpush2.msra.mxu0 %v12363
    %12464 = vmatprep.subr.mxu0 %v12360
    %12465 = vmatpush2.msra.mxu0 %v12359
    %12466 = vmatprep.subr.mxu0 %v12356
    %12467 = vmatpush2.msra.mxu0 %v12355
    %12468 = vmatprep.subr.mxu0 %v12352
    %12469 = vmatpush2.msra.mxu0 %v12351
    %12470 = vmatprep.subr.mxu0 %v12348
    %12471 = vmatpush2.msra.mxu0 %v12347
    %12472 = vmatprep.subr.mxu0 %v12344
    %12473 = vmatpush2.msra.mxu0 %v12343
    %12474 = vmatprep.subr.mxu0 %v12340
    %12475 = vmatpush2.msra.mxu0 %v12339
    %12476 = vmatprep.subr.mxu0 %v12336
    %12477 = vmatpush2.msra.mxu0 %v12335
    %12478 = vmatprep.subr.mxu0 %v12332
    %12479 = vmatpush2.msra.mxu0 %v12331
    %12480 = vmatprep.subr.mxu0 %v12328
    %12481 = vmatpush2.msra.mxu0 %v12327
    %12482 = vmatprep.mubr.f32.mxu0 %v12400
    %12483 = vmatmul.mubr.f32.gmra.mxu0 %v12399
    %v12484 = vpop.f32.mrf.mxu0
    %v12485 = vadd.f32 0.0, %v12484
    %v12486 = vpop.f32.mrf.mxu0
    %v12487 = vadd.f32 0.0, %v12486
    %12488 = vdwg.mxu0
    %12489 = vmatprep.subr.mxu0 0.0
    %12490 = vmatpush1.msra.mxu0 0.0
    %12491 = vmatprep.subr.mxu0 0.0
    %12492 = vmatpush1.msra.mxu0 0.0
    %12493 = vmatprep.subr.mxu0 0.0
    %12494 = vmatpush1.msra.mxu0 0.0
    %12495 = vmatprep.subr.mxu0 0.0
    %12496 = vmatpush1.msra.mxu0 0.0
    %12497 = vmatprep.subr.mxu0 0.0
    %12498 = vmatpush1.msra.mxu0 0.0
    %12499 = vmatprep.subr.mxu0 0.0
    %12500 = vmatpush1.msra.mxu0 0.0
    %12501 = vmatprep.subr.mxu0 0.0
    %12502 = vmatpush1.msra.mxu0 0.0
    %12503 = vmatprep.subr.mxu0 0.0
    %12504 = vmatpush1.msra.mxu0 0.0
    %12505 = vmatprep.subr.mxu0 0.0
    %12506 = vmatpush1.msra.mxu0 0.0
    %12507 = vmatprep.subr.mxu0 0.0
    %12508 = vmatpush1.msra.mxu0 0.0
    %12509 = vmatprep.subr.mxu0 0.0
    %12510 = vmatpush1.msra.mxu0 0.0
    %12511 = vmatprep.subr.mxu0 0.0
    %12512 = vmatpush1.msra.mxu0 0.0
    %12513 = vmatprep.subr.mxu0 0.0
    %12514 = vmatpush1.msra.mxu0 0.0
    %12515 = vmatprep.subr.mxu0 0.0
    %12516 = vmatpush1.msra.mxu0 0.0
    %12517 = vmatprep.subr.mxu0 %v12410
    %12518 = vmatpush1.msra.mxu0 %v12407
    %12519 = vmatprep.subr.mxu0 %v12392
    %12520 = vmatpush1.msra.mxu0 %v12391
    %12521 = vmatprep.subr.mxu0 0.0
    %12522 = vmatpush2.msra.mxu0 0.0
    %12523 = vmatprep.subr.mxu0 0.0
    %12524 = vmatpush2.msra.mxu0 0.0
    %12525 = vmatprep.subr.mxu0 0.0
    %12526 = vmatpush2.msra.mxu0 0.0
    %12527 = vmatprep.subr.mxu0 0.0
    %12528 = vmatpush2.msra.mxu0 0.0
    %12529 = vmatprep.subr.mxu0 0.0
    %12530 = vmatpush2.msra.mxu0 0.0
    %12531 = vmatprep.subr.mxu0 0.0
    %12532 = vmatpush2.msra.mxu0 0.0
    %12533 = vmatprep.subr.mxu0 0.0
    %12534 = vmatpush2.msra.mxu0 0.0
    %12535 = vmatprep.subr.mxu0 0.0
    %12536 = vmatpush2.msra.mxu0 0.0
    %12537 = vmatprep.subr.mxu0 0.0
    %12538 = vmatpush2.msra.mxu0 0.0
    %12539 = vmatprep.subr.mxu0 0.0
    %12540 = vmatpush2.msra.mxu0 0.0
    %12541 = vmatprep.subr.mxu0 0.0
    %12542 = vmatpush2.msra.mxu0 0.0
    %12543 = vmatprep.subr.mxu0 0.0
    %12544 = vmatpush2.msra.mxu0 0.0
    %12545 = vmatprep.subr.mxu0 0.0
    %12546 = vmatpush2.msra.mxu0 0.0
    %12547 = vmatprep.subr.mxu0 0.0
    %12548 = vmatpush2.msra.mxu0 0.0
    %12549 = vmatprep.subr.mxu0 0.0
    %12550 = vmatpush2.msra.mxu0 0.0
    %12551 = vmatprep.subr.mxu0 0.0
    %12552 = vmatpush2.msra.mxu0 0.0
    %12553 = vmatprep.mubr.f32.mxu0 0.0
    %12554 = vmatmul.mubr.f32.gmra.mxu0 %v12404
    %v12555 = vpop.f32.mrf.mxu0
    %v12556 = vadd.f32 %v12485, %v12555
    %v12557 = vpop.f32.mrf.mxu0
    %v12558 = vadd.f32 %v12487, %v12557
    %12559 = vdwg.mxu0
    %12560 = vmatprep.subr.mxu0 %v12326
    %12561 = vmatpush1.msra.mxu0 %v12325
    %12562 = vmatprep.subr.mxu0 %v12322
    %12563 = vmatpush1.msra.mxu0 %v12321
    %12564 = vmatprep.subr.mxu0 %v12318
    %12565 = vmatpush1.msra.mxu0 %v12317
    %12566 = vmatprep.subr.mxu0 %v12314
    %12567 = vmatpush1.msra.mxu0 %v12313
    %12568 = vmatprep.subr.mxu0 %v12310
    %12569 = vmatpush1.msra.mxu0 %v12309
    %12570 = vmatprep.subr.mxu0 %v12306
    %12571 = vmatpush1.msra.mxu0 %v12305
    %12572 = vmatprep.subr.mxu0 %v12302
    %12573 = vmatpush1.msra.mxu0 %v12301
    %12574 = vmatprep.subr.mxu0 %v12298
    %12575 = vmatpush1.msra.mxu0 %v12297
    %12576 = vmatprep.subr.mxu0 %v12294
    %12577 = vmatpush1.msra.mxu0 %v12293
    %12578 = vmatprep.subr.mxu0 %v12290
    %12579 = vmatpush1.msra.mxu0 %v12289
    %12580 = vmatprep.subr.mxu0 %v12286
    %12581 = vmatpush1.msra.mxu0 %v12285
    %12582 = vmatprep.subr.mxu0 %v12282
    %12583 = vmatpush1.msra.mxu0 %v12281
    %12584 = vmatprep.subr.mxu0 %v12278
    %12585 = vmatpush1.msra.mxu0 %v12277
    %12586 = vmatprep.subr.mxu0 %v12274
    %12587 = vmatpush1.msra.mxu0 %v12273
    %12588 = vmatprep.subr.mxu0 %v12270
    %12589 = vmatpush1.msra.mxu0 %v12269
    %12590 = vmatprep.subr.mxu0 %v12266
    %12591 = vmatpush1.msra.mxu0 %v12265
    %12592 = vmatprep.subr.mxu0 %v12390
    %12593 = vmatpush2.msra.mxu0 %v12389
    %12594 = vmatprep.subr.mxu0 %v12386
    %12595 = vmatpush2.msra.mxu0 %v12385
    %12596 = vmatprep.subr.mxu0 %v12382
    %12597 = vmatpush2.msra.mxu0 %v12381
    %12598 = vmatprep.subr.mxu0 %v12378
    %12599 = vmatpush2.msra.mxu0 %v12377
    %12600 = vmatprep.subr.mxu0 %v12374
    %12601 = vmatpush2.msra.mxu0 %v12373
    %12602 = vmatprep.subr.mxu0 %v12370
    %12603 = vmatpush2.msra.mxu0 %v12369
    %12604 = vmatprep.subr.mxu0 %v12366
    %12605 = vmatpush2.msra.mxu0 %v12365
    %12606 = vmatprep.subr.mxu0 %v12362
    %12607 = vmatpush2.msra.mxu0 %v12361
    %12608 = vmatprep.subr.mxu0 %v12358
    %12609 = vmatpush2.msra.mxu0 %v12357
    %12610 = vmatprep.subr.mxu0 %v12354
    %12611 = vmatpush2.msra.mxu0 %v12353
    %12612 = vmatprep.subr.mxu0 %v12350
    %12613 = vmatpush2.msra.mxu0 %v12349
    %12614 = vmatprep.subr.mxu0 %v12346
    %12615 = vmatpush2.msra.mxu0 %v12345
    %12616 = vmatprep.subr.mxu0 %v12342
    %12617 = vmatpush2.msra.mxu0 %v12341
    %12618 = vmatprep.subr.mxu0 %v12338
    %12619 = vmatpush2.msra.mxu0 %v12337
    %12620 = vmatprep.subr.mxu0 %v12334
    %12621 = vmatpush2.msra.mxu0 %v12333
    %12622 = vmatprep.subr.mxu0 %v12330
    %12623 = vmatpush2.msra.mxu0 %v12329
    %12624 = vmatprep.mubr.f32.mxu0 %v12400
    %12625 = vmatmul.mubr.f32.gmra.mxu0 %v12399
    %v12626 = vpop.f32.mrf.mxu0
    %v12627 = vadd.f32 0.0, %v12626
    %v12628 = vpop.f32.mrf.mxu0
    %v12629 = vadd.f32 0.0, %v12628
    %12630 = vdwg.mxu0
    %12631 = vmatprep.subr.mxu0 0.0
    %12632 = vmatpush1.msra.mxu0 0.0
    %12633 = vmatprep.subr.mxu0 0.0
    %12634 = vmatpush1.msra.mxu0 0.0
    %12635 = vmatprep.subr.mxu0 0.0
    %12636 = vmatpush1.msra.mxu0 0.0
    %12637 = vmatprep.subr.mxu0 0.0
    %12638 = vmatpush1.msra.mxu0 0.0
    %12639 = vmatprep.subr.mxu0 0.0
    %12640 = vmatpush1.msra.mxu0 0.0
    %12641 = vmatprep.subr.mxu0 0.0
    %12642 = vmatpush1.msra.mxu0 0.0
    %12643 = vmatprep.subr.mxu0 0.0
    %12644 = vmatpush1.msra.mxu0 0.0
    %12645 = vmatprep.subr.mxu0 0.0
    %12646 = vmatpush1.msra.mxu0 0.0
    %12647 = vmatprep.subr.mxu0 0.0
    %12648 = vmatpush1.msra.mxu0 0.0
    %12649 = vmatprep.subr.mxu0 0.0
    %12650 = vmatpush1.msra.mxu0 0.0
    %12651 = vmatprep.subr.mxu0 0.0
    %12652 = vmatpush1.msra.mxu0 0.0
    %12653 = vmatprep.subr.mxu0 0.0
    %12654 = vmatpush1.msra.mxu0 0.0
    %12655 = vmatprep.subr.mxu0 0.0
    %12656 = vmatpush1.msra.mxu0 0.0
    %12657 = vmatprep.subr.mxu0 0.0
    %12658 = vmatpush1.msra.mxu0 0.0
    %12659 = vmatprep.subr.mxu0 %v12416
    %12660 = vmatpush1.msra.mxu0 %v12413
    %12661 = vmatprep.subr.mxu0 %v12394
    %12662 = vmatpush1.msra.mxu0 %v12393
    %12663 = vmatprep.subr.mxu0 0.0
    %12664 = vmatpush2.msra.mxu0 0.0
    %12665 = vmatprep.subr.mxu0 0.0
    %12666 = vmatpush2.msra.mxu0 0.0
    %12667 = vmatprep.subr.mxu0 0.0
    %12668 = vmatpush2.msra.mxu0 0.0
    %12669 = vmatprep.subr.mxu0 0.0
    %12670 = vmatpush2.msra.mxu0 0.0
    %12671 = vmatprep.subr.mxu0 0.0
    %12672 = vmatpush2.msra.mxu0 0.0
    %12673 = vmatprep.subr.mxu0 0.0
    %12674 = vmatpush2.msra.mxu0 0.0
    %12675 = vmatprep.subr.mxu0 0.0
    %12676 = vmatpush2.msra.mxu0 0.0
    %12677 = vmatprep.subr.mxu0 0.0
    %12678 = vmatpush2.msra.mxu0 0.0
    %12679 = vmatprep.subr.mxu0 0.0
    %12680 = vmatpush2.msra.mxu0 0.0
    %12681 = vmatprep.subr.mxu0 0.0
    %12682 = vmatpush2.msra.mxu0 0.0
    %12683 = vmatprep.subr.mxu0 0.0
    %12684 = vmatpush2.msra.mxu0 0.0
    %12685 = vmatprep.subr.mxu0 0.0
    %12686 = vmatpush2.msra.mxu0 0.0
    %12687 = vmatprep.subr.mxu0 0.0
    %12688 = vmatpush2.msra.mxu0 0.0
    %12689 = vmatprep.subr.mxu0 0.0
    %12690 = vmatpush2.msra.mxu0 0.0
    %12691 = vmatprep.subr.mxu0 0.0
    %12692 = vmatpush2.msra.mxu0 0.0
    %12693 = vmatprep.subr.mxu0 0.0
    %12694 = vmatpush2.msra.mxu0 0.0
    %12695 = vmatprep.mubr.f32.mxu0 0.0
    %12696 = vmatmul.mubr.f32.gmra.mxu0 %v12404
    %v12697 = vpop.f32.mrf.mxu0
    %v12698 = vadd.f32 %v12627, %v12697
    %v12699 = vpop.f32.mrf.mxu0
    %v12700 = vadd.f32 %v12629, %v12699
    %12701 = vdwg.mxu0
    %v12702 = vadd.f32 %v12259, %v12556
    %v12703 = vadd.f32 %v12260, %v12558
    %v12704 = vadd.f32 %v12261, %v12698
    %v12705 = vadd.f32 %v12262, %v12700
    %v12710 = vcombine.low %v12702, %v12703
    %v12711 = vcombine.low %v12704, %v12705
    %v12713 = vunpack.c.l.s4 1966171168
    %v12714 = vunpack.c.0.s8 %v12713
    %v12715 = vlaneseq
    %v12716 = vshrl.u32 %v12715, 7
    %v12717 = vsub.s32 %v12714, %v12716
    %v12718 = vrot.slane %v12710, %v12717
    %v12720 = vunpack.c.l.s4 1966171168
    %v12721 = vunpack.c.0.s8 %v12720
    %v12722 = vlaneseq
    %v12723 = vshrl.u32 %v12722, 7
    %v12724 = vsub.s32 %v12721, %v12723
    %v12725 = vrot.slane %v12711, %v12724
    %v12726 = vcombine.low %v12718, %v12725
    %v12728 = vunpack.c.l.s4 1966171168
    %v12729 = vunpack.c.0.s8 %v12728
    %v12730 = vlaneseq
    %v12731 = vshrl.u32 %v12730, 7
    %v12732 = vsub.s32 %v12729, %v12731
    %v12733 = vrot.slane %v12726, %v12732
    %s12735 = scalar_lea.vmem [#allocation3], 1
    %12736 = vst.msk [vmem:[%s12735] ss:$2 sm:$0xf] %vm6610, %v12733
    %v12737 = vld [vmem:[#allocation3] sm:$0xff]
    %v12738 = vld [vmem:[%s7] sm:$0xf]
    %v12740 = vlaneseq
    %v12741 = vshrl.u32 %v12740, 7
    %v12742 = vsub.s32 0, %v12741
    %v12743 = vrot.slane %v12738, %v12742
    %v12744 = vlaneseq
    %v12745 = vshrl.u32 %v12744, 7
    %v12746 = vsub.s32 1, %v12745
    %v12747 = vrot.slane %v12738, %v12746
    %v12748 = vlaneseq
    %v12749 = vshrl.u32 %v12748, 7
    %v12750 = vsub.s32 2, %v12749
    %v12751 = vrot.slane %v12738, %v12750
    %v12752 = vlaneseq
    %v12753 = vshrl.u32 %v12752, 7
    %v12754 = vsub.s32 3, %v12753
    %v12755 = vrot.slane %v12738, %v12754
    %v12756 = vcombine.low %v12743, %v12747
    %v12757 = vcombine.low %v12751, %v12755
    %v12759 = vunpack.c.l.s4 1983009808
    %v12760 = vunpack.c.0.s8 %v12759
    %v12761 = vlaneseq
    %v12762 = vshrl.u32 %v12761, 7
    %v12763 = vsub.s32 %v12760, %v12762
    %v12764 = vrot.slane %v12756, %v12763
    %v12766 = vunpack.c.l.s4 1983009808
    %v12767 = vunpack.c.0.s8 %v12766
    %v12768 = vlaneseq
    %v12769 = vshrl.u32 %v12768, 7
    %v12770 = vsub.s32 %v12767, %v12769
    %v12771 = vrot.slane %v12757, %v12770
    %v12772 = vcombine.low %v12764, %v12771
    %v12774 = vadd.f32 %v12737, %v12772
    %v12775 = vmax.f32 %v12774, 0.0
    %v12776 = vld [vmem:[%s8] sm:$0xff]
    %v12777 = vld [vmem:[%s8 + $0x8] sm:$0xff]
    %v12778 = vld [vmem:[%s8 + $0x10] sm:$0xff]
    %v12779 = vld [vmem:[%s8 + $0x18] sm:$0xff]
    %v12780 = vld [vmem:[%s8 + $0x20] sm:$0xff]
    %v12781 = vld [vmem:[%s8 + $0x28] sm:$0xff]
    %v12782 = vld [vmem:[%s8 + $0x30] sm:$0xff]
    %v12783 = vld [vmem:[%s8 + $0x38] sm:$0xff]
    %v12784 = vld [vmem:[%s8 + $0x40] sm:$0xff]
    %v12785 = vld [vmem:[%s8 + $0x48] sm:$0xff]
    %v12786 = vld [vmem:[%s8 + $0x50] sm:$0xff]
    %v12787 = vld [vmem:[%s8 + $0x58] sm:$0xff]
    %v12788 = vld [vmem:[%s8 + $0x60] sm:$0xff]
    %v12789 = vld [vmem:[%s8 + $0x68] sm:$0xff]
    %v12790 = vld [vmem:[%s8 + $0x70] sm:$0xff]
    %v12791 = vld [vmem:[%s8 + $0x78] sm:$0xff]
    %v12792 = vld [vmem:[%s8 + $0x80] sm:$0xff]
    %v12793 = vld [vmem:[%s8 + $0x88] sm:$0xff]
    %v12794 = vld [vmem:[%s8 + $0x90] sm:$0xff]
    %v12795 = vld [vmem:[%s8 + $0x98] sm:$0xff]
    %v12796 = vld [vmem:[%s8 + $0xa0] sm:$0xff]
    %v12797 = vld [vmem:[%s8 + $0xa8] sm:$0xff]
    %v12798 = vld [vmem:[%s8 + $0xb0] sm:$0xff]
    %v12799 = vld [vmem:[%s8 + $0xb8] sm:$0xff]
    %v12800 = vld [vmem:[%s8 + $0xc0] sm:$0xff]
    %v12801 = vld [vmem:[%s8 + $0xc8] sm:$0xff]
    %v12802 = vld [vmem:[%s8 + $0xd0] sm:$0xff]
    %v12803 = vld [vmem:[%s8 + $0xd8] sm:$0xff]
    %v12804 = vld [vmem:[%s8 + $0xe0] sm:$0xff]
    %v12805 = vld [vmem:[%s8 + $0xe8] sm:$0xff]
    %v12806 = vld [vmem:[%s8 + $0xf0] sm:$0xff]
    %v12807 = vld [vmem:[%s8 + $0xf8] sm:$0xff]
    %v12808 = vld [vmem:[%s8 + $0x100] sm:$0xff]
    %v12809 = vld [vmem:[%s8 + $0x108] sm:$0xff]
    %v12810 = vld [vmem:[%s8 + $0x110] sm:$0xff]
    %v12811 = vld [vmem:[%s8 + $0x118] sm:$0xff]
    %v12812 = vld [vmem:[%s8 + $0x120] sm:$0xff]
    %v12813 = vld [vmem:[%s8 + $0x128] sm:$0xff]
    %v12814 = vld [vmem:[%s8 + $0x130] sm:$0xff]
    %v12815 = vld [vmem:[%s8 + $0x138] sm:$0xff]
    %v12816 = vld [vmem:[%s8 + $0x140] sm:$0xff]
    %v12817 = vld [vmem:[%s8 + $0x148] sm:$0xff]
    %v12818 = vld [vmem:[%s8 + $0x150] sm:$0xff]
    %v12819 = vld [vmem:[%s8 + $0x158] sm:$0xff]
    %v12820 = vld [vmem:[%s8 + $0x160] sm:$0xff]
    %v12821 = vld [vmem:[%s8 + $0x168] sm:$0xff]
    %v12822 = vld [vmem:[%s8 + $0x170] sm:$0xff]
    %v12823 = vld [vmem:[%s8 + $0x178] sm:$0xff]
    %v12824 = vld [vmem:[%s8 + $0x180] sm:$0xff]
    %v12825 = vld [vmem:[%s8 + $0x188] sm:$0xff]
    %v12826 = vld [vmem:[%s9] sm:$0x1]
    %v12828 = vlaneseq
    %v12829 = vshrl.u32 %v12828, 7
    %v12830 = vsub.s32 0, %v12829
    %v12831 = vrot.slane %v12826, %v12830
    %v12834 = vcombine.high %v12775, %v12775
    %v12836 = vunpack.c.l.s4 1983009808
    %v12837 = vunpack.c.0.s8 %v12836
    %v12838 = vlaneseq
    %v12839 = vshrl.u32 %v12838, 7
    %v12840 = vsub.s32 %v12837, %v12839
    %v12841 = vrot.slane %v12775, %v12840
    %v12843 = vunpack.c.l.s4 1983009808
    %v12844 = vunpack.c.0.s8 %v12843
    %v12845 = vlaneseq
    %v12846 = vshrl.u32 %v12845, 7
    %v12847 = vsub.s32 %v12844, %v12846
    %v12848 = vrot.slane %v12834, %v12847
    %v12849 = vcombine.high %v12841, %v12841
    %v12850 = vcombine.high %v12848, %v12848
    %vm12854 = vcmask 130048
    %v12855 = vsel %vm12854, %v12850, 0
    %12857 = vmatprep.subr.mxu0 0.0
    %12858 = vmatpush1.msra.mxu0 %v12791
    %12859 = vmatprep.subr.mxu0 0.0
    %12860 = vmatpush1.msra.mxu0 %v12790
    %12861 = vmatprep.subr.mxu0 0.0
    %12862 = vmatpush1.msra.mxu0 %v12789
    %12863 = vmatprep.subr.mxu0 0.0
    %12864 = vmatpush1.msra.mxu0 %v12788
    %12865 = vmatprep.subr.mxu0 0.0
    %12866 = vmatpush1.msra.mxu0 %v12787
    %12867 = vmatprep.subr.mxu0 0.0
    %12868 = vmatpush1.msra.mxu0 %v12786
    %12869 = vmatprep.subr.mxu0 0.0
    %12870 = vmatpush1.msra.mxu0 %v12785
    %12871 = vmatprep.subr.mxu0 0.0
    %12872 = vmatpush1.msra.mxu0 %v12784
    %12873 = vmatprep.subr.mxu0 0.0
    %12874 = vmatpush1.msra.mxu0 %v12783
    %12875 = vmatprep.subr.mxu0 0.0
    %12876 = vmatpush1.msra.mxu0 %v12782
    %12877 = vmatprep.subr.mxu0 0.0
    %12878 = vmatpush1.msra.mxu0 %v12781
    %12879 = vmatprep.subr.mxu0 0.0
    %12880 = vmatpush1.msra.mxu0 %v12780
    %12881 = vmatprep.subr.mxu0 0.0
    %12882 = vmatpush1.msra.mxu0 %v12779
    %12883 = vmatprep.subr.mxu0 0.0
    %12884 = vmatpush1.msra.mxu0 %v12778
    %12885 = vmatprep.subr.mxu0 0.0
    %12886 = vmatpush1.msra.mxu0 %v12777
    %12887 = vmatprep.subr.mxu0 0.0
    %12888 = vmatpush1.msra.mxu0 %v12776
    %12889 = vmatprep.subr.mxu0 0.0
    %12890 = vmatpush2.msra.mxu0 %v12807
    %12891 = vmatprep.subr.mxu0 0.0
    %12892 = vmatpush2.msra.mxu0 %v12806
    %12893 = vmatprep.subr.mxu0 0.0
    %12894 = vmatpush2.msra.mxu0 %v12805
    %12895 = vmatprep.subr.mxu0 0.0
    %12896 = vmatpush2.msra.mxu0 %v12804
    %12897 = vmatprep.subr.mxu0 0.0
    %12898 = vmatpush2.msra.mxu0 %v12803
    %12899 = vmatprep.subr.mxu0 0.0
    %12900 = vmatpush2.msra.mxu0 %v12802
    %12901 = vmatprep.subr.mxu0 0.0
    %12902 = vmatpush2.msra.mxu0 %v12801
    %12903 = vmatprep.subr.mxu0 0.0
    %12904 = vmatpush2.msra.mxu0 %v12800
    %12905 = vmatprep.subr.mxu0 0.0
    %12906 = vmatpush2.msra.mxu0 %v12799
    %12907 = vmatprep.subr.mxu0 0.0
    %12908 = vmatpush2.msra.mxu0 %v12798
    %12909 = vmatprep.subr.mxu0 0.0
    %12910 = vmatpush2.msra.mxu0 %v12797
    %12911 = vmatprep.subr.mxu0 0.0
    %12912 = vmatpush2.msra.mxu0 %v12796
    %12913 = vmatprep.subr.mxu0 0.0
    %12914 = vmatpush2.msra.mxu0 %v12795
    %12915 = vmatprep.subr.mxu0 0.0
    %12916 = vmatpush2.msra.mxu0 %v12794
    %12917 = vmatprep.subr.mxu0 0.0
    %12918 = vmatpush2.msra.mxu0 %v12793
    %12919 = vmatprep.subr.mxu0 0.0
    %12920 = vmatpush2.msra.mxu0 %v12792
    %12921 = vmatprep.mubr.f32.mxu0 %v12849
    %12922 = vmatmul.mubr.f32.gmra.mxu0 %v12841
    %v12923 = vpop.f32.mrf.mxu0
    %v12924 = vadd.f32 %v12831, %v12923
    %v12925 = vpop.f32.mrf.mxu0
    %12926 = vdwg.mxu0
    %12927 = vmatprep.subr.mxu0 0.0
    %12928 = vmatpush1.msra.mxu0 %v12823
    %12929 = vmatprep.subr.mxu0 0.0
    %12930 = vmatpush1.msra.mxu0 %v12822
    %12931 = vmatprep.subr.mxu0 0.0
    %12932 = vmatpush1.msra.mxu0 %v12821
    %12933 = vmatprep.subr.mxu0 0.0
    %12934 = vmatpush1.msra.mxu0 %v12820
    %12935 = vmatprep.subr.mxu0 0.0
    %12936 = vmatpush1.msra.mxu0 %v12819
    %12937 = vmatprep.subr.mxu0 0.0
    %12938 = vmatpush1.msra.mxu0 %v12818
    %12939 = vmatprep.subr.mxu0 0.0
    %12940 = vmatpush1.msra.mxu0 %v12817
    %12941 = vmatprep.subr.mxu0 0.0
    %12942 = vmatpush1.msra.mxu0 %v12816
    %12943 = vmatprep.subr.mxu0 0.0
    %12944 = vmatpush1.msra.mxu0 %v12815
    %12945 = vmatprep.subr.mxu0 0.0
    %12946 = vmatpush1.msra.mxu0 %v12814
    %12947 = vmatprep.subr.mxu0 0.0
    %12948 = vmatpush1.msra.mxu0 %v12813
    %12949 = vmatprep.subr.mxu0 0.0
    %12950 = vmatpush1.msra.mxu0 %v12812
    %12951 = vmatprep.subr.mxu0 0.0
    %12952 = vmatpush1.msra.mxu0 %v12811
    %12953 = vmatprep.subr.mxu0 0.0
    %12954 = vmatpush1.msra.mxu0 %v12810
    %12955 = vmatprep.subr.mxu0 0.0
    %12956 = vmatpush1.msra.mxu0 %v12809
    %12957 = vmatprep.subr.mxu0 0.0
    %12958 = vmatpush1.msra.mxu0 %v12808
    %12959 = vmatprep.subr.mxu0 0.0
    %12960 = vmatpush2.msra.mxu0 0.0
    %12961 = vmatprep.subr.mxu0 0.0
    %12962 = vmatpush2.msra.mxu0 0.0
    %12963 = vmatprep.subr.mxu0 0.0
    %12964 = vmatpush2.msra.mxu0 0.0
    %12965 = vmatprep.subr.mxu0 0.0
    %12966 = vmatpush2.msra.mxu0 0.0
    %12967 = vmatprep.subr.mxu0 0.0
    %12968 = vmatpush2.msra.mxu0 0.0
    %12969 = vmatprep.subr.mxu0 0.0
    %12970 = vmatpush2.msra.mxu0 0.0
    %12971 = vmatprep.subr.mxu0 0.0
    %12972 = vmatpush2.msra.mxu0 0.0
    %12973 = vmatprep.subr.mxu0 0.0
    %12974 = vmatpush2.msra.mxu0 0.0
    %12975 = vmatprep.subr.mxu0 0.0
    %12976 = vmatpush2.msra.mxu0 0.0
    %12977 = vmatprep.subr.mxu0 0.0
    %12978 = vmatpush2.msra.mxu0 0.0
    %12979 = vmatprep.subr.mxu0 0.0
    %12980 = vmatpush2.msra.mxu0 0.0
    %12981 = vmatprep.subr.mxu0 0.0
    %12982 = vmatpush2.msra.mxu0 0.0
    %12983 = vmatprep.subr.mxu0 0.0
    %12984 = vmatpush2.msra.mxu0 0.0
    %12985 = vmatprep.subr.mxu0 0.0
    %12986 = vmatpush2.msra.mxu0 0.0
    %12987 = vmatprep.subr.mxu0 0.0
    %12988 = vmatpush2.msra.mxu0 %v12825
    %12989 = vmatprep.subr.mxu0 0.0
    %12990 = vmatpush2.msra.mxu0 %v12824
    %12991 = vmatprep.mubr.f32.mxu0 %v12855
    %12992 = vmatmul.mubr.f32.gmra.mxu0 %v12848
    %v12993 = vpop.f32.mrf.mxu0
    %v12994 = vadd.f32 %v12924, %v12993
    %v12995 = vpop.f32.mrf.mxu0
    %12996 = vdwg.mxu0
    %v12997 = vmax.f32 %v12994, 0.0
    %v12998 = vld [vmem:[%s10] sm:$0xff]
    %v12999 = vld [vmem:[%s10 + $0x8] sm:$0xff]
    %v13000 = vld [vmem:[%s10 + $0x10] sm:$0xff]
    %v13001 = vld [vmem:[%s10 + $0x18] sm:$0xff]
    %v13002 = vld [vmem:[%s10 + $0x20] sm:$0xff]
    %v13003 = vld [vmem:[%s10 + $0x28] sm:$0xff]
    %v13004 = vld [vmem:[%s10 + $0x30] sm:$0xff]
    %v13005 = vld [vmem:[%s10 + $0x38] sm:$0xff]
    %v13006 = vld [vmem:[%s10 + $0x40] sm:$0xff]
    %v13007 = vld [vmem:[%s10 + $0x48] sm:$0xff]
    %v13008 = vld [vmem:[%s10 + $0x50] sm:$0xf]
    %v13009 = vld [vmem:[%s11] sm:$0x1]
    %v13011 = vlaneseq
    %v13012 = vshrl.u32 %v13011, 7
    %v13013 = vsub.s32 0, %v13012
    %v13014 = vrot.slane %v13009, %v13013
    %vm13016 = vcmask 687104
    %v13018 = vsel %vm13016, %v12997, 0
    %v13021 = vsel %vm4453, %v13008, 0
    %13023 = vmatprep.subr.mxu0 0.0
    %13024 = vmatpush1.msra.mxu0 0.0
    %13025 = vmatprep.subr.mxu0 0.0
    %13026 = vmatpush1.msra.mxu0 0.0
    %13027 = vmatprep.subr.mxu0 0.0
    %13028 = vmatpush1.msra.mxu0 0.0
    %13029 = vmatprep.subr.mxu0 0.0
    %13030 = vmatpush1.msra.mxu0 0.0
    %13031 = vmatprep.subr.mxu0 0.0
    %13032 = vmatpush1.msra.mxu0 0.0
    %13033 = vmatprep.subr.mxu0 0.0
    %13034 = vmatpush1.msra.mxu0 %v13021
    %13035 = vmatprep.subr.mxu0 0.0
    %13036 = vmatpush1.msra.mxu0 %v13007
    %13037 = vmatprep.subr.mxu0 0.0
    %13038 = vmatpush1.msra.mxu0 %v13006
    %13039 = vmatprep.subr.mxu0 0.0
    %13040 = vmatpush1.msra.mxu0 %v13005
    %13041 = vmatprep.subr.mxu0 0.0
    %13042 = vmatpush1.msra.mxu0 %v13004
    %13043 = vmatprep.subr.mxu0 0.0
    %13044 = vmatpush1.msra.mxu0 %v13003
    %13045 = vmatprep.subr.mxu0 0.0
    %13046 = vmatpush1.msra.mxu0 %v13002
    %13047 = vmatprep.subr.mxu0 0.0
    %13048 = vmatpush1.msra.mxu0 %v13001
    %13049 = vmatprep.subr.mxu0 0.0
    %13050 = vmatpush1.msra.mxu0 %v13000
    %13051 = vmatprep.subr.mxu0 0.0
    %13052 = vmatpush1.msra.mxu0 %v12999
    %13053 = vmatprep.subr.mxu0 0.0
    %13054 = vmatpush1.msra.mxu0 %v12998
    %13055 = vmatprep.subr.mxu0 0.0
    %13056 = vmatpush2.msra.mxu0 0.0
    %13057 = vmatprep.subr.mxu0 0.0
    %13058 = vmatpush2.msra.mxu0 0.0
    %13059 = vmatprep.subr.mxu0 0.0
    %13060 = vmatpush2.msra.mxu0 0.0
    %13061 = vmatprep.subr.mxu0 0.0
    %13062 = vmatpush2.msra.mxu0 0.0
    %13063 = vmatprep.subr.mxu0 0.0
    %13064 = vmatpush2.msra.mxu0 0.0
    %13065 = vmatprep.subr.mxu0 0.0
    %13066 = vmatpush2.msra.mxu0 0.0
    %13067 = vmatprep.subr.mxu0 0.0
    %13068 = vmatpush2.msra.mxu0 0.0
    %13069 = vmatprep.subr.mxu0 0.0
    %13070 = vmatpush2.msra.mxu0 0.0
    %13071 = vmatprep.subr.mxu0 0.0
    %13072 = vmatpush2.msra.mxu0 0.0
    %13073 = vmatprep.subr.mxu0 0.0
    %13074 = vmatpush2.msra.mxu0 0.0
    %13075 = vmatprep.subr.mxu0 0.0
    %13076 = vmatpush2.msra.mxu0 0.0
    %13077 = vmatprep.subr.mxu0 0.0
    %13078 = vmatpush2.msra.mxu0 0.0
    %13079 = vmatprep.subr.mxu0 0.0
    %13080 = vmatpush2.msra.mxu0 0.0
    %13081 = vmatprep.subr.mxu0 0.0
    %13082 = vmatpush2.msra.mxu0 0.0
    %13083 = vmatprep.subr.mxu0 0.0
    %13084 = vmatpush2.msra.mxu0 0.0
    %13085 = vmatprep.subr.mxu0 0.0
    %13086 = vmatpush2.msra.mxu0 0.0
    %13087 = vmatprep.mubr.f32.mxu0 0.0
    %13088 = vmatmul.mubr.f32.gmra.mxu0 %v13018
    %v13089 = vpop.f32.mrf.mxu0
    %v13090 = vadd.f32 %v13014, %v13089
    %v13091 = vpop.f32.mrf.mxu0
    %13092 = vdwg.mxu0
    %v13093 = vmax.f32 %v13090, 0.0
    %v13094 = vld [vmem:[%s12] sm:$0xff]
    %v13095 = vld [vmem:[%s12 + $0x8] sm:$0x3]
    %v13096 = vld [vmem:[%s13] sm:$0x1]
    %v13098 = vlaneseq
    %v13099 = vshrl.u32 %v13098, 7
    %v13100 = vsub.s32 0, %v13099
    %v13101 = vrot.slane %v13096, %v13100
    %vm13103 = vcmask 80896
    %v13105 = vsel %vm13103, %v13093, 0
    %v13108 = vsel %vm3167, %v13095, 0
    %13110 = vmatprep.subr.mxu0 0.0
    %13111 = vmatpush1.msra.mxu0 0.0
    %13112 = vmatprep.subr.mxu0 0.0
    %13113 = vmatpush1.msra.mxu0 0.0
    %13114 = vmatprep.subr.mxu0 0.0
    %13115 = vmatpush1.msra.mxu0 0.0
    %13116 = vmatprep.subr.mxu0 0.0
    %13117 = vmatpush1.msra.mxu0 0.0
    %13118 = vmatprep.subr.mxu0 0.0
    %13119 = vmatpush1.msra.mxu0 0.0
    %13120 = vmatprep.subr.mxu0 0.0
    %13121 = vmatpush1.msra.mxu0 0.0
    %13122 = vmatprep.subr.mxu0 0.0
    %13123 = vmatpush1.msra.mxu0 0.0
    %13124 = vmatprep.subr.mxu0 0.0
    %13125 = vmatpush1.msra.mxu0 0.0
    %13126 = vmatprep.subr.mxu0 0.0
    %13127 = vmatpush1.msra.mxu0 0.0
    %13128 = vmatprep.subr.mxu0 0.0
    %13129 = vmatpush1.msra.mxu0 0.0
    %13130 = vmatprep.subr.mxu0 0.0
    %13131 = vmatpush1.msra.mxu0 0.0
    %13132 = vmatprep.subr.mxu0 0.0
    %13133 = vmatpush1.msra.mxu0 0.0
    %13134 = vmatprep.subr.mxu0 0.0
    %13135 = vmatpush1.msra.mxu0 0.0
    %13136 = vmatprep.subr.mxu0 0.0
    %13137 = vmatpush1.msra.mxu0 0.0
    %13138 = vmatprep.subr.mxu0 0.0
    %13139 = vmatpush1.msra.mxu0 %v13108
    %13140 = vmatprep.subr.mxu0 0.0
    %13141 = vmatpush1.msra.mxu0 %v13094
    %13142 = vmatprep.subr.mxu0 0.0
    %13143 = vmatpush2.msra.mxu0 0.0
    %13144 = vmatprep.subr.mxu0 0.0
    %13145 = vmatpush2.msra.mxu0 0.0
    %13146 = vmatprep.subr.mxu0 0.0
    %13147 = vmatpush2.msra.mxu0 0.0
    %13148 = vmatprep.subr.mxu0 0.0
    %13149 = vmatpush2.msra.mxu0 0.0
    %13150 = vmatprep.subr.mxu0 0.0
    %13151 = vmatpush2.msra.mxu0 0.0
    %13152 = vmatprep.subr.mxu0 0.0
    %13153 = vmatpush2.msra.mxu0 0.0
    %13154 = vmatprep.subr.mxu0 0.0
    %13155 = vmatpush2.msra.mxu0 0.0
    %13156 = vmatprep.subr.mxu0 0.0
    %13157 = vmatpush2.msra.mxu0 0.0
    %13158 = vmatprep.subr.mxu0 0.0
    %13159 = vmatpush2.msra.mxu0 0.0
    %13160 = vmatprep.subr.mxu0 0.0
    %13161 = vmatpush2.msra.mxu0 0.0
    %13162 = vmatprep.subr.mxu0 0.0
    %13163 = vmatpush2.msra.mxu0 0.0
    %13164 = vmatprep.subr.mxu0 0.0
    %13165 = vmatpush2.msra.mxu0 0.0
    %13166 = vmatprep.subr.mxu0 0.0
    %13167 = vmatpush2.msra.mxu0 0.0
    %13168 = vmatprep.subr.mxu0 0.0
    %13169 = vmatpush2.msra.mxu0 0.0
    %13170 = vmatprep.subr.mxu0 0.0
    %13171 = vmatpush2.msra.mxu0 0.0
    %13172 = vmatprep.subr.mxu0 0.0
    %13173 = vmatpush2.msra.mxu0 0.0
    %13174 = vmatprep.mubr.f32.mxu0 0.0
    %13175 = vmatmul.mubr.f32.gmra.mxu0 %v13105
    %v13176 = vpop.f32.mrf.mxu0
    %v13177 = vadd.f32 %v13101, %v13176
    %v13178 = vpop.f32.mrf.mxu0
    %13179 = vdwg.mxu0
    %vm13180 = vcmask 9216
    %13181 = vst.msk [vmem:[#allocation4] sm:$0x3] %vm13180, %v13177
    // Predicated region
    $region58: #{net_forward.1} parent=1 // pred_check
      _
    $region59: #{net_forward.1} parent=1 // pred_check_branch
      %13183 = sbr.rel (0) target = $region61
    $region60: #{net_forward.1} parent=1 // pred_region
      %s13185 = ssub.s32 32, 32
      %13186 = vsyncadd [#allocation5], %s13185
      %s13188 = sshll.u32 [#allocation4], 4
      %s13189 = int_to_ptr.vmem [resolvable:$true] %s13188
      %13191 = dma.vmem_to_hbm [thread:$0]  %s13189, 32, %s14, [#allocation5]
    $region61: #{net_forward.1} parent=1 // pred_fallthru
      _
    // Predicated region
    $region62: #{net_forward.1} parent=1 // pred_check
      _
    $region63: #{net_forward.1} parent=1 // pred_check_branch
      %13193 = sbr.rel (0) target = $region65
    $region64: #{net_forward.1} parent=1 // pred_region
      %13194 = dma.done [#allocation5], 32
    $region65: #{net_forward.1} parent=1 // pred_fallthru
      _
    %13195 = vsyncpa [#allocation5], 1

</llo_original>
